<compile_context>
chip_gen: v7x
topology: tpu7x:2x2x1
jax: 0.10.0
libtpu: 0.0.40
codegen_flags: <defaults>
</compile_context>

<pallas_src>
import functools

import numpy as np
import jax
import jax.numpy as jnp
from jax.experimental import pallas as pl
from jax.experimental.pallas import tpu as pltpu


_LEAKY_SLOPE = 0.2
_IN_EPS = 1e-5


# ---------------------------------------------------------------------------
# Pallas kernels
# ---------------------------------------------------------------------------
def _conv_taps_norm_act(use_norm, wz, rows_out, n_valid,
                        z_ref, w_ref, b_ref, mask_ref):
    """Shared conv-block body for a single batch element.

    z_ref:    (1, (Ho+2)*(Wo+2), 4*Cin_pad)  space-to-depth input (bf16)
    w_ref:    (4, 4*Cin_pad, Cout_pad)       per-tap weights (bf16)
    b_ref:    (1, Cout_pad)                  bias (only used when use_norm=False)
    mask_ref: (rows_out, 1)                  1.0 on valid spatial rows, 0.0 on
                                             the 2 garbage columns per row group
    Returns y: (rows_out, Cout_pad) f32 = conv [+bias | InstanceNorm] ->
    LeakyReLU(0.2), with garbage rows zeroed.
    """
    acc = None
    # Static tap offsets: (dq, dp) in row-major order matching the weight layout.
    for t, (dq, dp) in enumerate(((0, 0), (0, 1), (1, 0), (1, 1))):
        start = dq * wz + dp                                     # static int
        patch = z_ref[0, start:start + rows_out, :]              # (rows_out, 4*Cin)
        part = jnp.dot(patch, w_ref[t], preferred_element_type=jnp.float32)
        acc = part if acc is None else acc + part

    mask = mask_ref[...]                                         # (rows_out, 1)
    if use_norm:
        # InstanceNorm2d(affine=False, track_running_stats=False), eps=1e-5:
        # per-(n, c) mean / biased var over the n_valid real spatial positions,
        # single pass: var = E[y^2] - E[y]^2 (f32 accumulator, clamped >= 0).
        inv_n = 1.0 / float(n_valid)
        ym = acc * mask
        s1 = jnp.sum(ym, axis=0, keepdims=True)
        s2 = jnp.sum(ym * ym, axis=0, keepdims=True)
        mean = s1 * inv_n
        var = jnp.maximum(s2 * inv_n - mean * mean, 0.0)
        y = (acc - mean) * jax.lax.rsqrt(var + _IN_EPS)
    else:
        y = acc + b_ref[...]
    y = jnp.where(y > 0.0, y, _LEAKY_SLOPE * y)                  # LeakyReLU(0.2)
    return y * mask                                              # zero garbage rows


def _conv_block_kernel(use_norm, wz, rows_out, n_valid,
                       z_ref, w_ref, b_ref, mask_ref, o_ref):
    y = _conv_taps_norm_act(use_norm, wz, rows_out, n_valid,
                            z_ref, w_ref, b_ref, mask_ref)
    o_ref[0] = y.astype(o_ref.dtype)


def _conv_pool_kernel(use_norm, wz, rows_out, n_valid,
                      z_ref, w_ref, b_ref, mask_ref, pmat_ref, o_ref):
    """Last conv block fused with AdaptiveAvgPool2d((12,12)) as a matmul."""
    y = _conv_taps_norm_act(use_norm, wz, rows_out, n_valid,
                            z_ref, w_ref, b_ref, mask_ref)
    pooled = jnp.dot(pmat_ref[...], y, preferred_element_type=jnp.float32)
    o_ref[0] = pooled.astype(o_ref.dtype)


def _fc_head_kernel(x_ref, w1_ref, b1_ref, w2_ref, b2_ref, o_ref, acc_ref):
    """fc1 (K-tiled, f32 accumulator) -> LeakyReLU(0.2) -> fc2."""
    k = pl.program_id(0)

    @pl.when(k == 0)
    def _init():
        acc_ref[...] = jnp.zeros_like(acc_ref)

    acc_ref[...] += jnp.dot(x_ref[...], w1_ref[...],
                            preferred_element_type=jnp.float32)

    @pl.when(k == pl.num_programs(0) - 1)
    def _finalize():
        h = acc_ref[...] + b1_ref[...]
        h = jnp.where(h > 0.0, h, _LEAKY_SLOPE * h)
        o_ref[...] = (jnp.dot(h, w2_ref[...], preferred_element_type=jnp.float32)
                      + b2_ref[...])


# ---------------------------------------------------------------------------
# pallas_call wrappers
# ---------------------------------------------------------------------------
def conv_block(z, w4, b, mask, *, use_norm, wz, rows_out, n_valid):
    n, r, c4 = z.shape
    cout = w4.shape[2]
    kern = functools.partial(_conv_block_kernel, use_norm, wz, rows_out, n_valid)
    return pl.pallas_call(
        kern,
        out_shape=jax.ShapeDtypeStruct((n, rows_out, cout), jnp.bfloat16),
        grid_spec=pltpu.PrefetchScalarGridSpec(
            num_scalar_prefetch=0,
            grid=(n,),
            in_specs=[
                pl.BlockSpec((1, r, c4), lambda i: (i, 0, 0)),
                pl.BlockSpec((4, c4, cout), lambda i: (0, 0, 0)),
                pl.BlockSpec((1, cout), lambda i: (0, 0)),
                pl.BlockSpec((rows_out, 1), lambda i: (0, 0)),
            ],
            out_specs=pl.BlockSpec((1, rows_out, cout), lambda i: (i, 0, 0)),
        ),
        compiler_params=pltpu.CompilerParams(dimension_semantics=("parallel",)),
    )(z, w4, b, mask)


def conv_pool_block(z, w4, b, mask, pmat, *, use_norm, wz, rows_out, n_valid):
    n, r, c4 = z.shape
    cout = w4.shape[2]
    kern = functools.partial(_conv_pool_kernel, use_norm, wz, rows_out, n_valid)
    return pl.pallas_call(
        kern,
        out_shape=jax.ShapeDtypeStruct((n, 144, cout), jnp.bfloat16),
        grid_spec=pltpu.PrefetchScalarGridSpec(
            num_scalar_prefetch=0,
            grid=(n,),
            in_specs=[
                pl.BlockSpec((1, r, c4), lambda i: (i, 0, 0)),
                pl.BlockSpec((4, c4, cout), lambda i: (0, 0, 0)),
                pl.BlockSpec((1, cout), lambda i: (0, 0)),
                pl.BlockSpec((rows_out, 1), lambda i: (0, 0)),
                pl.BlockSpec((144, rows_out), lambda i: (0, 0)),
            ],
            out_specs=pl.BlockSpec((1, 144, cout), lambda i: (i, 0, 0)),
        ),
        compiler_params=pltpu.CompilerParams(dimension_semantics=("parallel",)),
    )(z, w4, b, mask, pmat)


def fc_head(x, w1, b1, w2, b2):
    n, feat = x.shape
    hid = w1.shape[1]
    # K-tiling keeps the (feat, 128) fc1 weight out of VMEM all at once
    # (at width=64 it is ~19 MB in bf16); 9 always divides 144 * Cpad.
    if feat % 9 == 0 and (feat // 9) % 128 == 0:
        tk = feat // 9
    else:
        tk = feat
    nk = feat // tk
    return pl.pallas_call(
        _fc_head_kernel,
        out_shape=jax.ShapeDtypeStruct((n, 1), jnp.float32),
        grid_spec=pltpu.PrefetchScalarGridSpec(
            num_scalar_prefetch=0,
            grid=(nk,),
            in_specs=[
                pl.BlockSpec((n, tk), lambda k: (0, k)),
                pl.BlockSpec((tk, hid), lambda k: (k, 0)),
                pl.BlockSpec((1, hid), lambda k: (0, 0)),
                pl.BlockSpec((hid, 1), lambda k: (0, 0)),
                pl.BlockSpec((1, 1), lambda k: (0, 0)),
            ],
            out_specs=pl.BlockSpec((n, 1), lambda k: (0, 0)),
            scratch_shapes=[pltpu.VMEM((n, hid), jnp.float32)],
        ),
        compiler_params=pltpu.CompilerParams(dimension_semantics=("arbitrary",)),
    )(x, w1, b1, w2, b2)


# ---------------------------------------------------------------------------
# Host-side glue: space-to-depth, masks, pooling matrix, params, forward
# ---------------------------------------------------------------------------
def _space_to_depth(x):
    """(N, H, W, C) -> (N, (Ho+2)*(Wo+2), 4*C): pad=1 conv padding plus extra
    zero rows/cols so every 2x2-tap of the stride-2 conv is a contiguous row
    slice of the flattened tensor.  Channel order of the 4-group is (s, t)."""
    n, h, w, c = x.shape
    ho, wo = h // 2, w // 2
    xp = jnp.pad(x, ((0, 0), (1, 3), (1, 3), (0, 0)))
    z = xp.reshape(n, ho + 2, 2, wo + 2, 2, c)
    z = jnp.transpose(z, (0, 1, 3, 2, 4, 5))            # (n, q, p, s, t, c)
    return z.reshape(n, (ho + 2) * (wo + 2), 4 * c)


@functools.lru_cache(maxsize=None)
def _valid_mask_np(ho, wo, wz):
    m = np.zeros((ho, wz, 1), np.float32)
    m[:, :wo, :] = 1.0
    return m.reshape(ho * wz, 1)


def _adaptive_pool_matrix(in_size, out_size):
    """Row-stochastic matrix reproducing PyTorch AdaptiveAvgPool binning."""
    p = np.zeros((out_size, in_size), np.float32)
    for o in range(out_size):
        start = (o * in_size) // out_size
        end = -(-((o + 1) * in_size) // out_size)        # ceil division
        p[o, start:end] = 1.0 / (end - start)
    return p


@functools.lru_cache(maxsize=None)
def _pool_matrix_np(ho, wo, wz):
    """(144, ho*wz) pooling matrix over the extended (garbage-column) layout."""
    ph = _adaptive_pool_matrix(ho, 12)
    pw = _adaptive_pool_matrix(wo, 12)
    pm = np.einsum("ai,bj->abij", ph, pw).reshape(144, ho, wo)
    pme = np.zeros((144, ho, wz), np.float32)
    pme[:, :, :wo] = pm
    return pme.reshape(144, ho * wz)


def _round_up(x, m):
    return ((x + m - 1) // m) * m


def init_params(key, width=8, in_ch=3):
    """Deterministic synthetic parameters, pre-laid-out for the kernels.

    Conv weights: PyTorch layout (Cout, Cin, 4, 4) is rearranged into the
    4-tap space-to-depth layout (4, 4*Cin_pad, Cout_pad) in bf16, with zero
    padding on both channel axes (Cout padded to a multiple of 128 so kernel
    output stores are lane-dense).  fc1 rows are permuted so the pooled
    (N, 144, Cpad) tensor flattens directly (no runtime transpose); the hidden
    dim is padded 100 -> 128 with zero columns/rows.
    """
    chans = [in_ch, width, width * 2, width * 4, width * 8]
    cin_pad0 = 8
    cout_pads = [_round_up(c, 128) for c in chans[1:]]
    keys = jax.random.split(key, 10)

    params = {"conv_w": [], "conv_b": []}
    kidx = 0
    for blk in range(4):
        cin, cout = chans[blk], chans[blk + 1]
        cin_p = cin_pad0 if blk == 0 else cout_pads[blk - 1]
        cout_p = cout_pads[blk]
        w_t = 0.05 * jax.random.normal(keys[kidx], (cout, cin, 4, 4), jnp.float32)
        kidx += 1
        wk = jnp.transpose(w_t, (2, 3, 1, 0))            # (kh, kw, cin, cout)
        wk = wk.reshape(2, 2, 2, 2, cin, cout)           # (dq, s, dp, t, cin, cout)
        wk = jnp.transpose(wk, (0, 2, 1, 3, 4, 5))       # (dq, dp, s, t, cin, cout)
        wk = jnp.pad(wk, ((0, 0),) * 4 + ((0, cin_p - cin), (0, cout_p - cout)))
        params["conv_w"].append(wk.reshape(4, 4 * cin_p, cout_p).astype(jnp.bfloat16))
        if blk == 0:                                     # normalize=False -> bias
            b_t = 0.05 * jax.random.normal(keys[kidx], (cout,), jnp.float32)
            kidx += 1
            b = jnp.zeros((1, cout_p), jnp.float32).at[0, :cout].set(b_t)
        else:                                            # InstanceNorm blocks: no bias
            b = jnp.zeros((1, cout_p), jnp.float32)
        params["conv_b"].append(b)

    c_last, c_last_p = chans[4], cout_pads[3]
    feat_real = c_last * 144
    # PyTorch fc1.weight is (100, feat_real) with feature index c*144 + s;
    # rearrange rows to s*Cpad + c so pooled.reshape(N, -1) feeds it directly.
    w1_t = 0.02 * jax.random.normal(keys[kidx], (100, feat_real), jnp.float32)
    kidx += 1
    w1 = jnp.transpose(w1_t.reshape(100, c_last, 144), (2, 1, 0))   # (s, c, 100)
    w1 = jnp.pad(w1, ((0, 0), (0, c_last_p - c_last), (0, 128 - 100)))
    params["fc1_w"] = w1.reshape(144 * c_last_p, 128).astype(jnp.bfloat16)

    b1_t = 0.02 * jax.random.normal(keys[kidx], (100,), jnp.float32)
    kidx += 1
    params["fc1_b"] = jnp.zeros((1, 128), jnp.float32).at[0, :100].set(b1_t)

    w2_t = 0.02 * jax.random.normal(keys[kidx], (1, 100), jnp.float32)
    kidx += 1
    params["fc2_w"] = jnp.zeros((128, 1), jnp.float32).at[:100, 0].set(w2_t[0])
    params["fc2_b"] = 0.02 * jax.random.normal(keys[kidx], (1, 1), jnp.float32)
    return params


def discriminator_forward(params, x_nchw):
    """Matches Discriminator.forward (dropout = inference identity); internal
    activations/weights are bf16 with f32 accumulation."""
    use_norm = (False, True, True, True)
    x = jnp.transpose(x_nchw, (0, 2, 3, 1)).astype(jnp.bfloat16)   # NCHW -> NHWC
    n = x.shape[0]
    cin_pad0 = params["conv_w"][0].shape[1] // 4
    if cin_pad0 > x.shape[-1]:
        x = jnp.pad(x, ((0, 0), (0, 0), (0, 0), (0, cin_pad0 - x.shape[-1])))

    pooled = None
    for blk in range(4):
        _, h, w, _ = x.shape
        ho, wo = h // 2, w // 2
        wz = wo + 2
        rows_out = ho * wz
        z = _space_to_depth(x)
        mask = jnp.asarray(_valid_mask_np(ho, wo, wz))
        if blk < 3:
            y = conv_block(z, params["conv_w"][blk], params["conv_b"][blk], mask,
                           use_norm=use_norm[blk], wz=wz, rows_out=rows_out,
                           n_valid=ho * wo)
            cout = y.shape[-1]
            # drop the 2 (already zeroed) garbage columns per row group
            x = y.reshape(n, ho, wz, cout)[:, :, :wo, :]
        else:
            pmat = jnp.asarray(_pool_matrix_np(ho, wo, wz))
            pooled = conv_pool_block(z, params["conv_w"][blk], params["conv_b"][blk],
                                     mask, pmat, use_norm=use_norm[blk], wz=wz,
                                     rows_out=rows_out, n_valid=ho * wo)

    flat = pooled.reshape(n, -1)                       # (N, 144*Cpad), bf16
    return fc_head(flat, params["fc1_w"], params["fc1_b"],
                   params["fc2_w"], params["fc2_b"])


if __name__ == "__main__":
    key = jax.random.PRNGKey(0)
    pkey, xkey = jax.random.split(key)

    width = 8  # small stand-in for the default width=64 (same structure)
    params = init_params(pkey, width=width)

    # NCHW input like the PyTorch module; spatial 32 -> 16 -> 8 -> 4 -> 2 -> pool 12x12
    x = jax.random.normal(xkey, (2, 3, 32, 32), jnp.float32)

    fwd = jax.jit(discriminator_forward)
    out = fwd(params, x)
    out = jax.block_until_ready(out)

    assert out.shape == (2, 1), out.shape
    assert bool(jnp.all(jnp.isfinite(out)))
    print("KERNEL_OK")
</pallas_src>

<mosaic_0001>
module attributes {stable_mosaic.version = 11 : i64} {
  func.func @_conv_block_kernel(%arg0: i32, %arg1: memref<1x324x32xbf16, #tpu.memory_space<vmem>>, %arg2: memref<4x32x128xbf16, #tpu.memory_space<vmem>>, %arg3: memref<1x128xf32, #tpu.memory_space<vmem>>, %arg4: memref<288x1xf32, #tpu.memory_space<vmem>>, %arg5: memref<1x288x128xbf16, #tpu.memory_space<vmem>>) attributes {dimension_semantics = [#tpu.dimension_semantics<parallel>], iteration_bounds = array<i64: 2>, scalar_prefetch = 0 : i64, scratch_operands = 0 : i64, tpu.core_type = #tpu.core_type<tc>, window_params = [{transform_indices = @transform_0, window_bounds = array<i64: 1, 324, 32>}, {pipeline_mode = #tpu.pipeline_mode<synchronous>, transform_indices = @transform_1, window_bounds = array<i64: 4, 32, 128>}, {pipeline_mode = #tpu.pipeline_mode<synchronous>, transform_indices = @transform_2, window_bounds = array<i64: 1, 128>}, {pipeline_mode = #tpu.pipeline_mode<synchronous>, transform_indices = @transform_3, window_bounds = array<i64: 288, 1>}, {transform_indices = @transform_4, window_bounds = array<i64: 1, 288, 128>}]} {
    %c0 = arith.constant 0 : index
    %c0_0 = arith.constant 0 : index
    %c0_1 = arith.constant 0 : index
    %0 = vector.load %arg1[%c0, %c0_0, %c0_1] : memref<1x324x32xbf16, #tpu.memory_space<vmem>>, vector<1x288x32xbf16>
    %1 = vector.shape_cast %0 : vector<1x288x32xbf16> to vector<288x32xbf16>
    %c0_2 = arith.constant 0 : index
    %c0_3 = arith.constant 0 : index
    %c0_4 = arith.constant 0 : index
    %2 = vector.load %arg2[%c0_2, %c0_3, %c0_4] : memref<4x32x128xbf16, #tpu.memory_space<vmem>>, vector<1x32x128xbf16>
    %3 = vector.shape_cast %2 : vector<1x32x128xbf16> to vector<32x128xbf16>
    %cst = arith.constant dense<0.000000e+00> : vector<288x128xf32>
    %4 = tpu.matmul %1, %3, %cst {dimension_numbers = #tpu.dot_dimension_numbers<[1], [0], [0], [1], [0, 0, 1, 1], [], []>} : vector<288x32xbf16>, vector<32x128xbf16>, vector<288x128xf32> -> vector<288x128xf32>
    %c0_5 = arith.constant 0 : index
    %c1 = arith.constant 1 : index
    %c0_6 = arith.constant 0 : index
    %5 = vector.load %arg1[%c0_5, %c1, %c0_6] : memref<1x324x32xbf16, #tpu.memory_space<vmem>>, vector<1x288x32xbf16>
    %6 = vector.shape_cast %5 : vector<1x288x32xbf16> to vector<288x32xbf16>
    %c1_7 = arith.constant 1 : index
    %c0_8 = arith.constant 0 : index
    %c0_9 = arith.constant 0 : index
    %7 = vector.load %arg2[%c1_7, %c0_8, %c0_9] : memref<4x32x128xbf16, #tpu.memory_space<vmem>>, vector<1x32x128xbf16>
    %8 = vector.shape_cast %7 : vector<1x32x128xbf16> to vector<32x128xbf16>
    %cst_10 = arith.constant dense<0.000000e+00> : vector<288x128xf32>
    %9 = tpu.matmul %6, %8, %cst_10 {dimension_numbers = #tpu.dot_dimension_numbers<[1], [0], [0], [1], [0, 0, 1, 1], [], []>} : vector<288x32xbf16>, vector<32x128xbf16>, vector<288x128xf32> -> vector<288x128xf32>
    %10 = arith.addf %4, %9 : vector<288x128xf32>
    %c0_11 = arith.constant 0 : index
    %c18 = arith.constant 18 : index
    %c0_12 = arith.constant 0 : index
    %11 = vector.load %arg1[%c0_11, %c18, %c0_12] : memref<1x324x32xbf16, #tpu.memory_space<vmem>>, vector<1x288x32xbf16>
    %12 = vector.shape_cast %11 : vector<1x288x32xbf16> to vector<288x32xbf16>
    %c2 = arith.constant 2 : index
    %c0_13 = arith.constant 0 : index
    %c0_14 = arith.constant 0 : index
    %13 = vector.load %arg2[%c2, %c0_13, %c0_14] : memref<4x32x128xbf16, #tpu.memory_space<vmem>>, vector<1x32x128xbf16>
    %14 = vector.shape_cast %13 : vector<1x32x128xbf16> to vector<32x128xbf16>
    %cst_15 = arith.constant dense<0.000000e+00> : vector<288x128xf32>
    %15 = tpu.matmul %12, %14, %cst_15 {dimension_numbers = #tpu.dot_dimension_numbers<[1], [0], [0], [1], [0, 0, 1, 1], [], []>} : vector<288x32xbf16>, vector<32x128xbf16>, vector<288x128xf32> -> vector<288x128xf32>
    %16 = arith.addf %10, %15 : vector<288x128xf32>
    %c0_16 = arith.constant 0 : index
    %c19 = arith.constant 19 : index
    %c0_17 = arith.constant 0 : index
    %17 = vector.load %arg1[%c0_16, %c19, %c0_17] : memref<1x324x32xbf16, #tpu.memory_space<vmem>>, vector<1x288x32xbf16>
    %18 = vector.shape_cast %17 : vector<1x288x32xbf16> to vector<288x32xbf16>
    %c3 = arith.constant 3 : index
    %c0_18 = arith.constant 0 : index
    %c0_19 = arith.constant 0 : index
    %19 = vector.load %arg2[%c3, %c0_18, %c0_19] : memref<4x32x128xbf16, #tpu.memory_space<vmem>>, vector<1x32x128xbf16>
    %20 = vector.shape_cast %19 : vector<1x32x128xbf16> to vector<32x128xbf16>
    %cst_20 = arith.constant dense<0.000000e+00> : vector<288x128xf32>
    %21 = tpu.matmul %18, %20, %cst_20 {dimension_numbers = #tpu.dot_dimension_numbers<[1], [0], [0], [1], [0, 0, 1, 1], [], []>} : vector<288x32xbf16>, vector<32x128xbf16>, vector<288x128xf32> -> vector<288x128xf32>
    %22 = arith.addf %16, %21 : vector<288x128xf32>
    %c0_21 = arith.constant 0 : index
    %c0_22 = arith.constant 0 : index
    %23 = vector.load %arg4[%c0_21, %c0_22] : memref<288x1xf32, #tpu.memory_space<vmem>>, vector<288x1xf32>
    %c0_23 = arith.constant 0 : index
    %c0_24 = arith.constant 0 : index
    %24 = vector.load %arg3[%c0_23, %c0_24] : memref<1x128xf32, #tpu.memory_space<vmem>>, vector<1x128xf32>
    %25 = vector.broadcast %24 : vector<1x128xf32> to vector<288x128xf32>
    %26 = arith.addf %22, %25 : vector<288x128xf32>
    %cst_25 = arith.constant 0.000000e+00 : f32
    %27 = vector.broadcast %cst_25 : f32 to vector<288x128xf32>
    %28 = arith.cmpf ogt, %26, %27 : vector<288x128xf32>
    %cst_26 = arith.constant 2.000000e-01 : f32
    %29 = vector.broadcast %cst_26 : f32 to vector<288x128xf32>
    %30 = arith.mulf %29, %26 : vector<288x128xf32>
    %31 = arith.select %28, %26, %30 : vector<288x128xi1>, vector<288x128xf32>
    %32 = vector.broadcast %23 : vector<288x1xf32> to vector<288x128xf32>
    %33 = arith.mulf %31, %32 : vector<288x128xf32>
    %34 = arith.truncf %33 : vector<288x128xf32> to vector<288x128xbf16>
    %c0_27 = arith.constant 0 : index
    %c0_28 = arith.constant 0 : index
    %c0_29 = arith.constant 0 : index
    %35 = vector.load %arg5[%c0_27, %c0_28, %c0_29] : memref<1x288x128xbf16, #tpu.memory_space<vmem>>, vector<1x288x128xbf16>
    %36 = vector.shape_cast %35 : vector<1x288x128xbf16> to vector<288x128xbf16>
    %37 = vector.shape_cast %34 : vector<288x128xbf16> to vector<1x288x128xbf16>
    tpu.vector_store %arg5[%c0_27, %c0_28, %c0_29], %37 {strides = array<i32>} : memref<1x288x128xbf16, #tpu.memory_space<vmem>>, vector<1x288x128xbf16>,
    return
  }
  func.func @transform_0(%arg0: i32) -> (i32, i32, i32) {
    %c0_i32 = arith.constant 0 : i32
    %c0_i32_0 = arith.constant 0 : i32
    %c0_i32_1 = arith.constant 0 : i32
    return %arg0, %c0_i32, %c0_i32_0 : i32, i32, i32
  }
  func.func @transform_1(%arg0: i32) -> (i32, i32, i32) {
    %c0_i32 = arith.constant 0 : i32
    %c0_i32_0 = arith.constant 0 : i32
    %c0_i32_1 = arith.constant 0 : i32
    %c0_i32_2 = arith.constant 0 : i32
    return %c0_i32, %c0_i32_0, %c0_i32_1 : i32, i32, i32
  }
  func.func @transform_2(%arg0: i32) -> (i32, i32) {
    %c0_i32 = arith.constant 0 : i32
    %c0_i32_0 = arith.constant 0 : i32
    %c0_i32_1 = arith.constant 0 : i32
    return %c0_i32, %c0_i32_0 : i32, i32
  }
  func.func @transform_3(%arg0: i32) -> (i32, i32) {
    %c0_i32 = arith.constant 0 : i32
    %c0_i32_0 = arith.constant 0 : i32
    %c0_i32_1 = arith.constant 0 : i32
    return %c0_i32, %c0_i32_0 : i32, i32
  }
  func.func @transform_4(%arg0: i32) -> (i32, i32, i32) {
    %c0_i32 = arith.constant 0 : i32
    %c0_i32_0 = arith.constant 0 : i32
    %c0_i32_1 = arith.constant 0 : i32
    return %arg0, %c0_i32, %c0_i32_0 : i32, i32, i32
  }
}

module attributes {stable_mosaic.version = 11 : i64} {
  func.func @_conv_block_kernel(%arg0: i32, %arg1: memref<1x100x512xbf16, #tpu.memory_space<vmem>>, %arg2: memref<4x512x128xbf16, #tpu.memory_space<vmem>>, %arg3: memref<1x128xf32, #tpu.memory_space<vmem>>, %arg4: memref<80x1xf32, #tpu.memory_space<vmem>>, %arg5: memref<1x80x128xbf16, #tpu.memory_space<vmem>>) attributes {dimension_semantics = [#tpu.dimension_semantics<parallel>], iteration_bounds = array<i64: 2>, scalar_prefetch = 0 : i64, scratch_operands = 0 : i64, tpu.core_type = #tpu.core_type<tc>, window_params = [{transform_indices = @transform_0, window_bounds = array<i64: 1, 100, 512>}, {pipeline_mode = #tpu.pipeline_mode<synchronous>, transform_indices = @transform_1, window_bounds = array<i64: 4, 512, 128>}, {pipeline_mode = #tpu.pipeline_mode<synchronous>, transform_indices = @transform_2, window_bounds = array<i64: 1, 128>}, {pipeline_mode = #tpu.pipeline_mode<synchronous>, transform_indices = @transform_3, window_bounds = array<i64: 80, 1>}, {transform_indices = @transform_4, window_bounds = array<i64: 1, 80, 128>}]} {
    %c0 = arith.constant 0 : index
    %c0_0 = arith.constant 0 : index
    %c0_1 = arith.constant 0 : index
    %0 = vector.load %arg1[%c0, %c0_0, %c0_1] : memref<1x100x512xbf16, #tpu.memory_space<vmem>>, vector<1x80x512xbf16>
    %1 = vector.shape_cast %0 : vector<1x80x512xbf16> to vector<80x512xbf16>
    %c0_2 = arith.constant 0 : index
    %c0_3 = arith.constant 0 : index
    %c0_4 = arith.constant 0 : index
    %2 = vector.load %arg2[%c0_2, %c0_3, %c0_4] : memref<4x512x128xbf16, #tpu.memory_space<vmem>>, vector<1x512x128xbf16>
    %3 = vector.shape_cast %2 : vector<1x512x128xbf16> to vector<512x128xbf16>
    %cst = arith.constant dense<0.000000e+00> : vector<80x128xf32>
    %4 = tpu.matmul %1, %3, %cst {dimension_numbers = #tpu.dot_dimension_numbers<[1], [0], [0], [1], [0, 0, 1, 1], [], []>} : vector<80x512xbf16>, vector<512x128xbf16>, vector<80x128xf32> -> vector<80x128xf32>
    %c0_5 = arith.constant 0 : index
    %c1 = arith.constant 1 : index
    %c0_6 = arith.constant 0 : index
    %5 = vector.load %arg1[%c0_5, %c1, %c0_6] : memref<1x100x512xbf16, #tpu.memory_space<vmem>>, vector<1x80x512xbf16>
    %6 = vector.shape_cast %5 : vector<1x80x512xbf16> to vector<80x512xbf16>
    %c1_7 = arith.constant 1 : index
    %c0_8 = arith.constant 0 : index
    %c0_9 = arith.constant 0 : index
    %7 = vector.load %arg2[%c1_7, %c0_8, %c0_9] : memref<4x512x128xbf16, #tpu.memory_space<vmem>>, vector<1x512x128xbf16>
    %8 = vector.shape_cast %7 : vector<1x512x128xbf16> to vector<512x128xbf16>
    %cst_10 = arith.constant dense<0.000000e+00> : vector<80x128xf32>
    %9 = tpu.matmul %6, %8, %cst_10 {dimension_numbers = #tpu.dot_dimension_numbers<[1], [0], [0], [1], [0, 0, 1, 1], [], []>} : vector<80x512xbf16>, vector<512x128xbf16>, vector<80x128xf32> -> vector<80x128xf32>
    %10 = arith.addf %4, %9 : vector<80x128xf32>
    %c0_11 = arith.constant 0 : index
    %c10 = arith.constant 10 : index
    %c0_12 = arith.constant 0 : index
    %11 = vector.load %arg1[%c0_11, %c10, %c0_12] : memref<1x100x512xbf16, #tpu.memory_space<vmem>>, vector<1x80x512xbf16>
    %12 = vector.shape_cast %11 : vector<1x80x512xbf16> to vector<80x512xbf16>
    %c2 = arith.constant 2 : index
    %c0_13 = arith.constant 0 : index
    %c0_14 = arith.constant 0 : index
    %13 = vector.load %arg2[%c2, %c0_13, %c0_14] : memref<4x512x128xbf16, #tpu.memory_space<vmem>>, vector<1x512x128xbf16>
    %14 = vector.shape_cast %13 : vector<1x512x128xbf16> to vector<512x128xbf16>
    %cst_15 = arith.constant dense<0.000000e+00> : vector<80x128xf32>
    %15 = tpu.matmul %12, %14, %cst_15 {dimension_numbers = #tpu.dot_dimension_numbers<[1], [0], [0], [1], [0, 0, 1, 1], [], []>} : vector<80x512xbf16>, vector<512x128xbf16>, vector<80x128xf32> -> vector<80x128xf32>
    %16 = arith.addf %10, %15 : vector<80x128xf32>
    %c0_16 = arith.constant 0 : index
    %c11 = arith.constant 11 : index
    %c0_17 = arith.constant 0 : index
    %17 = vector.load %arg1[%c0_16, %c11, %c0_17] : memref<1x100x512xbf16, #tpu.memory_space<vmem>>, vector<1x80x512xbf16>
    %18 = vector.shape_cast %17 : vector<1x80x512xbf16> to vector<80x512xbf16>
    %c3 = arith.constant 3 : index
    %c0_18 = arith.constant 0 : index
    %c0_19 = arith.constant 0 : index
    %19 = vector.load %arg2[%c3, %c0_18, %c0_19] : memref<4x512x128xbf16, #tpu.memory_space<vmem>>, vector<1x512x128xbf16>
    %20 = vector.shape_cast %19 : vector<1x512x128xbf16> to vector<512x128xbf16>
    %cst_20 = arith.constant dense<0.000000e+00> : vector<80x128xf32>
    %21 = tpu.matmul %18, %20, %cst_20 {dimension_numbers = #tpu.dot_dimension_numbers<[1], [0], [0], [1], [0, 0, 1, 1], [], []>} : vector<80x512xbf16>, vector<512x128xbf16>, vector<80x128xf32> -> vector<80x128xf32>
    %22 = arith.addf %16, %21 : vector<80x128xf32>
    %c0_21 = arith.constant 0 : index
    %c0_22 = arith.constant 0 : index
    %23 = vector.load %arg4[%c0_21, %c0_22] : memref<80x1xf32, #tpu.memory_space<vmem>>, vector<80x1xf32>
    %24 = vector.broadcast %23 : vector<80x1xf32> to vector<80x128xf32>
    %25 = arith.mulf %22, %24 : vector<80x128xf32>
    %cst_23 = arith.constant dense<0.000000e+00> : vector<128xf32>
    %26 = vector.multi_reduction <add>, %25, %cst_23 [0] : vector<80x128xf32> to vector<128xf32>
    %27 = vector.shape_cast %26 : vector<128xf32> to vector<1x128xf32>
    %28 = arith.mulf %25, %25 : vector<80x128xf32>
    %cst_24 = arith.constant dense<0.000000e+00> : vector<128xf32>
    %29 = vector.multi_reduction <add>, %28, %cst_24 [0] : vector<80x128xf32> to vector<128xf32>
    %30 = vector.shape_cast %29 : vector<128xf32> to vector<1x128xf32>
    %cst_25 = arith.constant 1.562500e-02 : f32
    %31 = vector.broadcast %cst_25 : f32 to vector<1x128xf32>
    %32 = arith.mulf %27, %31 : vector<1x128xf32>
    %cst_26 = arith.constant 1.562500e-02 : f32
    %33 = vector.broadcast %cst_26 : f32 to vector<1x128xf32>
    %34 = arith.mulf %30, %33 : vector<1x128xf32>
    %35 = arith.mulf %32, %32 : vector<1x128xf32>
    %36 = arith.subf %34, %35 : vector<1x128xf32>
    %cst_27 = arith.constant 0.000000e+00 : f32
    %37 = vector.broadcast %cst_27 : f32 to vector<1x128xf32>
    %38 = arith.maximumf %36, %37 : vector<1x128xf32>
    %39 = vector.broadcast %32 : vector<1x128xf32> to vector<80x128xf32>
    %40 = arith.subf %22, %39 : vector<80x128xf32>
    %cst_28 = arith.constant 9.99999974E-6 : f32
    %41 = vector.broadcast %cst_28 : f32 to vector<1x128xf32>
    %42 = arith.addf %38, %41 : vector<1x128xf32>
    %43 = math.rsqrt %42 : vector<1x128xf32>
    %44 = vector.broadcast %43 : vector<1x128xf32> to vector<80x128xf32>
    %45 = arith.mulf %40, %44 : vector<80x128xf32>
    %cst_29 = arith.constant 0.000000e+00 : f32
    %46 = vector.broadcast %cst_29 : f32 to vector<80x128xf32>
    %47 = arith.cmpf ogt, %45, %46 : vector<80x128xf32>
    %cst_30 = arith.constant 2.000000e-01 : f32
    %48 = vector.broadcast %cst_30 : f32 to vector<80x128xf32>
    %49 = arith.mulf %48, %45 : vector<80x128xf32>
    %50 = arith.select %47, %45, %49 : vector<80x128xi1>, vector<80x128xf32>
    %51 = vector.broadcast %23 : vector<80x1xf32> to vector<80x128xf32>
    %52 = arith.mulf %50, %51 : vector<80x128xf32>
    %53 = arith.truncf %52 : vector<80x128xf32> to vector<80x128xbf16>
    %c0_31 = arith.constant 0 : index
    %c0_32 = arith.constant 0 : index
    %c0_33 = arith.constant 0 : index
    %54 = vector.load %arg5[%c0_31, %c0_32, %c0_33] : memref<1x80x128xbf16, #tpu.memory_space<vmem>>, vector<1x80x128xbf16>
    %55 = vector.shape_cast %54 : vector<1x80x128xbf16> to vector<80x128xbf16>
    %56 = vector.shape_cast %53 : vector<80x128xbf16> to vector<1x80x128xbf16>
    tpu.vector_store %arg5[%c0_31, %c0_32, %c0_33], %56 {strides = array<i32>} : memref<1x80x128xbf16, #tpu.memory_space<vmem>>, vector<1x80x128xbf16>,
    return
  }
  func.func @transform_0(%arg0: i32) -> (i32, i32, i32) {
    %c0_i32 = arith.constant 0 : i32
    %c0_i32_0 = arith.constant 0 : i32
    %c0_i32_1 = arith.constant 0 : i32
    return %arg0, %c0_i32, %c0_i32_0 : i32, i32, i32
  }
  func.func @transform_1(%arg0: i32) -> (i32, i32, i32) {
    %c0_i32 = arith.constant 0 : i32
    %c0_i32_0 = arith.constant 0 : i32
    %c0_i32_1 = arith.constant 0 : i32
    %c0_i32_2 = arith.constant 0 : i32
    return %c0_i32, %c0_i32_0, %c0_i32_1 : i32, i32, i32
  }
  func.func @transform_2(%arg0: i32) -> (i32, i32) {
    %c0_i32 = arith.constant 0 : i32
    %c0_i32_0 = arith.constant 0 : i32
    %c0_i32_1 = arith.constant 0 : i32
    return %c0_i32, %c0_i32_0 : i32, i32
  }
  func.func @transform_3(%arg0: i32) -> (i32, i32) {
    %c0_i32 = arith.constant 0 : i32
    %c0_i32_0 = arith.constant 0 : i32
    %c0_i32_1 = arith.constant 0 : i32
    return %c0_i32, %c0_i32_0 : i32, i32
  }
  func.func @transform_4(%arg0: i32) -> (i32, i32, i32) {
    %c0_i32 = arith.constant 0 : i32
    %c0_i32_0 = arith.constant 0 : i32
    %c0_i32_1 = arith.constant 0 : i32
    return %arg0, %c0_i32, %c0_i32_0 : i32, i32, i32
  }
}

module attributes {stable_mosaic.version = 11 : i64} {
  func.func @_conv_block_kernel(%arg0: i32, %arg1: memref<1x36x512xbf16, #tpu.memory_space<vmem>>, %arg2: memref<4x512x128xbf16, #tpu.memory_space<vmem>>, %arg3: memref<1x128xf32, #tpu.memory_space<vmem>>, %arg4: memref<24x1xf32, #tpu.memory_space<vmem>>, %arg5: memref<1x24x128xbf16, #tpu.memory_space<vmem>>) attributes {dimension_semantics = [#tpu.dimension_semantics<parallel>], iteration_bounds = array<i64: 2>, scalar_prefetch = 0 : i64, scratch_operands = 0 : i64, tpu.core_type = #tpu.core_type<tc>, window_params = [{transform_indices = @transform_0, window_bounds = array<i64: 1, 36, 512>}, {pipeline_mode = #tpu.pipeline_mode<synchronous>, transform_indices = @transform_1, window_bounds = array<i64: 4, 512, 128>}, {pipeline_mode = #tpu.pipeline_mode<synchronous>, transform_indices = @transform_2, window_bounds = array<i64: 1, 128>}, {pipeline_mode = #tpu.pipeline_mode<synchronous>, transform_indices = @transform_3, window_bounds = array<i64: 24, 1>}, {transform_indices = @transform_4, window_bounds = array<i64: 1, 24, 128>}]} {
    %c0 = arith.constant 0 : index
    %c0_0 = arith.constant 0 : index
    %c0_1 = arith.constant 0 : index
    %0 = vector.load %arg1[%c0, %c0_0, %c0_1] : memref<1x36x512xbf16, #tpu.memory_space<vmem>>, vector<1x24x512xbf16>
    %1 = vector.shape_cast %0 : vector<1x24x512xbf16> to vector<24x512xbf16>
    %c0_2 = arith.constant 0 : index
    %c0_3 = arith.constant 0 : index
    %c0_4 = arith.constant 0 : index
    %2 = vector.load %arg2[%c0_2, %c0_3, %c0_4] : memref<4x512x128xbf16, #tpu.memory_space<vmem>>, vector<1x512x128xbf16>
    %3 = vector.shape_cast %2 : vector<1x512x128xbf16> to vector<512x128xbf16>
    %cst = arith.constant dense<0.000000e+00> : vector<24x128xf32>
    %4 = tpu.matmul %1, %3, %cst {dimension_numbers = #tpu.dot_dimension_numbers<[1], [0], [0], [1], [0, 0, 1, 1], [], []>} : vector<24x512xbf16>, vector<512x128xbf16>, vector<24x128xf32> -> vector<24x128xf32>
    %c0_5 = arith.constant 0 : index
    %c1 = arith.constant 1 : index
    %c0_6 = arith.constant 0 : index
    %5 = vector.load %arg1[%c0_5, %c1, %c0_6] : memref<1x36x512xbf16, #tpu.memory_space<vmem>>, vector<1x24x512xbf16>
    %6 = vector.shape_cast %5 : vector<1x24x512xbf16> to vector<24x512xbf16>
    %c1_7 = arith.constant 1 : index
    %c0_8 = arith.constant 0 : index
    %c0_9 = arith.constant 0 : index
    %7 = vector.load %arg2[%c1_7, %c0_8, %c0_9] : memref<4x512x128xbf16, #tpu.memory_space<vmem>>, vector<1x512x128xbf16>
    %8 = vector.shape_cast %7 : vector<1x512x128xbf16> to vector<512x128xbf16>
    %cst_10 = arith.constant dense<0.000000e+00> : vector<24x128xf32>
    %9 = tpu.matmul %6, %8, %cst_10 {dimension_numbers = #tpu.dot_dimension_numbers<[1], [0], [0], [1], [0, 0, 1, 1], [], []>} : vector<24x512xbf16>, vector<512x128xbf16>, vector<24x128xf32> -> vector<24x128xf32>
    %10 = arith.addf %4, %9 : vector<24x128xf32>
    %c0_11 = arith.constant 0 : index
    %c6 = arith.constant 6 : index
    %c0_12 = arith.constant 0 : index
    %11 = vector.load %arg1[%c0_11, %c6, %c0_12] : memref<1x36x512xbf16, #tpu.memory_space<vmem>>, vector<1x24x512xbf16>
    %12 = vector.shape_cast %11 : vector<1x24x512xbf16> to vector<24x512xbf16>
    %c2 = arith.constant 2 : index
    %c0_13 = arith.constant 0 : index
    %c0_14 = arith.constant 0 : index
    %13 = vector.load %arg2[%c2, %c0_13, %c0_14] : memref<4x512x128xbf16, #tpu.memory_space<vmem>>, vector<1x512x128xbf16>
    %14 = vector.shape_cast %13 : vector<1x512x128xbf16> to vector<512x128xbf16>
    %cst_15 = arith.constant dense<0.000000e+00> : vector<24x128xf32>
    %15 = tpu.matmul %12, %14, %cst_15 {dimension_numbers = #tpu.dot_dimension_numbers<[1], [0], [0], [1], [0, 0, 1, 1], [], []>} : vector<24x512xbf16>, vector<512x128xbf16>, vector<24x128xf32> -> vector<24x128xf32>
    %16 = arith.addf %10, %15 : vector<24x128xf32>
    %c0_16 = arith.constant 0 : index
    %c7 = arith.constant 7 : index
    %c0_17 = arith.constant 0 : index
    %17 = vector.load %arg1[%c0_16, %c7, %c0_17] : memref<1x36x512xbf16, #tpu.memory_space<vmem>>, vector<1x24x512xbf16>
    %18 = vector.shape_cast %17 : vector<1x24x512xbf16> to vector<24x512xbf16>
    %c3 = arith.constant 3 : index
    %c0_18 = arith.constant 0 : index
    %c0_19 = arith.constant 0 : index
    %19 = vector.load %arg2[%c3, %c0_18, %c0_19] : memref<4x512x128xbf16, #tpu.memory_space<vmem>>, vector<1x512x128xbf16>
    %20 = vector.shape_cast %19 : vector<1x512x128xbf16> to vector<512x128xbf16>
    %cst_20 = arith.constant dense<0.000000e+00> : vector<24x128xf32>
    %21 = tpu.matmul %18, %20, %cst_20 {dimension_numbers = #tpu.dot_dimension_numbers<[1], [0], [0], [1], [0, 0, 1, 1], [], []>} : vector<24x512xbf16>, vector<512x128xbf16>, vector<24x128xf32> -> vector<24x128xf32>
    %22 = arith.addf %16, %21 : vector<24x128xf32>
    %c0_21 = arith.constant 0 : index
    %c0_22 = arith.constant 0 : index
    %23 = vector.load %arg4[%c0_21, %c0_22] : memref<24x1xf32, #tpu.memory_space<vmem>>, vector<24x1xf32>
    %24 = vector.broadcast %23 : vector<24x1xf32> to vector<24x128xf32>
    %25 = arith.mulf %22, %24 : vector<24x128xf32>
    %cst_23 = arith.constant dense<0.000000e+00> : vector<128xf32>
    %26 = vector.multi_reduction <add>, %25, %cst_23 [0] : vector<24x128xf32> to vector<128xf32>
    %27 = vector.shape_cast %26 : vector<128xf32> to vector<1x128xf32>
    %28 = arith.mulf %25, %25 : vector<24x128xf32>
    %cst_24 = arith.constant dense<0.000000e+00> : vector<128xf32>
    %29 = vector.multi_reduction <add>, %28, %cst_24 [0] : vector<24x128xf32> to vector<128xf32>
    %30 = vector.shape_cast %29 : vector<128xf32> to vector<1x128xf32>
    %cst_25 = arith.constant 6.250000e-02 : f32
    %31 = vector.broadcast %cst_25 : f32 to vector<1x128xf32>
    %32 = arith.mulf %27, %31 : vector<1x128xf32>
    %cst_26 = arith.constant 6.250000e-02 : f32
    %33 = vector.broadcast %cst_26 : f32 to vector<1x128xf32>
    %34 = arith.mulf %30, %33 : vector<1x128xf32>
    %35 = arith.mulf %32, %32 : vector<1x128xf32>
    %36 = arith.subf %34, %35 : vector<1x128xf32>
    %cst_27 = arith.constant 0.000000e+00 : f32
    %37 = vector.broadcast %cst_27 : f32 to vector<1x128xf32>
    %38 = arith.maximumf %36, %37 : vector<1x128xf32>
    %39 = vector.broadcast %32 : vector<1x128xf32> to vector<24x128xf32>
    %40 = arith.subf %22, %39 : vector<24x128xf32>
    %cst_28 = arith.constant 9.99999974E-6 : f32
    %41 = vector.broadcast %cst_28 : f32 to vector<1x128xf32>
    %42 = arith.addf %38, %41 : vector<1x128xf32>
    %43 = math.rsqrt %42 : vector<1x128xf32>
    %44 = vector.broadcast %43 : vector<1x128xf32> to vector<24x128xf32>
    %45 = arith.mulf %40, %44 : vector<24x128xf32>
    %cst_29 = arith.constant 0.000000e+00 : f32
    %46 = vector.broadcast %cst_29 : f32 to vector<24x128xf32>
    %47 = arith.cmpf ogt, %45, %46 : vector<24x128xf32>
    %cst_30 = arith.constant 2.000000e-01 : f32
    %48 = vector.broadcast %cst_30 : f32 to vector<24x128xf32>
    %49 = arith.mulf %48, %45 : vector<24x128xf32>
    %50 = arith.select %47, %45, %49 : vector<24x128xi1>, vector<24x128xf32>
    %51 = vector.broadcast %23 : vector<24x1xf32> to vector<24x128xf32>
    %52 = arith.mulf %50, %51 : vector<24x128xf32>
    %53 = arith.truncf %52 : vector<24x128xf32> to vector<24x128xbf16>
    %c0_31 = arith.constant 0 : index
    %c0_32 = arith.constant 0 : index
    %c0_33 = arith.constant 0 : index
    %54 = vector.load %arg5[%c0_31, %c0_32, %c0_33] : memref<1x24x128xbf16, #tpu.memory_space<vmem>>, vector<1x24x128xbf16>
    %55 = vector.shape_cast %54 : vector<1x24x128xbf16> to vector<24x128xbf16>
    %56 = vector.shape_cast %53 : vector<24x128xbf16> to vector<1x24x128xbf16>
    tpu.vector_store %arg5[%c0_31, %c0_32, %c0_33], %56 {strides = array<i32>} : memref<1x24x128xbf16, #tpu.memory_space<vmem>>, vector<1x24x128xbf16>,
    return
  }
  func.func @transform_0(%arg0: i32) -> (i32, i32, i32) {
    %c0_i32 = arith.constant 0 : i32
    %c0_i32_0 = arith.constant 0 : i32
    %c0_i32_1 = arith.constant 0 : i32
    return %arg0, %c0_i32, %c0_i32_0 : i32, i32, i32
  }
  func.func @transform_1(%arg0: i32) -> (i32, i32, i32) {
    %c0_i32 = arith.constant 0 : i32
    %c0_i32_0 = arith.constant 0 : i32
    %c0_i32_1 = arith.constant 0 : i32
    %c0_i32_2 = arith.constant 0 : i32
    return %c0_i32, %c0_i32_0, %c0_i32_1 : i32, i32, i32
  }
  func.func @transform_2(%arg0: i32) -> (i32, i32) {
    %c0_i32 = arith.constant 0 : i32
    %c0_i32_0 = arith.constant 0 : i32
    %c0_i32_1 = arith.constant 0 : i32
    return %c0_i32, %c0_i32_0 : i32, i32
  }
  func.func @transform_3(%arg0: i32) -> (i32, i32) {
    %c0_i32 = arith.constant 0 : i32
    %c0_i32_0 = arith.constant 0 : i32
    %c0_i32_1 = arith.constant 0 : i32
    return %c0_i32, %c0_i32_0 : i32, i32
  }
  func.func @transform_4(%arg0: i32) -> (i32, i32, i32) {
    %c0_i32 = arith.constant 0 : i32
    %c0_i32_0 = arith.constant 0 : i32
    %c0_i32_1 = arith.constant 0 : i32
    return %arg0, %c0_i32, %c0_i32_0 : i32, i32, i32
  }
}

module attributes {stable_mosaic.version = 11 : i64} {
  func.func @_conv_pool_kernel(%arg0: i32, %arg1: memref<1x16x512xbf16, #tpu.memory_space<vmem>>, %arg2: memref<4x512x128xbf16, #tpu.memory_space<vmem>>, %arg3: memref<1x128xf32, #tpu.memory_space<vmem>>, %arg4: memref<8x1xf32, #tpu.memory_space<vmem>>, %arg5: memref<144x8xf32, #tpu.memory_space<vmem>>, %arg6: memref<1x144x128xbf16, #tpu.memory_space<vmem>>) attributes {dimension_semantics = [#tpu.dimension_semantics<parallel>], iteration_bounds = array<i64: 2>, scalar_prefetch = 0 : i64, scratch_operands = 0 : i64, tpu.core_type = #tpu.core_type<tc>, window_params = [{transform_indices = @transform_0, window_bounds = array<i64: 1, 16, 512>}, {pipeline_mode = #tpu.pipeline_mode<synchronous>, transform_indices = @transform_1, window_bounds = array<i64: 4, 512, 128>}, {pipeline_mode = #tpu.pipeline_mode<synchronous>, transform_indices = @transform_2, window_bounds = array<i64: 1, 128>}, {pipeline_mode = #tpu.pipeline_mode<synchronous>, transform_indices = @transform_3, window_bounds = array<i64: 8, 1>}, {pipeline_mode = #tpu.pipeline_mode<synchronous>, transform_indices = @transform_4, window_bounds = array<i64: 144, 8>}, {transform_indices = @transform_5, window_bounds = array<i64: 1, 144, 128>}]} {
    %c0 = arith.constant 0 : index
    %c0_0 = arith.constant 0 : index
    %c0_1 = arith.constant 0 : index
    %0 = vector.load %arg1[%c0, %c0_0, %c0_1] : memref<1x16x512xbf16, #tpu.memory_space<vmem>>, vector<1x8x512xbf16>
    %1 = vector.shape_cast %0 : vector<1x8x512xbf16> to vector<8x512xbf16>
    %c0_2 = arith.constant 0 : index
    %c0_3 = arith.constant 0 : index
    %c0_4 = arith.constant 0 : index
    %2 = vector.load %arg2[%c0_2, %c0_3, %c0_4] : memref<4x512x128xbf16, #tpu.memory_space<vmem>>, vector<1x512x128xbf16>
    %3 = vector.shape_cast %2 : vector<1x512x128xbf16> to vector<512x128xbf16>
    %cst = arith.constant dense<0.000000e+00> : vector<8x128xf32>
    %4 = tpu.matmul %1, %3, %cst {dimension_numbers = #tpu.dot_dimension_numbers<[1], [0], [0], [1], [0, 0, 1, 1], [], []>} : vector<8x512xbf16>, vector<512x128xbf16>, vector<8x128xf32> -> vector<8x128xf32>
    %c0_5 = arith.constant 0 : index
    %c1 = arith.constant 1 : index
    %c0_6 = arith.constant 0 : index
    %5 = vector.load %arg1[%c0_5, %c1, %c0_6] : memref<1x16x512xbf16, #tpu.memory_space<vmem>>, vector<1x8x512xbf16>
    %6 = vector.shape_cast %5 : vector<1x8x512xbf16> to vector<8x512xbf16>
    %c1_7 = arith.constant 1 : index
    %c0_8 = arith.constant 0 : index
    %c0_9 = arith.constant 0 : index
    %7 = vector.load %arg2[%c1_7, %c0_8, %c0_9] : memref<4x512x128xbf16, #tpu.memory_space<vmem>>, vector<1x512x128xbf16>
    %8 = vector.shape_cast %7 : vector<1x512x128xbf16> to vector<512x128xbf16>
    %cst_10 = arith.constant dense<0.000000e+00> : vector<8x128xf32>
    %9 = tpu.matmul %6, %8, %cst_10 {dimension_numbers = #tpu.dot_dimension_numbers<[1], [0], [0], [1], [0, 0, 1, 1], [], []>} : vector<8x512xbf16>, vector<512x128xbf16>, vector<8x128xf32> -> vector<8x128xf32>
    %10 = arith.addf %4, %9 : vector<8x128xf32>
    %c0_11 = arith.constant 0 : index
    %c4 = arith.constant 4 : index
    %c0_12 = arith.constant 0 : index
    %11 = vector.load %arg1[%c0_11, %c4, %c0_12] : memref<1x16x512xbf16, #tpu.memory_space<vmem>>, vector<1x8x512xbf16>
    %12 = vector.shape_cast %11 : vector<1x8x512xbf16> to vector<8x512xbf16>
    %c2 = arith.constant 2 : index
    %c0_13 = arith.constant 0 : index
    %c0_14 = arith.constant 0 : index
    %13 = vector.load %arg2[%c2, %c0_13, %c0_14] : memref<4x512x128xbf16, #tpu.memory_space<vmem>>, vector<1x512x128xbf16>
    %14 = vector.shape_cast %13 : vector<1x512x128xbf16> to vector<512x128xbf16>
    %cst_15 = arith.constant dense<0.000000e+00> : vector<8x128xf32>
    %15 = tpu.matmul %12, %14, %cst_15 {dimension_numbers = #tpu.dot_dimension_numbers<[1], [0], [0], [1], [0, 0, 1, 1], [], []>} : vector<8x512xbf16>, vector<512x128xbf16>, vector<8x128xf32> -> vector<8x128xf32>
    %16 = arith.addf %10, %15 : vector<8x128xf32>
    %c0_16 = arith.constant 0 : index
    %c5 = arith.constant 5 : index
    %c0_17 = arith.constant 0 : index
    %17 = vector.load %arg1[%c0_16, %c5, %c0_17] : memref<1x16x512xbf16, #tpu.memory_space<vmem>>, vector<1x8x512xbf16>
    %18 = vector.shape_cast %17 : vector<1x8x512xbf16> to vector<8x512xbf16>
    %c3 = arith.constant 3 : index
    %c0_18 = arith.constant 0 : index
    %c0_19 = arith.constant 0 : index
    %19 = vector.load %arg2[%c3, %c0_18, %c0_19] : memref<4x512x128xbf16, #tpu.memory_space<vmem>>, vector<1x512x128xbf16>
    %20 = vector.shape_cast %19 : vector<1x512x128xbf16> to vector<512x128xbf16>
    %cst_20 = arith.constant dense<0.000000e+00> : vector<8x128xf32>
    %21 = tpu.matmul %18, %20, %cst_20 {dimension_numbers = #tpu.dot_dimension_numbers<[1], [0], [0], [1], [0, 0, 1, 1], [], []>} : vector<8x512xbf16>, vector<512x128xbf16>, vector<8x128xf32> -> vector<8x128xf32>
    %22 = arith.addf %16, %21 : vector<8x128xf32>
    %c0_21 = arith.constant 0 : index
    %c0_22 = arith.constant 0 : index
    %23 = vector.load %arg4[%c0_21, %c0_22] : memref<8x1xf32, #tpu.memory_space<vmem>>, vector<8x1xf32>
    %24 = vector.broadcast %23 : vector<8x1xf32> to vector<8x128xf32>
    %25 = arith.mulf %22, %24 : vector<8x128xf32>
    %cst_23 = arith.constant dense<0.000000e+00> : vector<128xf32>
    %26 = vector.multi_reduction <add>, %25, %cst_23 [0] : vector<8x128xf32> to vector<128xf32>
    %27 = vector.shape_cast %26 : vector<128xf32> to vector<1x128xf32>
    %28 = arith.mulf %25, %25 : vector<8x128xf32>
    %cst_24 = arith.constant dense<0.000000e+00> : vector<128xf32>
    %29 = vector.multi_reduction <add>, %28, %cst_24 [0] : vector<8x128xf32> to vector<128xf32>
    %30 = vector.shape_cast %29 : vector<128xf32> to vector<1x128xf32>
    %cst_25 = arith.constant 2.500000e-01 : f32
    %31 = vector.broadcast %cst_25 : f32 to vector<1x128xf32>
    %32 = arith.mulf %27, %31 : vector<1x128xf32>
    %cst_26 = arith.constant 2.500000e-01 : f32
    %33 = vector.broadcast %cst_26 : f32 to vector<1x128xf32>
    %34 = arith.mulf %30, %33 : vector<1x128xf32>
    %35 = arith.mulf %32, %32 : vector<1x128xf32>
    %36 = arith.subf %34, %35 : vector<1x128xf32>
    %cst_27 = arith.constant 0.000000e+00 : f32
    %37 = vector.broadcast %cst_27 : f32 to vector<1x128xf32>
    %38 = arith.maximumf %36, %37 : vector<1x128xf32>
    %39 = vector.broadcast %32 : vector<1x128xf32> to vector<8x128xf32>
    %40 = arith.subf %22, %39 : vector<8x128xf32>
    %cst_28 = arith.constant 9.99999974E-6 : f32
    %41 = vector.broadcast %cst_28 : f32 to vector<1x128xf32>
    %42 = arith.addf %38, %41 : vector<1x128xf32>
    %43 = math.rsqrt %42 : vector<1x128xf32>
    %44 = vector.broadcast %43 : vector<1x128xf32> to vector<8x128xf32>
    %45 = arith.mulf %40, %44 : vector<8x128xf32>
    %cst_29 = arith.constant 0.000000e+00 : f32
    %46 = vector.broadcast %cst_29 : f32 to vector<8x128xf32>
    %47 = arith.cmpf ogt, %45, %46 : vector<8x128xf32>
    %cst_30 = arith.constant 2.000000e-01 : f32
    %48 = vector.broadcast %cst_30 : f32 to vector<8x128xf32>
    %49 = arith.mulf %48, %45 : vector<8x128xf32>
    %50 = arith.select %47, %45, %49 : vector<8x128xi1>, vector<8x128xf32>
    %51 = vector.broadcast %23 : vector<8x1xf32> to vector<8x128xf32>
    %52 = arith.mulf %50, %51 : vector<8x128xf32>
    %c0_31 = arith.constant 0 : index
    %c0_32 = arith.constant 0 : index
    %53 = vector.load %arg5[%c0_31, %c0_32] : memref<144x8xf32, #tpu.memory_space<vmem>>, vector<144x8xf32>
    %cst_33 = arith.constant dense<0.000000e+00> : vector<144x128xf32>
    %54 = tpu.matmul %53, %52, %cst_33 {dimension_numbers = #tpu.dot_dimension_numbers<[1], [0], [0], [1], [0, 0, 1, 1], [], []>} : vector<144x8xf32>, vector<8x128xf32>, vector<144x128xf32> -> vector<144x128xf32>
    %55 = arith.truncf %54 : vector<144x128xf32> to vector<144x128xbf16>
    %c0_34 = arith.constant 0 : index
    %c0_35 = arith.constant 0 : index
    %c0_36 = arith.constant 0 : index
    %56 = vector.load %arg6[%c0_34, %c0_35, %c0_36] : memref<1x144x128xbf16, #tpu.memory_space<vmem>>, vector<1x144x128xbf16>
    %57 = vector.shape_cast %56 : vector<1x144x128xbf16> to vector<144x128xbf16>
    %58 = vector.shape_cast %55 : vector<144x128xbf16> to vector<1x144x128xbf16>
    tpu.vector_store %arg6[%c0_34, %c0_35, %c0_36], %58 {strides = array<i32>} : memref<1x144x128xbf16, #tpu.memory_space<vmem>>, vector<1x144x128xbf16>,
    return
  }
  func.func @transform_0(%arg0: i32) -> (i32, i32, i32) {
    %c0_i32 = arith.constant 0 : i32
    %c0_i32_0 = arith.constant 0 : i32
    %c0_i32_1 = arith.constant 0 : i32
    return %arg0, %c0_i32, %c0_i32_0 : i32, i32, i32
  }
  func.func @transform_1(%arg0: i32) -> (i32, i32, i32) {
    %c0_i32 = arith.constant 0 : i32
    %c0_i32_0 = arith.constant 0 : i32
    %c0_i32_1 = arith.constant 0 : i32
    %c0_i32_2 = arith.constant 0 : i32
    return %c0_i32, %c0_i32_0, %c0_i32_1 : i32, i32, i32
  }
  func.func @transform_2(%arg0: i32) -> (i32, i32) {
    %c0_i32 = arith.constant 0 : i32
    %c0_i32_0 = arith.constant 0 : i32
    %c0_i32_1 = arith.constant 0 : i32
    return %c0_i32, %c0_i32_0 : i32, i32
  }
  func.func @transform_3(%arg0: i32) -> (i32, i32) {
    %c0_i32 = arith.constant 0 : i32
    %c0_i32_0 = arith.constant 0 : i32
    %c0_i32_1 = arith.constant 0 : i32
    return %c0_i32, %c0_i32_0 : i32, i32
  }
  func.func @transform_4(%arg0: i32) -> (i32, i32) {
    %c0_i32 = arith.constant 0 : i32
    %c0_i32_0 = arith.constant 0 : i32
    %c0_i32_1 = arith.constant 0 : i32
    return %c0_i32, %c0_i32_0 : i32, i32
  }
  func.func @transform_5(%arg0: i32) -> (i32, i32, i32) {
    %c0_i32 = arith.constant 0 : i32
    %c0_i32_0 = arith.constant 0 : i32
    %c0_i32_1 = arith.constant 0 : i32
    return %arg0, %c0_i32, %c0_i32_0 : i32, i32, i32
  }
}

module attributes {stable_mosaic.version = 11 : i64} {
  func.func @_fc_head_kernel(%arg0: i32, %arg1: memref<2x2048xbf16, #tpu.memory_space<vmem>>, %arg2: memref<2048x128xbf16, #tpu.memory_space<vmem>>, %arg3: memref<1x128xf32, #tpu.memory_space<vmem>>, %arg4: memref<128x1xf32, #tpu.memory_space<vmem>>, %arg5: memref<1x1xf32, #tpu.memory_space<vmem>>, %arg6: memref<2x1xf32, #tpu.memory_space<vmem>>, %arg7: memref<2x128xf32, #tpu.memory_space<vmem>>) attributes {dimension_semantics = [#tpu.dimension_semantics<arbitrary>], iteration_bounds = array<i64: 9>, scalar_prefetch = 0 : i64, scratch_operands = 1 : i64, tpu.core_type = #tpu.core_type<tc>, window_params = [{transform_indices = @transform_0, window_bounds = array<i64: 2, 2048>}, {transform_indices = @transform_1, window_bounds = array<i64: 2048, 128>}, {pipeline_mode = #tpu.pipeline_mode<synchronous>, transform_indices = @transform_2, window_bounds = array<i64: 1, 128>}, {pipeline_mode = #tpu.pipeline_mode<synchronous>, transform_indices = @transform_3, window_bounds = array<i64: 128, 1>}, {pipeline_mode = #tpu.pipeline_mode<synchronous>, transform_indices = @transform_4, window_bounds = array<i64: 1, 1>}, {pipeline_mode = #tpu.pipeline_mode<synchronous>, transform_indices = @transform_5, window_bounds = array<i64: 2, 1>}]} {
    %c0_i32 = arith.constant 0 : i32
    %0 = arith.cmpi eq, %arg0, %c0_i32 : i32
    %1 = arith.extui %0 : i1 to i32
    %c0_i32_0 = arith.constant 0 : i32
    %2 = arith.cmpi ne, %1, %c0_i32_0 : i32
    scf.if %2 {
      %cst_9 = arith.constant 0.000000e+00 : f32
      %12 = vector.broadcast %cst_9 : f32 to vector<2x128xf32>
      %c0_10 = arith.constant 0 : index
      %c0_11 = arith.constant 0 : index
      %13 = vector.load %arg7[%c0_10, %c0_11] : memref<2x128xf32, #tpu.memory_space<vmem>>, vector<2x128xf32>
      tpu.vector_store %arg7[%c0_10, %c0_11], %12 {strides = array<i32>} : memref<2x128xf32, #tpu.memory_space<vmem>>, vector<2x128xf32>,
    } else {
    }
    %c0 = arith.constant 0 : index
    %c0_1 = arith.constant 0 : index
    %3 = vector.load %arg7[%c0, %c0_1] : memref<2x128xf32, #tpu.memory_space<vmem>>, vector<2x128xf32>
    %c0_2 = arith.constant 0 : index
    %c0_3 = arith.constant 0 : index
    %4 = vector.load %arg1[%c0_2, %c0_3] : memref<2x2048xbf16, #tpu.memory_space<vmem>>, vector<2x2048xbf16>
    %c0_4 = arith.constant 0 : index
    %c0_5 = arith.constant 0 : index
    %5 = vector.load %arg2[%c0_4, %c0_5] : memref<2048x128xbf16, #tpu.memory_space<vmem>>, vector<2048x128xbf16>
    %cst = arith.constant dense<0.000000e+00> : vector<2x128xf32>
    %6 = tpu.matmul %4, %5, %cst {dimension_numbers = #tpu.dot_dimension_numbers<[1], [0], [0], [1], [0, 0, 1, 1], [], []>} : vector<2x2048xbf16>, vector<2048x128xbf16>, vector<2x128xf32> -> vector<2x128xf32>
    %7 = arith.addf %3, %6 : vector<2x128xf32>
    %c0_6 = arith.constant 0 : index
    %c0_7 = arith.constant 0 : index
    %8 = vector.load %arg7[%c0_6, %c0_7] : memref<2x128xf32, #tpu.memory_space<vmem>>, vector<2x128xf32>
    tpu.vector_store %arg7[%c0_6, %c0_7], %7 {strides = array<i32>} : memref<2x128xf32, #tpu.memory_space<vmem>>, vector<2x128xf32>,
    %c8_i32 = arith.constant 8 : i32
    %9 = arith.cmpi eq, %arg0, %c8_i32 : i32
    %10 = arith.extui %9 : i1 to i32
    %c0_i32_8 = arith.constant 0 : i32
    %11 = arith.cmpi ne, %10, %c0_i32_8 : i32
    scf.if %11 {
      %c0_9 = arith.constant 0 : index
      %c0_10 = arith.constant 0 : index
      %12 = vector.load %arg7[%c0_9, %c0_10] : memref<2x128xf32, #tpu.memory_space<vmem>>, vector<2x128xf32>
      %c0_11 = arith.constant 0 : index
      %c0_12 = arith.constant 0 : index
      %13 = vector.load %arg3[%c0_11, %c0_12] : memref<1x128xf32, #tpu.memory_space<vmem>>, vector<1x128xf32>
      %14 = vector.broadcast %13 : vector<1x128xf32> to vector<2x128xf32>
      %15 = arith.addf %12, %14 : vector<2x128xf32>
      %cst_13 = arith.constant 0.000000e+00 : f32
      %16 = vector.broadcast %cst_13 : f32 to vector<2x128xf32>
      %17 = arith.cmpf ogt, %15, %16 : vector<2x128xf32>
      %cst_14 = arith.constant 2.000000e-01 : f32
      %18 = vector.broadcast %cst_14 : f32 to vector<2x128xf32>
      %19 = arith.mulf %18, %15 : vector<2x128xf32>
      %20 = arith.select %17, %15, %19 : vector<2x128xi1>, vector<2x128xf32>
      %c0_15 = arith.constant 0 : index
      %c0_16 = arith.constant 0 : index
      %21 = vector.load %arg4[%c0_15, %c0_16] : memref<128x1xf32, #tpu.memory_space<vmem>>, vector<128x1xf32>
      %cst_17 = arith.constant dense<0.000000e+00> : vector<2x1xf32>
      %22 = tpu.matmul %20, %21, %cst_17 {dimension_numbers = #tpu.dot_dimension_numbers<[1], [0], [0], [1], [0, 0, 1, 1], [], []>} : vector<2x128xf32>, vector<128x1xf32>, vector<2x1xf32> -> vector<2x1xf32>
      %c0_18 = arith.constant 0 : index
      %c0_19 = arith.constant 0 : index
      %23 = vector.load %arg5[%c0_18, %c0_19] : memref<1x1xf32, #tpu.memory_space<vmem>>, vector<1x1xf32>
      %24 = vector.broadcast %23 : vector<1x1xf32> to vector<2x1xf32>
      %25 = arith.addf %22, %24 : vector<2x1xf32>
      %c0_20 = arith.constant 0 : index
      %c0_21 = arith.constant 0 : index
      %26 = vector.load %arg6[%c0_20, %c0_21] : memref<2x1xf32, #tpu.memory_space<vmem>>, vector<2x1xf32>
      tpu.vector_store %arg6[%c0_20, %c0_21], %25 {strides = array<i32>} : memref<2x1xf32, #tpu.memory_space<vmem>>, vector<2x1xf32>,
    } else {
    }
    return
  }
  func.func @transform_0(%arg0: i32) -> (i32, i32) {
    %c0_i32 = arith.constant 0 : i32
    %c0_i32_0 = arith.constant 0 : i32
    return %c0_i32, %arg0 : i32, i32
  }
  func.func @transform_1(%arg0: i32) -> (i32, i32) {
    %c0_i32 = arith.constant 0 : i32
    %c0_i32_0 = arith.constant 0 : i32
    return %arg0, %c0_i32 : i32, i32
  }
  func.func @transform_2(%arg0: i32) -> (i32, i32) {
    %c0_i32 = arith.constant 0 : i32
    %c0_i32_0 = arith.constant 0 : i32
    %c0_i32_1 = arith.constant 0 : i32
    return %c0_i32, %c0_i32_0 : i32, i32
  }
  func.func @transform_3(%arg0: i32) -> (i32, i32) {
    %c0_i32 = arith.constant 0 : i32
    %c0_i32_0 = arith.constant 0 : i32
    %c0_i32_1 = arith.constant 0 : i32
    return %c0_i32, %c0_i32_0 : i32, i32
  }
  func.func @transform_4(%arg0: i32) -> (i32, i32) {
    %c0_i32 = arith.constant 0 : i32
    %c0_i32_0 = arith.constant 0 : i32
    %c0_i32_1 = arith.constant 0 : i32
    return %c0_i32, %c0_i32_0 : i32, i32
  }
  func.func @transform_5(%arg0: i32) -> (i32, i32) {
    %c0_i32 = arith.constant 0 : i32
    %c0_i32_0 = arith.constant 0 : i32
    %c0_i32_1 = arith.constant 0 : i32
    return %c0_i32, %c0_i32_0 : i32, i32
  }
}

</mosaic_0001>

<llo_original>
// kernel: discriminator_forward.5
$region0: #{discriminator_forward.5}
  #allocation0 [shape = 'u32[]', space=smem, size = 0x4, offset = 0x4, fixed_abs, tag = 'smem constant byte address 0x4 - core index']
  #allocation1 [shape = 'u32[144,128]{1,0:T(1,128)}', space=vmem, size = 0x12000, scoped, tag = 'internal scratch']
  %s0 = inlined_call_operand.vmem [shape: bf16[2,324,32], index: 0, kind: input, shape index: {}]
  %s1 = inlined_call_operand.hbm [shape: bf16[4,32,128], index: 1, kind: input, shape index: {}]
  %s2 = inlined_call_operand.hbm [shape: f32[1,128], index: 2, kind: input, shape index: {}]
  %s3 = inlined_call_operand.hbm [shape: f32[288,1], index: 3, kind: input, shape index: {}]
  %s4 = inlined_call_operand.vmem [shape: bf16[2,288,128], index: 4, kind: output, shape index: {}]
  %s5 = sld [smem:[#allocation0]]
  $region61: #{discriminator_forward.5} parent=0
    _
  %s7 = ssub.s32 1, %s5
  %s8 = scalar_select 0, %s7, %s5
  $region1: #{discriminator_forward.5} parent=0
    #allocation2 [shape = 'u8[32768]{0}', space=vmem, size = 0x8000, scoped, tag = 'input window, operand 1, single buffered']
    #allocation3 [shape = 's32[2]{0}', space=sflag, size = 0x8, scoped, tag = 'scoped memory for discriminator_forward.5']
    #allocation4 [shape = 'u8[512]{0}', space=vmem, size = 0x400, scoped, tag = 'input window, operand 2, single buffered']
    #allocation5 [shape = 's32[1]{0}', space=sflag, size = 0x4, scoped, tag = 'scoped memory for discriminator_forward.5']
    #allocation6 [shape = 'u8[147456]{0}', space=vmem, size = 0x24000, scoped, tag = 'input window, operand 3, single buffered']
    %9 = vsyncpa [#allocation3], 0
    %10 = vsyncpa [#allocation5], 0
    loop: start=0, step=1, limit=4
    $region2: #{discriminator_forward.5} parent=1 // loop_pre_header
      _
    $region3: #{discriminator_forward.5} parent=1 // loop_header
      %s12 = sphi 0, %s16
      %p13 = scmp.ge.s32.totalorder %s12, 4
      %s22 = sphi 0, %s24
      %s25 = sphi 0, %s22
      %s26 = sphi 0, %s25
      %s42 = sphi 0, %s26
      %s46 = sphi 0, %s46
      %s48 = sphi 0, %s46
      %s49 = sphi 0, %s48
      %s63 = sphi 0, %s49
      %s67 = sphi 0, %s67
      %s69 = sphi 0, %s67
      %s70 = sphi 0, %s69
      %s84 = sphi 0, %s70
      %s88 = sphi 0, %s88
      %s90 = sphi 0, %s88
      %s91 = sphi 0, %s90
      %s105 = sphi 0, %s91
      %s111 = sphi 0, %s113
      %s114 = sphi 0, %s111
      %s115 = sphi 0, %s114
      %s131 = sphi 0, %s115
    $region4: #{discriminator_forward.5} parent=1 // loop_header_branch
      %15 = sbr.rel (%p13) target = $region8
    $region5: #{discriminator_forward.5} parent=1 // loop_body
      %s17 = ssub.s32 %s12, 1
      %s18 = ssub.s32 %s12, 2
      %s19 = sadd.s32 %s12, 1
      %s20 = ssub.s32 %s12, %s19
      %p21 = scmp.eq.s32.totalorder %s20, 0
      %s23 = sadd.s32 %s22, 1
      %s24 = scalar_select %p21, %s22, %s23
      %p27 = pneg %p21
      %p28 = scmp.eq.s32.totalorder %s12, 1
      %p29 = por %p27, %p28
      %p30 = scmp.ne.s32.totalorder %s22, %s25
      %p31 = scmp.eq.s32.totalorder %s12, 0
      %p32 = por %p30, %p31
      %p33 = scmp.ne.s32.totalorder %s22, %s25
      %p34 = scmp.eq.s32.totalorder %s17, 1
      %p35 = por %p33, %p34
      %p36 = scmp.ne.s32.totalorder %s25, %s26
      %p37 = scmp.eq.s32.totalorder %s17, 0
      %p38 = por %p36, %p37
      %p39 = scmp.ne.s32.totalorder %s25, %s26
      %p40 = scmp.eq.s32.totalorder %s18, 1
      %p41 = por %p39, %p40
      %p43 = scmp.ne.s32.totalorder %s26, %s42
      %p44 = scmp.eq.s32.totalorder %s18, 0
      %p45 = por %p43, %p44
      %s47 = sadd.s32 %s46, 1
      %p50 = scmp.eq.s32.totalorder %s12, 1
      %p51 = scmp.ne.s32.totalorder %s46, %s48
      %p52 = scmp.eq.s32.totalorder %s12, 0
      %p53 = por %p51, %p52
      %p54 = scmp.ne.s32.totalorder %s46, %s48
      %p55 = scmp.eq.s32.totalorder %s17, 1
      %p56 = por %p54, %p55
      %p57 = scmp.ne.s32.totalorder %s48, %s49
      %p58 = scmp.eq.s32.totalorder %s17, 0
      %p59 = por %p57, %p58
      %p60 = scmp.ne.s32.totalorder %s48, %s49
      %p61 = scmp.eq.s32.totalorder %s18, 1
      %p62 = por %p60, %p61
      %p64 = scmp.ne.s32.totalorder %s49, %s63
      %p65 = scmp.eq.s32.totalorder %s18, 0
      %p66 = por %p64, %p65
      %s68 = sadd.s32 %s67, 1
      %p71 = scmp.eq.s32.totalorder %s12, 1
      %p72 = scmp.ne.s32.totalorder %s67, %s69
      %p73 = scmp.eq.s32.totalorder %s12, 0
      %p74 = por %p72, %p73
      %p75 = scmp.ne.s32.totalorder %s67, %s69
      %p76 = scmp.eq.s32.totalorder %s17, 1
      %p77 = por %p75, %p76
      %p78 = scmp.ne.s32.totalorder %s69, %s70
      %p79 = scmp.eq.s32.totalorder %s17, 0
      %p80 = por %p78, %p79
      %p81 = scmp.ne.s32.totalorder %s69, %s70
      %p82 = scmp.eq.s32.totalorder %s18, 1
      %p83 = por %p81, %p82
      %p85 = scmp.ne.s32.totalorder %s70, %s84
      %p86 = scmp.eq.s32.totalorder %s18, 0
      %p87 = por %p85, %p86
      %s89 = sadd.s32 %s88, 1
      %p92 = scmp.eq.s32.totalorder %s12, 1
      %p93 = scmp.ne.s32.totalorder %s88, %s90
      %p94 = scmp.eq.s32.totalorder %s12, 0
      %p95 = por %p93, %p94
      %p96 = scmp.ne.s32.totalorder %s88, %s90
      %p97 = scmp.eq.s32.totalorder %s17, 1
      %p98 = por %p96, %p97
      %p99 = scmp.ne.s32.totalorder %s90, %s91
      %p100 = scmp.eq.s32.totalorder %s17, 0
      %p101 = por %p99, %p100
      %p102 = scmp.ne.s32.totalorder %s90, %s91
      %p103 = scmp.eq.s32.totalorder %s18, 1
      %p104 = por %p102, %p103
      %p106 = scmp.ne.s32.totalorder %s91, %s105
      %p107 = scmp.eq.s32.totalorder %s18, 0
      %p108 = por %p106, %p107
      %s109 = ssub.s32 %s12, %s19
      %p110 = scmp.eq.s32.totalorder %s109, 0
      %s112 = sadd.s32 %s111, 1
      %s113 = scalar_select %p110, %s111, %s112
      %p116 = pneg %p110
      %p117 = scmp.eq.s32.totalorder %s12, 1
      %p118 = por %p116, %p117
      %p119 = scmp.ne.s32.totalorder %s111, %s114
      %p120 = scmp.eq.s32.totalorder %s12, 0
      %p121 = por %p119, %p120
      %p122 = scmp.ne.s32.totalorder %s111, %s114
      %p123 = scmp.eq.s32.totalorder %s17, 1
      %p124 = por %p122, %p123
      %p125 = scmp.ne.s32.totalorder %s114, %s115
      %p126 = scmp.eq.s32.totalorder %s17, 0
      %p127 = por %p125, %p126
      %p128 = scmp.ne.s32.totalorder %s114, %s115
      %p129 = scmp.eq.s32.totalorder %s18, 1
      %p130 = por %p128, %p129
      %p132 = scmp.ne.s32.totalorder %s115, %s131
      %p133 = scmp.eq.s32.totalorder %s18, 0
      %p134 = por %p132, %p133
      %p135 = scmp.le.s32.totalorder 1, %s12
      %p136 = scmp.lt.s32.totalorder %s12, 3
      %p137 = pnand %p135, %p136
      %p138 = pneg %p137
      // Predicated region
      $region9: #{discriminator_forward.5} parent=5 // pred_check
        _
      $region10: #{discriminator_forward.5} parent=5 // pred_check_branch
        %140 = sbr.rel (%p137) target = $region12
      $region11: #{discriminator_forward.5} parent=5 // pred_region
        %s141 = ssub.s32 %s12, 1
        // Predicated region
        $region13: #{discriminator_forward.5} parent=11 // pred_check
          %p142 = pneg %p59
        $region14: #{discriminator_forward.5} parent=11 // pred_check_branch
          %144 = sbr.rel (%p142) target = $region16
        $region15: #{discriminator_forward.5} parent=11 // pred_region
          %s146 = ssub.s32 1024, 1024
          %147 = vsyncadd [#allocation3], %s146
          %s148 = sshll.u32 [#allocation2], 4
          %s149 = int_to_ptr.vmem [resolvable:$true] %s148
          %154 = dma.hbm_to_vmem [thread:$0]  %s1, 1024, %s149, [#allocation3], 64, 64, 4
        $region16: #{discriminator_forward.5} parent=11 // pred_fallthru
          _
        // Predicated region
        $region17: #{discriminator_forward.5} parent=11 // pred_check
          %p155 = pneg %p80
        $region18: #{discriminator_forward.5} parent=11 // pred_check_branch
          %157 = sbr.rel (%p155) target = $region20
        $region19: #{discriminator_forward.5} parent=11 // pred_region
          %s159 = ssub.s32 16, 16
          %160 = vsyncadd [#allocation5], %s159
          %s162 = sshll.u32 [#allocation4], 4
          %s163 = int_to_ptr.vmem [resolvable:$true] %s162
          %165 = dma.hbm_to_vmem [thread:$0]  %s2, 16, %s163, [#allocation5]
        $region20: #{discriminator_forward.5} parent=11 // pred_fallthru
          _
        // Predicated region
        $region21: #{discriminator_forward.5} parent=11 // pred_check
          %p166 = pneg %p101
        $region22: #{discriminator_forward.5} parent=11 // pred_check_branch
          %168 = sbr.rel (%p166) target = $region24
        $region23: #{discriminator_forward.5} parent=11 // pred_region
          %s170 = ssub.s32 4608, 4608
          %171 = vsyncadd [#allocation5], %s170
          %s172 = sshll.u32 [#allocation6], 4
          %s173 = int_to_ptr.vmem [resolvable:$true] %s172
          %178 = dma.hbm_to_vmem [thread:$0]  %s3, 4608, %s173, [#allocation5], 128, 128, 8
        $region24: #{discriminator_forward.5} parent=11 // pred_fallthru
          _
      $region12: #{discriminator_forward.5} parent=5 // pred_fallthru
        _
      %p179 = scmp.lt.s32.totalorder %s12, 2
      // Predicated region
      $region25: #{discriminator_forward.5} parent=5 // pred_check
        %p180 = pneg %p179
      $region26: #{discriminator_forward.5} parent=5 // pred_check_branch
        %182 = sbr.rel (%p180) target = $region28
      $region27: #{discriminator_forward.5} parent=5 // pred_region
        // Predicated region
        $region29: #{discriminator_forward.5} parent=27 // pred_check
          %p183 = pneg %p32
        $region30: #{discriminator_forward.5} parent=27 // pred_check_branch
          %185 = sbr.rel (%p183) target = $region32
        $region31: #{discriminator_forward.5} parent=27 // pred_region
          %p186 = scmp.lt.s32.totalorder %s12, 1
          %s187 = scalar_select %p186, %s12, 1
          %s188 = smul.addr %s187, 41
          %s189 = smul.addr %s188, 4
          %s190 = scalar_lea.vmem %s0, %s189
        $region32: #{discriminator_forward.5} parent=27 // pred_fallthru
          _
      $region28: #{discriminator_forward.5} parent=5 // pred_fallthru
        _
      %p191 = scmp.le.s32.totalorder 1, %s12
      %p192 = scmp.lt.s32.totalorder %s12, 3
      %p193 = pnand %p191, %p192
      %p194 = pneg %p193
      // Predicated region
      $region33: #{discriminator_forward.5} parent=5 // pred_check
        _
      $region34: #{discriminator_forward.5} parent=5 // pred_check_branch
        %196 = sbr.rel (%p193) target = $region36
      $region35: #{discriminator_forward.5} parent=5 // pred_region
        %s197 = ssub.s32 %s12, 1
        // Predicated region
        $region37: #{discriminator_forward.5} parent=35 // pred_check
          %p198 = pneg %p59
        $region38: #{discriminator_forward.5} parent=35 // pred_check_branch
          %200 = sbr.rel (%p198) target = $region40
        $region39: #{discriminator_forward.5} parent=35 // pred_region
          %201 = dma.done [#allocation3], 1024
        $region40: #{discriminator_forward.5} parent=35 // pred_fallthru
          _
        // Predicated region
        $region41: #{discriminator_forward.5} parent=35 // pred_check
          %p202 = pneg %p80
        $region42: #{discriminator_forward.5} parent=35 // pred_check_branch
          %204 = sbr.rel (%p202) target = $region44
        $region43: #{discriminator_forward.5} parent=35 // pred_region
          %205 = dma.done [#allocation5], 16
        $region44: #{discriminator_forward.5} parent=35 // pred_fallthru
          _
        // Predicated region
        $region45: #{discriminator_forward.5} parent=35 // pred_check
          %p206 = pneg %p101
        $region46: #{discriminator_forward.5} parent=35 // pred_check_branch
          %208 = sbr.rel (%p206) target = $region48
        $region47: #{discriminator_forward.5} parent=35 // pred_region
          %209 = dma.done [#allocation5], 4608
        $region48: #{discriminator_forward.5} parent=35 // pred_fallthru
          _
        %p210 = scmp.lt.s32.totalorder %s17, 1
        %s211 = scalar_select %p210, %s17, 1
        %s212 = smul.addr %s211, 41
        %s213 = smul.addr %s212, 4
        %s214 = scalar_lea.vmem %s0, %s213
        %p215 = pneg %p38
        %p216 = pneg %p35
        %p217 = pneg %p59
        %p218 = pneg %p56
        %p219 = pneg %p80
        %p220 = pneg %p77
        %p221 = pneg %p101
        %p222 = pneg %p98
        %p223 = pneg %p127
        %p224 = pneg %p124
        %p225 = scmp.lt.s32.totalorder %s17, 1
        %s226 = scalar_select %p225, %s17, 1
        %s227 = smul.addr %s226, 36
        %s228 = smul.addr %s227, 4
        %s229 = scalar_lea.vmem %s4, %s228
        %p230 = scmp.lt.s32.totalorder %s17, 1
        %s231 = scalar_select %p230, %s17, 1
        %s232 = smul.addr %s231, 41
        %s233 = smul.addr %s232, 4
        %s234 = scalar_lea.vmem %s0, %s233
        %p235 = scmp.lt.s32.totalorder %s17, 1
        %s236 = scalar_select %p235, %s17, 1
        %s237 = smul.addr %s236, 36
        %s238 = smul.addr %s237, 4
        %s239 = scalar_lea.vmem %s4, %s238
        %v241 = vld [vmem:[%s234] sm:$0xf]
        %v242 = vld [vmem:[%s234 + $0x4] sm:$0xf]
        %v243 = vld [vmem:[%s234 + $0x8] sm:$0xf]
        %v244 = vld [vmem:[%s234 + $0xc] sm:$0xf]
        %v245 = vld [vmem:[%s234 + $0x10] sm:$0xf]
        %v246 = vld [vmem:[%s234 + $0x14] sm:$0xf]
        %v247 = vld [vmem:[%s234 + $0x18] sm:$0xf]
        %v248 = vld [vmem:[%s234 + $0x1c] sm:$0xf]
        %v249 = vld [vmem:[%s234 + $0x20] sm:$0xf]
        %v250 = vld [vmem:[%s234 + $0x24] sm:$0xf]
        %v251 = vld [vmem:[%s234 + $0x28] sm:$0xf]
        %v252 = vld [vmem:[%s234 + $0x2c] sm:$0xf]
        %v253 = vld [vmem:[%s234 + $0x30] sm:$0xf]
        %v254 = vld [vmem:[%s234 + $0x34] sm:$0xf]
        %v255 = vld [vmem:[%s234 + $0x38] sm:$0xf]
        %v256 = vld [vmem:[%s234 + $0x3c] sm:$0xf]
        %v257 = vld [vmem:[%s234 + $0x40] sm:$0xf]
        %v258 = vld [vmem:[%s234 + $0x44] sm:$0xf]
        %v259 = vld [vmem:[%s234 + $0x48] sm:$0xf]
        %v260 = vld [vmem:[%s234 + $0x4c] sm:$0xf]
        %v261 = vld [vmem:[%s234 + $0x50] sm:$0xf]
        %v262 = vld [vmem:[%s234 + $0x54] sm:$0xf]
        %v263 = vld [vmem:[%s234 + $0x58] sm:$0xf]
        %v264 = vld [vmem:[%s234 + $0x5c] sm:$0xf]
        %v265 = vld [vmem:[%s234 + $0x60] sm:$0xf]
        %v266 = vld [vmem:[%s234 + $0x64] sm:$0xf]
        %v267 = vld [vmem:[%s234 + $0x68] sm:$0xf]
        %v268 = vld [vmem:[%s234 + $0x6c] sm:$0xf]
        %v269 = vld [vmem:[%s234 + $0x70] sm:$0xf]
        %v270 = vld [vmem:[%s234 + $0x74] sm:$0xf]
        %v271 = vld [vmem:[%s234 + $0x78] sm:$0xf]
        %v272 = vld [vmem:[%s234 + $0x7c] sm:$0xf]
        %v273 = vld [vmem:[%s234 + $0x80] sm:$0xf]
        %v274 = vld [vmem:[%s234 + $0x84] sm:$0xf]
        %v275 = vld [vmem:[%s234 + $0x88] sm:$0xf]
        %v276 = vld [vmem:[%s234 + $0x8c] sm:$0xf]
        %v277 = vld [vmem:[#allocation2] sm:$0xf]
        %v278 = vld [vmem:[#allocation2 + $0x4] sm:$0xf]
        %v279 = vld [vmem:[#allocation2 + $0x8] sm:$0xf]
        %v280 = vld [vmem:[#allocation2 + $0xc] sm:$0xf]
        %v281 = vld [vmem:[%s234 + $0x90] sm:$0x1]
        %s282 = scalar_lea.vmem [#allocation2], 16
        %v283 = vld [vmem:[%s282] sm:$0xf]
        %v284 = vld [vmem:[%s282 + $0x4] sm:$0xf]
        %v285 = vld [vmem:[%s282 + $0x8] sm:$0xf]
        %v286 = vld [vmem:[%s282 + $0xc] sm:$0xf]
        %v324 = vunpack.c.l.b16 %v241
        %v325 = vunpack.c.l.b16 %v242
        %v326 = vunpack.c.l.b16 %v243
        %v327 = vunpack.c.l.b16 %v244
        %v328 = vunpack.c.l.b16 %v245
        %v329 = vunpack.c.l.b16 %v246
        %v330 = vunpack.c.l.b16 %v247
        %v331 = vunpack.c.l.b16 %v248
        %v332 = vunpack.c.l.b16 %v249
        %v333 = vunpack.c.l.b16 %v250
        %v334 = vunpack.c.l.b16 %v251
        %v335 = vunpack.c.l.b16 %v252
        %v336 = vunpack.c.l.b16 %v253
        %v337 = vunpack.c.l.b16 %v254
        %v338 = vunpack.c.l.b16 %v255
        %v339 = vunpack.c.l.b16 %v256
        %v340 = vunpack.c.l.b16 %v257
        %v341 = vunpack.c.l.b16 %v258
        %v342 = vunpack.c.l.b16 %v259
        %v343 = vunpack.c.l.b16 %v260
        %v344 = vunpack.c.l.b16 %v261
        %v345 = vunpack.c.l.b16 %v262
        %v346 = vunpack.c.l.b16 %v263
        %v347 = vunpack.c.l.b16 %v264
        %v348 = vunpack.c.l.b16 %v265
        %v349 = vunpack.c.l.b16 %v266
        %v350 = vunpack.c.l.b16 %v267
        %v351 = vunpack.c.l.b16 %v268
        %v352 = vunpack.c.l.b16 %v269
        %v353 = vunpack.c.l.b16 %v270
        %v354 = vunpack.c.l.b16 %v271
        %v355 = vunpack.c.l.b16 %v272
        %v356 = vunpack.c.l.b16 %v273
        %v357 = vunpack.c.l.b16 %v274
        %v358 = vunpack.c.l.b16 %v275
        %v359 = vunpack.c.l.b16 %v276
        %v360 = vunpack.c.l.b16 %v281
        %v361 = vpack.c.b16 %v325, %v324
        %v362 = vpack.c.b16 %v327, %v326
        %v363 = vpack.c.b16 %v329, %v328
        %v364 = vpack.c.b16 %v331, %v330
        %v365 = vpack.c.b16 %v333, %v332
        %v366 = vpack.c.b16 %v335, %v334
        %v367 = vpack.c.b16 %v337, %v336
        %v368 = vpack.c.b16 %v339, %v338
        %v369 = vpack.c.b16 %v341, %v340
        %v370 = vpack.c.b16 %v343, %v342
        %v371 = vpack.c.b16 %v345, %v344
        %v372 = vpack.c.b16 %v347, %v346
        %v373 = vpack.c.b16 %v349, %v348
        %v374 = vpack.c.b16 %v351, %v350
        %v375 = vpack.c.b16 %v353, %v352
        %v376 = vpack.c.b16 %v355, %v354
        %v377 = vpack.c.b16 %v357, %v356
        %v378 = vpack.c.b16 %v359, %v358
        %v379 = vpack.c.b16 %v360, %v360
        %vm380 = vsmask.f32 7424
        %v382 = vshrl.u32 %v361, 16
        %v384 = vshll.u32 %v361, 16
        %v386 = vrot.slane %v384, 1
        %v387 = vor.u32 %v382, %v386
        %v389 = vshll.u32 %v362, 16
        %v391 = vrot.slane %v389, 1
        %v392 = vsel %vm380, %v387, %v391
        %v393 = vshrl.u32 %v362, 16
        %v395 = vor.u32 %v393, %v391
        %v397 = vshll.u32 %v363, 16
        %v399 = vrot.slane %v397, 1
        %v400 = vsel %vm380, %v395, %v399
        %v401 = vshrl.u32 %v363, 16
        %v403 = vor.u32 %v401, %v399
        %v405 = vshll.u32 %v364, 16
        %v407 = vrot.slane %v405, 1
        %v408 = vsel %vm380, %v403, %v407
        %v409 = vshrl.u32 %v364, 16
        %v411 = vor.u32 %v409, %v407
        %v413 = vshll.u32 %v365, 16
        %v415 = vrot.slane %v413, 1
        %v416 = vsel %vm380, %v411, %v415
        %v417 = vshrl.u32 %v365, 16
        %v419 = vor.u32 %v417, %v415
        %v421 = vshll.u32 %v366, 16
        %v423 = vrot.slane %v421, 1
        %v424 = vsel %vm380, %v419, %v423
        %v425 = vshrl.u32 %v366, 16
        %v427 = vor.u32 %v425, %v423
        %v429 = vshll.u32 %v367, 16
        %v431 = vrot.slane %v429, 1
        %v432 = vsel %vm380, %v427, %v431
        %v433 = vshrl.u32 %v367, 16
        %v435 = vor.u32 %v433, %v431
        %v437 = vshll.u32 %v368, 16
        %v439 = vrot.slane %v437, 1
        %v440 = vsel %vm380, %v435, %v439
        %v441 = vshrl.u32 %v368, 16
        %v443 = vor.u32 %v441, %v439
        %v445 = vshll.u32 %v369, 16
        %v447 = vrot.slane %v445, 1
        %v448 = vsel %vm380, %v443, %v447
        %v449 = vshrl.u32 %v369, 16
        %v451 = vor.u32 %v449, %v447
        %v453 = vshll.u32 %v370, 16
        %v455 = vrot.slane %v453, 1
        %v456 = vsel %vm380, %v451, %v455
        %v457 = vshrl.u32 %v370, 16
        %v459 = vor.u32 %v457, %v455
        %v461 = vshll.u32 %v371, 16
        %v463 = vrot.slane %v461, 1
        %v464 = vsel %vm380, %v459, %v463
        %v465 = vshrl.u32 %v371, 16
        %v467 = vor.u32 %v465, %v463
        %v469 = vshll.u32 %v372, 16
        %v471 = vrot.slane %v469, 1
        %v472 = vsel %vm380, %v467, %v471
        %v473 = vshrl.u32 %v372, 16
        %v475 = vor.u32 %v473, %v471
        %v477 = vshll.u32 %v373, 16
        %v479 = vrot.slane %v477, 1
        %v480 = vsel %vm380, %v475, %v479
        %v481 = vshrl.u32 %v373, 16
        %v483 = vor.u32 %v481, %v479
        %v485 = vshll.u32 %v374, 16
        %v487 = vrot.slane %v485, 1
        %v488 = vsel %vm380, %v483, %v487
        %v489 = vshrl.u32 %v374, 16
        %v491 = vor.u32 %v489, %v487
        %v493 = vshll.u32 %v375, 16
        %v495 = vrot.slane %v493, 1
        %v496 = vsel %vm380, %v491, %v495
        %v497 = vshrl.u32 %v375, 16
        %v499 = vor.u32 %v497, %v495
        %v501 = vshll.u32 %v376, 16
        %v503 = vrot.slane %v501, 1
        %v504 = vsel %vm380, %v499, %v503
        %v505 = vshrl.u32 %v376, 16
        %v507 = vor.u32 %v505, %v503
        %v509 = vshll.u32 %v377, 16
        %v511 = vrot.slane %v509, 1
        %v512 = vsel %vm380, %v507, %v511
        %v513 = vshrl.u32 %v377, 16
        %v515 = vor.u32 %v513, %v511
        %v517 = vshll.u32 %v378, 16
        %v519 = vrot.slane %v517, 1
        %v520 = vsel %vm380, %v515, %v519
        %v521 = vshrl.u32 %v378, 16
        %v523 = vor.u32 %v521, %v519
        %v525 = vshll.u32 %v379, 16
        %v527 = vrot.slane %v525, 1
        %v528 = vsel %vm380, %v523, %v527
        %v533 = vunpack.c.l.b16 %v283
        %v534 = vunpack.c.l.b16 %v284
        %v535 = vunpack.c.l.b16 %v285
        %v536 = vunpack.c.l.b16 %v286
        %v537 = vpack.c.b16 %v534, %v533
        %v538 = vpack.c.b16 %v536, %v535
        %vm541 = vcmask 261120
        %v543 = vsel %vm541, %v392, 0
        %v546 = vsel %vm541, %v400, 0
        %v549 = vsel %vm541, %v408, 0
        %v552 = vsel %vm541, %v416, 0
        %v555 = vsel %vm541, %v424, 0
        %v558 = vsel %vm541, %v432, 0
        %v561 = vsel %vm541, %v440, 0
        %v564 = vsel %vm541, %v448, 0
        %v567 = vsel %vm541, %v456, 0
        %v570 = vsel %vm541, %v464, 0
        %v573 = vsel %vm541, %v472, 0
        %v576 = vsel %vm541, %v480, 0
        %v579 = vsel %vm541, %v488, 0
        %v582 = vsel %vm541, %v496, 0
        %v585 = vsel %vm541, %v504, 0
        %v588 = vsel %vm541, %v512, 0
        %v591 = vsel %vm541, %v520, 0
        %v594 = vsel %vm541, %v528, 0
        %596 = vmatprep.subr.bf16.mxu0 0
        %597 = vmatpush1.bf16.msra.mxu0 %v537
        %598 = vmatprep.subr.bf16.mxu0 0
        %599 = vmatpush1.bf16.msra.mxu0 %v538
        %600 = vmatprep.subr.bf16.mxu0 0
        %601 = vmatpush1.bf16.msra.mxu0 0
        %602 = vmatprep.subr.bf16.mxu0 0
        %603 = vmatpush1.bf16.msra.mxu0 0
        %604 = vmatprep.subr.bf16.mxu0 0
        %605 = vmatpush1.bf16.msra.mxu0 0
        %606 = vmatprep.subr.bf16.mxu0 0
        %607 = vmatpush1.bf16.msra.mxu0 0
        %608 = vmatprep.subr.bf16.mxu0 0
        %609 = vmatpush1.bf16.msra.mxu0 0
        %610 = vmatprep.subr.bf16.mxu0 0
        %611 = vmatpush1.bf16.msra.mxu0 0
        %612 = vmatprep.subr.bf16.mxu0 0
        %613 = vmatpush1.bf16.msra.mxu0 0
        %614 = vmatprep.subr.bf16.mxu0 0
        %615 = vmatpush1.bf16.msra.mxu0 0
        %616 = vmatprep.subr.bf16.mxu0 0
        %617 = vmatpush1.bf16.msra.mxu0 0
        %618 = vmatprep.subr.bf16.mxu0 0
        %619 = vmatpush1.bf16.msra.mxu0 0
        %620 = vmatprep.subr.bf16.mxu0 0
        %621 = vmatpush1.bf16.msra.mxu0 0
        %622 = vmatprep.subr.bf16.mxu0 0
        %623 = vmatpush1.bf16.msra.mxu0 0
        %624 = vmatprep.subr.bf16.mxu0 0
        %625 = vmatpush1.bf16.msra.mxu0 0
        %626 = vmatprep.subr.bf16.mxu0 0
        %627 = vmatpush1.bf16.msra.mxu0 0
        %628 = vmatprep.mubr.bf16.mxu0 0
        %629 = vmatmul.mubr.bf16.gmra.mrb[0].mxu0 %v543
        %v630 = vpop.f32.mrb[0].mxu0
        %v631 = vadd.f32 0.0, %v630
        %v632 = vpop.f32.mrb[0].mxu0
        %v633 = vpop.f32.mrb[0].mxu0
        %v634 = vadd.f32 0.0, %v633
        %v635 = vpop.f32.mrb[0].mxu0
        %636 = vmatprep.mubr.bf16.mxu0 0
        %637 = vmatmul.mubr.bf16.gmra.mrb[0].mxu0 %v546
        %v638 = vpop.f32.mrb[0].mxu0
        %v639 = vadd.f32 0.0, %v638
        %v640 = vpop.f32.mrb[0].mxu0
        %v641 = vpop.f32.mrb[0].mxu0
        %v642 = vadd.f32 0.0, %v641
        %v643 = vpop.f32.mrb[0].mxu0
        %644 = vmatprep.mubr.bf16.mxu0 0
        %645 = vmatmul.mubr.bf16.gmra.mrb[0].mxu0 %v549
        %v646 = vpop.f32.mrb[0].mxu0
        %v647 = vadd.f32 0.0, %v646
        %v648 = vpop.f32.mrb[0].mxu0
        %v649 = vpop.f32.mrb[0].mxu0
        %v650 = vadd.f32 0.0, %v649
        %v651 = vpop.f32.mrb[0].mxu0
        %652 = vmatprep.mubr.bf16.mxu0 0
        %653 = vmatmul.mubr.bf16.gmra.mrb[0].mxu0 %v552
        %v654 = vpop.f32.mrb[0].mxu0
        %v655 = vadd.f32 0.0, %v654
        %v656 = vpop.f32.mrb[0].mxu0
        %v657 = vpop.f32.mrb[0].mxu0
        %v658 = vadd.f32 0.0, %v657
        %v659 = vpop.f32.mrb[0].mxu0
        %660 = vmatprep.mubr.bf16.mxu0 0
        %661 = vmatmul.mubr.bf16.gmra.mrb[0].mxu0 %v555
        %v662 = vpop.f32.mrb[0].mxu0
        %v663 = vadd.f32 0.0, %v662
        %v664 = vpop.f32.mrb[0].mxu0
        %v665 = vpop.f32.mrb[0].mxu0
        %v666 = vadd.f32 0.0, %v665
        %v667 = vpop.f32.mrb[0].mxu0
        %668 = vmatprep.mubr.bf16.mxu0 0
        %669 = vmatmul.mubr.bf16.gmra.mrb[0].mxu0 %v558
        %v670 = vpop.f32.mrb[0].mxu0
        %v671 = vadd.f32 0.0, %v670
        %v672 = vpop.f32.mrb[0].mxu0
        %v673 = vpop.f32.mrb[0].mxu0
        %v674 = vadd.f32 0.0, %v673
        %v675 = vpop.f32.mrb[0].mxu0
        %676 = vmatprep.mubr.bf16.mxu0 0
        %677 = vmatmul.mubr.bf16.gmra.mrb[0].mxu0 %v561
        %v678 = vpop.f32.mrb[0].mxu0
        %v679 = vadd.f32 0.0, %v678
        %v680 = vpop.f32.mrb[0].mxu0
        %v681 = vpop.f32.mrb[0].mxu0
        %v682 = vadd.f32 0.0, %v681
        %v683 = vpop.f32.mrb[0].mxu0
        %684 = vmatprep.mubr.bf16.mxu0 0
        %685 = vmatmul.mubr.bf16.gmra.mrb[0].mxu0 %v564
        %v686 = vpop.f32.mrb[0].mxu0
        %v687 = vadd.f32 0.0, %v686
        %v688 = vpop.f32.mrb[0].mxu0
        %v689 = vpop.f32.mrb[0].mxu0
        %v690 = vadd.f32 0.0, %v689
        %v691 = vpop.f32.mrb[0].mxu0
        %692 = vmatprep.mubr.bf16.mxu0 0
        %693 = vmatmul.mubr.bf16.gmra.mrb[0].mxu0 %v567
        %v694 = vpop.f32.mrb[0].mxu0
        %v695 = vadd.f32 0.0, %v694
        %v696 = vpop.f32.mrb[0].mxu0
        %v697 = vpop.f32.mrb[0].mxu0
        %v698 = vadd.f32 0.0, %v697
        %v699 = vpop.f32.mrb[0].mxu0
        %700 = vmatprep.mubr.bf16.mxu0 0
        %701 = vmatmul.mubr.bf16.gmra.mrb[0].mxu0 %v570
        %v702 = vpop.f32.mrb[0].mxu0
        %v703 = vadd.f32 0.0, %v702
        %v704 = vpop.f32.mrb[0].mxu0
        %v705 = vpop.f32.mrb[0].mxu0
        %v706 = vadd.f32 0.0, %v705
        %v707 = vpop.f32.mrb[0].mxu0
        %708 = vmatprep.mubr.bf16.mxu0 0
        %709 = vmatmul.mubr.bf16.gmra.mrb[0].mxu0 %v573
        %v710 = vpop.f32.mrb[0].mxu0
        %v711 = vadd.f32 0.0, %v710
        %v712 = vpop.f32.mrb[0].mxu0
        %v713 = vpop.f32.mrb[0].mxu0
        %v714 = vadd.f32 0.0, %v713
        %v715 = vpop.f32.mrb[0].mxu0
        %716 = vmatprep.mubr.bf16.mxu0 0
        %717 = vmatmul.mubr.bf16.gmra.mrb[0].mxu0 %v576
        %v718 = vpop.f32.mrb[0].mxu0
        %v719 = vadd.f32 0.0, %v718
        %v720 = vpop.f32.mrb[0].mxu0
        %v721 = vpop.f32.mrb[0].mxu0
        %v722 = vadd.f32 0.0, %v721
        %v723 = vpop.f32.mrb[0].mxu0
        %724 = vmatprep.mubr.bf16.mxu0 0
        %725 = vmatmul.mubr.bf16.gmra.mrb[0].mxu0 %v579
        %v726 = vpop.f32.mrb[0].mxu0
        %v727 = vadd.f32 0.0, %v726
        %v728 = vpop.f32.mrb[0].mxu0
        %v729 = vpop.f32.mrb[0].mxu0
        %v730 = vadd.f32 0.0, %v729
        %v731 = vpop.f32.mrb[0].mxu0
        %732 = vmatprep.mubr.bf16.mxu0 0
        %733 = vmatmul.mubr.bf16.gmra.mrb[0].mxu0 %v582
        %v734 = vpop.f32.mrb[0].mxu0
        %v735 = vadd.f32 0.0, %v734
        %v736 = vpop.f32.mrb[0].mxu0
        %v737 = vpop.f32.mrb[0].mxu0
        %v738 = vadd.f32 0.0, %v737
        %v739 = vpop.f32.mrb[0].mxu0
        %740 = vmatprep.mubr.bf16.mxu0 0
        %741 = vmatmul.mubr.bf16.gmra.mrb[0].mxu0 %v585
        %v742 = vpop.f32.mrb[0].mxu0
        %v743 = vadd.f32 0.0, %v742
        %v744 = vpop.f32.mrb[0].mxu0
        %v745 = vpop.f32.mrb[0].mxu0
        %v746 = vadd.f32 0.0, %v745
        %v747 = vpop.f32.mrb[0].mxu0
        %748 = vmatprep.mubr.bf16.mxu0 0
        %749 = vmatmul.mubr.bf16.gmra.mrb[0].mxu0 %v588
        %v750 = vpop.f32.mrb[0].mxu0
        %v751 = vadd.f32 0.0, %v750
        %v752 = vpop.f32.mrb[0].mxu0
        %v753 = vpop.f32.mrb[0].mxu0
        %v754 = vadd.f32 0.0, %v753
        %v755 = vpop.f32.mrb[0].mxu0
        %756 = vmatprep.mubr.bf16.mxu0 0
        %757 = vmatmul.mubr.bf16.gmra.mrb[0].mxu0 %v591
        %v758 = vpop.f32.mrb[0].mxu0
        %v759 = vadd.f32 0.0, %v758
        %v760 = vpop.f32.mrb[0].mxu0
        %v761 = vpop.f32.mrb[0].mxu0
        %v762 = vadd.f32 0.0, %v761
        %v763 = vpop.f32.mrb[0].mxu0
        %764 = vmatprep.mubr.bf16.mxu0 0
        %765 = vmatmul.mubr.bf16.gmra.mrb[0].mxu0 %v594
        %v766 = vpop.f32.mrb[0].mxu0
        %v767 = vadd.f32 0.0, %v766
        %v768 = vpop.f32.mrb[0].mxu0
        %v769 = vpop.f32.mrb[0].mxu0
        %v770 = vadd.f32 0.0, %v769
        %v771 = vpop.f32.mrb[0].mxu0
        %772 = vdwg.mxu0
        %v777 = vunpack.c.l.b16 %v277
        %v778 = vunpack.c.l.b16 %v278
        %v779 = vunpack.c.l.b16 %v279
        %v780 = vunpack.c.l.b16 %v280
        %v781 = vpack.c.b16 %v778, %v777
        %v782 = vpack.c.b16 %v780, %v779
        %v785 = vsel %vm541, %v361, 0
        %v787 = vsel %vm541, %v362, 0
        %v789 = vsel %vm541, %v363, 0
        %v791 = vsel %vm541, %v364, 0
        %v793 = vsel %vm541, %v365, 0
        %v795 = vsel %vm541, %v366, 0
        %v797 = vsel %vm541, %v367, 0
        %v799 = vsel %vm541, %v368, 0
        %v801 = vsel %vm541, %v369, 0
        %v803 = vsel %vm541, %v370, 0
        %v805 = vsel %vm541, %v371, 0
        %v807 = vsel %vm541, %v372, 0
        %v809 = vsel %vm541, %v373, 0
        %v811 = vsel %vm541, %v374, 0
        %v813 = vsel %vm541, %v375, 0
        %v815 = vsel %vm541, %v376, 0
        %v817 = vsel %vm541, %v377, 0
        %v819 = vsel %vm541, %v378, 0
        %821 = vmatprep.subr.bf16.mxu0 0
        %822 = vmatpush1.bf16.msra.mxu0 %v781
        %823 = vmatprep.subr.bf16.mxu0 0
        %824 = vmatpush1.bf16.msra.mxu0 %v782
        %825 = vmatprep.subr.bf16.mxu0 0
        %826 = vmatpush1.bf16.msra.mxu0 0
        %827 = vmatprep.subr.bf16.mxu0 0
        %828 = vmatpush1.bf16.msra.mxu0 0
        %829 = vmatprep.subr.bf16.mxu0 0
        %830 = vmatpush1.bf16.msra.mxu0 0
        %831 = vmatprep.subr.bf16.mxu0 0
        %832 = vmatpush1.bf16.msra.mxu0 0
        %833 = vmatprep.subr.bf16.mxu0 0
        %834 = vmatpush1.bf16.msra.mxu0 0
        %835 = vmatprep.subr.bf16.mxu0 0
        %836 = vmatpush1.bf16.msra.mxu0 0
        %837 = vmatprep.subr.bf16.mxu0 0
        %838 = vmatpush1.bf16.msra.mxu0 0
        %839 = vmatprep.subr.bf16.mxu0 0
        %840 = vmatpush1.bf16.msra.mxu0 0
        %841 = vmatprep.subr.bf16.mxu0 0
        %842 = vmatpush1.bf16.msra.mxu0 0
        %843 = vmatprep.subr.bf16.mxu0 0
        %844 = vmatpush1.bf16.msra.mxu0 0
        %845 = vmatprep.subr.bf16.mxu0 0
        %846 = vmatpush1.bf16.msra.mxu0 0
        %847 = vmatprep.subr.bf16.mxu0 0
        %848 = vmatpush1.bf16.msra.mxu0 0
        %849 = vmatprep.subr.bf16.mxu0 0
        %850 = vmatpush1.bf16.msra.mxu0 0
        %851 = vmatprep.subr.bf16.mxu0 0
        %852 = vmatpush1.bf16.msra.mxu0 0
        %853 = vmatprep.mubr.bf16.mxu0 0
        %854 = vmatmul.mubr.bf16.gmra.mrb[0].mxu0 %v785
        %v855 = vpop.f32.mrb[0].mxu0
        %v856 = vadd.f32 %v631, %v855
        %v857 = vpop.f32.mrb[0].mxu0
        %v858 = vpop.f32.mrb[0].mxu0
        %v859 = vadd.f32 %v634, %v858
        %v860 = vpop.f32.mrb[0].mxu0
        %861 = vmatprep.mubr.bf16.mxu0 0
        %862 = vmatmul.mubr.bf16.gmra.mrb[0].mxu0 %v787
        %v863 = vpop.f32.mrb[0].mxu0
        %v864 = vadd.f32 %v639, %v863
        %v865 = vpop.f32.mrb[0].mxu0
        %v866 = vpop.f32.mrb[0].mxu0
        %v867 = vadd.f32 %v642, %v866
        %v868 = vpop.f32.mrb[0].mxu0
        %869 = vmatprep.mubr.bf16.mxu0 0
        %870 = vmatmul.mubr.bf16.gmra.mrb[0].mxu0 %v789
        %v871 = vpop.f32.mrb[0].mxu0
        %v872 = vadd.f32 %v647, %v871
        %v873 = vpop.f32.mrb[0].mxu0
        %v874 = vpop.f32.mrb[0].mxu0
        %v875 = vadd.f32 %v650, %v874
        %v876 = vpop.f32.mrb[0].mxu0
        %877 = vmatprep.mubr.bf16.mxu0 0
        %878 = vmatmul.mubr.bf16.gmra.mrb[0].mxu0 %v791
        %v879 = vpop.f32.mrb[0].mxu0
        %v880 = vadd.f32 %v655, %v879
        %v881 = vpop.f32.mrb[0].mxu0
        %v882 = vpop.f32.mrb[0].mxu0
        %v883 = vadd.f32 %v658, %v882
        %v884 = vpop.f32.mrb[0].mxu0
        %885 = vmatprep.mubr.bf16.mxu0 0
        %886 = vmatmul.mubr.bf16.gmra.mrb[0].mxu0 %v793
        %v887 = vpop.f32.mrb[0].mxu0
        %v888 = vadd.f32 %v663, %v887
        %v889 = vpop.f32.mrb[0].mxu0
        %v890 = vpop.f32.mrb[0].mxu0
        %v891 = vadd.f32 %v666, %v890
        %v892 = vpop.f32.mrb[0].mxu0
        %893 = vmatprep.mubr.bf16.mxu0 0
        %894 = vmatmul.mubr.bf16.gmra.mrb[0].mxu0 %v795
        %v895 = vpop.f32.mrb[0].mxu0
        %v896 = vadd.f32 %v671, %v895
        %v897 = vpop.f32.mrb[0].mxu0
        %v898 = vpop.f32.mrb[0].mxu0
        %v899 = vadd.f32 %v674, %v898
        %v900 = vpop.f32.mrb[0].mxu0
        %901 = vmatprep.mubr.bf16.mxu0 0
        %902 = vmatmul.mubr.bf16.gmra.mrb[0].mxu0 %v797
        %v903 = vpop.f32.mrb[0].mxu0
        %v904 = vadd.f32 %v679, %v903
        %v905 = vpop.f32.mrb[0].mxu0
        %v906 = vpop.f32.mrb[0].mxu0
        %v907 = vadd.f32 %v682, %v906
        %v908 = vpop.f32.mrb[0].mxu0
        %909 = vmatprep.mubr.bf16.mxu0 0
        %910 = vmatmul.mubr.bf16.gmra.mrb[0].mxu0 %v799
        %v911 = vpop.f32.mrb[0].mxu0
        %v912 = vadd.f32 %v687, %v911
        %v913 = vpop.f32.mrb[0].mxu0
        %v914 = vpop.f32.mrb[0].mxu0
        %v915 = vadd.f32 %v690, %v914
        %v916 = vpop.f32.mrb[0].mxu0
        %917 = vmatprep.mubr.bf16.mxu0 0
        %918 = vmatmul.mubr.bf16.gmra.mrb[0].mxu0 %v801
        %v919 = vpop.f32.mrb[0].mxu0
        %v920 = vadd.f32 %v695, %v919
        %v921 = vpop.f32.mrb[0].mxu0
        %v922 = vpop.f32.mrb[0].mxu0
        %v923 = vadd.f32 %v698, %v922
        %v924 = vpop.f32.mrb[0].mxu0
        %925 = vmatprep.mubr.bf16.mxu0 0
        %926 = vmatmul.mubr.bf16.gmra.mrb[0].mxu0 %v803
        %v927 = vpop.f32.mrb[0].mxu0
        %v928 = vadd.f32 %v703, %v927
        %v929 = vpop.f32.mrb[0].mxu0
        %v930 = vpop.f32.mrb[0].mxu0
        %v931 = vadd.f32 %v706, %v930
        %v932 = vpop.f32.mrb[0].mxu0
        %933 = vmatprep.mubr.bf16.mxu0 0
        %934 = vmatmul.mubr.bf16.gmra.mrb[0].mxu0 %v805
        %v935 = vpop.f32.mrb[0].mxu0
        %v936 = vadd.f32 %v711, %v935
        %v937 = vpop.f32.mrb[0].mxu0
        %v938 = vpop.f32.mrb[0].mxu0
        %v939 = vadd.f32 %v714, %v938
        %v940 = vpop.f32.mrb[0].mxu0
        %941 = vmatprep.mubr.bf16.mxu0 0
        %942 = vmatmul.mubr.bf16.gmra.mrb[0].mxu0 %v807
        %v943 = vpop.f32.mrb[0].mxu0
        %v944 = vadd.f32 %v719, %v943
        %v945 = vpop.f32.mrb[0].mxu0
        %v946 = vpop.f32.mrb[0].mxu0
        %v947 = vadd.f32 %v722, %v946
        %v948 = vpop.f32.mrb[0].mxu0
        %949 = vmatprep.mubr.bf16.mxu0 0
        %950 = vmatmul.mubr.bf16.gmra.mrb[0].mxu0 %v809
        %v951 = vpop.f32.mrb[0].mxu0
        %v952 = vadd.f32 %v727, %v951
        %v953 = vpop.f32.mrb[0].mxu0
        %v954 = vpop.f32.mrb[0].mxu0
        %v955 = vadd.f32 %v730, %v954
        %v956 = vpop.f32.mrb[0].mxu0
        %957 = vmatprep.mubr.bf16.mxu0 0
        %958 = vmatmul.mubr.bf16.gmra.mrb[0].mxu0 %v811
        %v959 = vpop.f32.mrb[0].mxu0
        %v960 = vadd.f32 %v735, %v959
        %v961 = vpop.f32.mrb[0].mxu0
        %v962 = vpop.f32.mrb[0].mxu0
        %v963 = vadd.f32 %v738, %v962
        %v964 = vpop.f32.mrb[0].mxu0
        %965 = vmatprep.mubr.bf16.mxu0 0
        %966 = vmatmul.mubr.bf16.gmra.mrb[0].mxu0 %v813
        %v967 = vpop.f32.mrb[0].mxu0
        %v968 = vadd.f32 %v743, %v967
        %v969 = vpop.f32.mrb[0].mxu0
        %v970 = vpop.f32.mrb[0].mxu0
        %v971 = vadd.f32 %v746, %v970
        %v972 = vpop.f32.mrb[0].mxu0
        %973 = vmatprep.mubr.bf16.mxu0 0
        %974 = vmatmul.mubr.bf16.gmra.mrb[0].mxu0 %v815
        %v975 = vpop.f32.mrb[0].mxu0
        %v976 = vadd.f32 %v751, %v975
        %v977 = vpop.f32.mrb[0].mxu0
        %v978 = vpop.f32.mrb[0].mxu0
        %v979 = vadd.f32 %v754, %v978
        %v980 = vpop.f32.mrb[0].mxu0
        %981 = vmatprep.mubr.bf16.mxu0 0
        %982 = vmatmul.mubr.bf16.gmra.mrb[0].mxu0 %v817
        %v983 = vpop.f32.mrb[0].mxu0
        %v984 = vadd.f32 %v759, %v983
        %v985 = vpop.f32.mrb[0].mxu0
        %v986 = vpop.f32.mrb[0].mxu0
        %v987 = vadd.f32 %v762, %v986
        %v988 = vpop.f32.mrb[0].mxu0
        %989 = vmatprep.mubr.bf16.mxu0 0
        %990 = vmatmul.mubr.bf16.gmra.mrb[0].mxu0 %v819
        %v991 = vpop.f32.mrb[0].mxu0
        %v992 = vadd.f32 %v767, %v991
        %v993 = vpop.f32.mrb[0].mxu0
        %v994 = vpop.f32.mrb[0].mxu0
        %v995 = vadd.f32 %v770, %v994
        %v996 = vpop.f32.mrb[0].mxu0
        %997 = vdwg.mxu0
        %v998 = vld [vmem:[%s234 + $0x8] sm:$0xe]
        %v999 = vld [vmem:[%s234 + $0xc] sm:$0xf]
        %v1000 = vld [vmem:[%s234 + $0x10] sm:$0xf]
        %v1001 = vld [vmem:[%s234 + $0x14] sm:$0xf]
        %v1002 = vld [vmem:[%s234 + $0x18] sm:$0xf]
        %v1003 = vld [vmem:[%s234 + $0x1c] sm:$0xf]
        %v1004 = vld [vmem:[%s234 + $0x20] sm:$0xf]
        %v1005 = vld [vmem:[%s234 + $0x24] sm:$0xf]
        %v1006 = vld [vmem:[%s234 + $0x28] sm:$0xf]
        %v1007 = vld [vmem:[%s234 + $0x2c] sm:$0xf]
        %v1008 = vld [vmem:[%s234 + $0x30] sm:$0xf]
        %v1009 = vld [vmem:[%s234 + $0x34] sm:$0xf]
        %v1010 = vld [vmem:[%s234 + $0x38] sm:$0xf]
        %v1011 = vld [vmem:[%s234 + $0x3c] sm:$0xf]
        %v1012 = vld [vmem:[%s234 + $0x40] sm:$0xf]
        %v1013 = vld [vmem:[%s234 + $0x44] sm:$0xf]
        %v1014 = vld [vmem:[%s234 + $0x48] sm:$0xf]
        %v1015 = vld [vmem:[%s234 + $0x4c] sm:$0xf]
        %v1016 = vld [vmem:[%s234 + $0x50] sm:$0xf]
        %v1017 = vld [vmem:[%s234 + $0x54] sm:$0xf]
        %v1018 = vld [vmem:[%s234 + $0x58] sm:$0xf]
        %v1019 = vld [vmem:[%s234 + $0x5c] sm:$0xf]
        %v1020 = vld [vmem:[%s234 + $0x60] sm:$0xf]
        %v1021 = vld [vmem:[%s234 + $0x64] sm:$0xf]
        %v1022 = vld [vmem:[%s234 + $0x68] sm:$0xf]
        %v1023 = vld [vmem:[%s234 + $0x6c] sm:$0xf]
        %v1024 = vld [vmem:[%s234 + $0x70] sm:$0xf]
        %v1025 = vld [vmem:[%s234 + $0x74] sm:$0xf]
        %v1026 = vld [vmem:[%s234 + $0x78] sm:$0xf]
        %v1027 = vld [vmem:[%s234 + $0x7c] sm:$0xf]
        %v1028 = vld [vmem:[%s234 + $0x80] sm:$0xf]
        %v1029 = vld [vmem:[%s234 + $0x84] sm:$0xf]
        %v1030 = vld [vmem:[%s234 + $0x88] sm:$0xf]
        %v1031 = vld [vmem:[%s234 + $0x8c] sm:$0xf]
        %v1032 = vld [vmem:[%s234 + $0x90] sm:$0xf]
        %v1033 = vld [vmem:[%s234 + $0x94] sm:$0xf]
        %v1034 = vld [vmem:[%s234 + $0x98] sm:$0x1]
        %s1035 = scalar_lea.vmem [#allocation2], 32
        %v1036 = vld [vmem:[%s1035] sm:$0xf]
        %v1037 = vld [vmem:[%s1035 + $0x4] sm:$0xf]
        %v1038 = vld [vmem:[%s1035 + $0x8] sm:$0xf]
        %v1039 = vld [vmem:[%s1035 + $0xc] sm:$0xf]
        %v1077 = vunpack.c.l.b16 %v998
        %v1078 = vunpack.c.l.b16 %v999
        %v1079 = vunpack.c.l.b16 %v1000
        %v1080 = vunpack.c.l.b16 %v1001
        %v1081 = vunpack.c.l.b16 %v1002
        %v1082 = vunpack.c.l.b16 %v1003
        %v1083 = vunpack.c.l.b16 %v1004
        %v1084 = vunpack.c.l.b16 %v1005
        %v1085 = vunpack.c.l.b16 %v1006
        %v1086 = vunpack.c.l.b16 %v1007
        %v1087 = vunpack.c.l.b16 %v1008
        %v1088 = vunpack.c.l.b16 %v1009
        %v1089 = vunpack.c.l.b16 %v1010
        %v1090 = vunpack.c.l.b16 %v1011
        %v1091 = vunpack.c.l.b16 %v1012
        %v1092 = vunpack.c.l.b16 %v1013
        %v1093 = vunpack.c.l.b16 %v1014
        %v1094 = vunpack.c.l.b16 %v1015
        %v1095 = vunpack.c.l.b16 %v1016
        %v1096 = vunpack.c.l.b16 %v1017
        %v1097 = vunpack.c.l.b16 %v1018
        %v1098 = vunpack.c.l.b16 %v1019
        %v1099 = vunpack.c.l.b16 %v1020
        %v1100 = vunpack.c.l.b16 %v1021
        %v1101 = vunpack.c.l.b16 %v1022
        %v1102 = vunpack.c.l.b16 %v1023
        %v1103 = vunpack.c.l.b16 %v1024
        %v1104 = vunpack.c.l.b16 %v1025
        %v1105 = vunpack.c.l.b16 %v1026
        %v1106 = vunpack.c.l.b16 %v1027
        %v1107 = vunpack.c.l.b16 %v1028
        %v1108 = vunpack.c.l.b16 %v1029
        %v1109 = vunpack.c.l.b16 %v1030
        %v1110 = vunpack.c.l.b16 %v1031
        %v1111 = vunpack.c.l.b16 %v1032
        %v1112 = vunpack.c.l.b16 %v1033
        %v1113 = vunpack.c.l.b16 %v1034
        %v1114 = vpack.c.b16 %v1078, %v1077
        %v1115 = vpack.c.b16 %v1080, %v1079
        %v1116 = vpack.c.b16 %v1082, %v1081
        %v1117 = vpack.c.b16 %v1084, %v1083
        %v1118 = vpack.c.b16 %v1086, %v1085
        %v1119 = vpack.c.b16 %v1088, %v1087
        %v1120 = vpack.c.b16 %v1090, %v1089
        %v1121 = vpack.c.b16 %v1092, %v1091
        %v1122 = vpack.c.b16 %v1094, %v1093
        %v1123 = vpack.c.b16 %v1096, %v1095
        %v1124 = vpack.c.b16 %v1098, %v1097
        %v1125 = vpack.c.b16 %v1100, %v1099
        %v1126 = vpack.c.b16 %v1102, %v1101
        %v1127 = vpack.c.b16 %v1104, %v1103
        %v1128 = vpack.c.b16 %v1106, %v1105
        %v1129 = vpack.c.b16 %v1108, %v1107
        %v1130 = vpack.c.b16 %v1110, %v1109
        %v1131 = vpack.c.b16 %v1112, %v1111
        %v1132 = vpack.c.b16 %v1113, %v1113
        %vm1133 = vcmask 1046528
        %v1134 = vrot.slane %v1114, 1
        %v1135 = vrot.slane %v1115, 1
        %v1136 = vsel %vm1133, %v1134, %v1135
        %v1137 = vrot.slane %v1116, 1
        %v1138 = vsel %vm1133, %v1135, %v1137
        %v1139 = vrot.slane %v1117, 1
        %v1140 = vsel %vm1133, %v1137, %v1139
        %v1141 = vrot.slane %v1118, 1
        %v1142 = vsel %vm1133, %v1139, %v1141
        %v1143 = vrot.slane %v1119, 1
        %v1144 = vsel %vm1133, %v1141, %v1143
        %v1145 = vrot.slane %v1120, 1
        %v1146 = vsel %vm1133, %v1143, %v1145
        %v1147 = vrot.slane %v1121, 1
        %v1148 = vsel %vm1133, %v1145, %v1147
        %v1149 = vrot.slane %v1122, 1
        %v1150 = vsel %vm1133, %v1147, %v1149
        %v1151 = vrot.slane %v1123, 1
        %v1152 = vsel %vm1133, %v1149, %v1151
        %v1153 = vrot.slane %v1124, 1
        %v1154 = vsel %vm1133, %v1151, %v1153
        %v1155 = vrot.slane %v1125, 1
        %v1156 = vsel %vm1133, %v1153, %v1155
        %v1157 = vrot.slane %v1126, 1
        %v1158 = vsel %vm1133, %v1155, %v1157
        %v1159 = vrot.slane %v1127, 1
        %v1160 = vsel %vm1133, %v1157, %v1159
        %v1161 = vrot.slane %v1128, 1
        %v1162 = vsel %vm1133, %v1159, %v1161
        %v1163 = vrot.slane %v1129, 1
        %v1164 = vsel %vm1133, %v1161, %v1163
        %v1165 = vrot.slane %v1130, 1
        %v1166 = vsel %vm1133, %v1163, %v1165
        %v1167 = vrot.slane %v1131, 1
        %v1168 = vsel %vm1133, %v1165, %v1167
        %v1169 = vrot.slane %v1132, 1
        %v1170 = vsel %vm1133, %v1167, %v1169
        %v1175 = vunpack.c.l.b16 %v1036
        %v1176 = vunpack.c.l.b16 %v1037
        %v1177 = vunpack.c.l.b16 %v1038
        %v1178 = vunpack.c.l.b16 %v1039
        %v1179 = vpack.c.b16 %v1176, %v1175
        %v1180 = vpack.c.b16 %v1178, %v1177
        %v1184 = vsel %vm541, %v1136, 0
        %v1187 = vsel %vm541, %v1138, 0
        %v1190 = vsel %vm541, %v1140, 0
        %v1193 = vsel %vm541, %v1142, 0
        %v1196 = vsel %vm541, %v1144, 0
        %v1199 = vsel %vm541, %v1146, 0
        %v1202 = vsel %vm541, %v1148, 0
        %v1205 = vsel %vm541, %v1150, 0
        %v1208 = vsel %vm541, %v1152, 0
        %v1211 = vsel %vm541, %v1154, 0
        %v1214 = vsel %vm541, %v1156, 0
        %v1217 = vsel %vm541, %v1158, 0
        %v1220 = vsel %vm541, %v1160, 0
        %v1223 = vsel %vm541, %v1162, 0
        %v1226 = vsel %vm541, %v1164, 0
        %v1229 = vsel %vm541, %v1166, 0
        %v1232 = vsel %vm541, %v1168, 0
        %v1235 = vsel %vm541, %v1170, 0
        %1237 = vmatprep.subr.bf16.mxu0 0
        %1238 = vmatpush1.bf16.msra.mxu0 %v1179
        %1239 = vmatprep.subr.bf16.mxu0 0
        %1240 = vmatpush1.bf16.msra.mxu0 %v1180
        %1241 = vmatprep.subr.bf16.mxu0 0
        %1242 = vmatpush1.bf16.msra.mxu0 0
        %1243 = vmatprep.subr.bf16.mxu0 0
        %1244 = vmatpush1.bf16.msra.mxu0 0
        %1245 = vmatprep.subr.bf16.mxu0 0
        %1246 = vmatpush1.bf16.msra.mxu0 0
        %1247 = vmatprep.subr.bf16.mxu0 0
        %1248 = vmatpush1.bf16.msra.mxu0 0
        %1249 = vmatprep.subr.bf16.mxu0 0
        %1250 = vmatpush1.bf16.msra.mxu0 0
        %1251 = vmatprep.subr.bf16.mxu0 0
        %1252 = vmatpush1.bf16.msra.mxu0 0
        %1253 = vmatprep.subr.bf16.mxu0 0
        %1254 = vmatpush1.bf16.msra.mxu0 0
        %1255 = vmatprep.subr.bf16.mxu0 0
        %1256 = vmatpush1.bf16.msra.mxu0 0
        %1257 = vmatprep.subr.bf16.mxu0 0
        %1258 = vmatpush1.bf16.msra.mxu0 0
        %1259 = vmatprep.subr.bf16.mxu0 0
        %1260 = vmatpush1.bf16.msra.mxu0 0
        %1261 = vmatprep.subr.bf16.mxu0 0
        %1262 = vmatpush1.bf16.msra.mxu0 0
        %1263 = vmatprep.subr.bf16.mxu0 0
        %1264 = vmatpush1.bf16.msra.mxu0 0
        %1265 = vmatprep.subr.bf16.mxu0 0
        %1266 = vmatpush1.bf16.msra.mxu0 0
        %1267 = vmatprep.subr.bf16.mxu0 0
        %1268 = vmatpush1.bf16.msra.mxu0 0
        %1269 = vmatprep.mubr.bf16.mxu0 0
        %1270 = vmatmul.mubr.bf16.gmra.mrb[0].mxu0 %v1184
        %v1271 = vpop.f32.mrb[0].mxu0
        %v1272 = vadd.f32 0.0, %v1271
        %v1273 = vpop.f32.mrb[0].mxu0
        %v1274 = vpop.f32.mrb[0].mxu0
        %v1275 = vadd.f32 0.0, %v1274
        %v1276 = vpop.f32.mrb[0].mxu0
        %1277 = vmatprep.mubr.bf16.mxu0 0
        %1278 = vmatmul.mubr.bf16.gmra.mrb[0].mxu0 %v1187
        %v1279 = vpop.f32.mrb[0].mxu0
        %v1280 = vadd.f32 0.0, %v1279
        %v1281 = vpop.f32.mrb[0].mxu0
        %v1282 = vpop.f32.mrb[0].mxu0
        %v1283 = vadd.f32 0.0, %v1282
        %v1284 = vpop.f32.mrb[0].mxu0
        %1285 = vmatprep.mubr.bf16.mxu0 0
        %1286 = vmatmul.mubr.bf16.gmra.mrb[0].mxu0 %v1190
        %v1287 = vpop.f32.mrb[0].mxu0
        %v1288 = vadd.f32 0.0, %v1287
        %v1289 = vpop.f32.mrb[0].mxu0
        %v1290 = vpop.f32.mrb[0].mxu0
        %v1291 = vadd.f32 0.0, %v1290
        %v1292 = vpop.f32.mrb[0].mxu0
        %1293 = vmatprep.mubr.bf16.mxu0 0
        %1294 = vmatmul.mubr.bf16.gmra.mrb[0].mxu0 %v1193
        %v1295 = vpop.f32.mrb[0].mxu0
        %v1296 = vadd.f32 0.0, %v1295
        %v1297 = vpop.f32.mrb[0].mxu0
        %v1298 = vpop.f32.mrb[0].mxu0
        %v1299 = vadd.f32 0.0, %v1298
        %v1300 = vpop.f32.mrb[0].mxu0
        %1301 = vmatprep.mubr.bf16.mxu0 0
        %1302 = vmatmul.mubr.bf16.gmra.mrb[0].mxu0 %v1196
        %v1303 = vpop.f32.mrb[0].mxu0
        %v1304 = vadd.f32 0.0, %v1303
        %v1305 = vpop.f32.mrb[0].mxu0
        %v1306 = vpop.f32.mrb[0].mxu0
        %v1307 = vadd.f32 0.0, %v1306
        %v1308 = vpop.f32.mrb[0].mxu0
        %1309 = vmatprep.mubr.bf16.mxu0 0
        %1310 = vmatmul.mubr.bf16.gmra.mrb[0].mxu0 %v1199
        %v1311 = vpop.f32.mrb[0].mxu0
        %v1312 = vadd.f32 0.0, %v1311
        %v1313 = vpop.f32.mrb[0].mxu0
        %v1314 = vpop.f32.mrb[0].mxu0
        %v1315 = vadd.f32 0.0, %v1314
        %v1316 = vpop.f32.mrb[0].mxu0
        %1317 = vmatprep.mubr.bf16.mxu0 0
        %1318 = vmatmul.mubr.bf16.gmra.mrb[0].mxu0 %v1202
        %v1319 = vpop.f32.mrb[0].mxu0
        %v1320 = vadd.f32 0.0, %v1319
        %v1321 = vpop.f32.mrb[0].mxu0
        %v1322 = vpop.f32.mrb[0].mxu0
        %v1323 = vadd.f32 0.0, %v1322
        %v1324 = vpop.f32.mrb[0].mxu0
        %1325 = vmatprep.mubr.bf16.mxu0 0
        %1326 = vmatmul.mubr.bf16.gmra.mrb[0].mxu0 %v1205
        %v1327 = vpop.f32.mrb[0].mxu0
        %v1328 = vadd.f32 0.0, %v1327
        %v1329 = vpop.f32.mrb[0].mxu0
        %v1330 = vpop.f32.mrb[0].mxu0
        %v1331 = vadd.f32 0.0, %v1330
        %v1332 = vpop.f32.mrb[0].mxu0
        %1333 = vmatprep.mubr.bf16.mxu0 0
        %1334 = vmatmul.mubr.bf16.gmra.mrb[0].mxu0 %v1208
        %v1335 = vpop.f32.mrb[0].mxu0
        %v1336 = vadd.f32 0.0, %v1335
        %v1337 = vpop.f32.mrb[0].mxu0
        %v1338 = vpop.f32.mrb[0].mxu0
        %v1339 = vadd.f32 0.0, %v1338
        %v1340 = vpop.f32.mrb[0].mxu0
        %1341 = vmatprep.mubr.bf16.mxu0 0
        %1342 = vmatmul.mubr.bf16.gmra.mrb[0].mxu0 %v1211
        %v1343 = vpop.f32.mrb[0].mxu0
        %v1344 = vadd.f32 0.0, %v1343
        %v1345 = vpop.f32.mrb[0].mxu0
        %v1346 = vpop.f32.mrb[0].mxu0
        %v1347 = vadd.f32 0.0, %v1346
        %v1348 = vpop.f32.mrb[0].mxu0
        %1349 = vmatprep.mubr.bf16.mxu0 0
        %1350 = vmatmul.mubr.bf16.gmra.mrb[0].mxu0 %v1214
        %v1351 = vpop.f32.mrb[0].mxu0
        %v1352 = vadd.f32 0.0, %v1351
        %v1353 = vpop.f32.mrb[0].mxu0
        %v1354 = vpop.f32.mrb[0].mxu0
        %v1355 = vadd.f32 0.0, %v1354
        %v1356 = vpop.f32.mrb[0].mxu0
        %1357 = vmatprep.mubr.bf16.mxu0 0
        %1358 = vmatmul.mubr.bf16.gmra.mrb[0].mxu0 %v1217
        %v1359 = vpop.f32.mrb[0].mxu0
        %v1360 = vadd.f32 0.0, %v1359
        %v1361 = vpop.f32.mrb[0].mxu0
        %v1362 = vpop.f32.mrb[0].mxu0
        %v1363 = vadd.f32 0.0, %v1362
        %v1364 = vpop.f32.mrb[0].mxu0
        %1365 = vmatprep.mubr.bf16.mxu0 0
        %1366 = vmatmul.mubr.bf16.gmra.mrb[0].mxu0 %v1220
        %v1367 = vpop.f32.mrb[0].mxu0
        %v1368 = vadd.f32 0.0, %v1367
        %v1369 = vpop.f32.mrb[0].mxu0
        %v1370 = vpop.f32.mrb[0].mxu0
        %v1371 = vadd.f32 0.0, %v1370
        %v1372 = vpop.f32.mrb[0].mxu0
        %1373 = vmatprep.mubr.bf16.mxu0 0
        %1374 = vmatmul.mubr.bf16.gmra.mrb[0].mxu0 %v1223
        %v1375 = vpop.f32.mrb[0].mxu0
        %v1376 = vadd.f32 0.0, %v1375
        %v1377 = vpop.f32.mrb[0].mxu0
        %v1378 = vpop.f32.mrb[0].mxu0
        %v1379 = vadd.f32 0.0, %v1378
        %v1380 = vpop.f32.mrb[0].mxu0
        %1381 = vmatprep.mubr.bf16.mxu0 0
        %1382 = vmatmul.mubr.bf16.gmra.mrb[0].mxu0 %v1226
        %v1383 = vpop.f32.mrb[0].mxu0
        %v1384 = vadd.f32 0.0, %v1383
        %v1385 = vpop.f32.mrb[0].mxu0
        %v1386 = vpop.f32.mrb[0].mxu0
        %v1387 = vadd.f32 0.0, %v1386
        %v1388 = vpop.f32.mrb[0].mxu0
        %1389 = vmatprep.mubr.bf16.mxu0 0
        %1390 = vmatmul.mubr.bf16.gmra.mrb[0].mxu0 %v1229
        %v1391 = vpop.f32.mrb[0].mxu0
        %v1392 = vadd.f32 0.0, %v1391
        %v1393 = vpop.f32.mrb[0].mxu0
        %v1394 = vpop.f32.mrb[0].mxu0
        %v1395 = vadd.f32 0.0, %v1394
        %v1396 = vpop.f32.mrb[0].mxu0
        %1397 = vmatprep.mubr.bf16.mxu0 0
        %1398 = vmatmul.mubr.bf16.gmra.mrb[0].mxu0 %v1232
        %v1399 = vpop.f32.mrb[0].mxu0
        %v1400 = vadd.f32 0.0, %v1399
        %v1401 = vpop.f32.mrb[0].mxu0
        %v1402 = vpop.f32.mrb[0].mxu0
        %v1403 = vadd.f32 0.0, %v1402
        %v1404 = vpop.f32.mrb[0].mxu0
        %1405 = vmatprep.mubr.bf16.mxu0 0
        %1406 = vmatmul.mubr.bf16.gmra.mrb[0].mxu0 %v1235
        %v1407 = vpop.f32.mrb[0].mxu0
        %v1408 = vadd.f32 0.0, %v1407
        %v1409 = vpop.f32.mrb[0].mxu0
        %v1410 = vpop.f32.mrb[0].mxu0
        %v1411 = vadd.f32 0.0, %v1410
        %v1412 = vpop.f32.mrb[0].mxu0
        %1413 = vdwg.mxu0
        %v1414 = vadd.f32 %v856, %v1272
        %v1415 = vadd.f32 %v859, %v1275
        %v1416 = vadd.f32 %v864, %v1280
        %v1417 = vadd.f32 %v867, %v1283
        %v1418 = vadd.f32 %v872, %v1288
        %v1419 = vadd.f32 %v875, %v1291
        %v1420 = vadd.f32 %v880, %v1296
        %v1421 = vadd.f32 %v883, %v1299
        %v1422 = vadd.f32 %v888, %v1304
        %v1423 = vadd.f32 %v891, %v1307
        %v1424 = vadd.f32 %v896, %v1312
        %v1425 = vadd.f32 %v899, %v1315
        %v1426 = vadd.f32 %v904, %v1320
        %v1427 = vadd.f32 %v907, %v1323
        %v1428 = vadd.f32 %v912, %v1328
        %v1429 = vadd.f32 %v915, %v1331
        %v1430 = vadd.f32 %v920, %v1336
        %v1431 = vadd.f32 %v923, %v1339
        %v1432 = vadd.f32 %v928, %v1344
        %v1433 = vadd.f32 %v931, %v1347
        %v1434 = vadd.f32 %v936, %v1352
        %v1435 = vadd.f32 %v939, %v1355
        %v1436 = vadd.f32 %v944, %v1360
        %v1437 = vadd.f32 %v947, %v1363
        %v1438 = vadd.f32 %v952, %v1368
        %v1439 = vadd.f32 %v955, %v1371
        %v1440 = vadd.f32 %v960, %v1376
        %v1441 = vadd.f32 %v963, %v1379
        %v1442 = vadd.f32 %v968, %v1384
        %v1443 = vadd.f32 %v971, %v1387
        %v1444 = vadd.f32 %v976, %v1392
        %v1445 = vadd.f32 %v979, %v1395
        %v1446 = vadd.f32 %v984, %v1400
        %v1447 = vadd.f32 %v987, %v1403
        %v1448 = vadd.f32 %v992, %v1408
        %v1449 = vadd.f32 %v995, %v1411
        %v1450 = vld [vmem:[%s234 + $0x98] sm:$0x3]
        %s1451 = scalar_lea.vmem [#allocation2], 48
        %v1452 = vld [vmem:[%s1451] sm:$0xf]
        %v1453 = vld [vmem:[%s1451 + $0x4] sm:$0xf]
        %v1454 = vld [vmem:[%s1451 + $0x8] sm:$0xf]
        %v1455 = vld [vmem:[%s1451 + $0xc] sm:$0xf]
        %v1457 = vunpack.c.l.b16 %v1450
        %v1458 = vpack.c.b16 %v1457, %v1457
        %vm1459 = vsmask.f32 6400
        %v1461 = vshrl.u32 %v1114, 16
        %v1463 = vrot.slane %v1461, 1
        %v1464 = vshll.u32 %v1114, 16
        %v1466 = vrot.slane %v1464, 2
        %v1467 = vor.u32 %v1463, %v1466
        %v1469 = vshrl.u32 %v1115, 16
        %v1471 = vrot.slane %v1469, 1
        %v1472 = vshll.u32 %v1115, 16
        %v1474 = vrot.slane %v1472, 2
        %v1475 = vor.u32 %v1471, %v1474
        %v1476 = vsel %vm1459, %v1467, %v1475
        %v1478 = vshrl.u32 %v1116, 16
        %v1480 = vrot.slane %v1478, 1
        %v1481 = vshll.u32 %v1116, 16
        %v1483 = vrot.slane %v1481, 2
        %v1484 = vor.u32 %v1480, %v1483
        %v1485 = vsel %vm1459, %v1475, %v1484
        %v1487 = vshrl.u32 %v1117, 16
        %v1489 = vrot.slane %v1487, 1
        %v1490 = vshll.u32 %v1117, 16
        %v1492 = vrot.slane %v1490, 2
        %v1493 = vor.u32 %v1489, %v1492
        %v1494 = vsel %vm1459, %v1484, %v1493
        %v1496 = vshrl.u32 %v1118, 16
        %v1498 = vrot.slane %v1496, 1
        %v1499 = vshll.u32 %v1118, 16
        %v1501 = vrot.slane %v1499, 2
        %v1502 = vor.u32 %v1498, %v1501
        %v1503 = vsel %vm1459, %v1493, %v1502
        %v1505 = vshrl.u32 %v1119, 16
        %v1507 = vrot.slane %v1505, 1
        %v1508 = vshll.u32 %v1119, 16
        %v1510 = vrot.slane %v1508, 2
        %v1511 = vor.u32 %v1507, %v1510
        %v1512 = vsel %vm1459, %v1502, %v1511
        %v1514 = vshrl.u32 %v1120, 16
        %v1516 = vrot.slane %v1514, 1
        %v1517 = vshll.u32 %v1120, 16
        %v1519 = vrot.slane %v1517, 2
        %v1520 = vor.u32 %v1516, %v1519
        %v1521 = vsel %vm1459, %v1511, %v1520
        %v1523 = vshrl.u32 %v1121, 16
        %v1525 = vrot.slane %v1523, 1
        %v1526 = vshll.u32 %v1121, 16
        %v1528 = vrot.slane %v1526, 2
        %v1529 = vor.u32 %v1525, %v1528
        %v1530 = vsel %vm1459, %v1520, %v1529
        %v1532 = vshrl.u32 %v1122, 16
        %v1534 = vrot.slane %v1532, 1
        %v1535 = vshll.u32 %v1122, 16
        %v1537 = vrot.slane %v1535, 2
        %v1538 = vor.u32 %v1534, %v1537
        %v1539 = vsel %vm1459, %v1529, %v1538
        %v1541 = vshrl.u32 %v1123, 16
        %v1543 = vrot.slane %v1541, 1
        %v1544 = vshll.u32 %v1123, 16
        %v1546 = vrot.slane %v1544, 2
        %v1547 = vor.u32 %v1543, %v1546
        %v1548 = vsel %vm1459, %v1538, %v1547
        %v1550 = vshrl.u32 %v1124, 16
        %v1552 = vrot.slane %v1550, 1
        %v1553 = vshll.u32 %v1124, 16
        %v1555 = vrot.slane %v1553, 2
        %v1556 = vor.u32 %v1552, %v1555
        %v1557 = vsel %vm1459, %v1547, %v1556
        %v1559 = vshrl.u32 %v1125, 16
        %v1561 = vrot.slane %v1559, 1
        %v1562 = vshll.u32 %v1125, 16
        %v1564 = vrot.slane %v1562, 2
        %v1565 = vor.u32 %v1561, %v1564
        %v1566 = vsel %vm1459, %v1556, %v1565
        %v1568 = vshrl.u32 %v1126, 16
        %v1570 = vrot.slane %v1568, 1
        %v1571 = vshll.u32 %v1126, 16
        %v1573 = vrot.slane %v1571, 2
        %v1574 = vor.u32 %v1570, %v1573
        %v1575 = vsel %vm1459, %v1565, %v1574
        %v1577 = vshrl.u32 %v1127, 16
        %v1579 = vrot.slane %v1577, 1
        %v1580 = vshll.u32 %v1127, 16
        %v1582 = vrot.slane %v1580, 2
        %v1583 = vor.u32 %v1579, %v1582
        %v1584 = vsel %vm1459, %v1574, %v1583
        %v1586 = vshrl.u32 %v1128, 16
        %v1588 = vrot.slane %v1586, 1
        %v1589 = vshll.u32 %v1128, 16
        %v1591 = vrot.slane %v1589, 2
        %v1592 = vor.u32 %v1588, %v1591
        %v1593 = vsel %vm1459, %v1583, %v1592
        %v1595 = vshrl.u32 %v1129, 16
        %v1597 = vrot.slane %v1595, 1
        %v1598 = vshll.u32 %v1129, 16
        %v1600 = vrot.slane %v1598, 2
        %v1601 = vor.u32 %v1597, %v1600
        %v1602 = vsel %vm1459, %v1592, %v1601
        %v1604 = vshrl.u32 %v1130, 16
        %v1606 = vrot.slane %v1604, 1
        %v1607 = vshll.u32 %v1130, 16
        %v1609 = vrot.slane %v1607, 2
        %v1610 = vor.u32 %v1606, %v1609
        %v1611 = vsel %vm1459, %v1601, %v1610
        %v1613 = vshrl.u32 %v1131, 16
        %v1615 = vrot.slane %v1613, 1
        %v1616 = vshll.u32 %v1131, 16
        %v1618 = vrot.slane %v1616, 2
        %v1619 = vor.u32 %v1615, %v1618
        %v1620 = vsel %vm1459, %v1610, %v1619
        %v1622 = vshrl.u32 %v1458, 16
        %v1624 = vrot.slane %v1622, 1
        %v1625 = vshll.u32 %v1458, 16
        %v1627 = vrot.slane %v1625, 2
        %v1628 = vor.u32 %v1624, %v1627
        %v1629 = vsel %vm1459, %v1619, %v1628
        %v1634 = vunpack.c.l.b16 %v1452
        %v1635 = vunpack.c.l.b16 %v1453
        %v1636 = vunpack.c.l.b16 %v1454
        %v1637 = vunpack.c.l.b16 %v1455
        %v1638 = vpack.c.b16 %v1635, %v1634
        %v1639 = vpack.c.b16 %v1637, %v1636
        %v1643 = vsel %vm541, %v1476, 0
        %v1646 = vsel %vm541, %v1485, 0
        %v1649 = vsel %vm541, %v1494, 0
        %v1652 = vsel %vm541, %v1503, 0
        %v1655 = vsel %vm541, %v1512, 0
        %v1658 = vsel %vm541, %v1521, 0
        %v1661 = vsel %vm541, %v1530, 0
        %v1664 = vsel %vm541, %v1539, 0
        %v1667 = vsel %vm541, %v1548, 0
        %v1670 = vsel %vm541, %v1557, 0
        %v1673 = vsel %vm541, %v1566, 0
        %v1676 = vsel %vm541, %v1575, 0
        %v1679 = vsel %vm541, %v1584, 0
        %v1682 = vsel %vm541, %v1593, 0
        %v1685 = vsel %vm541, %v1602, 0
        %v1688 = vsel %vm541, %v1611, 0
        %v1691 = vsel %vm541, %v1620, 0
        %v1694 = vsel %vm541, %v1629, 0
        %1696 = vmatprep.subr.bf16.mxu0 0
        %1697 = vmatpush1.bf16.msra.mxu0 %v1638
        %1698 = vmatprep.subr.bf16.mxu0 0
        %1699 = vmatpush1.bf16.msra.mxu0 %v1639
        %1700 = vmatprep.subr.bf16.mxu0 0
        %1701 = vmatpush1.bf16.msra.mxu0 0
        %1702 = vmatprep.subr.bf16.mxu0 0
        %1703 = vmatpush1.bf16.msra.mxu0 0
        %1704 = vmatprep.subr.bf16.mxu0 0
        %1705 = vmatpush1.bf16.msra.mxu0 0
        %1706 = vmatprep.subr.bf16.mxu0 0
        %1707 = vmatpush1.bf16.msra.mxu0 0
        %1708 = vmatprep.subr.bf16.mxu0 0
        %1709 = vmatpush1.bf16.msra.mxu0 0
        %1710 = vmatprep.subr.bf16.mxu0 0
        %1711 = vmatpush1.bf16.msra.mxu0 0
        %1712 = vmatprep.subr.bf16.mxu0 0
        %1713 = vmatpush1.bf16.msra.mxu0 0
        %1714 = vmatprep.subr.bf16.mxu0 0
        %1715 = vmatpush1.bf16.msra.mxu0 0
        %1716 = vmatprep.subr.bf16.mxu0 0
        %1717 = vmatpush1.bf16.msra.mxu0 0
        %1718 = vmatprep.subr.bf16.mxu0 0
        %1719 = vmatpush1.bf16.msra.mxu0 0
        %1720 = vmatprep.subr.bf16.mxu0 0
        %1721 = vmatpush1.bf16.msra.mxu0 0
        %1722 = vmatprep.subr.bf16.mxu0 0
        %1723 = vmatpush1.bf16.msra.mxu0 0
        %1724 = vmatprep.subr.bf16.mxu0 0
        %1725 = vmatpush1.bf16.msra.mxu0 0
        %1726 = vmatprep.subr.bf16.mxu0 0
        %1727 = vmatpush1.bf16.msra.mxu0 0
        %1728 = vmatprep.mubr.bf16.mxu0 0
        %1729 = vmatmul.mubr.bf16.gmra.mrb[0].mxu0 %v1643
        %v1730 = vpop.f32.mrb[0].mxu0
        %v1731 = vadd.f32 0.0, %v1730
        %v1732 = vpop.f32.mrb[0].mxu0
        %v1733 = vpop.f32.mrb[0].mxu0
        %v1734 = vadd.f32 0.0, %v1733
        %v1735 = vpop.f32.mrb[0].mxu0
        %1736 = vmatprep.mubr.bf16.mxu0 0
        %1737 = vmatmul.mubr.bf16.gmra.mrb[0].mxu0 %v1646
        %v1738 = vpop.f32.mrb[0].mxu0
        %v1739 = vadd.f32 0.0, %v1738
        %v1740 = vpop.f32.mrb[0].mxu0
        %v1741 = vpop.f32.mrb[0].mxu0
        %v1742 = vadd.f32 0.0, %v1741
        %v1743 = vpop.f32.mrb[0].mxu0
        %1744 = vmatprep.mubr.bf16.mxu0 0
        %1745 = vmatmul.mubr.bf16.gmra.mrb[0].mxu0 %v1649
        %v1746 = vpop.f32.mrb[0].mxu0
        %v1747 = vadd.f32 0.0, %v1746
        %v1748 = vpop.f32.mrb[0].mxu0
        %v1749 = vpop.f32.mrb[0].mxu0
        %v1750 = vadd.f32 0.0, %v1749
        %v1751 = vpop.f32.mrb[0].mxu0
        %1752 = vmatprep.mubr.bf16.mxu0 0
        %1753 = vmatmul.mubr.bf16.gmra.mrb[0].mxu0 %v1652
        %v1754 = vpop.f32.mrb[0].mxu0
        %v1755 = vadd.f32 0.0, %v1754
        %v1756 = vpop.f32.mrb[0].mxu0
        %v1757 = vpop.f32.mrb[0].mxu0
        %v1758 = vadd.f32 0.0, %v1757
        %v1759 = vpop.f32.mrb[0].mxu0
        %1760 = vmatprep.mubr.bf16.mxu0 0
        %1761 = vmatmul.mubr.bf16.gmra.mrb[0].mxu0 %v1655
        %v1762 = vpop.f32.mrb[0].mxu0
        %v1763 = vadd.f32 0.0, %v1762
        %v1764 = vpop.f32.mrb[0].mxu0
        %v1765 = vpop.f32.mrb[0].mxu0
        %v1766 = vadd.f32 0.0, %v1765
        %v1767 = vpop.f32.mrb[0].mxu0
        %1768 = vmatprep.mubr.bf16.mxu0 0
        %1769 = vmatmul.mubr.bf16.gmra.mrb[0].mxu0 %v1658
        %v1770 = vpop.f32.mrb[0].mxu0
        %v1771 = vadd.f32 0.0, %v1770
        %v1772 = vpop.f32.mrb[0].mxu0
        %v1773 = vpop.f32.mrb[0].mxu0
        %v1774 = vadd.f32 0.0, %v1773
        %v1775 = vpop.f32.mrb[0].mxu0
        %1776 = vmatprep.mubr.bf16.mxu0 0
        %1777 = vmatmul.mubr.bf16.gmra.mrb[0].mxu0 %v1661
        %v1778 = vpop.f32.mrb[0].mxu0
        %v1779 = vadd.f32 0.0, %v1778
        %v1780 = vpop.f32.mrb[0].mxu0
        %v1781 = vpop.f32.mrb[0].mxu0
        %v1782 = vadd.f32 0.0, %v1781
        %v1783 = vpop.f32.mrb[0].mxu0
        %1784 = vmatprep.mubr.bf16.mxu0 0
        %1785 = vmatmul.mubr.bf16.gmra.mrb[0].mxu0 %v1664
        %v1786 = vpop.f32.mrb[0].mxu0
        %v1787 = vadd.f32 0.0, %v1786
        %v1788 = vpop.f32.mrb[0].mxu0
        %v1789 = vpop.f32.mrb[0].mxu0
        %v1790 = vadd.f32 0.0, %v1789
        %v1791 = vpop.f32.mrb[0].mxu0
        %1792 = vmatprep.mubr.bf16.mxu0 0
        %1793 = vmatmul.mubr.bf16.gmra.mrb[0].mxu0 %v1667
        %v1794 = vpop.f32.mrb[0].mxu0
        %v1795 = vadd.f32 0.0, %v1794
        %v1796 = vpop.f32.mrb[0].mxu0
        %v1797 = vpop.f32.mrb[0].mxu0
        %v1798 = vadd.f32 0.0, %v1797
        %v1799 = vpop.f32.mrb[0].mxu0
        %1800 = vmatprep.mubr.bf16.mxu0 0
        %1801 = vmatmul.mubr.bf16.gmra.mrb[0].mxu0 %v1670
        %v1802 = vpop.f32.mrb[0].mxu0
        %v1803 = vadd.f32 0.0, %v1802
        %v1804 = vpop.f32.mrb[0].mxu0
        %v1805 = vpop.f32.mrb[0].mxu0
        %v1806 = vadd.f32 0.0, %v1805
        %v1807 = vpop.f32.mrb[0].mxu0
        %1808 = vmatprep.mubr.bf16.mxu0 0
        %1809 = vmatmul.mubr.bf16.gmra.mrb[0].mxu0 %v1673
        %v1810 = vpop.f32.mrb[0].mxu0
        %v1811 = vadd.f32 0.0, %v1810
        %v1812 = vpop.f32.mrb[0].mxu0
        %v1813 = vpop.f32.mrb[0].mxu0
        %v1814 = vadd.f32 0.0, %v1813
        %v1815 = vpop.f32.mrb[0].mxu0
        %1816 = vmatprep.mubr.bf16.mxu0 0
        %1817 = vmatmul.mubr.bf16.gmra.mrb[0].mxu0 %v1676
        %v1818 = vpop.f32.mrb[0].mxu0
        %v1819 = vadd.f32 0.0, %v1818
        %v1820 = vpop.f32.mrb[0].mxu0
        %v1821 = vpop.f32.mrb[0].mxu0
        %v1822 = vadd.f32 0.0, %v1821
        %v1823 = vpop.f32.mrb[0].mxu0
        %1824 = vmatprep.mubr.bf16.mxu0 0
        %1825 = vmatmul.mubr.bf16.gmra.mrb[0].mxu0 %v1679
        %v1826 = vpop.f32.mrb[0].mxu0
        %v1827 = vadd.f32 0.0, %v1826
        %v1828 = vpop.f32.mrb[0].mxu0
        %v1829 = vpop.f32.mrb[0].mxu0
        %v1830 = vadd.f32 0.0, %v1829
        %v1831 = vpop.f32.mrb[0].mxu0
        %1832 = vmatprep.mubr.bf16.mxu0 0
        %1833 = vmatmul.mubr.bf16.gmra.mrb[0].mxu0 %v1682
        %v1834 = vpop.f32.mrb[0].mxu0
        %v1835 = vadd.f32 0.0, %v1834
        %v1836 = vpop.f32.mrb[0].mxu0
        %v1837 = vpop.f32.mrb[0].mxu0
        %v1838 = vadd.f32 0.0, %v1837
        %v1839 = vpop.f32.mrb[0].mxu0
        %1840 = vmatprep.mubr.bf16.mxu0 0
        %1841 = vmatmul.mubr.bf16.gmra.mrb[0].mxu0 %v1685
        %v1842 = vpop.f32.mrb[0].mxu0
        %v1843 = vadd.f32 0.0, %v1842
        %v1844 = vpop.f32.mrb[0].mxu0
        %v1845 = vpop.f32.mrb[0].mxu0
        %v1846 = vadd.f32 0.0, %v1845
        %v1847 = vpop.f32.mrb[0].mxu0
        %1848 = vmatprep.mubr.bf16.mxu0 0
        %1849 = vmatmul.mubr.bf16.gmra.mrb[0].mxu0 %v1688
        %v1850 = vpop.f32.mrb[0].mxu0
        %v1851 = vadd.f32 0.0, %v1850
        %v1852 = vpop.f32.mrb[0].mxu0
        %v1853 = vpop.f32.mrb[0].mxu0
        %v1854 = vadd.f32 0.0, %v1853
        %v1855 = vpop.f32.mrb[0].mxu0
        %1856 = vmatprep.mubr.bf16.mxu0 0
        %1857 = vmatmul.mubr.bf16.gmra.mrb[0].mxu0 %v1691
        %v1858 = vpop.f32.mrb[0].mxu0
        %v1859 = vadd.f32 0.0, %v1858
        %v1860 = vpop.f32.mrb[0].mxu0
        %v1861 = vpop.f32.mrb[0].mxu0
        %v1862 = vadd.f32 0.0, %v1861
        %v1863 = vpop.f32.mrb[0].mxu0
        %1864 = vmatprep.mubr.bf16.mxu0 0
        %1865 = vmatmul.mubr.bf16.gmra.mrb[0].mxu0 %v1694
        %v1866 = vpop.f32.mrb[0].mxu0
        %v1867 = vadd.f32 0.0, %v1866
        %v1868 = vpop.f32.mrb[0].mxu0
        %v1869 = vpop.f32.mrb[0].mxu0
        %v1870 = vadd.f32 0.0, %v1869
        %v1871 = vpop.f32.mrb[0].mxu0
        %1872 = vdwg.mxu0
        %v1873 = vadd.f32 %v1414, %v1731
        %v1874 = vadd.f32 %v1415, %v1734
        %v1875 = vadd.f32 %v1416, %v1739
        %v1876 = vadd.f32 %v1417, %v1742
        %v1877 = vadd.f32 %v1418, %v1747
        %v1878 = vadd.f32 %v1419, %v1750
        %v1879 = vadd.f32 %v1420, %v1755
        %v1880 = vadd.f32 %v1421, %v1758
        %v1881 = vadd.f32 %v1422, %v1763
        %v1882 = vadd.f32 %v1423, %v1766
        %v1883 = vadd.f32 %v1424, %v1771
        %v1884 = vadd.f32 %v1425, %v1774
        %v1885 = vadd.f32 %v1426, %v1779
        %v1886 = vadd.f32 %v1427, %v1782
        %v1887 = vadd.f32 %v1428, %v1787
        %v1888 = vadd.f32 %v1429, %v1790
        %v1889 = vadd.f32 %v1430, %v1795
        %v1890 = vadd.f32 %v1431, %v1798
        %v1891 = vadd.f32 %v1432, %v1803
        %v1892 = vadd.f32 %v1433, %v1806
        %v1893 = vadd.f32 %v1434, %v1811
        %v1894 = vadd.f32 %v1435, %v1814
        %v1895 = vadd.f32 %v1436, %v1819
        %v1896 = vadd.f32 %v1437, %v1822
        %v1897 = vadd.f32 %v1438, %v1827
        %v1898 = vadd.f32 %v1439, %v1830
        %v1899 = vadd.f32 %v1440, %v1835
        %v1900 = vadd.f32 %v1441, %v1838
        %v1901 = vadd.f32 %v1442, %v1843
        %v1902 = vadd.f32 %v1443, %v1846
        %v1903 = vadd.f32 %v1444, %v1851
        %v1904 = vadd.f32 %v1445, %v1854
        %v1905 = vadd.f32 %v1446, %v1859
        %v1906 = vadd.f32 %v1447, %v1862
        %v1907 = vadd.f32 %v1448, %v1867
        %v1908 = vadd.f32 %v1449, %v1870
        %v1909 = vld [vmem:[#allocation6] sm:$0xff]
        %v1910 = vld [vmem:[#allocation6 + $0x8] sm:$0xff]
        %v1911 = vld [vmem:[#allocation6 + $0x10] sm:$0xff]
        %v1912 = vld [vmem:[#allocation6 + $0x18] sm:$0xff]
        %v1913 = vld [vmem:[#allocation6 + $0x20] sm:$0xff]
        %v1914 = vld [vmem:[#allocation6 + $0x28] sm:$0xff]
        %v1915 = vld [vmem:[#allocation6 + $0x30] sm:$0xff]
        %v1916 = vld [vmem:[#allocation6 + $0x38] sm:$0xff]
        %v1917 = vld [vmem:[#allocation6 + $0x40] sm:$0xff]
        %v1918 = vld [vmem:[#allocation6 + $0x48] sm:$0xff]
        %v1919 = vld [vmem:[#allocation6 + $0x50] sm:$0xff]
        %v1920 = vld [vmem:[#allocation6 + $0x58] sm:$0xff]
        %v1921 = vld [vmem:[#allocation6 + $0x60] sm:$0xff]
        %v1922 = vld [vmem:[#allocation6 + $0x68] sm:$0xff]
        %v1923 = vld [vmem:[#allocation6 + $0x70] sm:$0xff]
        %v1924 = vld [vmem:[#allocation6 + $0x78] sm:$0xff]
        %v1925 = vld [vmem:[#allocation6 + $0x80] sm:$0xff]
        %v1926 = vld [vmem:[#allocation6 + $0x88] sm:$0xff]
        %v1927 = vld [vmem:[#allocation6 + $0x90] sm:$0xff]
        %v1928 = vld [vmem:[#allocation6 + $0x98] sm:$0xff]
        %v1929 = vld [vmem:[#allocation6 + $0xa0] sm:$0xff]
        %v1930 = vld [vmem:[#allocation6 + $0xa8] sm:$0xff]
        %v1931 = vld [vmem:[#allocation6 + $0xb0] sm:$0xff]
        %v1932 = vld [vmem:[#allocation6 + $0xb8] sm:$0xff]
        %v1933 = vld [vmem:[#allocation6 + $0xc0] sm:$0xff]
        %v1934 = vld [vmem:[#allocation6 + $0xc8] sm:$0xff]
        %v1935 = vld [vmem:[#allocation6 + $0xd0] sm:$0xff]
        %v1936 = vld [vmem:[#allocation6 + $0xd8] sm:$0xff]
        %v1937 = vld [vmem:[#allocation6 + $0xe0] sm:$0xff]
        %v1938 = vld [vmem:[#allocation6 + $0xe8] sm:$0xff]
        %v1939 = vld [vmem:[#allocation6 + $0xf0] sm:$0xff]
        %v1940 = vld [vmem:[#allocation6 + $0xf8] sm:$0xff]
        %v1941 = vld [vmem:[#allocation6 + $0x100] sm:$0xff]
        %v1942 = vld [vmem:[#allocation6 + $0x108] sm:$0xff]
        %v1943 = vld [vmem:[#allocation6 + $0x110] sm:$0xff]
        %v1944 = vld [vmem:[#allocation6 + $0x118] sm:$0xff]
        %v1945 = vld [vmem:[#allocation4] sm:$0x1]
        %v1947 = vlaneseq
        %v1948 = vshrl.u32 %v1947, 7
        %v1949 = vsub.s32 0, %v1948
        %v1950 = vrot.slane %v1945, %v1949
        %v1952 = vadd.f32 %v1873, %v1950
        %v1953 = vadd.f32 %v1874, %v1950
        %v1954 = vadd.f32 %v1875, %v1950
        %v1955 = vadd.f32 %v1876, %v1950
        %v1956 = vadd.f32 %v1877, %v1950
        %v1957 = vadd.f32 %v1878, %v1950
        %v1958 = vadd.f32 %v1879, %v1950
        %v1959 = vadd.f32 %v1880, %v1950
        %v1960 = vadd.f32 %v1881, %v1950
        %v1961 = vadd.f32 %v1882, %v1950
        %v1962 = vadd.f32 %v1883, %v1950
        %v1963 = vadd.f32 %v1884, %v1950
        %v1964 = vadd.f32 %v1885, %v1950
        %v1965 = vadd.f32 %v1886, %v1950
        %v1966 = vadd.f32 %v1887, %v1950
        %v1967 = vadd.f32 %v1888, %v1950
        %v1968 = vadd.f32 %v1889, %v1950
        %v1969 = vadd.f32 %v1890, %v1950
        %v1970 = vadd.f32 %v1891, %v1950
        %v1971 = vadd.f32 %v1892, %v1950
        %v1972 = vadd.f32 %v1893, %v1950
        %v1973 = vadd.f32 %v1894, %v1950
        %v1974 = vadd.f32 %v1895, %v1950
        %v1975 = vadd.f32 %v1896, %v1950
        %v1976 = vadd.f32 %v1897, %v1950
        %v1977 = vadd.f32 %v1898, %v1950
        %v1978 = vadd.f32 %v1899, %v1950
        %v1979 = vadd.f32 %v1900, %v1950
        %v1980 = vadd.f32 %v1901, %v1950
        %v1981 = vadd.f32 %v1902, %v1950
        %v1982 = vadd.f32 %v1903, %v1950
        %v1983 = vadd.f32 %v1904, %v1950
        %v1984 = vadd.f32 %v1905, %v1950
        %v1985 = vadd.f32 %v1906, %v1950
        %v1986 = vadd.f32 %v1907, %v1950
        %v1987 = vadd.f32 %v1908, %v1950
        %vm1988 = vcmp.gt.f32.partialorder %v1952, 0.0
        %vm1989 = vcmp.gt.f32.partialorder %v1953, 0.0
        %vm1990 = vcmp.gt.f32.partialorder %v1954, 0.0
        %vm1991 = vcmp.gt.f32.partialorder %v1955, 0.0
        %vm1992 = vcmp.gt.f32.partialorder %v1956, 0.0
        %vm1993 = vcmp.gt.f32.partialorder %v1957, 0.0
        %vm1994 = vcmp.gt.f32.partialorder %v1958, 0.0
        %vm1995 = vcmp.gt.f32.partialorder %v1959, 0.0
        %vm1996 = vcmp.gt.f32.partialorder %v1960, 0.0
        %vm1997 = vcmp.gt.f32.partialorder %v1961, 0.0
        %vm1998 = vcmp.gt.f32.partialorder %v1962, 0.0
        %vm1999 = vcmp.gt.f32.partialorder %v1963, 0.0
        %vm2000 = vcmp.gt.f32.partialorder %v1964, 0.0
        %vm2001 = vcmp.gt.f32.partialorder %v1965, 0.0
        %vm2002 = vcmp.gt.f32.partialorder %v1966, 0.0
        %vm2003 = vcmp.gt.f32.partialorder %v1967, 0.0
        %vm2004 = vcmp.gt.f32.partialorder %v1968, 0.0
        %vm2005 = vcmp.gt.f32.partialorder %v1969, 0.0
        %vm2006 = vcmp.gt.f32.partialorder %v1970, 0.0
        %vm2007 = vcmp.gt.f32.partialorder %v1971, 0.0
        %vm2008 = vcmp.gt.f32.partialorder %v1972, 0.0
        %vm2009 = vcmp.gt.f32.partialorder %v1973, 0.0
        %vm2010 = vcmp.gt.f32.partialorder %v1974, 0.0
        %vm2011 = vcmp.gt.f32.partialorder %v1975, 0.0
        %vm2012 = vcmp.gt.f32.partialorder %v1976, 0.0
        %vm2013 = vcmp.gt.f32.partialorder %v1977, 0.0
        %vm2014 = vcmp.gt.f32.partialorder %v1978, 0.0
        %vm2015 = vcmp.gt.f32.partialorder %v1979, 0.0
        %vm2016 = vcmp.gt.f32.partialorder %v1980, 0.0
        %vm2017 = vcmp.gt.f32.partialorder %v1981, 0.0
        %vm2018 = vcmp.gt.f32.partialorder %v1982, 0.0
        %vm2019 = vcmp.gt.f32.partialorder %v1983, 0.0
        %vm2020 = vcmp.gt.f32.partialorder %v1984, 0.0
        %vm2021 = vcmp.gt.f32.partialorder %v1985, 0.0
        %vm2022 = vcmp.gt.f32.partialorder %v1986, 0.0
        %vm2023 = vcmp.gt.f32.partialorder %v1987, 0.0
        %v2024 = vmul.f32 %v1952, 0.2
        %v2025 = vmul.f32 %v1953, 0.2
        %v2026 = vmul.f32 %v1954, 0.2
        %v2027 = vmul.f32 %v1955, 0.2
        %v2028 = vmul.f32 %v1956, 0.2
        %v2029 = vmul.f32 %v1957, 0.2
        %v2030 = vmul.f32 %v1958, 0.2
        %v2031 = vmul.f32 %v1959, 0.2
        %v2032 = vmul.f32 %v1960, 0.2
        %v2033 = vmul.f32 %v1961, 0.2
        %v2034 = vmul.f32 %v1962, 0.2
        %v2035 = vmul.f32 %v1963, 0.2
        %v2036 = vmul.f32 %v1964, 0.2
        %v2037 = vmul.f32 %v1965, 0.2
        %v2038 = vmul.f32 %v1966, 0.2
        %v2039 = vmul.f32 %v1967, 0.2
        %v2040 = vmul.f32 %v1968, 0.2
        %v2041 = vmul.f32 %v1969, 0.2
        %v2042 = vmul.f32 %v1970, 0.2
        %v2043 = vmul.f32 %v1971, 0.2
        %v2044 = vmul.f32 %v1972, 0.2
        %v2045 = vmul.f32 %v1973, 0.2
        %v2046 = vmul.f32 %v1974, 0.2
        %v2047 = vmul.f32 %v1975, 0.2
        %v2048 = vmul.f32 %v1976, 0.2
        %v2049 = vmul.f32 %v1977, 0.2
        %v2050 = vmul.f32 %v1978, 0.2
        %v2051 = vmul.f32 %v1979, 0.2
        %v2052 = vmul.f32 %v1980, 0.2
        %v2053 = vmul.f32 %v1981, 0.2
        %v2054 = vmul.f32 %v1982, 0.2
        %v2055 = vmul.f32 %v1983, 0.2
        %v2056 = vmul.f32 %v1984, 0.2
        %v2057 = vmul.f32 %v1985, 0.2
        %v2058 = vmul.f32 %v1986, 0.2
        %v2059 = vmul.f32 %v1987, 0.2
        %v2060 = vsel %vm1988, %v1952, %v2024
        %v2061 = vsel %vm1989, %v1953, %v2025
        %v2062 = vsel %vm1990, %v1954, %v2026
        %v2063 = vsel %vm1991, %v1955, %v2027
        %v2064 = vsel %vm1992, %v1956, %v2028
        %v2065 = vsel %vm1993, %v1957, %v2029
        %v2066 = vsel %vm1994, %v1958, %v2030
        %v2067 = vsel %vm1995, %v1959, %v2031
        %v2068 = vsel %vm1996, %v1960, %v2032
        %v2069 = vsel %vm1997, %v1961, %v2033
        %v2070 = vsel %vm1998, %v1962, %v2034
        %v2071 = vsel %vm1999, %v1963, %v2035
        %v2072 = vsel %vm2000, %v1964, %v2036
        %v2073 = vsel %vm2001, %v1965, %v2037
        %v2074 = vsel %vm2002, %v1966, %v2038
        %v2075 = vsel %vm2003, %v1967, %v2039
        %v2076 = vsel %vm2004, %v1968, %v2040
        %v2077 = vsel %vm2005, %v1969, %v2041
        %v2078 = vsel %vm2006, %v1970, %v2042
        %v2079 = vsel %vm2007, %v1971, %v2043
        %v2080 = vsel %vm2008, %v1972, %v2044
        %v2081 = vsel %vm2009, %v1973, %v2045
        %v2082 = vsel %vm2010, %v1974, %v2046
        %v2083 = vsel %vm2011, %v1975, %v2047
        %v2084 = vsel %vm2012, %v1976, %v2048
        %v2085 = vsel %vm2013, %v1977, %v2049
        %v2086 = vsel %vm2014, %v1978, %v2050
        %v2087 = vsel %vm2015, %v1979, %v2051
        %v2088 = vsel %vm2016, %v1980, %v2052
        %v2089 = vsel %vm2017, %v1981, %v2053
        %v2090 = vsel %vm2018, %v1982, %v2054
        %v2091 = vsel %vm2019, %v1983, %v2055
        %v2092 = vsel %vm2020, %v1984, %v2056
        %v2093 = vsel %vm2021, %v1985, %v2057
        %v2094 = vsel %vm2022, %v1986, %v2058
        %v2095 = vsel %vm2023, %v1987, %v2059
        %2097 = vset.pattern.permute.xlu0 0
        %2098 = vperm.xlu0 %2097, %v1909
        %v2099 = vpop.permute.xlu0 %2098
        %2102 = vset.pattern.permute.xlu0 0
        %2103 = vperm.xlu0 %2102, %v1910
        %v2104 = vpop.permute.xlu0 %2103
        %2107 = vset.pattern.permute.xlu0 0
        %2108 = vperm.xlu0 %2107, %v1911
        %v2109 = vpop.permute.xlu0 %2108
        %2112 = vset.pattern.permute.xlu0 0
        %2113 = vperm.xlu0 %2112, %v1912
        %v2114 = vpop.permute.xlu0 %2113
        %2117 = vset.pattern.permute.xlu0 0
        %2118 = vperm.xlu0 %2117, %v1913
        %v2119 = vpop.permute.xlu0 %2118
        %2122 = vset.pattern.permute.xlu0 0
        %2123 = vperm.xlu0 %2122, %v1914
        %v2124 = vpop.permute.xlu0 %2123
        %2127 = vset.pattern.permute.xlu0 0
        %2128 = vperm.xlu0 %2127, %v1915
        %v2129 = vpop.permute.xlu0 %2128
        %2132 = vset.pattern.permute.xlu0 0
        %2133 = vperm.xlu0 %2132, %v1916
        %v2134 = vpop.permute.xlu0 %2133
        %2137 = vset.pattern.permute.xlu0 0
        %2138 = vperm.xlu0 %2137, %v1917
        %v2139 = vpop.permute.xlu0 %2138
        %2142 = vset.pattern.permute.xlu0 0
        %2143 = vperm.xlu0 %2142, %v1918
        %v2144 = vpop.permute.xlu0 %2143
        %2147 = vset.pattern.permute.xlu0 0
        %2148 = vperm.xlu0 %2147, %v1919
        %v2149 = vpop.permute.xlu0 %2148
        %2152 = vset.pattern.permute.xlu0 0
        %2153 = vperm.xlu0 %2152, %v1920
        %v2154 = vpop.permute.xlu0 %2153
        %2157 = vset.pattern.permute.xlu0 0
        %2158 = vperm.xlu0 %2157, %v1921
        %v2159 = vpop.permute.xlu0 %2158
        %2162 = vset.pattern.permute.xlu0 0
        %2163 = vperm.xlu0 %2162, %v1922
        %v2164 = vpop.permute.xlu0 %2163
        %2167 = vset.pattern.permute.xlu0 0
        %2168 = vperm.xlu0 %2167, %v1923
        %v2169 = vpop.permute.xlu0 %2168
        %2172 = vset.pattern.permute.xlu0 0
        %2173 = vperm.xlu0 %2172, %v1924
        %v2174 = vpop.permute.xlu0 %2173
        %2177 = vset.pattern.permute.xlu0 0
        %2178 = vperm.xlu0 %2177, %v1925
        %v2179 = vpop.permute.xlu0 %2178
        %2182 = vset.pattern.permute.xlu0 0
        %2183 = vperm.xlu0 %2182, %v1926
        %v2184 = vpop.permute.xlu0 %2183
        %2187 = vset.pattern.permute.xlu0 0
        %2188 = vperm.xlu0 %2187, %v1927
        %v2189 = vpop.permute.xlu0 %2188
        %2192 = vset.pattern.permute.xlu0 0
        %2193 = vperm.xlu0 %2192, %v1928
        %v2194 = vpop.permute.xlu0 %2193
        %2197 = vset.pattern.permute.xlu0 0
        %2198 = vperm.xlu0 %2197, %v1929
        %v2199 = vpop.permute.xlu0 %2198
        %2202 = vset.pattern.permute.xlu0 0
        %2203 = vperm.xlu0 %2202, %v1930
        %v2204 = vpop.permute.xlu0 %2203
        %2207 = vset.pattern.permute.xlu0 0
        %2208 = vperm.xlu0 %2207, %v1931
        %v2209 = vpop.permute.xlu0 %2208
        %2212 = vset.pattern.permute.xlu0 0
        %2213 = vperm.xlu0 %2212, %v1932
        %v2214 = vpop.permute.xlu0 %2213
        %2217 = vset.pattern.permute.xlu0 0
        %2218 = vperm.xlu0 %2217, %v1933
        %v2219 = vpop.permute.xlu0 %2218
        %2222 = vset.pattern.permute.xlu0 0
        %2223 = vperm.xlu0 %2222, %v1934
        %v2224 = vpop.permute.xlu0 %2223
        %2227 = vset.pattern.permute.xlu0 0
        %2228 = vperm.xlu0 %2227, %v1935
        %v2229 = vpop.permute.xlu0 %2228
        %2232 = vset.pattern.permute.xlu0 0
        %2233 = vperm.xlu0 %2232, %v1936
        %v2234 = vpop.permute.xlu0 %2233
        %2237 = vset.pattern.permute.xlu0 0
        %2238 = vperm.xlu0 %2237, %v1937
        %v2239 = vpop.permute.xlu0 %2238
        %2242 = vset.pattern.permute.xlu0 0
        %2243 = vperm.xlu0 %2242, %v1938
        %v2244 = vpop.permute.xlu0 %2243
        %2247 = vset.pattern.permute.xlu0 0
        %2248 = vperm.xlu0 %2247, %v1939
        %v2249 = vpop.permute.xlu0 %2248
        %2252 = vset.pattern.permute.xlu0 0
        %2253 = vperm.xlu0 %2252, %v1940
        %v2254 = vpop.permute.xlu0 %2253
        %2257 = vset.pattern.permute.xlu0 0
        %2258 = vperm.xlu0 %2257, %v1941
        %v2259 = vpop.permute.xlu0 %2258
        %2262 = vset.pattern.permute.xlu0 0
        %2263 = vperm.xlu0 %2262, %v1942
        %v2264 = vpop.permute.xlu0 %2263
        %2267 = vset.pattern.permute.xlu0 0
        %2268 = vperm.xlu0 %2267, %v1943
        %v2269 = vpop.permute.xlu0 %2268
        %2272 = vset.pattern.permute.xlu0 0
        %2273 = vperm.xlu0 %2272, %v1944
        %v2274 = vpop.permute.xlu0 %2273
        %v2276 = vmul.f32 %v2060, %v2099
        %v2277 = vmul.f32 %v2061, %v2104
        %v2278 = vmul.f32 %v2062, %v2109
        %v2279 = vmul.f32 %v2063, %v2114
        %v2280 = vmul.f32 %v2064, %v2119
        %v2281 = vmul.f32 %v2065, %v2124
        %v2282 = vmul.f32 %v2066, %v2129
        %v2283 = vmul.f32 %v2067, %v2134
        %v2284 = vmul.f32 %v2068, %v2139
        %v2285 = vmul.f32 %v2069, %v2144
        %v2286 = vmul.f32 %v2070, %v2149
        %v2287 = vmul.f32 %v2071, %v2154
        %v2288 = vmul.f32 %v2072, %v2159
        %v2289 = vmul.f32 %v2073, %v2164
        %v2290 = vmul.f32 %v2074, %v2169
        %v2291 = vmul.f32 %v2075, %v2174
        %v2292 = vmul.f32 %v2076, %v2179
        %v2293 = vmul.f32 %v2077, %v2184
        %v2294 = vmul.f32 %v2078, %v2189
        %v2295 = vmul.f32 %v2079, %v2194
        %v2296 = vmul.f32 %v2080, %v2199
        %v2297 = vmul.f32 %v2081, %v2204
        %v2298 = vmul.f32 %v2082, %v2209
        %v2299 = vmul.f32 %v2083, %v2214
        %v2300 = vmul.f32 %v2084, %v2219
        %v2301 = vmul.f32 %v2085, %v2224
        %v2302 = vmul.f32 %v2086, %v2229
        %v2303 = vmul.f32 %v2087, %v2234
        %v2304 = vmul.f32 %v2088, %v2239
        %v2305 = vmul.f32 %v2089, %v2244
        %v2306 = vmul.f32 %v2090, %v2249
        %v2307 = vmul.f32 %v2091, %v2254
        %v2308 = vmul.f32 %v2092, %v2259
        %v2309 = vmul.f32 %v2093, %v2264
        %v2310 = vmul.f32 %v2094, %v2269
        %v2311 = vmul.f32 %v2095, %v2274
        %v2312 = vpack.c.bf16 %v2277, %v2276
        %v2313 = vpack.c.bf16 %v2279, %v2278
        %v2314 = vpack.c.bf16 %v2281, %v2280
        %v2315 = vpack.c.bf16 %v2283, %v2282
        %v2316 = vpack.c.bf16 %v2285, %v2284
        %v2317 = vpack.c.bf16 %v2287, %v2286
        %v2318 = vpack.c.bf16 %v2289, %v2288
        %v2319 = vpack.c.bf16 %v2291, %v2290
        %v2320 = vpack.c.bf16 %v2293, %v2292
        %v2321 = vpack.c.bf16 %v2295, %v2294
        %v2322 = vpack.c.bf16 %v2297, %v2296
        %v2323 = vpack.c.bf16 %v2299, %v2298
        %v2324 = vpack.c.bf16 %v2301, %v2300
        %v2325 = vpack.c.bf16 %v2303, %v2302
        %v2326 = vpack.c.bf16 %v2305, %v2304
        %v2327 = vpack.c.bf16 %v2307, %v2306
        %v2328 = vpack.c.bf16 %v2309, %v2308
        %v2329 = vpack.c.bf16 %v2311, %v2310
        %v2348 = vunpack.c.l.b16 %v2312
        %v2349 = vunpack.c.h.b16 %v2312
        %v2350 = vunpack.c.l.b16 %v2313
        %v2351 = vunpack.c.h.b16 %v2313
        %v2352 = vunpack.c.l.b16 %v2314
        %v2353 = vunpack.c.h.b16 %v2314
        %v2354 = vunpack.c.l.b16 %v2315
        %v2355 = vunpack.c.h.b16 %v2315
        %v2356 = vunpack.c.l.b16 %v2316
        %v2357 = vunpack.c.h.b16 %v2316
        %v2358 = vunpack.c.l.b16 %v2317
        %v2359 = vunpack.c.h.b16 %v2317
        %v2360 = vunpack.c.l.b16 %v2318
        %v2361 = vunpack.c.h.b16 %v2318
        %v2362 = vunpack.c.l.b16 %v2319
        %v2363 = vunpack.c.h.b16 %v2319
        %v2364 = vunpack.c.l.b16 %v2320
        %v2365 = vunpack.c.h.b16 %v2320
        %v2366 = vunpack.c.l.b16 %v2321
        %v2367 = vunpack.c.h.b16 %v2321
        %v2368 = vunpack.c.l.b16 %v2322
        %v2369 = vunpack.c.h.b16 %v2322
        %v2370 = vunpack.c.l.b16 %v2323
        %v2371 = vunpack.c.h.b16 %v2323
        %v2372 = vunpack.c.l.b16 %v2324
        %v2373 = vunpack.c.h.b16 %v2324
        %v2374 = vunpack.c.l.b16 %v2325
        %v2375 = vunpack.c.h.b16 %v2325
        %v2376 = vunpack.c.l.b16 %v2326
        %v2377 = vunpack.c.h.b16 %v2326
        %v2378 = vunpack.c.l.b16 %v2327
        %v2379 = vunpack.c.h.b16 %v2327
        %v2380 = vunpack.c.l.b16 %v2328
        %v2381 = vunpack.c.h.b16 %v2328
        %v2382 = vunpack.c.l.b16 %v2329
        %v2383 = vunpack.c.h.b16 %v2329
        %v2384 = vpack.c.b16 %v2348, %v2348
        %v2385 = vpack.c.b16 %v2349, %v2349
        %v2386 = vpack.c.b16 %v2350, %v2350
        %v2387 = vpack.c.b16 %v2351, %v2351
        %v2388 = vpack.c.b16 %v2352, %v2352
        %v2389 = vpack.c.b16 %v2353, %v2353
        %v2390 = vpack.c.b16 %v2354, %v2354
        %v2391 = vpack.c.b16 %v2355, %v2355
        %v2392 = vpack.c.b16 %v2356, %v2356
        %v2393 = vpack.c.b16 %v2357, %v2357
        %v2394 = vpack.c.b16 %v2358, %v2358
        %v2395 = vpack.c.b16 %v2359, %v2359
        %v2396 = vpack.c.b16 %v2360, %v2360
        %v2397 = vpack.c.b16 %v2361, %v2361
        %v2398 = vpack.c.b16 %v2362, %v2362
        %v2399 = vpack.c.b16 %v2363, %v2363
        %v2400 = vpack.c.b16 %v2364, %v2364
        %v2401 = vpack.c.b16 %v2365, %v2365
        %v2402 = vpack.c.b16 %v2366, %v2366
        %v2403 = vpack.c.b16 %v2367, %v2367
        %v2404 = vpack.c.b16 %v2368, %v2368
        %v2405 = vpack.c.b16 %v2369, %v2369
        %v2406 = vpack.c.b16 %v2370, %v2370
        %v2407 = vpack.c.b16 %v2371, %v2371
        %v2408 = vpack.c.b16 %v2372, %v2372
        %v2409 = vpack.c.b16 %v2373, %v2373
        %v2410 = vpack.c.b16 %v2374, %v2374
        %v2411 = vpack.c.b16 %v2375, %v2375
        %v2412 = vpack.c.b16 %v2376, %v2376
        %v2413 = vpack.c.b16 %v2377, %v2377
        %v2414 = vpack.c.b16 %v2378, %v2378
        %v2415 = vpack.c.b16 %v2379, %v2379
        %v2416 = vpack.c.b16 %v2380, %v2380
        %v2417 = vpack.c.b16 %v2381, %v2381
        %v2418 = vpack.c.b16 %v2382, %v2382
        %v2419 = vpack.c.b16 %v2383, %v2383
        %2456 = vst [vmem:[%s239] sm:$0xf] %v2384
        %2457 = vst [vmem:[%s239 + $0x4] sm:$0xf] %v2385
        %2458 = vst [vmem:[%s239 + $0x8] sm:$0xf] %v2386
        %2459 = vst [vmem:[%s239 + $0xc] sm:$0xf] %v2387
        %2460 = vst [vmem:[%s239 + $0x10] sm:$0xf] %v2388
        %2461 = vst [vmem:[%s239 + $0x14] sm:$0xf] %v2389
        %2462 = vst [vmem:[%s239 + $0x18] sm:$0xf] %v2390
        %2463 = vst [vmem:[%s239 + $0x1c] sm:$0xf] %v2391
        %2464 = vst [vmem:[%s239 + $0x20] sm:$0xf] %v2392
        %2465 = vst [vmem:[%s239 + $0x24] sm:$0xf] %v2393
        %2466 = vst [vmem:[%s239 + $0x28] sm:$0xf] %v2394
        %2467 = vst [vmem:[%s239 + $0x2c] sm:$0xf] %v2395
        %2468 = vst [vmem:[%s239 + $0x30] sm:$0xf] %v2396
        %2469 = vst [vmem:[%s239 + $0x34] sm:$0xf] %v2397
        %2470 = vst [vmem:[%s239 + $0x38] sm:$0xf] %v2398
        %2471 = vst [vmem:[%s239 + $0x3c] sm:$0xf] %v2399
        %2472 = vst [vmem:[%s239 + $0x40] sm:$0xf] %v2400
        %2473 = vst [vmem:[%s239 + $0x44] sm:$0xf] %v2401
        %2474 = vst [vmem:[%s239 + $0x48] sm:$0xf] %v2402
        %2475 = vst [vmem:[%s239 + $0x4c] sm:$0xf] %v2403
        %2476 = vst [vmem:[%s239 + $0x50] sm:$0xf] %v2404
        %2477 = vst [vmem:[%s239 + $0x54] sm:$0xf] %v2405
        %2478 = vst [vmem:[%s239 + $0x58] sm:$0xf] %v2406
        %2479 = vst [vmem:[%s239 + $0x5c] sm:$0xf] %v2407
        %2480 = vst [vmem:[%s239 + $0x60] sm:$0xf] %v2408
        %2481 = vst [vmem:[%s239 + $0x64] sm:$0xf] %v2409
        %2482 = vst [vmem:[%s239 + $0x68] sm:$0xf] %v2410
        %2483 = vst [vmem:[%s239 + $0x6c] sm:$0xf] %v2411
        %2484 = vst [vmem:[%s239 + $0x70] sm:$0xf] %v2412
        %2485 = vst [vmem:[%s239 + $0x74] sm:$0xf] %v2413
        %2486 = vst [vmem:[%s239 + $0x78] sm:$0xf] %v2414
        %2487 = vst [vmem:[%s239 + $0x7c] sm:$0xf] %v2415
        %2488 = vst [vmem:[%s239 + $0x80] sm:$0xf] %v2416
        %2489 = vst [vmem:[%s239 + $0x84] sm:$0xf] %v2417
        %2490 = vst [vmem:[%s239 + $0x88] sm:$0xf] %v2418
        %2491 = vst [vmem:[%s239 + $0x8c] sm:$0xf] %v2419
        %p2492 = scmp.lt.s32.totalorder %s17, 1
        %s2493 = scalar_select %p2492, %s17, 1
        %s2494 = smul.addr %s2493, 36
        %s2495 = smul.addr %s2494, 4
        %s2496 = scalar_lea.vmem %s4, %s2495
        // Predicated region
        $region49: #{discriminator_forward.5} parent=35 // pred_check
          %p2497 = pneg %p124
        $region50: #{discriminator_forward.5} parent=35 // pred_check_branch
          %2499 = sbr.rel (%p2497) target = $region52
        $region51: #{discriminator_forward.5} parent=35 // pred_region
          _
        $region52: #{discriminator_forward.5} parent=35 // pred_fallthru
          _
      $region36: #{discriminator_forward.5} parent=5 // pred_fallthru
        _
      %p2500 = scmp.le.s32.totalorder 2, %s12
      // Predicated region
      $region53: #{discriminator_forward.5} parent=5 // pred_check
        %p2501 = pneg %p2500
      $region54: #{discriminator_forward.5} parent=5 // pred_check_branch
        %2503 = sbr.rel (%p2501) target = $region56
      $region55: #{discriminator_forward.5} parent=5 // pred_region
        %s2504 = ssub.s32 %s12, 2
        // Predicated region
        $region57: #{discriminator_forward.5} parent=55 // pred_check
          %p2505 = pneg %p130
        $region58: #{discriminator_forward.5} parent=55 // pred_check_branch
          %2507 = sbr.rel (%p2505) target = $region60
        $region59: #{discriminator_forward.5} parent=55 // pred_region
          %p2508 = scmp.lt.s32.totalorder %s18, 1
          %s2509 = scalar_select %p2508, %s18, 1
          %s2510 = smul.addr %s2509, 36
          %s2511 = smul.addr %s2510, 4
          %s2512 = scalar_lea.vmem %s4, %s2511
        $region60: #{discriminator_forward.5} parent=55 // pred_fallthru
          _
      $region56: #{discriminator_forward.5} parent=5 // pred_fallthru
        _
    $region6: #{discriminator_forward.5} parent=1 // loop_footer
      %s16 = sadd.s32 1, %s12
    $region7: #{discriminator_forward.5} parent=1 // loop_footer_branch
      %11 = sbr.rel target = $region3
    $region8: #{discriminator_forward.5} parent=1 // loop_exit
      _
    %2513 = vsyncpa [#allocation3], 1
    %s2514 = scalar_lea.sflag [#allocation3], 1
    %2515 = vsyncpa %s2514, 1
    %2516 = vsyncpa [#allocation5], 1

// kernel: discriminator_forward.6
$region0: #{discriminator_forward.6}
  #allocation0 [shape = 'u32[]', space=smem, size = 0x4, offset = 0x4, fixed_abs, tag = 'smem constant byte address 0x4 - core index']
  #allocation1 [shape = 'u32[144,128]{1,0:T(1,128)}', space=vmem, size = 0x12000, scoped, tag = 'internal scratch']
  %s0 = inlined_call_operand.vmem [shape: bf16[2,100,512], index: 0, kind: input, shape index: {}]
  %s1 = inlined_call_operand.vmem [shape: bf16[4,512,128], index: 1, kind: input, shape index: {}]
  %s2 = inlined_call_operand.vmem [shape: f32[1,128], index: 2, kind: input, shape index: {}]
  %s3 = inlined_call_operand.vmem [shape: f32[80,1], index: 3, kind: input, shape index: {}]
  %s4 = inlined_call_operand.vmem [shape: bf16[2,80,128], index: 4, kind: output, shape index: {}]
  %s5 = sld [smem:[#allocation0]]
  $region49: #{discriminator_forward.6} parent=0
    _
  %s7 = ssub.s32 1, %s5
  %s8 = scalar_select 0, %s7, %s5
  loop: start=0, step=1, limit=4
  $region2: #{discriminator_forward.6} parent=0 // loop_pre_header
    _
  $region3: #{discriminator_forward.6} parent=0 // loop_header
    %s10 = sphi 0, %s14
    %p11 = scmp.ge.s32.totalorder %s10, 4
    %s20 = sphi 0, %s22
    %s23 = sphi 0, %s20
    %s24 = sphi 0, %s23
    %s40 = sphi 0, %s24
    %s44 = sphi 0, %s44
    %s46 = sphi 0, %s44
    %s47 = sphi 0, %s46
    %s61 = sphi 0, %s47
    %s65 = sphi 0, %s65
    %s67 = sphi 0, %s65
    %s68 = sphi 0, %s67
    %s82 = sphi 0, %s68
    %s86 = sphi 0, %s86
    %s88 = sphi 0, %s86
    %s89 = sphi 0, %s88
    %s103 = sphi 0, %s89
    %s109 = sphi 0, %s111
    %s112 = sphi 0, %s109
    %s113 = sphi 0, %s112
    %s129 = sphi 0, %s113
  $region4: #{discriminator_forward.6} parent=0 // loop_header_branch
    %13 = sbr.rel (%p11) target = $region8
  $region5: #{discriminator_forward.6} parent=0 // loop_body
    %s15 = ssub.s32 %s10, 1
    %s16 = ssub.s32 %s10, 2
    %s17 = sadd.s32 %s10, 1
    %s18 = ssub.s32 %s10, %s17
    %p19 = scmp.eq.s32.totalorder %s18, 0
    %s21 = sadd.s32 %s20, 1
    %s22 = scalar_select %p19, %s20, %s21
    %p25 = pneg %p19
    %p26 = scmp.eq.s32.totalorder %s10, 1
    %p27 = por %p25, %p26
    %p28 = scmp.ne.s32.totalorder %s20, %s23
    %p29 = scmp.eq.s32.totalorder %s10, 0
    %p30 = por %p28, %p29
    %p31 = scmp.ne.s32.totalorder %s20, %s23
    %p32 = scmp.eq.s32.totalorder %s15, 1
    %p33 = por %p31, %p32
    %p34 = scmp.ne.s32.totalorder %s23, %s24
    %p35 = scmp.eq.s32.totalorder %s15, 0
    %p36 = por %p34, %p35
    %p37 = scmp.ne.s32.totalorder %s23, %s24
    %p38 = scmp.eq.s32.totalorder %s16, 1
    %p39 = por %p37, %p38
    %p41 = scmp.ne.s32.totalorder %s24, %s40
    %p42 = scmp.eq.s32.totalorder %s16, 0
    %p43 = por %p41, %p42
    %s45 = sadd.s32 %s44, 1
    %p48 = scmp.eq.s32.totalorder %s10, 1
    %p49 = scmp.ne.s32.totalorder %s44, %s46
    %p50 = scmp.eq.s32.totalorder %s10, 0
    %p51 = por %p49, %p50
    %p52 = scmp.ne.s32.totalorder %s44, %s46
    %p53 = scmp.eq.s32.totalorder %s15, 1
    %p54 = por %p52, %p53
    %p55 = scmp.ne.s32.totalorder %s46, %s47
    %p56 = scmp.eq.s32.totalorder %s15, 0
    %p57 = por %p55, %p56
    %p58 = scmp.ne.s32.totalorder %s46, %s47
    %p59 = scmp.eq.s32.totalorder %s16, 1
    %p60 = por %p58, %p59
    %p62 = scmp.ne.s32.totalorder %s47, %s61
    %p63 = scmp.eq.s32.totalorder %s16, 0
    %p64 = por %p62, %p63
    %s66 = sadd.s32 %s65, 1
    %p69 = scmp.eq.s32.totalorder %s10, 1
    %p70 = scmp.ne.s32.totalorder %s65, %s67
    %p71 = scmp.eq.s32.totalorder %s10, 0
    %p72 = por %p70, %p71
    %p73 = scmp.ne.s32.totalorder %s65, %s67
    %p74 = scmp.eq.s32.totalorder %s15, 1
    %p75 = por %p73, %p74
    %p76 = scmp.ne.s32.totalorder %s67, %s68
    %p77 = scmp.eq.s32.totalorder %s15, 0
    %p78 = por %p76, %p77
    %p79 = scmp.ne.s32.totalorder %s67, %s68
    %p80 = scmp.eq.s32.totalorder %s16, 1
    %p81 = por %p79, %p80
    %p83 = scmp.ne.s32.totalorder %s68, %s82
    %p84 = scmp.eq.s32.totalorder %s16, 0
    %p85 = por %p83, %p84
    %s87 = sadd.s32 %s86, 1
    %p90 = scmp.eq.s32.totalorder %s10, 1
    %p91 = scmp.ne.s32.totalorder %s86, %s88
    %p92 = scmp.eq.s32.totalorder %s10, 0
    %p93 = por %p91, %p92
    %p94 = scmp.ne.s32.totalorder %s86, %s88
    %p95 = scmp.eq.s32.totalorder %s15, 1
    %p96 = por %p94, %p95
    %p97 = scmp.ne.s32.totalorder %s88, %s89
    %p98 = scmp.eq.s32.totalorder %s15, 0
    %p99 = por %p97, %p98
    %p100 = scmp.ne.s32.totalorder %s88, %s89
    %p101 = scmp.eq.s32.totalorder %s16, 1
    %p102 = por %p100, %p101
    %p104 = scmp.ne.s32.totalorder %s89, %s103
    %p105 = scmp.eq.s32.totalorder %s16, 0
    %p106 = por %p104, %p105
    %s107 = ssub.s32 %s10, %s17
    %p108 = scmp.eq.s32.totalorder %s107, 0
    %s110 = sadd.s32 %s109, 1
    %s111 = scalar_select %p108, %s109, %s110
    %p114 = pneg %p108
    %p115 = scmp.eq.s32.totalorder %s10, 1
    %p116 = por %p114, %p115
    %p117 = scmp.ne.s32.totalorder %s109, %s112
    %p118 = scmp.eq.s32.totalorder %s10, 0
    %p119 = por %p117, %p118
    %p120 = scmp.ne.s32.totalorder %s109, %s112
    %p121 = scmp.eq.s32.totalorder %s15, 1
    %p122 = por %p120, %p121
    %p123 = scmp.ne.s32.totalorder %s112, %s113
    %p124 = scmp.eq.s32.totalorder %s15, 0
    %p125 = por %p123, %p124
    %p126 = scmp.ne.s32.totalorder %s112, %s113
    %p127 = scmp.eq.s32.totalorder %s16, 1
    %p128 = por %p126, %p127
    %p130 = scmp.ne.s32.totalorder %s113, %s129
    %p131 = scmp.eq.s32.totalorder %s16, 0
    %p132 = por %p130, %p131
    %p133 = scmp.le.s32.totalorder 1, %s10
    %p134 = scmp.lt.s32.totalorder %s10, 3
    %p135 = pnand %p133, %p134
    %p136 = pneg %p135
    // Predicated region
    $region9: #{discriminator_forward.6} parent=5 // pred_check
      _
    $region10: #{discriminator_forward.6} parent=5 // pred_check_branch
      %138 = sbr.rel (%p135) target = $region12
    $region11: #{discriminator_forward.6} parent=5 // pred_region
      %s139 = ssub.s32 %s10, 1
      // Predicated region
      $region13: #{discriminator_forward.6} parent=11 // pred_check
        %p140 = pneg %p57
      $region14: #{discriminator_forward.6} parent=11 // pred_check_branch
        %142 = sbr.rel (%p140) target = $region16
      $region15: #{discriminator_forward.6} parent=11 // pred_region
        _
      $region16: #{discriminator_forward.6} parent=11 // pred_fallthru
        _
      // Predicated region
      $region17: #{discriminator_forward.6} parent=11 // pred_check
        %p143 = pneg %p78
      $region18: #{discriminator_forward.6} parent=11 // pred_check_branch
        %145 = sbr.rel (%p143) target = $region20
      $region19: #{discriminator_forward.6} parent=11 // pred_region
        _
      $region20: #{discriminator_forward.6} parent=11 // pred_fallthru
        _
      // Predicated region
      $region21: #{discriminator_forward.6} parent=11 // pred_check
        %p146 = pneg %p99
      $region22: #{discriminator_forward.6} parent=11 // pred_check_branch
        %148 = sbr.rel (%p146) target = $region24
      $region23: #{discriminator_forward.6} parent=11 // pred_region
        _
      $region24: #{discriminator_forward.6} parent=11 // pred_fallthru
        _
    $region12: #{discriminator_forward.6} parent=5 // pred_fallthru
      _
    %p149 = scmp.lt.s32.totalorder %s10, 2
    // Predicated region
    $region25: #{discriminator_forward.6} parent=5 // pred_check
      %p150 = pneg %p149
    $region26: #{discriminator_forward.6} parent=5 // pred_check_branch
      %152 = sbr.rel (%p150) target = $region28
    $region27: #{discriminator_forward.6} parent=5 // pred_region
      // Predicated region
      $region29: #{discriminator_forward.6} parent=27 // pred_check
        %p153 = pneg %p30
      $region30: #{discriminator_forward.6} parent=27 // pred_check_branch
        %155 = sbr.rel (%p153) target = $region32
      $region31: #{discriminator_forward.6} parent=27 // pred_region
        %p156 = scmp.lt.s32.totalorder %s10, 1
        %s157 = scalar_select %p156, %s10, 1
        %s158 = smul.addr %s157, 52
        %s159 = smul.addr %s158, 4
        %s160 = scalar_lea.vmem %s0, %s159
      $region32: #{discriminator_forward.6} parent=27 // pred_fallthru
        _
    $region28: #{discriminator_forward.6} parent=5 // pred_fallthru
      _
    %p161 = scmp.le.s32.totalorder 1, %s10
    %p162 = scmp.lt.s32.totalorder %s10, 3
    %p163 = pnand %p161, %p162
    %p164 = pneg %p163
    // Predicated region
    $region33: #{discriminator_forward.6} parent=5 // pred_check
      _
    $region34: #{discriminator_forward.6} parent=5 // pred_check_branch
      %166 = sbr.rel (%p163) target = $region36
    $region35: #{discriminator_forward.6} parent=5 // pred_region
      %s167 = ssub.s32 %s10, 1
      %p168 = scmp.lt.s32.totalorder %s15, 1
      %s169 = scalar_select %p168, %s15, 1
      %s170 = smul.addr %s169, 52
      %s171 = smul.addr %s170, 4
      %s172 = scalar_lea.vmem %s0, %s171
      %p173 = pneg %p36
      %p174 = pneg %p33
      %p175 = pneg %p57
      %p176 = pneg %p54
      %p177 = pneg %p78
      %p178 = pneg %p75
      %p179 = pneg %p99
      %p180 = pneg %p96
      %p181 = pneg %p125
      %p182 = pneg %p122
      %p183 = scmp.lt.s32.totalorder %s15, 1
      %s184 = scalar_select %p183, %s15, 1
      %s185 = smul.addr %s184, 10
      %s186 = smul.addr %s185, 4
      %s187 = scalar_lea.vmem %s4, %s186
      %p188 = scmp.lt.s32.totalorder %s15, 1
      %s189 = scalar_select %p188, %s15, 1
      %s190 = smul.addr %s189, 52
      %s191 = smul.addr %s190, 4
      %s192 = scalar_lea.vmem %s0, %s191
      %p193 = scmp.lt.s32.totalorder %s15, 1
      %s194 = scalar_select %p193, %s15, 1
      %s195 = smul.addr %s194, 10
      %s196 = smul.addr %s195, 4
      %s197 = scalar_lea.vmem %s4, %s196
      %v199 = vld [vmem:[%s192] sm:$0xff]
      %v200 = vld [vmem:[%s192 + $0x8] sm:$0xff]
      %v201 = vld [vmem:[%s192 + $0x10] sm:$0xff]
      %v202 = vld [vmem:[%s192 + $0x18] sm:$0xff]
      %v203 = vld [vmem:[%s192 + $0x20] sm:$0xff]
      %v204 = vld [vmem:[%s192 + $0x28] sm:$0xff]
      %v205 = vld [vmem:[%s192 + $0x30] sm:$0xff]
      %v206 = vld [vmem:[%s192 + $0x38] sm:$0xff]
      %v207 = vld [vmem:[%s192 + $0x40] sm:$0xff]
      %v208 = vld [vmem:[%s192 + $0x48] sm:$0xff]
      %v209 = vld [vmem:[%s192 + $0x50] sm:$0xff]
      %v210 = vld [vmem:[%s192 + $0x58] sm:$0xff]
      %v211 = vld [vmem:[%s192 + $0x60] sm:$0xff]
      %v212 = vld [vmem:[%s192 + $0x68] sm:$0xff]
      %v213 = vld [vmem:[%s192 + $0x70] sm:$0xff]
      %v214 = vld [vmem:[%s192 + $0x78] sm:$0xff]
      %v215 = vld [vmem:[%s192 + $0x80] sm:$0xff]
      %v216 = vld [vmem:[%s192 + $0x88] sm:$0xff]
      %v217 = vld [vmem:[%s192 + $0x90] sm:$0xff]
      %v218 = vld [vmem:[%s192 + $0x98] sm:$0xff]
      %v219 = vld [vmem:[%s1] sm:$0xf]
      %v220 = vld [vmem:[%s1 + $0x4] sm:$0xf]
      %v221 = vld [vmem:[%s1 + $0x8] sm:$0xf]
      %v222 = vld [vmem:[%s1 + $0xc] sm:$0xf]
      %v223 = vld [vmem:[%s1 + $0x10] sm:$0xf]
      %v224 = vld [vmem:[%s1 + $0x14] sm:$0xf]
      %v225 = vld [vmem:[%s1 + $0x18] sm:$0xf]
      %v226 = vld [vmem:[%s1 + $0x1c] sm:$0xf]
      %v227 = vld [vmem:[%s1 + $0x20] sm:$0xf]
      %v228 = vld [vmem:[%s1 + $0x24] sm:$0xf]
      %v229 = vld [vmem:[%s1 + $0x28] sm:$0xf]
      %v230 = vld [vmem:[%s1 + $0x2c] sm:$0xf]
      %v231 = vld [vmem:[%s1 + $0x30] sm:$0xf]
      %v232 = vld [vmem:[%s1 + $0x34] sm:$0xf]
      %v233 = vld [vmem:[%s1 + $0x38] sm:$0xf]
      %v234 = vld [vmem:[%s1 + $0x3c] sm:$0xf]
      %v235 = vld [vmem:[%s1 + $0x40] sm:$0xf]
      %v236 = vld [vmem:[%s1 + $0x44] sm:$0xf]
      %v237 = vld [vmem:[%s1 + $0x48] sm:$0xf]
      %v238 = vld [vmem:[%s1 + $0x4c] sm:$0xf]
      %v239 = vld [vmem:[%s1 + $0x50] sm:$0xf]
      %v240 = vld [vmem:[%s1 + $0x54] sm:$0xf]
      %v241 = vld [vmem:[%s1 + $0x58] sm:$0xf]
      %v242 = vld [vmem:[%s1 + $0x5c] sm:$0xf]
      %v243 = vld [vmem:[%s1 + $0x60] sm:$0xf]
      %v244 = vld [vmem:[%s1 + $0x64] sm:$0xf]
      %v245 = vld [vmem:[%s1 + $0x68] sm:$0xf]
      %v246 = vld [vmem:[%s1 + $0x6c] sm:$0xf]
      %v247 = vld [vmem:[%s1 + $0x70] sm:$0xf]
      %v248 = vld [vmem:[%s1 + $0x74] sm:$0xf]
      %v249 = vld [vmem:[%s1 + $0x78] sm:$0xf]
      %v250 = vld [vmem:[%s1 + $0x7c] sm:$0xf]
      %v251 = vld [vmem:[%s1 + $0x80] sm:$0xf]
      %v252 = vld [vmem:[%s1 + $0x84] sm:$0xf]
      %v253 = vld [vmem:[%s1 + $0x88] sm:$0xf]
      %v254 = vld [vmem:[%s1 + $0x8c] sm:$0xf]
      %v255 = vld [vmem:[%s1 + $0x90] sm:$0xf]
      %v256 = vld [vmem:[%s1 + $0x94] sm:$0xf]
      %v257 = vld [vmem:[%s1 + $0x98] sm:$0xf]
      %v258 = vld [vmem:[%s1 + $0x9c] sm:$0xf]
      %v259 = vld [vmem:[%s1 + $0xa0] sm:$0xf]
      %v260 = vld [vmem:[%s1 + $0xa4] sm:$0xf]
      %v261 = vld [vmem:[%s1 + $0xa8] sm:$0xf]
      %v262 = vld [vmem:[%s1 + $0xac] sm:$0xf]
      %v263 = vld [vmem:[%s1 + $0xb0] sm:$0xf]
      %v264 = vld [vmem:[%s1 + $0xb4] sm:$0xf]
      %v265 = vld [vmem:[%s1 + $0xb8] sm:$0xf]
      %v266 = vld [vmem:[%s1 + $0xbc] sm:$0xf]
      %v267 = vld [vmem:[%s1 + $0xc0] sm:$0xf]
      %v268 = vld [vmem:[%s1 + $0xc4] sm:$0xf]
      %v269 = vld [vmem:[%s1 + $0xc8] sm:$0xf]
      %v270 = vld [vmem:[%s1 + $0xcc] sm:$0xf]
      %v271 = vld [vmem:[%s1 + $0xd0] sm:$0xf]
      %v272 = vld [vmem:[%s1 + $0xd4] sm:$0xf]
      %v273 = vld [vmem:[%s1 + $0xd8] sm:$0xf]
      %v274 = vld [vmem:[%s1 + $0xdc] sm:$0xf]
      %v275 = vld [vmem:[%s1 + $0xe0] sm:$0xf]
      %v276 = vld [vmem:[%s1 + $0xe4] sm:$0xf]
      %v277 = vld [vmem:[%s1 + $0xe8] sm:$0xf]
      %v278 = vld [vmem:[%s1 + $0xec] sm:$0xf]
      %v279 = vld [vmem:[%s1 + $0xf0] sm:$0xf]
      %v280 = vld [vmem:[%s1 + $0xf4] sm:$0xf]
      %v281 = vld [vmem:[%s1 + $0xf8] sm:$0xf]
      %v282 = vld [vmem:[%s1 + $0xfc] sm:$0xf]
      %v283 = vld [vmem:[%s192 + $0xa0] sm:$0x11]
      %v284 = vld [vmem:[%s192 + $0xa8] sm:$0x11]
      %s285 = scalar_lea.vmem %s1, 256
      %v286 = vld [vmem:[%s285] sm:$0xf]
      %v287 = vld [vmem:[%s285 + $0x4] sm:$0xf]
      %v288 = vld [vmem:[%s285 + $0x8] sm:$0xf]
      %v289 = vld [vmem:[%s285 + $0xc] sm:$0xf]
      %v290 = vld [vmem:[%s285 + $0x10] sm:$0xf]
      %v291 = vld [vmem:[%s285 + $0x14] sm:$0xf]
      %v292 = vld [vmem:[%s285 + $0x18] sm:$0xf]
      %v293 = vld [vmem:[%s285 + $0x1c] sm:$0xf]
      %v294 = vld [vmem:[%s285 + $0x20] sm:$0xf]
      %v295 = vld [vmem:[%s285 + $0x24] sm:$0xf]
      %v296 = vld [vmem:[%s285 + $0x28] sm:$0xf]
      %v297 = vld [vmem:[%s285 + $0x2c] sm:$0xf]
      %v298 = vld [vmem:[%s285 + $0x30] sm:$0xf]
      %v299 = vld [vmem:[%s285 + $0x34] sm:$0xf]
      %v300 = vld [vmem:[%s285 + $0x38] sm:$0xf]
      %v301 = vld [vmem:[%s285 + $0x3c] sm:$0xf]
      %v302 = vld [vmem:[%s285 + $0x40] sm:$0xf]
      %v303 = vld [vmem:[%s285 + $0x44] sm:$0xf]
      %v304 = vld [vmem:[%s285 + $0x48] sm:$0xf]
      %v305 = vld [vmem:[%s285 + $0x4c] sm:$0xf]
      %v306 = vld [vmem:[%s285 + $0x50] sm:$0xf]
      %v307 = vld [vmem:[%s285 + $0x54] sm:$0xf]
      %v308 = vld [vmem:[%s285 + $0x58] sm:$0xf]
      %v309 = vld [vmem:[%s285 + $0x5c] sm:$0xf]
      %v310 = vld [vmem:[%s285 + $0x60] sm:$0xf]
      %v311 = vld [vmem:[%s285 + $0x64] sm:$0xf]
      %v312 = vld [vmem:[%s285 + $0x68] sm:$0xf]
      %v313 = vld [vmem:[%s285 + $0x6c] sm:$0xf]
      %v314 = vld [vmem:[%s285 + $0x70] sm:$0xf]
      %v315 = vld [vmem:[%s285 + $0x74] sm:$0xf]
      %v316 = vld [vmem:[%s285 + $0x78] sm:$0xf]
      %v317 = vld [vmem:[%s285 + $0x7c] sm:$0xf]
      %v318 = vld [vmem:[%s285 + $0x80] sm:$0xf]
      %v319 = vld [vmem:[%s285 + $0x84] sm:$0xf]
      %v320 = vld [vmem:[%s285 + $0x88] sm:$0xf]
      %v321 = vld [vmem:[%s285 + $0x8c] sm:$0xf]
      %v322 = vld [vmem:[%s285 + $0x90] sm:$0xf]
      %v323 = vld [vmem:[%s285 + $0x94] sm:$0xf]
      %v324 = vld [vmem:[%s285 + $0x98] sm:$0xf]
      %v325 = vld [vmem:[%s285 + $0x9c] sm:$0xf]
      %v326 = vld [vmem:[%s285 + $0xa0] sm:$0xf]
      %v327 = vld [vmem:[%s285 + $0xa4] sm:$0xf]
      %v328 = vld [vmem:[%s285 + $0xa8] sm:$0xf]
      %v329 = vld [vmem:[%s285 + $0xac] sm:$0xf]
      %v330 = vld [vmem:[%s285 + $0xb0] sm:$0xf]
      %v331 = vld [vmem:[%s285 + $0xb4] sm:$0xf]
      %v332 = vld [vmem:[%s285 + $0xb8] sm:$0xf]
      %v333 = vld [vmem:[%s285 + $0xbc] sm:$0xf]
      %v334 = vld [vmem:[%s285 + $0xc0] sm:$0xf]
      %v335 = vld [vmem:[%s285 + $0xc4] sm:$0xf]
      %v336 = vld [vmem:[%s285 + $0xc8] sm:$0xf]
      %v337 = vld [vmem:[%s285 + $0xcc] sm:$0xf]
      %v338 = vld [vmem:[%s285 + $0xd0] sm:$0xf]
      %v339 = vld [vmem:[%s285 + $0xd4] sm:$0xf]
      %v340 = vld [vmem:[%s285 + $0xd8] sm:$0xf]
      %v341 = vld [vmem:[%s285 + $0xdc] sm:$0xf]
      %v342 = vld [vmem:[%s285 + $0xe0] sm:$0xf]
      %v343 = vld [vmem:[%s285 + $0xe4] sm:$0xf]
      %v344 = vld [vmem:[%s285 + $0xe8] sm:$0xf]
      %v345 = vld [vmem:[%s285 + $0xec] sm:$0xf]
      %v346 = vld [vmem:[%s285 + $0xf0] sm:$0xf]
      %v347 = vld [vmem:[%s285 + $0xf4] sm:$0xf]
      %v348 = vld [vmem:[%s285 + $0xf8] sm:$0xf]
      %v349 = vld [vmem:[%s285 + $0xfc] sm:$0xf]
      %v372 = vunpack.c.l.b16 %v199
      %v373 = vunpack.c.h.b16 %v199
      %v374 = vunpack.c.l.b16 %v200
      %v375 = vunpack.c.h.b16 %v200
      %v376 = vunpack.c.l.b16 %v201
      %v377 = vunpack.c.h.b16 %v201
      %v378 = vunpack.c.l.b16 %v202
      %v379 = vunpack.c.h.b16 %v202
      %v380 = vunpack.c.l.b16 %v203
      %v381 = vunpack.c.h.b16 %v203
      %v382 = vunpack.c.l.b16 %v204
      %v383 = vunpack.c.h.b16 %v204
      %v384 = vunpack.c.l.b16 %v205
      %v385 = vunpack.c.h.b16 %v205
      %v386 = vunpack.c.l.b16 %v206
      %v387 = vunpack.c.h.b16 %v206
      %v388 = vunpack.c.l.b16 %v207
      %v389 = vunpack.c.h.b16 %v207
      %v390 = vunpack.c.l.b16 %v208
      %v391 = vunpack.c.h.b16 %v208
      %v392 = vunpack.c.l.b16 %v209
      %v393 = vunpack.c.h.b16 %v209
      %v394 = vunpack.c.l.b16 %v210
      %v395 = vunpack.c.h.b16 %v210
      %v396 = vunpack.c.l.b16 %v211
      %v397 = vunpack.c.h.b16 %v211
      %v398 = vunpack.c.l.b16 %v212
      %v399 = vunpack.c.h.b16 %v212
      %v400 = vunpack.c.l.b16 %v213
      %v401 = vunpack.c.h.b16 %v213
      %v402 = vunpack.c.l.b16 %v214
      %v403 = vunpack.c.h.b16 %v214
      %v404 = vunpack.c.l.b16 %v215
      %v405 = vunpack.c.h.b16 %v215
      %v406 = vunpack.c.l.b16 %v216
      %v407 = vunpack.c.h.b16 %v216
      %v408 = vunpack.c.l.b16 %v217
      %v409 = vunpack.c.h.b16 %v217
      %v410 = vunpack.c.l.b16 %v218
      %v411 = vunpack.c.h.b16 %v218
      %v412 = vunpack.c.l.b16 %v283
      %v413 = vunpack.c.h.b16 %v283
      %v414 = vunpack.c.l.b16 %v284
      %v415 = vunpack.c.h.b16 %v284
      %v416 = vpack.c.b16 %v376, %v372
      %v417 = vpack.c.b16 %v377, %v373
      %v418 = vpack.c.b16 %v378, %v374
      %v419 = vpack.c.b16 %v379, %v375
      %v420 = vpack.c.b16 %v384, %v380
      %v421 = vpack.c.b16 %v385, %v381
      %v422 = vpack.c.b16 %v386, %v382
      %v423 = vpack.c.b16 %v387, %v383
      %v424 = vpack.c.b16 %v392, %v388
      %v425 = vpack.c.b16 %v393, %v389
      %v426 = vpack.c.b16 %v394, %v390
      %v427 = vpack.c.b16 %v395, %v391
      %v428 = vpack.c.b16 %v400, %v396
      %v429 = vpack.c.b16 %v401, %v397
      %v430 = vpack.c.b16 %v402, %v398
      %v431 = vpack.c.b16 %v403, %v399
      %v432 = vpack.c.b16 %v408, %v404
      %v433 = vpack.c.b16 %v409, %v405
      %v434 = vpack.c.b16 %v410, %v406
      %v435 = vpack.c.b16 %v411, %v407
      %v436 = vpack.c.b16 %v412, %v412
      %v437 = vpack.c.b16 %v413, %v413
      %v438 = vpack.c.b16 %v414, %v414
      %v439 = vpack.c.b16 %v415, %v415
      %vm440 = vsmask.f32 7424
      %v442 = vshrl.u32 %v416, 16
      %v444 = vshll.u32 %v416, 16
      %v446 = vrot.slane %v444, 1
      %v447 = vor.u32 %v442, %v446
      %v449 = vshll.u32 %v420, 16
      %v451 = vrot.slane %v449, 1
      %v452 = vsel %vm440, %v447, %v451
      %v454 = vshrl.u32 %v417, 16
      %v456 = vshll.u32 %v417, 16
      %v458 = vrot.slane %v456, 1
      %v459 = vor.u32 %v454, %v458
      %v461 = vshll.u32 %v421, 16
      %v463 = vrot.slane %v461, 1
      %v464 = vsel %vm440, %v459, %v463
      %v466 = vshrl.u32 %v418, 16
      %v468 = vshll.u32 %v418, 16
      %v470 = vrot.slane %v468, 1
      %v471 = vor.u32 %v466, %v470
      %v473 = vshll.u32 %v422, 16
      %v475 = vrot.slane %v473, 1
      %v476 = vsel %vm440, %v471, %v475
      %v478 = vshrl.u32 %v419, 16
      %v480 = vshll.u32 %v419, 16
      %v482 = vrot.slane %v480, 1
      %v483 = vor.u32 %v478, %v482
      %v485 = vshll.u32 %v423, 16
      %v487 = vrot.slane %v485, 1
      %v488 = vsel %vm440, %v483, %v487
      %v489 = vshrl.u32 %v420, 16
      %v491 = vor.u32 %v489, %v451
      %v493 = vshll.u32 %v424, 16
      %v495 = vrot.slane %v493, 1
      %v496 = vsel %vm440, %v491, %v495
      %v497 = vshrl.u32 %v421, 16
      %v499 = vor.u32 %v497, %v463
      %v501 = vshll.u32 %v425, 16
      %v503 = vrot.slane %v501, 1
      %v504 = vsel %vm440, %v499, %v503
      %v505 = vshrl.u32 %v422, 16
      %v507 = vor.u32 %v505, %v475
      %v509 = vshll.u32 %v426, 16
      %v511 = vrot.slane %v509, 1
      %v512 = vsel %vm440, %v507, %v511
      %v513 = vshrl.u32 %v423, 16
      %v515 = vor.u32 %v513, %v487
      %v517 = vshll.u32 %v427, 16
      %v519 = vrot.slane %v517, 1
      %v520 = vsel %vm440, %v515, %v519
      %v521 = vshrl.u32 %v424, 16
      %v523 = vor.u32 %v521, %v495
      %v525 = vshll.u32 %v428, 16
      %v527 = vrot.slane %v525, 1
      %v528 = vsel %vm440, %v523, %v527
      %v529 = vshrl.u32 %v425, 16
      %v531 = vor.u32 %v529, %v503
      %v533 = vshll.u32 %v429, 16
      %v535 = vrot.slane %v533, 1
      %v536 = vsel %vm440, %v531, %v535
      %v537 = vshrl.u32 %v426, 16
      %v539 = vor.u32 %v537, %v511
      %v541 = vshll.u32 %v430, 16
      %v543 = vrot.slane %v541, 1
      %v544 = vsel %vm440, %v539, %v543
      %v545 = vshrl.u32 %v427, 16
      %v547 = vor.u32 %v545, %v519
      %v549 = vshll.u32 %v431, 16
      %v551 = vrot.slane %v549, 1
      %v552 = vsel %vm440, %v547, %v551
      %v553 = vshrl.u32 %v428, 16
      %v555 = vor.u32 %v553, %v527
      %v557 = vshll.u32 %v432, 16
      %v559 = vrot.slane %v557, 1
      %v560 = vsel %vm440, %v555, %v559
      %v561 = vshrl.u32 %v429, 16
      %v563 = vor.u32 %v561, %v535
      %v565 = vshll.u32 %v433, 16
      %v567 = vrot.slane %v565, 1
      %v568 = vsel %vm440, %v563, %v567
      %v569 = vshrl.u32 %v430, 16
      %v571 = vor.u32 %v569, %v543
      %v573 = vshll.u32 %v434, 16
      %v575 = vrot.slane %v573, 1
      %v576 = vsel %vm440, %v571, %v575
      %v577 = vshrl.u32 %v431, 16
      %v579 = vor.u32 %v577, %v551
      %v581 = vshll.u32 %v435, 16
      %v583 = vrot.slane %v581, 1
      %v584 = vsel %vm440, %v579, %v583
      %v585 = vshrl.u32 %v432, 16
      %v587 = vor.u32 %v585, %v559
      %v589 = vshll.u32 %v436, 16
      %v591 = vrot.slane %v589, 1
      %v592 = vsel %vm440, %v587, %v591
      %v593 = vshrl.u32 %v433, 16
      %v595 = vor.u32 %v593, %v567
      %v597 = vshll.u32 %v437, 16
      %v599 = vrot.slane %v597, 1
      %v600 = vsel %vm440, %v595, %v599
      %v601 = vshrl.u32 %v434, 16
      %v603 = vor.u32 %v601, %v575
      %v605 = vshll.u32 %v438, 16
      %v607 = vrot.slane %v605, 1
      %v608 = vsel %vm440, %v603, %v607
      %v609 = vshrl.u32 %v435, 16
      %v611 = vor.u32 %v609, %v583
      %v613 = vshll.u32 %v439, 16
      %v615 = vrot.slane %v613, 1
      %v616 = vsel %vm440, %v611, %v615
      %v701 = vunpack.c.l.b16 %v286
      %v702 = vunpack.c.l.b16 %v287
      %v703 = vunpack.c.l.b16 %v288
      %v704 = vunpack.c.l.b16 %v289
      %v705 = vunpack.c.l.b16 %v290
      %v706 = vunpack.c.l.b16 %v291
      %v707 = vunpack.c.l.b16 %v292
      %v708 = vunpack.c.l.b16 %v293
      %v709 = vunpack.c.l.b16 %v294
      %v710 = vunpack.c.l.b16 %v295
      %v711 = vunpack.c.l.b16 %v296
      %v712 = vunpack.c.l.b16 %v297
      %v713 = vunpack.c.l.b16 %v298
      %v714 = vunpack.c.l.b16 %v299
      %v715 = vunpack.c.l.b16 %v300
      %v716 = vunpack.c.l.b16 %v301
      %v717 = vunpack.c.l.b16 %v302
      %v718 = vunpack.c.l.b16 %v303
      %v719 = vunpack.c.l.b16 %v304
      %v720 = vunpack.c.l.b16 %v305
      %v721 = vunpack.c.l.b16 %v306
      %v722 = vunpack.c.l.b16 %v307
      %v723 = vunpack.c.l.b16 %v308
      %v724 = vunpack.c.l.b16 %v309
      %v725 = vunpack.c.l.b16 %v310
      %v726 = vunpack.c.l.b16 %v311
      %v727 = vunpack.c.l.b16 %v312
      %v728 = vunpack.c.l.b16 %v313
      %v729 = vunpack.c.l.b16 %v314
      %v730 = vunpack.c.l.b16 %v315
      %v731 = vunpack.c.l.b16 %v316
      %v732 = vunpack.c.l.b16 %v317
      %v733 = vunpack.c.l.b16 %v318
      %v734 = vunpack.c.l.b16 %v319
      %v735 = vunpack.c.l.b16 %v320
      %v736 = vunpack.c.l.b16 %v321
      %v737 = vunpack.c.l.b16 %v322
      %v738 = vunpack.c.l.b16 %v323
      %v739 = vunpack.c.l.b16 %v324
      %v740 = vunpack.c.l.b16 %v325
      %v741 = vunpack.c.l.b16 %v326
      %v742 = vunpack.c.l.b16 %v327
      %v743 = vunpack.c.l.b16 %v328
      %v744 = vunpack.c.l.b16 %v329
      %v745 = vunpack.c.l.b16 %v330
      %v746 = vunpack.c.l.b16 %v331
      %v747 = vunpack.c.l.b16 %v332
      %v748 = vunpack.c.l.b16 %v333
      %v749 = vunpack.c.l.b16 %v334
      %v750 = vunpack.c.l.b16 %v335
      %v751 = vunpack.c.l.b16 %v336
      %v752 = vunpack.c.l.b16 %v337
      %v753 = vunpack.c.l.b16 %v338
      %v754 = vunpack.c.l.b16 %v339
      %v755 = vunpack.c.l.b16 %v340
      %v756 = vunpack.c.l.b16 %v341
      %v757 = vunpack.c.l.b16 %v342
      %v758 = vunpack.c.l.b16 %v343
      %v759 = vunpack.c.l.b16 %v344
      %v760 = vunpack.c.l.b16 %v345
      %v761 = vunpack.c.l.b16 %v346
      %v762 = vunpack.c.l.b16 %v347
      %v763 = vunpack.c.l.b16 %v348
      %v764 = vunpack.c.l.b16 %v349
      %v765 = vpack.c.b16 %v702, %v701
      %v766 = vpack.c.b16 %v704, %v703
      %v767 = vpack.c.b16 %v706, %v705
      %v768 = vpack.c.b16 %v708, %v707
      %v769 = vpack.c.b16 %v710, %v709
      %v770 = vpack.c.b16 %v712, %v711
      %v771 = vpack.c.b16 %v714, %v713
      %v772 = vpack.c.b16 %v716, %v715
      %v773 = vpack.c.b16 %v718, %v717
      %v774 = vpack.c.b16 %v720, %v719
      %v775 = vpack.c.b16 %v722, %v721
      %v776 = vpack.c.b16 %v724, %v723
      %v777 = vpack.c.b16 %v726, %v725
      %v778 = vpack.c.b16 %v728, %v727
      %v779 = vpack.c.b16 %v730, %v729
      %v780 = vpack.c.b16 %v732, %v731
      %v781 = vpack.c.b16 %v734, %v733
      %v782 = vpack.c.b16 %v736, %v735
      %v783 = vpack.c.b16 %v738, %v737
      %v784 = vpack.c.b16 %v740, %v739
      %v785 = vpack.c.b16 %v742, %v741
      %v786 = vpack.c.b16 %v744, %v743
      %v787 = vpack.c.b16 %v746, %v745
      %v788 = vpack.c.b16 %v748, %v747
      %v789 = vpack.c.b16 %v750, %v749
      %v790 = vpack.c.b16 %v752, %v751
      %v791 = vpack.c.b16 %v754, %v753
      %v792 = vpack.c.b16 %v756, %v755
      %v793 = vpack.c.b16 %v758, %v757
      %v794 = vpack.c.b16 %v760, %v759
      %v795 = vpack.c.b16 %v762, %v761
      %v796 = vpack.c.b16 %v764, %v763
      %829 = vmatprep.subr.bf16.mxu0 0
      %830 = vmatpush1.bf16.msra.mxu0 %v765
      %831 = vmatprep.subr.bf16.mxu0 0
      %832 = vmatpush1.bf16.msra.mxu0 %v766
      %833 = vmatprep.subr.bf16.mxu0 0
      %834 = vmatpush1.bf16.msra.mxu0 %v767
      %835 = vmatprep.subr.bf16.mxu0 0
      %836 = vmatpush1.bf16.msra.mxu0 %v768
      %837 = vmatprep.subr.bf16.mxu0 0
      %838 = vmatpush1.bf16.msra.mxu0 %v769
      %839 = vmatprep.subr.bf16.mxu0 0
      %840 = vmatpush1.bf16.msra.mxu0 %v770
      %841 = vmatprep.subr.bf16.mxu0 0
      %842 = vmatpush1.bf16.msra.mxu0 %v771
      %843 = vmatprep.subr.bf16.mxu0 0
      %844 = vmatpush1.bf16.msra.mxu0 %v772
      %845 = vmatprep.subr.bf16.mxu0 0
      %846 = vmatpush1.bf16.msra.mxu0 %v773
      %847 = vmatprep.subr.bf16.mxu0 0
      %848 = vmatpush1.bf16.msra.mxu0 %v774
      %849 = vmatprep.subr.bf16.mxu0 0
      %850 = vmatpush1.bf16.msra.mxu0 %v775
      %851 = vmatprep.subr.bf16.mxu0 0
      %852 = vmatpush1.bf16.msra.mxu0 %v776
      %853 = vmatprep.subr.bf16.mxu0 0
      %854 = vmatpush1.bf16.msra.mxu0 %v777
      %855 = vmatprep.subr.bf16.mxu0 0
      %856 = vmatpush1.bf16.msra.mxu0 %v778
      %857 = vmatprep.subr.bf16.mxu0 0
      %858 = vmatpush1.bf16.msra.mxu0 %v779
      %859 = vmatprep.subr.bf16.mxu0 0
      %860 = vmatpush1.bf16.msra.mxu0 %v780
      %861 = vmatprep.mubr.bf16.mxu0 %v464
      %862 = vmatmul.mubr.bf16.gmra.mrb[0].mxu0 %v452
      %v863 = vpop.f32.mrb[0].mxu0
      %v864 = vadd.f32 0.0, %v863
      %v865 = vpop.f32.mrb[0].mxu0
      %v866 = vpop.f32.mrb[0].mxu0
      %v867 = vadd.f32 0.0, %v866
      %v868 = vpop.f32.mrb[0].mxu0
      %869 = vmatprep.mubr.bf16.mxu0 %v504
      %870 = vmatmul.mubr.bf16.gmra.mrb[0].mxu0 %v496
      %v871 = vpop.f32.mrb[0].mxu0
      %v872 = vadd.f32 0.0, %v871
      %v873 = vpop.f32.mrb[0].mxu0
      %v874 = vpop.f32.mrb[0].mxu0
      %v875 = vadd.f32 0.0, %v874
      %v876 = vpop.f32.mrb[0].mxu0
      %877 = vmatprep.mubr.bf16.mxu0 %v536
      %878 = vmatmul.mubr.bf16.gmra.mrb[0].mxu0 %v528
      %v879 = vpop.f32.mrb[0].mxu0
      %v880 = vadd.f32 0.0, %v879
      %v881 = vpop.f32.mrb[0].mxu0
      %v882 = vpop.f32.mrb[0].mxu0
      %v883 = vadd.f32 0.0, %v882
      %v884 = vpop.f32.mrb[0].mxu0
      %885 = vmatprep.mubr.bf16.mxu0 %v568
      %886 = vmatmul.mubr.bf16.gmra.mrb[0].mxu0 %v560
      %v887 = vpop.f32.mrb[0].mxu0
      %v888 = vadd.f32 0.0, %v887
      %v889 = vpop.f32.mrb[0].mxu0
      %v890 = vpop.f32.mrb[0].mxu0
      %v891 = vadd.f32 0.0, %v890
      %v892 = vpop.f32.mrb[0].mxu0
      %893 = vmatprep.mubr.bf16.mxu0 %v600
      %894 = vmatmul.mubr.bf16.gmra.mrb[0].mxu0 %v592
      %v895 = vpop.f32.mrb[0].mxu0
      %v896 = vadd.f32 0.0, %v895
      %v897 = vpop.f32.mrb[0].mxu0
      %v898 = vpop.f32.mrb[0].mxu0
      %v899 = vadd.f32 0.0, %v898
      %v900 = vpop.f32.mrb[0].mxu0
      %901 = vdwg.mxu0
      %902 = vmatprep.subr.bf16.mxu0 0
      %903 = vmatpush1.bf16.msra.mxu0 %v781
      %904 = vmatprep.subr.bf16.mxu0 0
      %905 = vmatpush1.bf16.msra.mxu0 %v782
      %906 = vmatprep.subr.bf16.mxu0 0
      %907 = vmatpush1.bf16.msra.mxu0 %v783
      %908 = vmatprep.subr.bf16.mxu0 0
      %909 = vmatpush1.bf16.msra.mxu0 %v784
      %910 = vmatprep.subr.bf16.mxu0 0
      %911 = vmatpush1.bf16.msra.mxu0 %v785
      %912 = vmatprep.subr.bf16.mxu0 0
      %913 = vmatpush1.bf16.msra.mxu0 %v786
      %914 = vmatprep.subr.bf16.mxu0 0
      %915 = vmatpush1.bf16.msra.mxu0 %v787
      %916 = vmatprep.subr.bf16.mxu0 0
      %917 = vmatpush1.bf16.msra.mxu0 %v788
      %918 = vmatprep.subr.bf16.mxu0 0
      %919 = vmatpush1.bf16.msra.mxu0 %v789
      %920 = vmatprep.subr.bf16.mxu0 0
      %921 = vmatpush1.bf16.msra.mxu0 %v790
      %922 = vmatprep.subr.bf16.mxu0 0
      %923 = vmatpush1.bf16.msra.mxu0 %v791
      %924 = vmatprep.subr.bf16.mxu0 0
      %925 = vmatpush1.bf16.msra.mxu0 %v792
      %926 = vmatprep.subr.bf16.mxu0 0
      %927 = vmatpush1.bf16.msra.mxu0 %v793
      %928 = vmatprep.subr.bf16.mxu0 0
      %929 = vmatpush1.bf16.msra.mxu0 %v794
      %930 = vmatprep.subr.bf16.mxu0 0
      %931 = vmatpush1.bf16.msra.mxu0 %v795
      %932 = vmatprep.subr.bf16.mxu0 0
      %933 = vmatpush1.bf16.msra.mxu0 %v796
      %934 = vmatprep.mubr.bf16.mxu0 %v488
      %935 = vmatmul.mubr.bf16.gmra.mrb[0].mxu0 %v476
      %v936 = vpop.f32.mrb[0].mxu0
      %v937 = vadd.f32 %v864, %v936
      %v938 = vpop.f32.mrb[0].mxu0
      %v939 = vpop.f32.mrb[0].mxu0
      %v940 = vadd.f32 %v867, %v939
      %v941 = vpop.f32.mrb[0].mxu0
      %942 = vmatprep.mubr.bf16.mxu0 %v520
      %943 = vmatmul.mubr.bf16.gmra.mrb[0].mxu0 %v512
      %v944 = vpop.f32.mrb[0].mxu0
      %v945 = vadd.f32 %v872, %v944
      %v946 = vpop.f32.mrb[0].mxu0
      %v947 = vpop.f32.mrb[0].mxu0
      %v948 = vadd.f32 %v875, %v947
      %v949 = vpop.f32.mrb[0].mxu0
      %950 = vmatprep.mubr.bf16.mxu0 %v552
      %951 = vmatmul.mubr.bf16.gmra.mrb[0].mxu0 %v544
      %v952 = vpop.f32.mrb[0].mxu0
      %v953 = vadd.f32 %v880, %v952
      %v954 = vpop.f32.mrb[0].mxu0
      %v955 = vpop.f32.mrb[0].mxu0
      %v956 = vadd.f32 %v883, %v955
      %v957 = vpop.f32.mrb[0].mxu0
      %958 = vmatprep.mubr.bf16.mxu0 %v584
      %959 = vmatmul.mubr.bf16.gmra.mrb[0].mxu0 %v576
      %v960 = vpop.f32.mrb[0].mxu0
      %v961 = vadd.f32 %v888, %v960
      %v962 = vpop.f32.mrb[0].mxu0
      %v963 = vpop.f32.mrb[0].mxu0
      %v964 = vadd.f32 %v891, %v963
      %v965 = vpop.f32.mrb[0].mxu0
      %966 = vmatprep.mubr.bf16.mxu0 %v616
      %967 = vmatmul.mubr.bf16.gmra.mrb[0].mxu0 %v608
      %v968 = vpop.f32.mrb[0].mxu0
      %v969 = vadd.f32 %v896, %v968
      %v970 = vpop.f32.mrb[0].mxu0
      %v971 = vpop.f32.mrb[0].mxu0
      %v972 = vadd.f32 %v899, %v971
      %v973 = vpop.f32.mrb[0].mxu0
      %974 = vdwg.mxu0
      %v1059 = vunpack.c.l.b16 %v219
      %v1060 = vunpack.c.l.b16 %v220
      %v1061 = vunpack.c.l.b16 %v221
      %v1062 = vunpack.c.l.b16 %v222
      %v1063 = vunpack.c.l.b16 %v223
      %v1064 = vunpack.c.l.b16 %v224
      %v1065 = vunpack.c.l.b16 %v225
      %v1066 = vunpack.c.l.b16 %v226
      %v1067 = vunpack.c.l.b16 %v227
      %v1068 = vunpack.c.l.b16 %v228
      %v1069 = vunpack.c.l.b16 %v229
      %v1070 = vunpack.c.l.b16 %v230
      %v1071 = vunpack.c.l.b16 %v231
      %v1072 = vunpack.c.l.b16 %v232
      %v1073 = vunpack.c.l.b16 %v233
      %v1074 = vunpack.c.l.b16 %v234
      %v1075 = vunpack.c.l.b16 %v235
      %v1076 = vunpack.c.l.b16 %v236
      %v1077 = vunpack.c.l.b16 %v237
      %v1078 = vunpack.c.l.b16 %v238
      %v1079 = vunpack.c.l.b16 %v239
      %v1080 = vunpack.c.l.b16 %v240
      %v1081 = vunpack.c.l.b16 %v241
      %v1082 = vunpack.c.l.b16 %v242
      %v1083 = vunpack.c.l.b16 %v243
      %v1084 = vunpack.c.l.b16 %v244
      %v1085 = vunpack.c.l.b16 %v245
      %v1086 = vunpack.c.l.b16 %v246
      %v1087 = vunpack.c.l.b16 %v247
      %v1088 = vunpack.c.l.b16 %v248
      %v1089 = vunpack.c.l.b16 %v249
      %v1090 = vunpack.c.l.b16 %v250
      %v1091 = vunpack.c.l.b16 %v251
      %v1092 = vunpack.c.l.b16 %v252
      %v1093 = vunpack.c.l.b16 %v253
      %v1094 = vunpack.c.l.b16 %v254
      %v1095 = vunpack.c.l.b16 %v255
      %v1096 = vunpack.c.l.b16 %v256
      %v1097 = vunpack.c.l.b16 %v257
      %v1098 = vunpack.c.l.b16 %v258
      %v1099 = vunpack.c.l.b16 %v259
      %v1100 = vunpack.c.l.b16 %v260
      %v1101 = vunpack.c.l.b16 %v261
      %v1102 = vunpack.c.l.b16 %v262
      %v1103 = vunpack.c.l.b16 %v263
      %v1104 = vunpack.c.l.b16 %v264
      %v1105 = vunpack.c.l.b16 %v265
      %v1106 = vunpack.c.l.b16 %v266
      %v1107 = vunpack.c.l.b16 %v267
      %v1108 = vunpack.c.l.b16 %v268
      %v1109 = vunpack.c.l.b16 %v269
      %v1110 = vunpack.c.l.b16 %v270
      %v1111 = vunpack.c.l.b16 %v271
      %v1112 = vunpack.c.l.b16 %v272
      %v1113 = vunpack.c.l.b16 %v273
      %v1114 = vunpack.c.l.b16 %v274
      %v1115 = vunpack.c.l.b16 %v275
      %v1116 = vunpack.c.l.b16 %v276
      %v1117 = vunpack.c.l.b16 %v277
      %v1118 = vunpack.c.l.b16 %v278
      %v1119 = vunpack.c.l.b16 %v279
      %v1120 = vunpack.c.l.b16 %v280
      %v1121 = vunpack.c.l.b16 %v281
      %v1122 = vunpack.c.l.b16 %v282
      %v1123 = vpack.c.b16 %v1060, %v1059
      %v1124 = vpack.c.b16 %v1062, %v1061
      %v1125 = vpack.c.b16 %v1064, %v1063
      %v1126 = vpack.c.b16 %v1066, %v1065
      %v1127 = vpack.c.b16 %v1068, %v1067
      %v1128 = vpack.c.b16 %v1070, %v1069
      %v1129 = vpack.c.b16 %v1072, %v1071
      %v1130 = vpack.c.b16 %v1074, %v1073
      %v1131 = vpack.c.b16 %v1076, %v1075
      %v1132 = vpack.c.b16 %v1078, %v1077
      %v1133 = vpack.c.b16 %v1080, %v1079
      %v1134 = vpack.c.b16 %v1082, %v1081
      %v1135 = vpack.c.b16 %v1084, %v1083
      %v1136 = vpack.c.b16 %v1086, %v1085
      %v1137 = vpack.c.b16 %v1088, %v1087
      %v1138 = vpack.c.b16 %v1090, %v1089
      %v1139 = vpack.c.b16 %v1092, %v1091
      %v1140 = vpack.c.b16 %v1094, %v1093
      %v1141 = vpack.c.b16 %v1096, %v1095
      %v1142 = vpack.c.b16 %v1098, %v1097
      %v1143 = vpack.c.b16 %v1100, %v1099
      %v1144 = vpack.c.b16 %v1102, %v1101
      %v1145 = vpack.c.b16 %v1104, %v1103
      %v1146 = vpack.c.b16 %v1106, %v1105
      %v1147 = vpack.c.b16 %v1108, %v1107
      %v1148 = vpack.c.b16 %v1110, %v1109
      %v1149 = vpack.c.b16 %v1112, %v1111
      %v1150 = vpack.c.b16 %v1114, %v1113
      %v1151 = vpack.c.b16 %v1116, %v1115
      %v1152 = vpack.c.b16 %v1118, %v1117
      %v1153 = vpack.c.b16 %v1120, %v1119
      %v1154 = vpack.c.b16 %v1122, %v1121
      %1187 = vmatprep.subr.bf16.mxu0 0
      %1188 = vmatpush1.bf16.msra.mxu0 %v1123
      %1189 = vmatprep.subr.bf16.mxu0 0
      %1190 = vmatpush1.bf16.msra.mxu0 %v1124
      %1191 = vmatprep.subr.bf16.mxu0 0
      %1192 = vmatpush1.bf16.msra.mxu0 %v1125
      %1193 = vmatprep.subr.bf16.mxu0 0
      %1194 = vmatpush1.bf16.msra.mxu0 %v1126
      %1195 = vmatprep.subr.bf16.mxu0 0
      %1196 = vmatpush1.bf16.msra.mxu0 %v1127
      %1197 = vmatprep.subr.bf16.mxu0 0
      %1198 = vmatpush1.bf16.msra.mxu0 %v1128
      %1199 = vmatprep.subr.bf16.mxu0 0
      %1200 = vmatpush1.bf16.msra.mxu0 %v1129
      %1201 = vmatprep.subr.bf16.mxu0 0
      %1202 = vmatpush1.bf16.msra.mxu0 %v1130
      %1203 = vmatprep.subr.bf16.mxu0 0
      %1204 = vmatpush1.bf16.msra.mxu0 %v1131
      %1205 = vmatprep.subr.bf16.mxu0 0
      %1206 = vmatpush1.bf16.msra.mxu0 %v1132
      %1207 = vmatprep.subr.bf16.mxu0 0
      %1208 = vmatpush1.bf16.msra.mxu0 %v1133
      %1209 = vmatprep.subr.bf16.mxu0 0
      %1210 = vmatpush1.bf16.msra.mxu0 %v1134
      %1211 = vmatprep.subr.bf16.mxu0 0
      %1212 = vmatpush1.bf16.msra.mxu0 %v1135
      %1213 = vmatprep.subr.bf16.mxu0 0
      %1214 = vmatpush1.bf16.msra.mxu0 %v1136
      %1215 = vmatprep.subr.bf16.mxu0 0
      %1216 = vmatpush1.bf16.msra.mxu0 %v1137
      %1217 = vmatprep.subr.bf16.mxu0 0
      %1218 = vmatpush1.bf16.msra.mxu0 %v1138
      %1219 = vmatprep.mubr.bf16.mxu0 %v417
      %1220 = vmatmul.mubr.bf16.gmra.mrb[0].mxu0 %v416
      %v1221 = vpop.f32.mrb[0].mxu0
      %v1222 = vadd.f32 %v937, %v1221
      %v1223 = vpop.f32.mrb[0].mxu0
      %v1224 = vpop.f32.mrb[0].mxu0
      %v1225 = vadd.f32 %v940, %v1224
      %v1226 = vpop.f32.mrb[0].mxu0
      %1227 = vmatprep.mubr.bf16.mxu0 %v421
      %1228 = vmatmul.mubr.bf16.gmra.mrb[0].mxu0 %v420
      %v1229 = vpop.f32.mrb[0].mxu0
      %v1230 = vadd.f32 %v945, %v1229
      %v1231 = vpop.f32.mrb[0].mxu0
      %v1232 = vpop.f32.mrb[0].mxu0
      %v1233 = vadd.f32 %v948, %v1232
      %v1234 = vpop.f32.mrb[0].mxu0
      %1235 = vmatprep.mubr.bf16.mxu0 %v425
      %1236 = vmatmul.mubr.bf16.gmra.mrb[0].mxu0 %v424
      %v1237 = vpop.f32.mrb[0].mxu0
      %v1238 = vadd.f32 %v953, %v1237
      %v1239 = vpop.f32.mrb[0].mxu0
      %v1240 = vpop.f32.mrb[0].mxu0
      %v1241 = vadd.f32 %v956, %v1240
      %v1242 = vpop.f32.mrb[0].mxu0
      %1243 = vmatprep.mubr.bf16.mxu0 %v429
      %1244 = vmatmul.mubr.bf16.gmra.mrb[0].mxu0 %v428
      %v1245 = vpop.f32.mrb[0].mxu0
      %v1246 = vadd.f32 %v961, %v1245
      %v1247 = vpop.f32.mrb[0].mxu0
      %v1248 = vpop.f32.mrb[0].mxu0
      %v1249 = vadd.f32 %v964, %v1248
      %v1250 = vpop.f32.mrb[0].mxu0
      %1251 = vmatprep.mubr.bf16.mxu0 %v433
      %1252 = vmatmul.mubr.bf16.gmra.mrb[0].mxu0 %v432
      %v1253 = vpop.f32.mrb[0].mxu0
      %v1254 = vadd.f32 %v969, %v1253
      %v1255 = vpop.f32.mrb[0].mxu0
      %v1256 = vpop.f32.mrb[0].mxu0
      %v1257 = vadd.f32 %v972, %v1256
      %v1258 = vpop.f32.mrb[0].mxu0
      %1259 = vdwg.mxu0
      %1260 = vmatprep.subr.bf16.mxu0 0
      %1261 = vmatpush1.bf16.msra.mxu0 %v1139
      %1262 = vmatprep.subr.bf16.mxu0 0
      %1263 = vmatpush1.bf16.msra.mxu0 %v1140
      %1264 = vmatprep.subr.bf16.mxu0 0
      %1265 = vmatpush1.bf16.msra.mxu0 %v1141
      %1266 = vmatprep.subr.bf16.mxu0 0
      %1267 = vmatpush1.bf16.msra.mxu0 %v1142
      %1268 = vmatprep.subr.bf16.mxu0 0
      %1269 = vmatpush1.bf16.msra.mxu0 %v1143
      %1270 = vmatprep.subr.bf16.mxu0 0
      %1271 = vmatpush1.bf16.msra.mxu0 %v1144
      %1272 = vmatprep.subr.bf16.mxu0 0
      %1273 = vmatpush1.bf16.msra.mxu0 %v1145
      %1274 = vmatprep.subr.bf16.mxu0 0
      %1275 = vmatpush1.bf16.msra.mxu0 %v1146
      %1276 = vmatprep.subr.bf16.mxu0 0
      %1277 = vmatpush1.bf16.msra.mxu0 %v1147
      %1278 = vmatprep.subr.bf16.mxu0 0
      %1279 = vmatpush1.bf16.msra.mxu0 %v1148
      %1280 = vmatprep.subr.bf16.mxu0 0
      %1281 = vmatpush1.bf16.msra.mxu0 %v1149
      %1282 = vmatprep.subr.bf16.mxu0 0
      %1283 = vmatpush1.bf16.msra.mxu0 %v1150
      %1284 = vmatprep.subr.bf16.mxu0 0
      %1285 = vmatpush1.bf16.msra.mxu0 %v1151
      %1286 = vmatprep.subr.bf16.mxu0 0
      %1287 = vmatpush1.bf16.msra.mxu0 %v1152
      %1288 = vmatprep.subr.bf16.mxu0 0
      %1289 = vmatpush1.bf16.msra.mxu0 %v1153
      %1290 = vmatprep.subr.bf16.mxu0 0
      %1291 = vmatpush1.bf16.msra.mxu0 %v1154
      %1292 = vmatprep.mubr.bf16.mxu0 %v419
      %1293 = vmatmul.mubr.bf16.gmra.mrb[0].mxu0 %v418
      %v1294 = vpop.f32.mrb[0].mxu0
      %v1295 = vadd.f32 %v1222, %v1294
      %v1296 = vpop.f32.mrb[0].mxu0
      %v1297 = vpop.f32.mrb[0].mxu0
      %v1298 = vadd.f32 %v1225, %v1297
      %v1299 = vpop.f32.mrb[0].mxu0
      %1300 = vmatprep.mubr.bf16.mxu0 %v423
      %1301 = vmatmul.mubr.bf16.gmra.mrb[0].mxu0 %v422
      %v1302 = vpop.f32.mrb[0].mxu0
      %v1303 = vadd.f32 %v1230, %v1302
      %v1304 = vpop.f32.mrb[0].mxu0
      %v1305 = vpop.f32.mrb[0].mxu0
      %v1306 = vadd.f32 %v1233, %v1305
      %v1307 = vpop.f32.mrb[0].mxu0
      %1308 = vmatprep.mubr.bf16.mxu0 %v427
      %1309 = vmatmul.mubr.bf16.gmra.mrb[0].mxu0 %v426
      %v1310 = vpop.f32.mrb[0].mxu0
      %v1311 = vadd.f32 %v1238, %v1310
      %v1312 = vpop.f32.mrb[0].mxu0
      %v1313 = vpop.f32.mrb[0].mxu0
      %v1314 = vadd.f32 %v1241, %v1313
      %v1315 = vpop.f32.mrb[0].mxu0
      %1316 = vmatprep.mubr.bf16.mxu0 %v431
      %1317 = vmatmul.mubr.bf16.gmra.mrb[0].mxu0 %v430
      %v1318 = vpop.f32.mrb[0].mxu0
      %v1319 = vadd.f32 %v1246, %v1318
      %v1320 = vpop.f32.mrb[0].mxu0
      %v1321 = vpop.f32.mrb[0].mxu0
      %v1322 = vadd.f32 %v1249, %v1321
      %v1323 = vpop.f32.mrb[0].mxu0
      %1324 = vmatprep.mubr.bf16.mxu0 %v435
      %1325 = vmatmul.mubr.bf16.gmra.mrb[0].mxu0 %v434
      %v1326 = vpop.f32.mrb[0].mxu0
      %v1327 = vadd.f32 %v1254, %v1326
      %v1328 = vpop.f32.mrb[0].mxu0
      %v1329 = vpop.f32.mrb[0].mxu0
      %v1330 = vadd.f32 %v1257, %v1329
      %v1331 = vpop.f32.mrb[0].mxu0
      %1332 = vdwg.mxu0
      %v1333 = vld [vmem:[%s192 + $0x10] sm:$0xee]
      %v1334 = vld [vmem:[%s192 + $0x18] sm:$0xee]
      %v1335 = vld [vmem:[%s192 + $0x20] sm:$0xff]
      %v1336 = vld [vmem:[%s192 + $0x28] sm:$0xff]
      %v1337 = vld [vmem:[%s192 + $0x30] sm:$0xff]
      %v1338 = vld [vmem:[%s192 + $0x38] sm:$0xff]
      %v1339 = vld [vmem:[%s192 + $0x40] sm:$0xff]
      %v1340 = vld [vmem:[%s192 + $0x48] sm:$0xff]
      %v1341 = vld [vmem:[%s192 + $0x50] sm:$0xff]
      %v1342 = vld [vmem:[%s192 + $0x58] sm:$0xff]
      %v1343 = vld [vmem:[%s192 + $0x60] sm:$0xff]
      %v1344 = vld [vmem:[%s192 + $0x68] sm:$0xff]
      %v1345 = vld [vmem:[%s192 + $0x70] sm:$0xff]
      %v1346 = vld [vmem:[%s192 + $0x78] sm:$0xff]
      %v1347 = vld [vmem:[%s192 + $0x80] sm:$0xff]
      %v1348 = vld [vmem:[%s192 + $0x88] sm:$0xff]
      %v1349 = vld [vmem:[%s192 + $0x90] sm:$0xff]
      %v1350 = vld [vmem:[%s192 + $0x98] sm:$0xff]
      %v1351 = vld [vmem:[%s192 + $0xa0] sm:$0xff]
      %v1352 = vld [vmem:[%s192 + $0xa8] sm:$0xff]
      %v1353 = vld [vmem:[%s192 + $0xb0] sm:$0x11]
      %v1354 = vld [vmem:[%s192 + $0xb8] sm:$0x11]
      %s1355 = scalar_lea.vmem %s1, 512
      %v1356 = vld [vmem:[%s1355] sm:$0xf]
      %v1357 = vld [vmem:[%s1355 + $0x4] sm:$0xf]
      %v1358 = vld [vmem:[%s1355 + $0x8] sm:$0xf]
      %v1359 = vld [vmem:[%s1355 + $0xc] sm:$0xf]
      %v1360 = vld [vmem:[%s1355 + $0x10] sm:$0xf]
      %v1361 = vld [vmem:[%s1355 + $0x14] sm:$0xf]
      %v1362 = vld [vmem:[%s1355 + $0x18] sm:$0xf]
      %v1363 = vld [vmem:[%s1355 + $0x1c] sm:$0xf]
      %v1364 = vld [vmem:[%s1355 + $0x20] sm:$0xf]
      %v1365 = vld [vmem:[%s1355 + $0x24] sm:$0xf]
      %v1366 = vld [vmem:[%s1355 + $0x28] sm:$0xf]
      %v1367 = vld [vmem:[%s1355 + $0x2c] sm:$0xf]
      %v1368 = vld [vmem:[%s1355 + $0x30] sm:$0xf]
      %v1369 = vld [vmem:[%s1355 + $0x34] sm:$0xf]
      %v1370 = vld [vmem:[%s1355 + $0x38] sm:$0xf]
      %v1371 = vld [vmem:[%s1355 + $0x3c] sm:$0xf]
      %v1372 = vld [vmem:[%s1355 + $0x40] sm:$0xf]
      %v1373 = vld [vmem:[%s1355 + $0x44] sm:$0xf]
      %v1374 = vld [vmem:[%s1355 + $0x48] sm:$0xf]
      %v1375 = vld [vmem:[%s1355 + $0x4c] sm:$0xf]
      %v1376 = vld [vmem:[%s1355 + $0x50] sm:$0xf]
      %v1377 = vld [vmem:[%s1355 + $0x54] sm:$0xf]
      %v1378 = vld [vmem:[%s1355 + $0x58] sm:$0xf]
      %v1379 = vld [vmem:[%s1355 + $0x5c] sm:$0xf]
      %v1380 = vld [vmem:[%s1355 + $0x60] sm:$0xf]
      %v1381 = vld [vmem:[%s1355 + $0x64] sm:$0xf]
      %v1382 = vld [vmem:[%s1355 + $0x68] sm:$0xf]
      %v1383 = vld [vmem:[%s1355 + $0x6c] sm:$0xf]
      %v1384 = vld [vmem:[%s1355 + $0x70] sm:$0xf]
      %v1385 = vld [vmem:[%s1355 + $0x74] sm:$0xf]
      %v1386 = vld [vmem:[%s1355 + $0x78] sm:$0xf]
      %v1387 = vld [vmem:[%s1355 + $0x7c] sm:$0xf]
      %v1388 = vld [vmem:[%s1355 + $0x80] sm:$0xf]
      %v1389 = vld [vmem:[%s1355 + $0x84] sm:$0xf]
      %v1390 = vld [vmem:[%s1355 + $0x88] sm:$0xf]
      %v1391 = vld [vmem:[%s1355 + $0x8c] sm:$0xf]
      %v1392 = vld [vmem:[%s1355 + $0x90] sm:$0xf]
      %v1393 = vld [vmem:[%s1355 + $0x94] sm:$0xf]
      %v1394 = vld [vmem:[%s1355 + $0x98] sm:$0xf]
      %v1395 = vld [vmem:[%s1355 + $0x9c] sm:$0xf]
      %v1396 = vld [vmem:[%s1355 + $0xa0] sm:$0xf]
      %v1397 = vld [vmem:[%s1355 + $0xa4] sm:$0xf]
      %v1398 = vld [vmem:[%s1355 + $0xa8] sm:$0xf]
      %v1399 = vld [vmem:[%s1355 + $0xac] sm:$0xf]
      %v1400 = vld [vmem:[%s1355 + $0xb0] sm:$0xf]
      %v1401 = vld [vmem:[%s1355 + $0xb4] sm:$0xf]
      %v1402 = vld [vmem:[%s1355 + $0xb8] sm:$0xf]
      %v1403 = vld [vmem:[%s1355 + $0xbc] sm:$0xf]
      %v1404 = vld [vmem:[%s1355 + $0xc0] sm:$0xf]
      %v1405 = vld [vmem:[%s1355 + $0xc4] sm:$0xf]
      %v1406 = vld [vmem:[%s1355 + $0xc8] sm:$0xf]
      %v1407 = vld [vmem:[%s1355 + $0xcc] sm:$0xf]
      %v1408 = vld [vmem:[%s1355 + $0xd0] sm:$0xf]
      %v1409 = vld [vmem:[%s1355 + $0xd4] sm:$0xf]
      %v1410 = vld [vmem:[%s1355 + $0xd8] sm:$0xf]
      %v1411 = vld [vmem:[%s1355 + $0xdc] sm:$0xf]
      %v1412 = vld [vmem:[%s1355 + $0xe0] sm:$0xf]
      %v1413 = vld [vmem:[%s1355 + $0xe4] sm:$0xf]
      %v1414 = vld [vmem:[%s1355 + $0xe8] sm:$0xf]
      %v1415 = vld [vmem:[%s1355 + $0xec] sm:$0xf]
      %v1416 = vld [vmem:[%s1355 + $0xf0] sm:$0xf]
      %v1417 = vld [vmem:[%s1355 + $0xf4] sm:$0xf]
      %v1418 = vld [vmem:[%s1355 + $0xf8] sm:$0xf]
      %v1419 = vld [vmem:[%s1355 + $0xfc] sm:$0xf]
      %v1442 = vunpack.c.l.b16 %v1333
      %v1443 = vunpack.c.h.b16 %v1333
      %v1444 = vunpack.c.l.b16 %v1334
      %v1445 = vunpack.c.h.b16 %v1334
      %v1446 = vunpack.c.l.b16 %v1335
      %v1447 = vunpack.c.h.b16 %v1335
      %v1448 = vunpack.c.l.b16 %v1336
      %v1449 = vunpack.c.h.b16 %v1336
      %v1450 = vunpack.c.l.b16 %v1337
      %v1451 = vunpack.c.h.b16 %v1337
      %v1452 = vunpack.c.l.b16 %v1338
      %v1453 = vunpack.c.h.b16 %v1338
      %v1454 = vunpack.c.l.b16 %v1339
      %v1455 = vunpack.c.h.b16 %v1339
      %v1456 = vunpack.c.l.b16 %v1340
      %v1457 = vunpack.c.h.b16 %v1340
      %v1458 = vunpack.c.l.b16 %v1341
      %v1459 = vunpack.c.h.b16 %v1341
      %v1460 = vunpack.c.l.b16 %v1342
      %v1461 = vunpack.c.h.b16 %v1342
      %v1462 = vunpack.c.l.b16 %v1343
      %v1463 = vunpack.c.h.b16 %v1343
      %v1464 = vunpack.c.l.b16 %v1344
      %v1465 = vunpack.c.h.b16 %v1344
      %v1466 = vunpack.c.l.b16 %v1345
      %v1467 = vunpack.c.h.b16 %v1345
      %v1468 = vunpack.c.l.b16 %v1346
      %v1469 = vunpack.c.h.b16 %v1346
      %v1470 = vunpack.c.l.b16 %v1347
      %v1471 = vunpack.c.h.b16 %v1347
      %v1472 = vunpack.c.l.b16 %v1348
      %v1473 = vunpack.c.h.b16 %v1348
      %v1474 = vunpack.c.l.b16 %v1349
      %v1475 = vunpack.c.h.b16 %v1349
      %v1476 = vunpack.c.l.b16 %v1350
      %v1477 = vunpack.c.h.b16 %v1350
      %v1478 = vunpack.c.l.b16 %v1351
      %v1479 = vunpack.c.h.b16 %v1351
      %v1480 = vunpack.c.l.b16 %v1352
      %v1481 = vunpack.c.h.b16 %v1352
      %v1482 = vunpack.c.l.b16 %v1353
      %v1483 = vunpack.c.h.b16 %v1353
      %v1484 = vunpack.c.l.b16 %v1354
      %v1485 = vunpack.c.h.b16 %v1354
      %v1486 = vpack.c.b16 %v1446, %v1442
      %v1487 = vpack.c.b16 %v1447, %v1443
      %v1488 = vpack.c.b16 %v1448, %v1444
      %v1489 = vpack.c.b16 %v1449, %v1445
      %v1490 = vpack.c.b16 %v1454, %v1450
      %v1491 = vpack.c.b16 %v1455, %v1451
      %v1492 = vpack.c.b16 %v1456, %v1452
      %v1493 = vpack.c.b16 %v1457, %v1453
      %v1494 = vpack.c.b16 %v1462, %v1458
      %v1495 = vpack.c.b16 %v1463, %v1459
      %v1496 = vpack.c.b16 %v1464, %v1460
      %v1497 = vpack.c.b16 %v1465, %v1461
      %v1498 = vpack.c.b16 %v1470, %v1466
      %v1499 = vpack.c.b16 %v1471, %v1467
      %v1500 = vpack.c.b16 %v1472, %v1468
      %v1501 = vpack.c.b16 %v1473, %v1469
      %v1502 = vpack.c.b16 %v1478, %v1474
      %v1503 = vpack.c.b16 %v1479, %v1475
      %v1504 = vpack.c.b16 %v1480, %v1476
      %v1505 = vpack.c.b16 %v1481, %v1477
      %v1506 = vpack.c.b16 %v1482, %v1482
      %v1507 = vpack.c.b16 %v1483, %v1483
      %v1508 = vpack.c.b16 %v1484, %v1484
      %v1509 = vpack.c.b16 %v1485, %v1485
      %vm1510 = vcmask 1046528
      %v1511 = vrot.slane %v1486, 1
      %v1512 = vrot.slane %v1490, 1
      %v1513 = vsel %vm1510, %v1511, %v1512
      %v1514 = vrot.slane %v1487, 1
      %v1515 = vrot.slane %v1491, 1
      %v1516 = vsel %vm1510, %v1514, %v1515
      %v1517 = vrot.slane %v1488, 1
      %v1518 = vrot.slane %v1492, 1
      %v1519 = vsel %vm1510, %v1517, %v1518
      %v1520 = vrot.slane %v1489, 1
      %v1521 = vrot.slane %v1493, 1
      %v1522 = vsel %vm1510, %v1520, %v1521
      %v1523 = vrot.slane %v1494, 1
      %v1524 = vsel %vm1510, %v1512, %v1523
      %v1525 = vrot.slane %v1495, 1
      %v1526 = vsel %vm1510, %v1515, %v1525
      %v1527 = vrot.slane %v1496, 1
      %v1528 = vsel %vm1510, %v1518, %v1527
      %v1529 = vrot.slane %v1497, 1
      %v1530 = vsel %vm1510, %v1521, %v1529
      %v1531 = vrot.slane %v1498, 1
      %v1532 = vsel %vm1510, %v1523, %v1531
      %v1533 = vrot.slane %v1499, 1
      %v1534 = vsel %vm1510, %v1525, %v1533
      %v1535 = vrot.slane %v1500, 1
      %v1536 = vsel %vm1510, %v1527, %v1535
      %v1537 = vrot.slane %v1501, 1
      %v1538 = vsel %vm1510, %v1529, %v1537
      %v1539 = vrot.slane %v1502, 1
      %v1540 = vsel %vm1510, %v1531, %v1539
      %v1541 = vrot.slane %v1503, 1
      %v1542 = vsel %vm1510, %v1533, %v1541
      %v1543 = vrot.slane %v1504, 1
      %v1544 = vsel %vm1510, %v1535, %v1543
      %v1545 = vrot.slane %v1505, 1
      %v1546 = vsel %vm1510, %v1537, %v1545
      %v1547 = vrot.slane %v1506, 1
      %v1548 = vsel %vm1510, %v1539, %v1547
      %v1549 = vrot.slane %v1507, 1
      %v1550 = vsel %vm1510, %v1541, %v1549
      %v1551 = vrot.slane %v1508, 1
      %v1552 = vsel %vm1510, %v1543, %v1551
      %v1553 = vrot.slane %v1509, 1
      %v1554 = vsel %vm1510, %v1545, %v1553
      %v1639 = vunpack.c.l.b16 %v1356
      %v1640 = vunpack.c.l.b16 %v1357
      %v1641 = vunpack.c.l.b16 %v1358
      %v1642 = vunpack.c.l.b16 %v1359
      %v1643 = vunpack.c.l.b16 %v1360
      %v1644 = vunpack.c.l.b16 %v1361
      %v1645 = vunpack.c.l.b16 %v1362
      %v1646 = vunpack.c.l.b16 %v1363
      %v1647 = vunpack.c.l.b16 %v1364
      %v1648 = vunpack.c.l.b16 %v1365
      %v1649 = vunpack.c.l.b16 %v1366
      %v1650 = vunpack.c.l.b16 %v1367
      %v1651 = vunpack.c.l.b16 %v1368
      %v1652 = vunpack.c.l.b16 %v1369
      %v1653 = vunpack.c.l.b16 %v1370
      %v1654 = vunpack.c.l.b16 %v1371
      %v1655 = vunpack.c.l.b16 %v1372
      %v1656 = vunpack.c.l.b16 %v1373
      %v1657 = vunpack.c.l.b16 %v1374
      %v1658 = vunpack.c.l.b16 %v1375
      %v1659 = vunpack.c.l.b16 %v1376
      %v1660 = vunpack.c.l.b16 %v1377
      %v1661 = vunpack.c.l.b16 %v1378
      %v1662 = vunpack.c.l.b16 %v1379
      %v1663 = vunpack.c.l.b16 %v1380
      %v1664 = vunpack.c.l.b16 %v1381
      %v1665 = vunpack.c.l.b16 %v1382
      %v1666 = vunpack.c.l.b16 %v1383
      %v1667 = vunpack.c.l.b16 %v1384
      %v1668 = vunpack.c.l.b16 %v1385
      %v1669 = vunpack.c.l.b16 %v1386
      %v1670 = vunpack.c.l.b16 %v1387
      %v1671 = vunpack.c.l.b16 %v1388
      %v1672 = vunpack.c.l.b16 %v1389
      %v1673 = vunpack.c.l.b16 %v1390
      %v1674 = vunpack.c.l.b16 %v1391
      %v1675 = vunpack.c.l.b16 %v1392
      %v1676 = vunpack.c.l.b16 %v1393
      %v1677 = vunpack.c.l.b16 %v1394
      %v1678 = vunpack.c.l.b16 %v1395
      %v1679 = vunpack.c.l.b16 %v1396
      %v1680 = vunpack.c.l.b16 %v1397
      %v1681 = vunpack.c.l.b16 %v1398
      %v1682 = vunpack.c.l.b16 %v1399
      %v1683 = vunpack.c.l.b16 %v1400
      %v1684 = vunpack.c.l.b16 %v1401
      %v1685 = vunpack.c.l.b16 %v1402
      %v1686 = vunpack.c.l.b16 %v1403
      %v1687 = vunpack.c.l.b16 %v1404
      %v1688 = vunpack.c.l.b16 %v1405
      %v1689 = vunpack.c.l.b16 %v1406
      %v1690 = vunpack.c.l.b16 %v1407
      %v1691 = vunpack.c.l.b16 %v1408
      %v1692 = vunpack.c.l.b16 %v1409
      %v1693 = vunpack.c.l.b16 %v1410
      %v1694 = vunpack.c.l.b16 %v1411
      %v1695 = vunpack.c.l.b16 %v1412
      %v1696 = vunpack.c.l.b16 %v1413
      %v1697 = vunpack.c.l.b16 %v1414
      %v1698 = vunpack.c.l.b16 %v1415
      %v1699 = vunpack.c.l.b16 %v1416
      %v1700 = vunpack.c.l.b16 %v1417
      %v1701 = vunpack.c.l.b16 %v1418
      %v1702 = vunpack.c.l.b16 %v1419
      %v1703 = vpack.c.b16 %v1640, %v1639
      %v1704 = vpack.c.b16 %v1642, %v1641
      %v1705 = vpack.c.b16 %v1644, %v1643
      %v1706 = vpack.c.b16 %v1646, %v1645
      %v1707 = vpack.c.b16 %v1648, %v1647
      %v1708 = vpack.c.b16 %v1650, %v1649
      %v1709 = vpack.c.b16 %v1652, %v1651
      %v1710 = vpack.c.b16 %v1654, %v1653
      %v1711 = vpack.c.b16 %v1656, %v1655
      %v1712 = vpack.c.b16 %v1658, %v1657
      %v1713 = vpack.c.b16 %v1660, %v1659
      %v1714 = vpack.c.b16 %v1662, %v1661
      %v1715 = vpack.c.b16 %v1664, %v1663
      %v1716 = vpack.c.b16 %v1666, %v1665
      %v1717 = vpack.c.b16 %v1668, %v1667
      %v1718 = vpack.c.b16 %v1670, %v1669
      %v1719 = vpack.c.b16 %v1672, %v1671
      %v1720 = vpack.c.b16 %v1674, %v1673
      %v1721 = vpack.c.b16 %v1676, %v1675
      %v1722 = vpack.c.b16 %v1678, %v1677
      %v1723 = vpack.c.b16 %v1680, %v1679
      %v1724 = vpack.c.b16 %v1682, %v1681
      %v1725 = vpack.c.b16 %v1684, %v1683
      %v1726 = vpack.c.b16 %v1686, %v1685
      %v1727 = vpack.c.b16 %v1688, %v1687
      %v1728 = vpack.c.b16 %v1690, %v1689
      %v1729 = vpack.c.b16 %v1692, %v1691
      %v1730 = vpack.c.b16 %v1694, %v1693
      %v1731 = vpack.c.b16 %v1696, %v1695
      %v1732 = vpack.c.b16 %v1698, %v1697
      %v1733 = vpack.c.b16 %v1700, %v1699
      %v1734 = vpack.c.b16 %v1702, %v1701
      %1767 = vmatprep.subr.bf16.mxu0 0
      %1768 = vmatpush1.bf16.msra.mxu0 %v1703
      %1769 = vmatprep.subr.bf16.mxu0 0
      %1770 = vmatpush1.bf16.msra.mxu0 %v1704
      %1771 = vmatprep.subr.bf16.mxu0 0
      %1772 = vmatpush1.bf16.msra.mxu0 %v1705
      %1773 = vmatprep.subr.bf16.mxu0 0
      %1774 = vmatpush1.bf16.msra.mxu0 %v1706
      %1775 = vmatprep.subr.bf16.mxu0 0
      %1776 = vmatpush1.bf16.msra.mxu0 %v1707
      %1777 = vmatprep.subr.bf16.mxu0 0
      %1778 = vmatpush1.bf16.msra.mxu0 %v1708
      %1779 = vmatprep.subr.bf16.mxu0 0
      %1780 = vmatpush1.bf16.msra.mxu0 %v1709
      %1781 = vmatprep.subr.bf16.mxu0 0
      %1782 = vmatpush1.bf16.msra.mxu0 %v1710
      %1783 = vmatprep.subr.bf16.mxu0 0
      %1784 = vmatpush1.bf16.msra.mxu0 %v1711
      %1785 = vmatprep.subr.bf16.mxu0 0
      %1786 = vmatpush1.bf16.msra.mxu0 %v1712
      %1787 = vmatprep.subr.bf16.mxu0 0
      %1788 = vmatpush1.bf16.msra.mxu0 %v1713
      %1789 = vmatprep.subr.bf16.mxu0 0
      %1790 = vmatpush1.bf16.msra.mxu0 %v1714
      %1791 = vmatprep.subr.bf16.mxu0 0
      %1792 = vmatpush1.bf16.msra.mxu0 %v1715
      %1793 = vmatprep.subr.bf16.mxu0 0
      %1794 = vmatpush1.bf16.msra.mxu0 %v1716
      %1795 = vmatprep.subr.bf16.mxu0 0
      %1796 = vmatpush1.bf16.msra.mxu0 %v1717
      %1797 = vmatprep.subr.bf16.mxu0 0
      %1798 = vmatpush1.bf16.msra.mxu0 %v1718
      %1799 = vmatprep.mubr.bf16.mxu0 %v1516
      %1800 = vmatmul.mubr.bf16.gmra.mrb[0].mxu0 %v1513
      %v1801 = vpop.f32.mrb[0].mxu0
      %v1802 = vadd.f32 0.0, %v1801
      %v1803 = vpop.f32.mrb[0].mxu0
      %v1804 = vpop.f32.mrb[0].mxu0
      %v1805 = vadd.f32 0.0, %v1804
      %v1806 = vpop.f32.mrb[0].mxu0
      %1807 = vmatprep.mubr.bf16.mxu0 %v1526
      %1808 = vmatmul.mubr.bf16.gmra.mrb[0].mxu0 %v1524
      %v1809 = vpop.f32.mrb[0].mxu0
      %v1810 = vadd.f32 0.0, %v1809
      %v1811 = vpop.f32.mrb[0].mxu0
      %v1812 = vpop.f32.mrb[0].mxu0
      %v1813 = vadd.f32 0.0, %v1812
      %v1814 = vpop.f32.mrb[0].mxu0
      %1815 = vmatprep.mubr.bf16.mxu0 %v1534
      %1816 = vmatmul.mubr.bf16.gmra.mrb[0].mxu0 %v1532
      %v1817 = vpop.f32.mrb[0].mxu0
      %v1818 = vadd.f32 0.0, %v1817
      %v1819 = vpop.f32.mrb[0].mxu0
      %v1820 = vpop.f32.mrb[0].mxu0
      %v1821 = vadd.f32 0.0, %v1820
      %v1822 = vpop.f32.mrb[0].mxu0
      %1823 = vmatprep.mubr.bf16.mxu0 %v1542
      %1824 = vmatmul.mubr.bf16.gmra.mrb[0].mxu0 %v1540
      %v1825 = vpop.f32.mrb[0].mxu0
      %v1826 = vadd.f32 0.0, %v1825
      %v1827 = vpop.f32.mrb[0].mxu0
      %v1828 = vpop.f32.mrb[0].mxu0
      %v1829 = vadd.f32 0.0, %v1828
      %v1830 = vpop.f32.mrb[0].mxu0
      %1831 = vmatprep.mubr.bf16.mxu0 %v1550
      %1832 = vmatmul.mubr.bf16.gmra.mrb[0].mxu0 %v1548
      %v1833 = vpop.f32.mrb[0].mxu0
      %v1834 = vadd.f32 0.0, %v1833
      %v1835 = vpop.f32.mrb[0].mxu0
      %v1836 = vpop.f32.mrb[0].mxu0
      %v1837 = vadd.f32 0.0, %v1836
      %v1838 = vpop.f32.mrb[0].mxu0
      %1839 = vdwg.mxu0
      %1840 = vmatprep.subr.bf16.mxu0 0
      %1841 = vmatpush1.bf16.msra.mxu0 %v1719
      %1842 = vmatprep.subr.bf16.mxu0 0
      %1843 = vmatpush1.bf16.msra.mxu0 %v1720
      %1844 = vmatprep.subr.bf16.mxu0 0
      %1845 = vmatpush1.bf16.msra.mxu0 %v1721
      %1846 = vmatprep.subr.bf16.mxu0 0
      %1847 = vmatpush1.bf16.msra.mxu0 %v1722
      %1848 = vmatprep.subr.bf16.mxu0 0
      %1849 = vmatpush1.bf16.msra.mxu0 %v1723
      %1850 = vmatprep.subr.bf16.mxu0 0
      %1851 = vmatpush1.bf16.msra.mxu0 %v1724
      %1852 = vmatprep.subr.bf16.mxu0 0
      %1853 = vmatpush1.bf16.msra.mxu0 %v1725
      %1854 = vmatprep.subr.bf16.mxu0 0
      %1855 = vmatpush1.bf16.msra.mxu0 %v1726
      %1856 = vmatprep.subr.bf16.mxu0 0
      %1857 = vmatpush1.bf16.msra.mxu0 %v1727
      %1858 = vmatprep.subr.bf16.mxu0 0
      %1859 = vmatpush1.bf16.msra.mxu0 %v1728
      %1860 = vmatprep.subr.bf16.mxu0 0
      %1861 = vmatpush1.bf16.msra.mxu0 %v1729
      %1862 = vmatprep.subr.bf16.mxu0 0
      %1863 = vmatpush1.bf16.msra.mxu0 %v1730
      %1864 = vmatprep.subr.bf16.mxu0 0
      %1865 = vmatpush1.bf16.msra.mxu0 %v1731
      %1866 = vmatprep.subr.bf16.mxu0 0
      %1867 = vmatpush1.bf16.msra.mxu0 %v1732
      %1868 = vmatprep.subr.bf16.mxu0 0
      %1869 = vmatpush1.bf16.msra.mxu0 %v1733
      %1870 = vmatprep.subr.bf16.mxu0 0
      %1871 = vmatpush1.bf16.msra.mxu0 %v1734
      %1872 = vmatprep.mubr.bf16.mxu0 %v1522
      %1873 = vmatmul.mubr.bf16.gmra.mrb[0].mxu0 %v1519
      %v1874 = vpop.f32.mrb[0].mxu0
      %v1875 = vadd.f32 %v1802, %v1874
      %v1876 = vpop.f32.mrb[0].mxu0
      %v1877 = vpop.f32.mrb[0].mxu0
      %v1878 = vadd.f32 %v1805, %v1877
      %v1879 = vpop.f32.mrb[0].mxu0
      %1880 = vmatprep.mubr.bf16.mxu0 %v1530
      %1881 = vmatmul.mubr.bf16.gmra.mrb[0].mxu0 %v1528
      %v1882 = vpop.f32.mrb[0].mxu0
      %v1883 = vadd.f32 %v1810, %v1882
      %v1884 = vpop.f32.mrb[0].mxu0
      %v1885 = vpop.f32.mrb[0].mxu0
      %v1886 = vadd.f32 %v1813, %v1885
      %v1887 = vpop.f32.mrb[0].mxu0
      %1888 = vmatprep.mubr.bf16.mxu0 %v1538
      %1889 = vmatmul.mubr.bf16.gmra.mrb[0].mxu0 %v1536
      %v1890 = vpop.f32.mrb[0].mxu0
      %v1891 = vadd.f32 %v1818, %v1890
      %v1892 = vpop.f32.mrb[0].mxu0
      %v1893 = vpop.f32.mrb[0].mxu0
      %v1894 = vadd.f32 %v1821, %v1893
      %v1895 = vpop.f32.mrb[0].mxu0
      %1896 = vmatprep.mubr.bf16.mxu0 %v1546
      %1897 = vmatmul.mubr.bf16.gmra.mrb[0].mxu0 %v1544
      %v1898 = vpop.f32.mrb[0].mxu0
      %v1899 = vadd.f32 %v1826, %v1898
      %v1900 = vpop.f32.mrb[0].mxu0
      %v1901 = vpop.f32.mrb[0].mxu0
      %v1902 = vadd.f32 %v1829, %v1901
      %v1903 = vpop.f32.mrb[0].mxu0
      %1904 = vmatprep.mubr.bf16.mxu0 %v1554
      %1905 = vmatmul.mubr.bf16.gmra.mrb[0].mxu0 %v1552
      %v1906 = vpop.f32.mrb[0].mxu0
      %v1907 = vadd.f32 %v1834, %v1906
      %v1908 = vpop.f32.mrb[0].mxu0
      %v1909 = vpop.f32.mrb[0].mxu0
      %v1910 = vadd.f32 %v1837, %v1909
      %v1911 = vpop.f32.mrb[0].mxu0
      %1912 = vdwg.mxu0
      %v1913 = vadd.f32 %v1295, %v1875
      %v1914 = vadd.f32 %v1298, %v1878
      %v1915 = vadd.f32 %v1303, %v1883
      %v1916 = vadd.f32 %v1306, %v1886
      %v1917 = vadd.f32 %v1311, %v1891
      %v1918 = vadd.f32 %v1314, %v1894
      %v1919 = vadd.f32 %v1319, %v1899
      %v1920 = vadd.f32 %v1322, %v1902
      %v1921 = vadd.f32 %v1327, %v1907
      %v1922 = vadd.f32 %v1330, %v1910
      %v1923 = vld [vmem:[%s192 + $0xb0] sm:$0x33]
      %v1924 = vld [vmem:[%s192 + $0xb8] sm:$0x33]
      %s1925 = scalar_lea.vmem %s1, 768
      %v1926 = vld [vmem:[%s1925] sm:$0xf]
      %v1927 = vld [vmem:[%s1925 + $0x4] sm:$0xf]
      %v1928 = vld [vmem:[%s1925 + $0x8] sm:$0xf]
      %v1929 = vld [vmem:[%s1925 + $0xc] sm:$0xf]
      %v1930 = vld [vmem:[%s1925 + $0x10] sm:$0xf]
      %v1931 = vld [vmem:[%s1925 + $0x14] sm:$0xf]
      %v1932 = vld [vmem:[%s1925 + $0x18] sm:$0xf]
      %v1933 = vld [vmem:[%s1925 + $0x1c] sm:$0xf]
      %v1934 = vld [vmem:[%s1925 + $0x20] sm:$0xf]
      %v1935 = vld [vmem:[%s1925 + $0x24] sm:$0xf]
      %v1936 = vld [vmem:[%s1925 + $0x28] sm:$0xf]
      %v1937 = vld [vmem:[%s1925 + $0x2c] sm:$0xf]
      %v1938 = vld [vmem:[%s1925 + $0x30] sm:$0xf]
      %v1939 = vld [vmem:[%s1925 + $0x34] sm:$0xf]
      %v1940 = vld [vmem:[%s1925 + $0x38] sm:$0xf]
      %v1941 = vld [vmem:[%s1925 + $0x3c] sm:$0xf]
      %v1942 = vld [vmem:[%s1925 + $0x40] sm:$0xf]
      %v1943 = vld [vmem:[%s1925 + $0x44] sm:$0xf]
      %v1944 = vld [vmem:[%s1925 + $0x48] sm:$0xf]
      %v1945 = vld [vmem:[%s1925 + $0x4c] sm:$0xf]
      %v1946 = vld [vmem:[%s1925 + $0x50] sm:$0xf]
      %v1947 = vld [vmem:[%s1925 + $0x54] sm:$0xf]
      %v1948 = vld [vmem:[%s1925 + $0x58] sm:$0xf]
      %v1949 = vld [vmem:[%s1925 + $0x5c] sm:$0xf]
      %v1950 = vld [vmem:[%s1925 + $0x60] sm:$0xf]
      %v1951 = vld [vmem:[%s1925 + $0x64] sm:$0xf]
      %v1952 = vld [vmem:[%s1925 + $0x68] sm:$0xf]
      %v1953 = vld [vmem:[%s1925 + $0x6c] sm:$0xf]
      %v1954 = vld [vmem:[%s1925 + $0x70] sm:$0xf]
      %v1955 = vld [vmem:[%s1925 + $0x74] sm:$0xf]
      %v1956 = vld [vmem:[%s1925 + $0x78] sm:$0xf]
      %v1957 = vld [vmem:[%s1925 + $0x7c] sm:$0xf]
      %v1958 = vld [vmem:[%s1925 + $0x80] sm:$0xf]
      %v1959 = vld [vmem:[%s1925 + $0x84] sm:$0xf]
      %v1960 = vld [vmem:[%s1925 + $0x88] sm:$0xf]
      %v1961 = vld [vmem:[%s1925 + $0x8c] sm:$0xf]
      %v1962 = vld [vmem:[%s1925 + $0x90] sm:$0xf]
      %v1963 = vld [vmem:[%s1925 + $0x94] sm:$0xf]
      %v1964 = vld [vmem:[%s1925 + $0x98] sm:$0xf]
      %v1965 = vld [vmem:[%s1925 + $0x9c] sm:$0xf]
      %v1966 = vld [vmem:[%s1925 + $0xa0] sm:$0xf]
      %v1967 = vld [vmem:[%s1925 + $0xa4] sm:$0xf]
      %v1968 = vld [vmem:[%s1925 + $0xa8] sm:$0xf]
      %v1969 = vld [vmem:[%s1925 + $0xac] sm:$0xf]
      %v1970 = vld [vmem:[%s1925 + $0xb0] sm:$0xf]
      %v1971 = vld [vmem:[%s1925 + $0xb4] sm:$0xf]
      %v1972 = vld [vmem:[%s1925 + $0xb8] sm:$0xf]
      %v1973 = vld [vmem:[%s1925 + $0xbc] sm:$0xf]
      %v1974 = vld [vmem:[%s1925 + $0xc0] sm:$0xf]
      %v1975 = vld [vmem:[%s1925 + $0xc4] sm:$0xf]
      %v1976 = vld [vmem:[%s1925 + $0xc8] sm:$0xf]
      %v1977 = vld [vmem:[%s1925 + $0xcc] sm:$0xf]
      %v1978 = vld [vmem:[%s1925 + $0xd0] sm:$0xf]
      %v1979 = vld [vmem:[%s1925 + $0xd4] sm:$0xf]
      %v1980 = vld [vmem:[%s1925 + $0xd8] sm:$0xf]
      %v1981 = vld [vmem:[%s1925 + $0xdc] sm:$0xf]
      %v1982 = vld [vmem:[%s1925 + $0xe0] sm:$0xf]
      %v1983 = vld [vmem:[%s1925 + $0xe4] sm:$0xf]
      %v1984 = vld [vmem:[%s1925 + $0xe8] sm:$0xf]
      %v1985 = vld [vmem:[%s1925 + $0xec] sm:$0xf]
      %v1986 = vld [vmem:[%s1925 + $0xf0] sm:$0xf]
      %v1987 = vld [vmem:[%s1925 + $0xf4] sm:$0xf]
      %v1988 = vld [vmem:[%s1925 + $0xf8] sm:$0xf]
      %v1989 = vld [vmem:[%s1925 + $0xfc] sm:$0xf]
      %v1992 = vunpack.c.l.b16 %v1923
      %v1993 = vunpack.c.h.b16 %v1923
      %v1994 = vunpack.c.l.b16 %v1924
      %v1995 = vunpack.c.h.b16 %v1924
      %v1996 = vpack.c.b16 %v1992, %v1992
      %v1997 = vpack.c.b16 %v1993, %v1993
      %v1998 = vpack.c.b16 %v1994, %v1994
      %v1999 = vpack.c.b16 %v1995, %v1995
      %vm2000 = vsmask.f32 6400
      %v2002 = vshrl.u32 %v1486, 16
      %v2004 = vrot.slane %v2002, 1
      %v2005 = vshll.u32 %v1486, 16
      %v2007 = vrot.slane %v2005, 2
      %v2008 = vor.u32 %v2004, %v2007
      %v2010 = vshrl.u32 %v1490, 16
      %v2012 = vrot.slane %v2010, 1
      %v2013 = vshll.u32 %v1490, 16
      %v2015 = vrot.slane %v2013, 2
      %v2016 = vor.u32 %v2012, %v2015
      %v2017 = vsel %vm2000, %v2008, %v2016
      %v2019 = vshrl.u32 %v1487, 16
      %v2021 = vrot.slane %v2019, 1
      %v2022 = vshll.u32 %v1487, 16
      %v2024 = vrot.slane %v2022, 2
      %v2025 = vor.u32 %v2021, %v2024
      %v2027 = vshrl.u32 %v1491, 16
      %v2029 = vrot.slane %v2027, 1
      %v2030 = vshll.u32 %v1491, 16
      %v2032 = vrot.slane %v2030, 2
      %v2033 = vor.u32 %v2029, %v2032
      %v2034 = vsel %vm2000, %v2025, %v2033
      %v2036 = vshrl.u32 %v1488, 16
      %v2038 = vrot.slane %v2036, 1
      %v2039 = vshll.u32 %v1488, 16
      %v2041 = vrot.slane %v2039, 2
      %v2042 = vor.u32 %v2038, %v2041
      %v2044 = vshrl.u32 %v1492, 16
      %v2046 = vrot.slane %v2044, 1
      %v2047 = vshll.u32 %v1492, 16
      %v2049 = vrot.slane %v2047, 2
      %v2050 = vor.u32 %v2046, %v2049
      %v2051 = vsel %vm2000, %v2042, %v2050
      %v2053 = vshrl.u32 %v1489, 16
      %v2055 = vrot.slane %v2053, 1
      %v2056 = vshll.u32 %v1489, 16
      %v2058 = vrot.slane %v2056, 2
      %v2059 = vor.u32 %v2055, %v2058
      %v2061 = vshrl.u32 %v1493, 16
      %v2063 = vrot.slane %v2061, 1
      %v2064 = vshll.u32 %v1493, 16
      %v2066 = vrot.slane %v2064, 2
      %v2067 = vor.u32 %v2063, %v2066
      %v2068 = vsel %vm2000, %v2059, %v2067
      %v2070 = vshrl.u32 %v1494, 16
      %v2072 = vrot.slane %v2070, 1
      %v2073 = vshll.u32 %v1494, 16
      %v2075 = vrot.slane %v2073, 2
      %v2076 = vor.u32 %v2072, %v2075
      %v2077 = vsel %vm2000, %v2016, %v2076
      %v2079 = vshrl.u32 %v1495, 16
      %v2081 = vrot.slane %v2079, 1
      %v2082 = vshll.u32 %v1495, 16
      %v2084 = vrot.slane %v2082, 2
      %v2085 = vor.u32 %v2081, %v2084
      %v2086 = vsel %vm2000, %v2033, %v2085
      %v2088 = vshrl.u32 %v1496, 16
      %v2090 = vrot.slane %v2088, 1
      %v2091 = vshll.u32 %v1496, 16
      %v2093 = vrot.slane %v2091, 2
      %v2094 = vor.u32 %v2090, %v2093
      %v2095 = vsel %vm2000, %v2050, %v2094
      %v2097 = vshrl.u32 %v1497, 16
      %v2099 = vrot.slane %v2097, 1
      %v2100 = vshll.u32 %v1497, 16
      %v2102 = vrot.slane %v2100, 2
      %v2103 = vor.u32 %v2099, %v2102
      %v2104 = vsel %vm2000, %v2067, %v2103
      %v2106 = vshrl.u32 %v1498, 16
      %v2108 = vrot.slane %v2106, 1
      %v2109 = vshll.u32 %v1498, 16
      %v2111 = vrot.slane %v2109, 2
      %v2112 = vor.u32 %v2108, %v2111
      %v2113 = vsel %vm2000, %v2076, %v2112
      %v2115 = vshrl.u32 %v1499, 16
      %v2117 = vrot.slane %v2115, 1
      %v2118 = vshll.u32 %v1499, 16
      %v2120 = vrot.slane %v2118, 2
      %v2121 = vor.u32 %v2117, %v2120
      %v2122 = vsel %vm2000, %v2085, %v2121
      %v2124 = vshrl.u32 %v1500, 16
      %v2126 = vrot.slane %v2124, 1
      %v2127 = vshll.u32 %v1500, 16
      %v2129 = vrot.slane %v2127, 2
      %v2130 = vor.u32 %v2126, %v2129
      %v2131 = vsel %vm2000, %v2094, %v2130
      %v2133 = vshrl.u32 %v1501, 16
      %v2135 = vrot.slane %v2133, 1
      %v2136 = vshll.u32 %v1501, 16
      %v2138 = vrot.slane %v2136, 2
      %v2139 = vor.u32 %v2135, %v2138
      %v2140 = vsel %vm2000, %v2103, %v2139
      %v2142 = vshrl.u32 %v1502, 16
      %v2144 = vrot.slane %v2142, 1
      %v2145 = vshll.u32 %v1502, 16
      %v2147 = vrot.slane %v2145, 2
      %v2148 = vor.u32 %v2144, %v2147
      %v2149 = vsel %vm2000, %v2112, %v2148
      %v2151 = vshrl.u32 %v1503, 16
      %v2153 = vrot.slane %v2151, 1
      %v2154 = vshll.u32 %v1503, 16
      %v2156 = vrot.slane %v2154, 2
      %v2157 = vor.u32 %v2153, %v2156
      %v2158 = vsel %vm2000, %v2121, %v2157
      %v2160 = vshrl.u32 %v1504, 16
      %v2162 = vrot.slane %v2160, 1
      %v2163 = vshll.u32 %v1504, 16
      %v2165 = vrot.slane %v2163, 2
      %v2166 = vor.u32 %v2162, %v2165
      %v2167 = vsel %vm2000, %v2130, %v2166
      %v2169 = vshrl.u32 %v1505, 16
      %v2171 = vrot.slane %v2169, 1
      %v2172 = vshll.u32 %v1505, 16
      %v2174 = vrot.slane %v2172, 2
      %v2175 = vor.u32 %v2171, %v2174
      %v2176 = vsel %vm2000, %v2139, %v2175
      %v2178 = vshrl.u32 %v1996, 16
      %v2180 = vrot.slane %v2178, 1
      %v2181 = vshll.u32 %v1996, 16
      %v2183 = vrot.slane %v2181, 2
      %v2184 = vor.u32 %v2180, %v2183
      %v2185 = vsel %vm2000, %v2148, %v2184
      %v2187 = vshrl.u32 %v1997, 16
      %v2189 = vrot.slane %v2187, 1
      %v2190 = vshll.u32 %v1997, 16
      %v2192 = vrot.slane %v2190, 2
      %v2193 = vor.u32 %v2189, %v2192
      %v2194 = vsel %vm2000, %v2157, %v2193
      %v2196 = vshrl.u32 %v1998, 16
      %v2198 = vrot.slane %v2196, 1
      %v2199 = vshll.u32 %v1998, 16
      %v2201 = vrot.slane %v2199, 2
      %v2202 = vor.u32 %v2198, %v2201
      %v2203 = vsel %vm2000, %v2166, %v2202
      %v2205 = vshrl.u32 %v1999, 16
      %v2207 = vrot.slane %v2205, 1
      %v2208 = vshll.u32 %v1999, 16
      %v2210 = vrot.slane %v2208, 2
      %v2211 = vor.u32 %v2207, %v2210
      %v2212 = vsel %vm2000, %v2175, %v2211
      %v2297 = vunpack.c.l.b16 %v1926
      %v2298 = vunpack.c.l.b16 %v1927
      %v2299 = vunpack.c.l.b16 %v1928
      %v2300 = vunpack.c.l.b16 %v1929
      %v2301 = vunpack.c.l.b16 %v1930
      %v2302 = vunpack.c.l.b16 %v1931
      %v2303 = vunpack.c.l.b16 %v1932
      %v2304 = vunpack.c.l.b16 %v1933
      %v2305 = vunpack.c.l.b16 %v1934
      %v2306 = vunpack.c.l.b16 %v1935
      %v2307 = vunpack.c.l.b16 %v1936
      %v2308 = vunpack.c.l.b16 %v1937
      %v2309 = vunpack.c.l.b16 %v1938
      %v2310 = vunpack.c.l.b16 %v1939
      %v2311 = vunpack.c.l.b16 %v1940
      %v2312 = vunpack.c.l.b16 %v1941
      %v2313 = vunpack.c.l.b16 %v1942
      %v2314 = vunpack.c.l.b16 %v1943
      %v2315 = vunpack.c.l.b16 %v1944
      %v2316 = vunpack.c.l.b16 %v1945
      %v2317 = vunpack.c.l.b16 %v1946
      %v2318 = vunpack.c.l.b16 %v1947
      %v2319 = vunpack.c.l.b16 %v1948
      %v2320 = vunpack.c.l.b16 %v1949
      %v2321 = vunpack.c.l.b16 %v1950
      %v2322 = vunpack.c.l.b16 %v1951
      %v2323 = vunpack.c.l.b16 %v1952
      %v2324 = vunpack.c.l.b16 %v1953
      %v2325 = vunpack.c.l.b16 %v1954
      %v2326 = vunpack.c.l.b16 %v1955
      %v2327 = vunpack.c.l.b16 %v1956
      %v2328 = vunpack.c.l.b16 %v1957
      %v2329 = vunpack.c.l.b16 %v1958
      %v2330 = vunpack.c.l.b16 %v1959
      %v2331 = vunpack.c.l.b16 %v1960
      %v2332 = vunpack.c.l.b16 %v1961
      %v2333 = vunpack.c.l.b16 %v1962
      %v2334 = vunpack.c.l.b16 %v1963
      %v2335 = vunpack.c.l.b16 %v1964
      %v2336 = vunpack.c.l.b16 %v1965
      %v2337 = vunpack.c.l.b16 %v1966
      %v2338 = vunpack.c.l.b16 %v1967
      %v2339 = vunpack.c.l.b16 %v1968
      %v2340 = vunpack.c.l.b16 %v1969
      %v2341 = vunpack.c.l.b16 %v1970
      %v2342 = vunpack.c.l.b16 %v1971
      %v2343 = vunpack.c.l.b16 %v1972
      %v2344 = vunpack.c.l.b16 %v1973
      %v2345 = vunpack.c.l.b16 %v1974
      %v2346 = vunpack.c.l.b16 %v1975
      %v2347 = vunpack.c.l.b16 %v1976
      %v2348 = vunpack.c.l.b16 %v1977
      %v2349 = vunpack.c.l.b16 %v1978
      %v2350 = vunpack.c.l.b16 %v1979
      %v2351 = vunpack.c.l.b16 %v1980
      %v2352 = vunpack.c.l.b16 %v1981
      %v2353 = vunpack.c.l.b16 %v1982
      %v2354 = vunpack.c.l.b16 %v1983
      %v2355 = vunpack.c.l.b16 %v1984
      %v2356 = vunpack.c.l.b16 %v1985
      %v2357 = vunpack.c.l.b16 %v1986
      %v2358 = vunpack.c.l.b16 %v1987
      %v2359 = vunpack.c.l.b16 %v1988
      %v2360 = vunpack.c.l.b16 %v1989
      %v2361 = vpack.c.b16 %v2298, %v2297
      %v2362 = vpack.c.b16 %v2300, %v2299
      %v2363 = vpack.c.b16 %v2302, %v2301
      %v2364 = vpack.c.b16 %v2304, %v2303
      %v2365 = vpack.c.b16 %v2306, %v2305
      %v2366 = vpack.c.b16 %v2308, %v2307
      %v2367 = vpack.c.b16 %v2310, %v2309
      %v2368 = vpack.c.b16 %v2312, %v2311
      %v2369 = vpack.c.b16 %v2314, %v2313
      %v2370 = vpack.c.b16 %v2316, %v2315
      %v2371 = vpack.c.b16 %v2318, %v2317
      %v2372 = vpack.c.b16 %v2320, %v2319
      %v2373 = vpack.c.b16 %v2322, %v2321
      %v2374 = vpack.c.b16 %v2324, %v2323
      %v2375 = vpack.c.b16 %v2326, %v2325
      %v2376 = vpack.c.b16 %v2328, %v2327
      %v2377 = vpack.c.b16 %v2330, %v2329
      %v2378 = vpack.c.b16 %v2332, %v2331
      %v2379 = vpack.c.b16 %v2334, %v2333
      %v2380 = vpack.c.b16 %v2336, %v2335
      %v2381 = vpack.c.b16 %v2338, %v2337
      %v2382 = vpack.c.b16 %v2340, %v2339
      %v2383 = vpack.c.b16 %v2342, %v2341
      %v2384 = vpack.c.b16 %v2344, %v2343
      %v2385 = vpack.c.b16 %v2346, %v2345
      %v2386 = vpack.c.b16 %v2348, %v2347
      %v2387 = vpack.c.b16 %v2350, %v2349
      %v2388 = vpack.c.b16 %v2352, %v2351
      %v2389 = vpack.c.b16 %v2354, %v2353
      %v2390 = vpack.c.b16 %v2356, %v2355
      %v2391 = vpack.c.b16 %v2358, %v2357
      %v2392 = vpack.c.b16 %v2360, %v2359
      %2425 = vmatprep.subr.bf16.mxu0 0
      %2426 = vmatpush1.bf16.msra.mxu0 %v2361
      %2427 = vmatprep.subr.bf16.mxu0 0
      %2428 = vmatpush1.bf16.msra.mxu0 %v2362
      %2429 = vmatprep.subr.bf16.mxu0 0
      %2430 = vmatpush1.bf16.msra.mxu0 %v2363
      %2431 = vmatprep.subr.bf16.mxu0 0
      %2432 = vmatpush1.bf16.msra.mxu0 %v2364
      %2433 = vmatprep.subr.bf16.mxu0 0
      %2434 = vmatpush1.bf16.msra.mxu0 %v2365
      %2435 = vmatprep.subr.bf16.mxu0 0
      %2436 = vmatpush1.bf16.msra.mxu0 %v2366
      %2437 = vmatprep.subr.bf16.mxu0 0
      %2438 = vmatpush1.bf16.msra.mxu0 %v2367
      %2439 = vmatprep.subr.bf16.mxu0 0
      %2440 = vmatpush1.bf16.msra.mxu0 %v2368
      %2441 = vmatprep.subr.bf16.mxu0 0
      %2442 = vmatpush1.bf16.msra.mxu0 %v2369
      %2443 = vmatprep.subr.bf16.mxu0 0
      %2444 = vmatpush1.bf16.msra.mxu0 %v2370
      %2445 = vmatprep.subr.bf16.mxu0 0
      %2446 = vmatpush1.bf16.msra.mxu0 %v2371
      %2447 = vmatprep.subr.bf16.mxu0 0
      %2448 = vmatpush1.bf16.msra.mxu0 %v2372
      %2449 = vmatprep.subr.bf16.mxu0 0
      %2450 = vmatpush1.bf16.msra.mxu0 %v2373
      %2451 = vmatprep.subr.bf16.mxu0 0
      %2452 = vmatpush1.bf16.msra.mxu0 %v2374
      %2453 = vmatprep.subr.bf16.mxu0 0
      %2454 = vmatpush1.bf16.msra.mxu0 %v2375
      %2455 = vmatprep.subr.bf16.mxu0 0
      %2456 = vmatpush1.bf16.msra.mxu0 %v2376
      %2457 = vmatprep.mubr.bf16.mxu0 %v2034
      %2458 = vmatmul.mubr.bf16.gmra.mrb[0].mxu0 %v2017
      %v2459 = vpop.f32.mrb[0].mxu0
      %v2460 = vadd.f32 0.0, %v2459
      %v2461 = vpop.f32.mrb[0].mxu0
      %v2462 = vpop.f32.mrb[0].mxu0
      %v2463 = vadd.f32 0.0, %v2462
      %v2464 = vpop.f32.mrb[0].mxu0
      %2465 = vmatprep.mubr.bf16.mxu0 %v2086
      %2466 = vmatmul.mubr.bf16.gmra.mrb[0].mxu0 %v2077
      %v2467 = vpop.f32.mrb[0].mxu0
      %v2468 = vadd.f32 0.0, %v2467
      %v2469 = vpop.f32.mrb[0].mxu0
      %v2470 = vpop.f32.mrb[0].mxu0
      %v2471 = vadd.f32 0.0, %v2470
      %v2472 = vpop.f32.mrb[0].mxu0
      %2473 = vmatprep.mubr.bf16.mxu0 %v2122
      %2474 = vmatmul.mubr.bf16.gmra.mrb[0].mxu0 %v2113
      %v2475 = vpop.f32.mrb[0].mxu0
      %v2476 = vadd.f32 0.0, %v2475
      %v2477 = vpop.f32.mrb[0].mxu0
      %v2478 = vpop.f32.mrb[0].mxu0
      %v2479 = vadd.f32 0.0, %v2478
      %v2480 = vpop.f32.mrb[0].mxu0
      %2481 = vmatprep.mubr.bf16.mxu0 %v2158
      %2482 = vmatmul.mubr.bf16.gmra.mrb[0].mxu0 %v2149
      %v2483 = vpop.f32.mrb[0].mxu0
      %v2484 = vadd.f32 0.0, %v2483
      %v2485 = vpop.f32.mrb[0].mxu0
      %v2486 = vpop.f32.mrb[0].mxu0
      %v2487 = vadd.f32 0.0, %v2486
      %v2488 = vpop.f32.mrb[0].mxu0
      %2489 = vmatprep.mubr.bf16.mxu0 %v2194
      %2490 = vmatmul.mubr.bf16.gmra.mrb[0].mxu0 %v2185
      %v2491 = vpop.f32.mrb[0].mxu0
      %v2492 = vadd.f32 0.0, %v2491
      %v2493 = vpop.f32.mrb[0].mxu0
      %v2494 = vpop.f32.mrb[0].mxu0
      %v2495 = vadd.f32 0.0, %v2494
      %v2496 = vpop.f32.mrb[0].mxu0
      %2497 = vdwg.mxu0
      %2498 = vmatprep.subr.bf16.mxu0 0
      %2499 = vmatpush1.bf16.msra.mxu0 %v2377
      %2500 = vmatprep.subr.bf16.mxu0 0
      %2501 = vmatpush1.bf16.msra.mxu0 %v2378
      %2502 = vmatprep.subr.bf16.mxu0 0
      %2503 = vmatpush1.bf16.msra.mxu0 %v2379
      %2504 = vmatprep.subr.bf16.mxu0 0
      %2505 = vmatpush1.bf16.msra.mxu0 %v2380
      %2506 = vmatprep.subr.bf16.mxu0 0
      %2507 = vmatpush1.bf16.msra.mxu0 %v2381
      %2508 = vmatprep.subr.bf16.mxu0 0
      %2509 = vmatpush1.bf16.msra.mxu0 %v2382
      %2510 = vmatprep.subr.bf16.mxu0 0
      %2511 = vmatpush1.bf16.msra.mxu0 %v2383
      %2512 = vmatprep.subr.bf16.mxu0 0
      %2513 = vmatpush1.bf16.msra.mxu0 %v2384
      %2514 = vmatprep.subr.bf16.mxu0 0
      %2515 = vmatpush1.bf16.msra.mxu0 %v2385
      %2516 = vmatprep.subr.bf16.mxu0 0
      %2517 = vmatpush1.bf16.msra.mxu0 %v2386
      %2518 = vmatprep.subr.bf16.mxu0 0
      %2519 = vmatpush1.bf16.msra.mxu0 %v2387
      %2520 = vmatprep.subr.bf16.mxu0 0
      %2521 = vmatpush1.bf16.msra.mxu0 %v2388
      %2522 = vmatprep.subr.bf16.mxu0 0
      %2523 = vmatpush1.bf16.msra.mxu0 %v2389
      %2524 = vmatprep.subr.bf16.mxu0 0
      %2525 = vmatpush1.bf16.msra.mxu0 %v2390
      %2526 = vmatprep.subr.bf16.mxu0 0
      %2527 = vmatpush1.bf16.msra.mxu0 %v2391
      %2528 = vmatprep.subr.bf16.mxu0 0
      %2529 = vmatpush1.bf16.msra.mxu0 %v2392
      %2530 = vmatprep.mubr.bf16.mxu0 %v2068
      %2531 = vmatmul.mubr.bf16.gmra.mrb[0].mxu0 %v2051
      %v2532 = vpop.f32.mrb[0].mxu0
      %v2533 = vadd.f32 %v2460, %v2532
      %v2534 = vpop.f32.mrb[0].mxu0
      %v2535 = vpop.f32.mrb[0].mxu0
      %v2536 = vadd.f32 %v2463, %v2535
      %v2537 = vpop.f32.mrb[0].mxu0
      %2538 = vmatprep.mubr.bf16.mxu0 %v2104
      %2539 = vmatmul.mubr.bf16.gmra.mrb[0].mxu0 %v2095
      %v2540 = vpop.f32.mrb[0].mxu0
      %v2541 = vadd.f32 %v2468, %v2540
      %v2542 = vpop.f32.mrb[0].mxu0
      %v2543 = vpop.f32.mrb[0].mxu0
      %v2544 = vadd.f32 %v2471, %v2543
      %v2545 = vpop.f32.mrb[0].mxu0
      %2546 = vmatprep.mubr.bf16.mxu0 %v2140
      %2547 = vmatmul.mubr.bf16.gmra.mrb[0].mxu0 %v2131
      %v2548 = vpop.f32.mrb[0].mxu0
      %v2549 = vadd.f32 %v2476, %v2548
      %v2550 = vpop.f32.mrb[0].mxu0
      %v2551 = vpop.f32.mrb[0].mxu0
      %v2552 = vadd.f32 %v2479, %v2551
      %v2553 = vpop.f32.mrb[0].mxu0
      %2554 = vmatprep.mubr.bf16.mxu0 %v2176
      %2555 = vmatmul.mubr.bf16.gmra.mrb[0].mxu0 %v2167
      %v2556 = vpop.f32.mrb[0].mxu0
      %v2557 = vadd.f32 %v2484, %v2556
      %v2558 = vpop.f32.mrb[0].mxu0
      %v2559 = vpop.f32.mrb[0].mxu0
      %v2560 = vadd.f32 %v2487, %v2559
      %v2561 = vpop.f32.mrb[0].mxu0
      %2562 = vmatprep.mubr.bf16.mxu0 %v2212
      %2563 = vmatmul.mubr.bf16.gmra.mrb[0].mxu0 %v2203
      %v2564 = vpop.f32.mrb[0].mxu0
      %v2565 = vadd.f32 %v2492, %v2564
      %v2566 = vpop.f32.mrb[0].mxu0
      %v2567 = vpop.f32.mrb[0].mxu0
      %v2568 = vadd.f32 %v2495, %v2567
      %v2569 = vpop.f32.mrb[0].mxu0
      %2570 = vdwg.mxu0
      %v2571 = vadd.f32 %v1913, %v2533
      %v2572 = vadd.f32 %v1914, %v2536
      %v2573 = vadd.f32 %v1915, %v2541
      %v2574 = vadd.f32 %v1916, %v2544
      %v2575 = vadd.f32 %v1917, %v2549
      %v2576 = vadd.f32 %v1918, %v2552
      %v2577 = vadd.f32 %v1919, %v2557
      %v2578 = vadd.f32 %v1920, %v2560
      %v2579 = vadd.f32 %v1921, %v2565
      %v2580 = vadd.f32 %v1922, %v2568
      %v2581 = vld [vmem:[%s3] sm:$0xff]
      %v2582 = vld [vmem:[%s3 + $0x8] sm:$0xff]
      %v2583 = vld [vmem:[%s3 + $0x10] sm:$0xff]
      %v2584 = vld [vmem:[%s3 + $0x18] sm:$0xff]
      %v2585 = vld [vmem:[%s3 + $0x20] sm:$0xff]
      %v2586 = vld [vmem:[%s3 + $0x28] sm:$0xff]
      %v2587 = vld [vmem:[%s3 + $0x30] sm:$0xff]
      %v2588 = vld [vmem:[%s3 + $0x38] sm:$0xff]
      %v2589 = vld [vmem:[%s3 + $0x40] sm:$0xff]
      %v2590 = vld [vmem:[%s3 + $0x48] sm:$0xff]
      %2592 = vset.pattern.permute.xlu0 0
      %2593 = vperm.xlu0 %2592, %v2581
      %v2594 = vpop.permute.xlu0 %2593
      %2597 = vset.pattern.permute.xlu0 0
      %2598 = vperm.xlu0 %2597, %v2582
      %v2599 = vpop.permute.xlu0 %2598
      %2602 = vset.pattern.permute.xlu0 0
      %2603 = vperm.xlu0 %2602, %v2583
      %v2604 = vpop.permute.xlu0 %2603
      %2607 = vset.pattern.permute.xlu0 0
      %2608 = vperm.xlu0 %2607, %v2584
      %v2609 = vpop.permute.xlu0 %2608
      %2612 = vset.pattern.permute.xlu0 0
      %2613 = vperm.xlu0 %2612, %v2585
      %v2614 = vpop.permute.xlu0 %2613
      %2617 = vset.pattern.permute.xlu0 0
      %2618 = vperm.xlu0 %2617, %v2586
      %v2619 = vpop.permute.xlu0 %2618
      %2622 = vset.pattern.permute.xlu0 0
      %2623 = vperm.xlu0 %2622, %v2587
      %v2624 = vpop.permute.xlu0 %2623
      %2627 = vset.pattern.permute.xlu0 0
      %2628 = vperm.xlu0 %2627, %v2588
      %v2629 = vpop.permute.xlu0 %2628
      %2632 = vset.pattern.permute.xlu0 0
      %2633 = vperm.xlu0 %2632, %v2589
      %v2634 = vpop.permute.xlu0 %2633
      %2637 = vset.pattern.permute.xlu0 0
      %2638 = vperm.xlu0 %2637, %v2590
      %v2639 = vpop.permute.xlu0 %2638
      %v2641 = vmul.f32 %v2571, %v2594
      %v2642 = vmul.f32 %v2572, %v2599
      %v2643 = vmul.f32 %v2573, %v2604
      %v2644 = vmul.f32 %v2574, %v2609
      %v2645 = vmul.f32 %v2575, %v2614
      %v2646 = vmul.f32 %v2576, %v2619
      %v2647 = vmul.f32 %v2577, %v2624
      %v2648 = vmul.f32 %v2578, %v2629
      %v2649 = vmul.f32 %v2579, %v2634
      %v2650 = vmul.f32 %v2580, %v2639
      %v2651 = vadd.f32 %v2641, %v2642
      %v2652 = vadd.f32 %v2651, %v2643
      %v2653 = vadd.f32 %v2652, %v2644
      %v2654 = vadd.f32 %v2653, %v2645
      %v2655 = vadd.f32 %v2654, %v2646
      %v2656 = vadd.f32 %v2655, %v2647
      %v2657 = vadd.f32 %v2656, %v2648
      %v2658 = vadd.f32 %v2657, %v2649
      %v2659 = vadd.f32 %v2658, %v2650
      %v2660 = vrot.slane %v2659, 4
      %v2661 = vadd.f32 %v2659, %v2660
      %v2662 = vrot.slane %v2661, 2
      %v2663 = vadd.f32 %v2661, %v2662
      %v2664 = vrot.slane %v2663, 1
      %v2665 = vadd.f32 %v2663, %v2664
      %v2666 = vmul.f32 %v2641, %v2641
      %v2667 = vmul.f32 %v2642, %v2642
      %v2668 = vmul.f32 %v2643, %v2643
      %v2669 = vmul.f32 %v2644, %v2644
      %v2670 = vmul.f32 %v2645, %v2645
      %v2671 = vmul.f32 %v2646, %v2646
      %v2672 = vmul.f32 %v2647, %v2647
      %v2673 = vmul.f32 %v2648, %v2648
      %v2674 = vmul.f32 %v2649, %v2649
      %v2675 = vmul.f32 %v2650, %v2650
      %v2676 = vadd.f32 %v2666, %v2667
      %v2677 = vadd.f32 %v2676, %v2668
      %v2678 = vadd.f32 %v2677, %v2669
      %v2679 = vadd.f32 %v2678, %v2670
      %v2680 = vadd.f32 %v2679, %v2671
      %v2681 = vadd.f32 %v2680, %v2672
      %v2682 = vadd.f32 %v2681, %v2673
      %v2683 = vadd.f32 %v2682, %v2674
      %v2684 = vadd.f32 %v2683, %v2675
      %v2685 = vrot.slane %v2684, 4
      %v2686 = vadd.f32 %v2684, %v2685
      %v2687 = vrot.slane %v2686, 2
      %v2688 = vadd.f32 %v2686, %v2687
      %v2689 = vrot.slane %v2688, 1
      %v2690 = vadd.f32 %v2688, %v2689
      %v2691 = vmul.f32 %v2665, 0.015625
      %v2692 = vmul.f32 %v2690, 0.015625
      %v2693 = vmul.f32 %v2691, %v2691
      %v2694 = vsub.f32 %v2692, %v2693
      %v2695 = vmax.f32 %v2694, 0.0
      %v2696 = vsub.f32 %v2571, %v2691
      %v2697 = vsub.f32 %v2572, %v2691
      %v2698 = vsub.f32 %v2573, %v2691
      %v2699 = vsub.f32 %v2574, %v2691
      %v2700 = vsub.f32 %v2575, %v2691
      %v2701 = vsub.f32 %v2576, %v2691
      %v2702 = vsub.f32 %v2577, %v2691
      %v2703 = vsub.f32 %v2578, %v2691
      %v2704 = vsub.f32 %v2579, %v2691
      %v2705 = vsub.f32 %v2580, %v2691
      %v2706 = vadd.f32 %v2695, 1e-05
      %v2707 = vrsqrt.pop %v2706
      %v2708 = vmul.f32 %v2696, %v2707
      %v2709 = vmul.f32 %v2697, %v2707
      %v2710 = vmul.f32 %v2698, %v2707
      %v2711 = vmul.f32 %v2699, %v2707
      %v2712 = vmul.f32 %v2700, %v2707
      %v2713 = vmul.f32 %v2701, %v2707
      %v2714 = vmul.f32 %v2702, %v2707
      %v2715 = vmul.f32 %v2703, %v2707
      %v2716 = vmul.f32 %v2704, %v2707
      %v2717 = vmul.f32 %v2705, %v2707
      %vm2718 = vcmp.gt.f32.partialorder %v2708, 0.0
      %vm2719 = vcmp.gt.f32.partialorder %v2709, 0.0
      %vm2720 = vcmp.gt.f32.partialorder %v2710, 0.0
      %vm2721 = vcmp.gt.f32.partialorder %v2711, 0.0
      %vm2722 = vcmp.gt.f32.partialorder %v2712, 0.0
      %vm2723 = vcmp.gt.f32.partialorder %v2713, 0.0
      %vm2724 = vcmp.gt.f32.partialorder %v2714, 0.0
      %vm2725 = vcmp.gt.f32.partialorder %v2715, 0.0
      %vm2726 = vcmp.gt.f32.partialorder %v2716, 0.0
      %vm2727 = vcmp.gt.f32.partialorder %v2717, 0.0
      %v2728 = vmul.f32 %v2708, 0.2
      %v2729 = vmul.f32 %v2709, 0.2
      %v2730 = vmul.f32 %v2710, 0.2
      %v2731 = vmul.f32 %v2711, 0.2
      %v2732 = vmul.f32 %v2712, 0.2
      %v2733 = vmul.f32 %v2713, 0.2
      %v2734 = vmul.f32 %v2714, 0.2
      %v2735 = vmul.f32 %v2715, 0.2
      %v2736 = vmul.f32 %v2716, 0.2
      %v2737 = vmul.f32 %v2717, 0.2
      %v2738 = vsel %vm2718, %v2708, %v2728
      %v2739 = vsel %vm2719, %v2709, %v2729
      %v2740 = vsel %vm2720, %v2710, %v2730
      %v2741 = vsel %vm2721, %v2711, %v2731
      %v2742 = vsel %vm2722, %v2712, %v2732
      %v2743 = vsel %vm2723, %v2713, %v2733
      %v2744 = vsel %vm2724, %v2714, %v2734
      %v2745 = vsel %vm2725, %v2715, %v2735
      %v2746 = vsel %vm2726, %v2716, %v2736
      %v2747 = vsel %vm2727, %v2717, %v2737
      %v2748 = vmul.f32 %v2738, %v2594
      %v2749 = vmul.f32 %v2739, %v2599
      %v2750 = vmul.f32 %v2740, %v2604
      %v2751 = vmul.f32 %v2741, %v2609
      %v2752 = vmul.f32 %v2742, %v2614
      %v2753 = vmul.f32 %v2743, %v2619
      %v2754 = vmul.f32 %v2744, %v2624
      %v2755 = vmul.f32 %v2745, %v2629
      %v2756 = vmul.f32 %v2746, %v2634
      %v2757 = vmul.f32 %v2747, %v2639
      %v2758 = vpack.c.bf16 %v2749, %v2748
      %v2759 = vpack.c.bf16 %v2751, %v2750
      %v2760 = vpack.c.bf16 %v2753, %v2752
      %v2761 = vpack.c.bf16 %v2755, %v2754
      %v2762 = vpack.c.bf16 %v2757, %v2756
      %v2768 = vunpack.c.l.b16 %v2758
      %v2769 = vunpack.c.h.b16 %v2758
      %v2770 = vunpack.c.l.b16 %v2759
      %v2771 = vunpack.c.h.b16 %v2759
      %v2772 = vunpack.c.l.b16 %v2760
      %v2773 = vunpack.c.h.b16 %v2760
      %v2774 = vunpack.c.l.b16 %v2761
      %v2775 = vunpack.c.h.b16 %v2761
      %v2776 = vunpack.c.l.b16 %v2762
      %v2777 = vunpack.c.h.b16 %v2762
      %v2778 = vpack.c.b16 %v2768, %v2768
      %v2779 = vpack.c.b16 %v2769, %v2769
      %v2780 = vpack.c.b16 %v2770, %v2770
      %v2781 = vpack.c.b16 %v2771, %v2771
      %v2782 = vpack.c.b16 %v2772, %v2772
      %v2783 = vpack.c.b16 %v2773, %v2773
      %v2784 = vpack.c.b16 %v2774, %v2774
      %v2785 = vpack.c.b16 %v2775, %v2775
      %v2786 = vpack.c.b16 %v2776, %v2776
      %v2787 = vpack.c.b16 %v2777, %v2777
      %2798 = vst [vmem:[%s197] sm:$0xf] %v2778
      %2799 = vst [vmem:[%s197 + $0x4] sm:$0xf] %v2779
      %2800 = vst [vmem:[%s197 + $0x8] sm:$0xf] %v2780
      %2801 = vst [vmem:[%s197 + $0xc] sm:$0xf] %v2781
      %2802 = vst [vmem:[%s197 + $0x10] sm:$0xf] %v2782
      %2803 = vst [vmem:[%s197 + $0x14] sm:$0xf] %v2783
      %2804 = vst [vmem:[%s197 + $0x18] sm:$0xf] %v2784
      %2805 = vst [vmem:[%s197 + $0x1c] sm:$0xf] %v2785
      %2806 = vst [vmem:[%s197 + $0x20] sm:$0xf] %v2786
      %2807 = vst [vmem:[%s197 + $0x24] sm:$0xf] %v2787
      %p2808 = scmp.lt.s32.totalorder %s15, 1
      %s2809 = scalar_select %p2808, %s15, 1
      %s2810 = smul.addr %s2809, 10
      %s2811 = smul.addr %s2810, 4
      %s2812 = scalar_lea.vmem %s4, %s2811
      // Predicated region
      $region37: #{discriminator_forward.6} parent=35 // pred_check
        %p2813 = pneg %p122
      $region38: #{discriminator_forward.6} parent=35 // pred_check_branch
        %2815 = sbr.rel (%p2813) target = $region40
      $region39: #{discriminator_forward.6} parent=35 // pred_region
        _
      $region40: #{discriminator_forward.6} parent=35 // pred_fallthru
        _
    $region36: #{discriminator_forward.6} parent=5 // pred_fallthru
      _
    %p2816 = scmp.le.s32.totalorder 2, %s10
    // Predicated region
    $region41: #{discriminator_forward.6} parent=5 // pred_check
      %p2817 = pneg %p2816
    $region42: #{discriminator_forward.6} parent=5 // pred_check_branch
      %2819 = sbr.rel (%p2817) target = $region44
    $region43: #{discriminator_forward.6} parent=5 // pred_region
      %s2820 = ssub.s32 %s10, 2
      // Predicated region
      $region45: #{discriminator_forward.6} parent=43 // pred_check
        %p2821 = pneg %p128
      $region46: #{discriminator_forward.6} parent=43 // pred_check_branch
        %2823 = sbr.rel (%p2821) target = $region48
      $region47: #{discriminator_forward.6} parent=43 // pred_region
        %p2824 = scmp.lt.s32.totalorder %s16, 1
        %s2825 = scalar_select %p2824, %s16, 1
        %s2826 = smul.addr %s2825, 10
        %s2827 = smul.addr %s2826, 4
        %s2828 = scalar_lea.vmem %s4, %s2827
      $region48: #{discriminator_forward.6} parent=43 // pred_fallthru
        _
    $region44: #{discriminator_forward.6} parent=5 // pred_fallthru
      _
  $region6: #{discriminator_forward.6} parent=0 // loop_footer
    %s14 = sadd.s32 1, %s10
  $region7: #{discriminator_forward.6} parent=0 // loop_footer_branch
    %9 = sbr.rel target = $region3
  $region8: #{discriminator_forward.6} parent=0 // loop_exit
    _

// kernel: discriminator_forward.7
$region0: #{discriminator_forward.7}
  #allocation0 [shape = 'u32[]', space=smem, size = 0x4, offset = 0x4, fixed_abs, tag = 'smem constant byte address 0x4 - core index']
  #allocation1 [shape = 'u32[144,128]{1,0:T(1,128)}', space=vmem, size = 0x12000, scoped, tag = 'internal scratch']
  %s0 = inlined_call_operand.vmem [shape: bf16[2,36,512], index: 0, kind: input, shape index: {}]
  %s1 = inlined_call_operand.vmem [shape: bf16[4,512,128], index: 1, kind: input, shape index: {}]
  %s2 = inlined_call_operand.vmem [shape: f32[1,128], index: 2, kind: input, shape index: {}]
  %s3 = inlined_call_operand.vmem [shape: f32[24,1], index: 3, kind: input, shape index: {}]
  %s4 = inlined_call_operand.vmem [shape: bf16[2,24,128], index: 4, kind: output, shape index: {}]
  %s5 = sld [smem:[#allocation0]]
  $region49: #{discriminator_forward.7} parent=0
    _
  %s7 = ssub.s32 1, %s5
  %s8 = scalar_select 0, %s7, %s5
  loop: start=0, step=1, limit=4
  $region2: #{discriminator_forward.7} parent=0 // loop_pre_header
    _
  $region3: #{discriminator_forward.7} parent=0 // loop_header
    %s10 = sphi 0, %s14
    %p11 = scmp.ge.s32.totalorder %s10, 4
    %s20 = sphi 0, %s22
    %s23 = sphi 0, %s20
    %s24 = sphi 0, %s23
    %s40 = sphi 0, %s24
    %s44 = sphi 0, %s44
    %s46 = sphi 0, %s44
    %s47 = sphi 0, %s46
    %s61 = sphi 0, %s47
    %s65 = sphi 0, %s65
    %s67 = sphi 0, %s65
    %s68 = sphi 0, %s67
    %s82 = sphi 0, %s68
    %s86 = sphi 0, %s86
    %s88 = sphi 0, %s86
    %s89 = sphi 0, %s88
    %s103 = sphi 0, %s89
    %s109 = sphi 0, %s111
    %s112 = sphi 0, %s109
    %s113 = sphi 0, %s112
    %s129 = sphi 0, %s113
  $region4: #{discriminator_forward.7} parent=0 // loop_header_branch
    %13 = sbr.rel (%p11) target = $region8
  $region5: #{discriminator_forward.7} parent=0 // loop_body
    %s15 = ssub.s32 %s10, 1
    %s16 = ssub.s32 %s10, 2
    %s17 = sadd.s32 %s10, 1
    %s18 = ssub.s32 %s10, %s17
    %p19 = scmp.eq.s32.totalorder %s18, 0
    %s21 = sadd.s32 %s20, 1
    %s22 = scalar_select %p19, %s20, %s21
    %p25 = pneg %p19
    %p26 = scmp.eq.s32.totalorder %s10, 1
    %p27 = por %p25, %p26
    %p28 = scmp.ne.s32.totalorder %s20, %s23
    %p29 = scmp.eq.s32.totalorder %s10, 0
    %p30 = por %p28, %p29
    %p31 = scmp.ne.s32.totalorder %s20, %s23
    %p32 = scmp.eq.s32.totalorder %s15, 1
    %p33 = por %p31, %p32
    %p34 = scmp.ne.s32.totalorder %s23, %s24
    %p35 = scmp.eq.s32.totalorder %s15, 0
    %p36 = por %p34, %p35
    %p37 = scmp.ne.s32.totalorder %s23, %s24
    %p38 = scmp.eq.s32.totalorder %s16, 1
    %p39 = por %p37, %p38
    %p41 = scmp.ne.s32.totalorder %s24, %s40
    %p42 = scmp.eq.s32.totalorder %s16, 0
    %p43 = por %p41, %p42
    %s45 = sadd.s32 %s44, 1
    %p48 = scmp.eq.s32.totalorder %s10, 1
    %p49 = scmp.ne.s32.totalorder %s44, %s46
    %p50 = scmp.eq.s32.totalorder %s10, 0
    %p51 = por %p49, %p50
    %p52 = scmp.ne.s32.totalorder %s44, %s46
    %p53 = scmp.eq.s32.totalorder %s15, 1
    %p54 = por %p52, %p53
    %p55 = scmp.ne.s32.totalorder %s46, %s47
    %p56 = scmp.eq.s32.totalorder %s15, 0
    %p57 = por %p55, %p56
    %p58 = scmp.ne.s32.totalorder %s46, %s47
    %p59 = scmp.eq.s32.totalorder %s16, 1
    %p60 = por %p58, %p59
    %p62 = scmp.ne.s32.totalorder %s47, %s61
    %p63 = scmp.eq.s32.totalorder %s16, 0
    %p64 = por %p62, %p63
    %s66 = sadd.s32 %s65, 1
    %p69 = scmp.eq.s32.totalorder %s10, 1
    %p70 = scmp.ne.s32.totalorder %s65, %s67
    %p71 = scmp.eq.s32.totalorder %s10, 0
    %p72 = por %p70, %p71
    %p73 = scmp.ne.s32.totalorder %s65, %s67
    %p74 = scmp.eq.s32.totalorder %s15, 1
    %p75 = por %p73, %p74
    %p76 = scmp.ne.s32.totalorder %s67, %s68
    %p77 = scmp.eq.s32.totalorder %s15, 0
    %p78 = por %p76, %p77
    %p79 = scmp.ne.s32.totalorder %s67, %s68
    %p80 = scmp.eq.s32.totalorder %s16, 1
    %p81 = por %p79, %p80
    %p83 = scmp.ne.s32.totalorder %s68, %s82
    %p84 = scmp.eq.s32.totalorder %s16, 0
    %p85 = por %p83, %p84
    %s87 = sadd.s32 %s86, 1
    %p90 = scmp.eq.s32.totalorder %s10, 1
    %p91 = scmp.ne.s32.totalorder %s86, %s88
    %p92 = scmp.eq.s32.totalorder %s10, 0
    %p93 = por %p91, %p92
    %p94 = scmp.ne.s32.totalorder %s86, %s88
    %p95 = scmp.eq.s32.totalorder %s15, 1
    %p96 = por %p94, %p95
    %p97 = scmp.ne.s32.totalorder %s88, %s89
    %p98 = scmp.eq.s32.totalorder %s15, 0
    %p99 = por %p97, %p98
    %p100 = scmp.ne.s32.totalorder %s88, %s89
    %p101 = scmp.eq.s32.totalorder %s16, 1
    %p102 = por %p100, %p101
    %p104 = scmp.ne.s32.totalorder %s89, %s103
    %p105 = scmp.eq.s32.totalorder %s16, 0
    %p106 = por %p104, %p105
    %s107 = ssub.s32 %s10, %s17
    %p108 = scmp.eq.s32.totalorder %s107, 0
    %s110 = sadd.s32 %s109, 1
    %s111 = scalar_select %p108, %s109, %s110
    %p114 = pneg %p108
    %p115 = scmp.eq.s32.totalorder %s10, 1
    %p116 = por %p114, %p115
    %p117 = scmp.ne.s32.totalorder %s109, %s112
    %p118 = scmp.eq.s32.totalorder %s10, 0
    %p119 = por %p117, %p118
    %p120 = scmp.ne.s32.totalorder %s109, %s112
    %p121 = scmp.eq.s32.totalorder %s15, 1
    %p122 = por %p120, %p121
    %p123 = scmp.ne.s32.totalorder %s112, %s113
    %p124 = scmp.eq.s32.totalorder %s15, 0
    %p125 = por %p123, %p124
    %p126 = scmp.ne.s32.totalorder %s112, %s113
    %p127 = scmp.eq.s32.totalorder %s16, 1
    %p128 = por %p126, %p127
    %p130 = scmp.ne.s32.totalorder %s113, %s129
    %p131 = scmp.eq.s32.totalorder %s16, 0
    %p132 = por %p130, %p131
    %p133 = scmp.le.s32.totalorder 1, %s10
    %p134 = scmp.lt.s32.totalorder %s10, 3
    %p135 = pnand %p133, %p134
    %p136 = pneg %p135
    // Predicated region
    $region9: #{discriminator_forward.7} parent=5 // pred_check
      _
    $region10: #{discriminator_forward.7} parent=5 // pred_check_branch
      %138 = sbr.rel (%p135) target = $region12
    $region11: #{discriminator_forward.7} parent=5 // pred_region
      %s139 = ssub.s32 %s10, 1
      // Predicated region
      $region13: #{discriminator_forward.7} parent=11 // pred_check
        %p140 = pneg %p57
      $region14: #{discriminator_forward.7} parent=11 // pred_check_branch
        %142 = sbr.rel (%p140) target = $region16
      $region15: #{discriminator_forward.7} parent=11 // pred_region
        _
      $region16: #{discriminator_forward.7} parent=11 // pred_fallthru
        _
      // Predicated region
      $region17: #{discriminator_forward.7} parent=11 // pred_check
        %p143 = pneg %p78
      $region18: #{discriminator_forward.7} parent=11 // pred_check_branch
        %145 = sbr.rel (%p143) target = $region20
      $region19: #{discriminator_forward.7} parent=11 // pred_region
        _
      $region20: #{discriminator_forward.7} parent=11 // pred_fallthru
        _
      // Predicated region
      $region21: #{discriminator_forward.7} parent=11 // pred_check
        %p146 = pneg %p99
      $region22: #{discriminator_forward.7} parent=11 // pred_check_branch
        %148 = sbr.rel (%p146) target = $region24
      $region23: #{discriminator_forward.7} parent=11 // pred_region
        _
      $region24: #{discriminator_forward.7} parent=11 // pred_fallthru
        _
    $region12: #{discriminator_forward.7} parent=5 // pred_fallthru
      _
    %p149 = scmp.lt.s32.totalorder %s10, 2
    // Predicated region
    $region25: #{discriminator_forward.7} parent=5 // pred_check
      %p150 = pneg %p149
    $region26: #{discriminator_forward.7} parent=5 // pred_check_branch
      %152 = sbr.rel (%p150) target = $region28
    $region27: #{discriminator_forward.7} parent=5 // pred_region
      // Predicated region
      $region29: #{discriminator_forward.7} parent=27 // pred_check
        %p153 = pneg %p30
      $region30: #{discriminator_forward.7} parent=27 // pred_check_branch
        %155 = sbr.rel (%p153) target = $region32
      $region31: #{discriminator_forward.7} parent=27 // pred_region
        %p156 = scmp.lt.s32.totalorder %s10, 1
        %s157 = scalar_select %p156, %s10, 1
        %s158 = smul.addr %s157, 20
        %s159 = smul.addr %s158, 4
        %s160 = scalar_lea.vmem %s0, %s159
      $region32: #{discriminator_forward.7} parent=27 // pred_fallthru
        _
    $region28: #{discriminator_forward.7} parent=5 // pred_fallthru
      _
    %p161 = scmp.le.s32.totalorder 1, %s10
    %p162 = scmp.lt.s32.totalorder %s10, 3
    %p163 = pnand %p161, %p162
    %p164 = pneg %p163
    // Predicated region
    $region33: #{discriminator_forward.7} parent=5 // pred_check
      _
    $region34: #{discriminator_forward.7} parent=5 // pred_check_branch
      %166 = sbr.rel (%p163) target = $region36
    $region35: #{discriminator_forward.7} parent=5 // pred_region
      %s167 = ssub.s32 %s10, 1
      %p168 = scmp.lt.s32.totalorder %s15, 1
      %s169 = scalar_select %p168, %s15, 1
      %s170 = smul.addr %s169, 20
      %s171 = smul.addr %s170, 4
      %s172 = scalar_lea.vmem %s0, %s171
      %p173 = pneg %p36
      %p174 = pneg %p33
      %p175 = pneg %p57
      %p176 = pneg %p54
      %p177 = pneg %p78
      %p178 = pneg %p75
      %p179 = pneg %p99
      %p180 = pneg %p96
      %p181 = pneg %p125
      %p182 = pneg %p122
      %p183 = scmp.lt.s32.totalorder %s15, 1
      %s184 = scalar_select %p183, %s15, 1
      %s185 = smul.addr %s184, 3
      %s186 = smul.addr %s185, 4
      %s187 = scalar_lea.vmem %s4, %s186
      %p188 = scmp.lt.s32.totalorder %s15, 1
      %s189 = scalar_select %p188, %s15, 1
      %s190 = smul.addr %s189, 20
      %s191 = smul.addr %s190, 4
      %s192 = scalar_lea.vmem %s0, %s191
      %p193 = scmp.lt.s32.totalorder %s15, 1
      %s194 = scalar_select %p193, %s15, 1
      %s195 = smul.addr %s194, 3
      %s196 = smul.addr %s195, 4
      %s197 = scalar_lea.vmem %s4, %s196
      %v199 = vld [vmem:[%s192] sm:$0xff]
      %v200 = vld [vmem:[%s192 + $0x8] sm:$0xff]
      %v201 = vld [vmem:[%s192 + $0x10] sm:$0xff]
      %v202 = vld [vmem:[%s192 + $0x18] sm:$0xff]
      %v203 = vld [vmem:[%s192 + $0x20] sm:$0xff]
      %v204 = vld [vmem:[%s192 + $0x28] sm:$0xff]
      %v205 = vld [vmem:[%s1] sm:$0xf]
      %v206 = vld [vmem:[%s1 + $0x4] sm:$0xf]
      %v207 = vld [vmem:[%s1 + $0x8] sm:$0xf]
      %v208 = vld [vmem:[%s1 + $0xc] sm:$0xf]
      %v209 = vld [vmem:[%s1 + $0x10] sm:$0xf]
      %v210 = vld [vmem:[%s1 + $0x14] sm:$0xf]
      %v211 = vld [vmem:[%s1 + $0x18] sm:$0xf]
      %v212 = vld [vmem:[%s1 + $0x1c] sm:$0xf]
      %v213 = vld [vmem:[%s1 + $0x20] sm:$0xf]
      %v214 = vld [vmem:[%s1 + $0x24] sm:$0xf]
      %v215 = vld [vmem:[%s1 + $0x28] sm:$0xf]
      %v216 = vld [vmem:[%s1 + $0x2c] sm:$0xf]
      %v217 = vld [vmem:[%s1 + $0x30] sm:$0xf]
      %v218 = vld [vmem:[%s1 + $0x34] sm:$0xf]
      %v219 = vld [vmem:[%s1 + $0x38] sm:$0xf]
      %v220 = vld [vmem:[%s1 + $0x3c] sm:$0xf]
      %v221 = vld [vmem:[%s1 + $0x40] sm:$0xf]
      %v222 = vld [vmem:[%s1 + $0x44] sm:$0xf]
      %v223 = vld [vmem:[%s1 + $0x48] sm:$0xf]
      %v224 = vld [vmem:[%s1 + $0x4c] sm:$0xf]
      %v225 = vld [vmem:[%s1 + $0x50] sm:$0xf]
      %v226 = vld [vmem:[%s1 + $0x54] sm:$0xf]
      %v227 = vld [vmem:[%s1 + $0x58] sm:$0xf]
      %v228 = vld [vmem:[%s1 + $0x5c] sm:$0xf]
      %v229 = vld [vmem:[%s1 + $0x60] sm:$0xf]
      %v230 = vld [vmem:[%s1 + $0x64] sm:$0xf]
      %v231 = vld [vmem:[%s1 + $0x68] sm:$0xf]
      %v232 = vld [vmem:[%s1 + $0x6c] sm:$0xf]
      %v233 = vld [vmem:[%s1 + $0x70] sm:$0xf]
      %v234 = vld [vmem:[%s1 + $0x74] sm:$0xf]
      %v235 = vld [vmem:[%s1 + $0x78] sm:$0xf]
      %v236 = vld [vmem:[%s1 + $0x7c] sm:$0xf]
      %v237 = vld [vmem:[%s1 + $0x80] sm:$0xf]
      %v238 = vld [vmem:[%s1 + $0x84] sm:$0xf]
      %v239 = vld [vmem:[%s1 + $0x88] sm:$0xf]
      %v240 = vld [vmem:[%s1 + $0x8c] sm:$0xf]
      %v241 = vld [vmem:[%s1 + $0x90] sm:$0xf]
      %v242 = vld [vmem:[%s1 + $0x94] sm:$0xf]
      %v243 = vld [vmem:[%s1 + $0x98] sm:$0xf]
      %v244 = vld [vmem:[%s1 + $0x9c] sm:$0xf]
      %v245 = vld [vmem:[%s1 + $0xa0] sm:$0xf]
      %v246 = vld [vmem:[%s1 + $0xa4] sm:$0xf]
      %v247 = vld [vmem:[%s1 + $0xa8] sm:$0xf]
      %v248 = vld [vmem:[%s1 + $0xac] sm:$0xf]
      %v249 = vld [vmem:[%s1 + $0xb0] sm:$0xf]
      %v250 = vld [vmem:[%s1 + $0xb4] sm:$0xf]
      %v251 = vld [vmem:[%s1 + $0xb8] sm:$0xf]
      %v252 = vld [vmem:[%s1 + $0xbc] sm:$0xf]
      %v253 = vld [vmem:[%s1 + $0xc0] sm:$0xf]
      %v254 = vld [vmem:[%s1 + $0xc4] sm:$0xf]
      %v255 = vld [vmem:[%s1 + $0xc8] sm:$0xf]
      %v256 = vld [vmem:[%s1 + $0xcc] sm:$0xf]
      %v257 = vld [vmem:[%s1 + $0xd0] sm:$0xf]
      %v258 = vld [vmem:[%s1 + $0xd4] sm:$0xf]
      %v259 = vld [vmem:[%s1 + $0xd8] sm:$0xf]
      %v260 = vld [vmem:[%s1 + $0xdc] sm:$0xf]
      %v261 = vld [vmem:[%s1 + $0xe0] sm:$0xf]
      %v262 = vld [vmem:[%s1 + $0xe4] sm:$0xf]
      %v263 = vld [vmem:[%s1 + $0xe8] sm:$0xf]
      %v264 = vld [vmem:[%s1 + $0xec] sm:$0xf]
      %v265 = vld [vmem:[%s1 + $0xf0] sm:$0xf]
      %v266 = vld [vmem:[%s1 + $0xf4] sm:$0xf]
      %v267 = vld [vmem:[%s1 + $0xf8] sm:$0xf]
      %v268 = vld [vmem:[%s1 + $0xfc] sm:$0xf]
      %v269 = vld [vmem:[%s192 + $0x30] sm:$0x11]
      %v270 = vld [vmem:[%s192 + $0x38] sm:$0x11]
      %s271 = scalar_lea.vmem %s1, 256
      %v272 = vld [vmem:[%s271] sm:$0xf]
      %v273 = vld [vmem:[%s271 + $0x4] sm:$0xf]
      %v274 = vld [vmem:[%s271 + $0x8] sm:$0xf]
      %v275 = vld [vmem:[%s271 + $0xc] sm:$0xf]
      %v276 = vld [vmem:[%s271 + $0x10] sm:$0xf]
      %v277 = vld [vmem:[%s271 + $0x14] sm:$0xf]
      %v278 = vld [vmem:[%s271 + $0x18] sm:$0xf]
      %v279 = vld [vmem:[%s271 + $0x1c] sm:$0xf]
      %v280 = vld [vmem:[%s271 + $0x20] sm:$0xf]
      %v281 = vld [vmem:[%s271 + $0x24] sm:$0xf]
      %v282 = vld [vmem:[%s271 + $0x28] sm:$0xf]
      %v283 = vld [vmem:[%s271 + $0x2c] sm:$0xf]
      %v284 = vld [vmem:[%s271 + $0x30] sm:$0xf]
      %v285 = vld [vmem:[%s271 + $0x34] sm:$0xf]
      %v286 = vld [vmem:[%s271 + $0x38] sm:$0xf]
      %v287 = vld [vmem:[%s271 + $0x3c] sm:$0xf]
      %v288 = vld [vmem:[%s271 + $0x40] sm:$0xf]
      %v289 = vld [vmem:[%s271 + $0x44] sm:$0xf]
      %v290 = vld [vmem:[%s271 + $0x48] sm:$0xf]
      %v291 = vld [vmem:[%s271 + $0x4c] sm:$0xf]
      %v292 = vld [vmem:[%s271 + $0x50] sm:$0xf]
      %v293 = vld [vmem:[%s271 + $0x54] sm:$0xf]
      %v294 = vld [vmem:[%s271 + $0x58] sm:$0xf]
      %v295 = vld [vmem:[%s271 + $0x5c] sm:$0xf]
      %v296 = vld [vmem:[%s271 + $0x60] sm:$0xf]
      %v297 = vld [vmem:[%s271 + $0x64] sm:$0xf]
      %v298 = vld [vmem:[%s271 + $0x68] sm:$0xf]
      %v299 = vld [vmem:[%s271 + $0x6c] sm:$0xf]
      %v300 = vld [vmem:[%s271 + $0x70] sm:$0xf]
      %v301 = vld [vmem:[%s271 + $0x74] sm:$0xf]
      %v302 = vld [vmem:[%s271 + $0x78] sm:$0xf]
      %v303 = vld [vmem:[%s271 + $0x7c] sm:$0xf]
      %v304 = vld [vmem:[%s271 + $0x80] sm:$0xf]
      %v305 = vld [vmem:[%s271 + $0x84] sm:$0xf]
      %v306 = vld [vmem:[%s271 + $0x88] sm:$0xf]
      %v307 = vld [vmem:[%s271 + $0x8c] sm:$0xf]
      %v308 = vld [vmem:[%s271 + $0x90] sm:$0xf]
      %v309 = vld [vmem:[%s271 + $0x94] sm:$0xf]
      %v310 = vld [vmem:[%s271 + $0x98] sm:$0xf]
      %v311 = vld [vmem:[%s271 + $0x9c] sm:$0xf]
      %v312 = vld [vmem:[%s271 + $0xa0] sm:$0xf]
      %v313 = vld [vmem:[%s271 + $0xa4] sm:$0xf]
      %v314 = vld [vmem:[%s271 + $0xa8] sm:$0xf]
      %v315 = vld [vmem:[%s271 + $0xac] sm:$0xf]
      %v316 = vld [vmem:[%s271 + $0xb0] sm:$0xf]
      %v317 = vld [vmem:[%s271 + $0xb4] sm:$0xf]
      %v318 = vld [vmem:[%s271 + $0xb8] sm:$0xf]
      %v319 = vld [vmem:[%s271 + $0xbc] sm:$0xf]
      %v320 = vld [vmem:[%s271 + $0xc0] sm:$0xf]
      %v321 = vld [vmem:[%s271 + $0xc4] sm:$0xf]
      %v322 = vld [vmem:[%s271 + $0xc8] sm:$0xf]
      %v323 = vld [vmem:[%s271 + $0xcc] sm:$0xf]
      %v324 = vld [vmem:[%s271 + $0xd0] sm:$0xf]
      %v325 = vld [vmem:[%s271 + $0xd4] sm:$0xf]
      %v326 = vld [vmem:[%s271 + $0xd8] sm:$0xf]
      %v327 = vld [vmem:[%s271 + $0xdc] sm:$0xf]
      %v328 = vld [vmem:[%s271 + $0xe0] sm:$0xf]
      %v329 = vld [vmem:[%s271 + $0xe4] sm:$0xf]
      %v330 = vld [vmem:[%s271 + $0xe8] sm:$0xf]
      %v331 = vld [vmem:[%s271 + $0xec] sm:$0xf]
      %v332 = vld [vmem:[%s271 + $0xf0] sm:$0xf]
      %v333 = vld [vmem:[%s271 + $0xf4] sm:$0xf]
      %v334 = vld [vmem:[%s271 + $0xf8] sm:$0xf]
      %v335 = vld [vmem:[%s271 + $0xfc] sm:$0xf]
      %v344 = vunpack.c.l.b16 %v199
      %v345 = vunpack.c.h.b16 %v199
      %v346 = vunpack.c.l.b16 %v200
      %v347 = vunpack.c.h.b16 %v200
      %v348 = vunpack.c.l.b16 %v201
      %v349 = vunpack.c.h.b16 %v201
      %v350 = vunpack.c.l.b16 %v202
      %v351 = vunpack.c.h.b16 %v202
      %v352 = vunpack.c.l.b16 %v203
      %v353 = vunpack.c.h.b16 %v203
      %v354 = vunpack.c.l.b16 %v204
      %v355 = vunpack.c.h.b16 %v204
      %v356 = vunpack.c.l.b16 %v269
      %v357 = vunpack.c.h.b16 %v269
      %v358 = vunpack.c.l.b16 %v270
      %v359 = vunpack.c.h.b16 %v270
      %v360 = vpack.c.b16 %v348, %v344
      %v361 = vpack.c.b16 %v349, %v345
      %v362 = vpack.c.b16 %v350, %v346
      %v363 = vpack.c.b16 %v351, %v347
      %v364 = vpack.c.b16 %v356, %v352
      %v365 = vpack.c.b16 %v357, %v353
      %v366 = vpack.c.b16 %v358, %v354
      %v367 = vpack.c.b16 %v359, %v355
      %vm368 = vsmask.f32 7424
      %v370 = vshrl.u32 %v360, 16
      %v372 = vshll.u32 %v360, 16
      %v374 = vrot.slane %v372, 1
      %v375 = vor.u32 %v370, %v374
      %v377 = vshll.u32 %v364, 16
      %v379 = vrot.slane %v377, 1
      %v380 = vsel %vm368, %v375, %v379
      %v382 = vshrl.u32 %v361, 16
      %v384 = vshll.u32 %v361, 16
      %v386 = vrot.slane %v384, 1
      %v387 = vor.u32 %v382, %v386
      %v389 = vshll.u32 %v365, 16
      %v391 = vrot.slane %v389, 1
      %v392 = vsel %vm368, %v387, %v391
      %v394 = vshrl.u32 %v362, 16
      %v396 = vshll.u32 %v362, 16
      %v398 = vrot.slane %v396, 1
      %v399 = vor.u32 %v394, %v398
      %v401 = vshll.u32 %v366, 16
      %v403 = vrot.slane %v401, 1
      %v404 = vsel %vm368, %v399, %v403
      %v406 = vshrl.u32 %v363, 16
      %v408 = vshll.u32 %v363, 16
      %v410 = vrot.slane %v408, 1
      %v411 = vor.u32 %v406, %v410
      %v413 = vshll.u32 %v367, 16
      %v415 = vrot.slane %v413, 1
      %v416 = vsel %vm368, %v411, %v415
      %v417 = vshrl.u32 %v364, 16
      %v419 = vor.u32 %v417, %v379
      %v420 = vshrl.u32 %v365, 16
      %v422 = vor.u32 %v420, %v391
      %v423 = vshrl.u32 %v366, 16
      %v425 = vor.u32 %v423, %v403
      %v426 = vshrl.u32 %v367, 16
      %v428 = vor.u32 %v426, %v415
      %v501 = vunpack.c.l.b16 %v272
      %v502 = vunpack.c.l.b16 %v273
      %v503 = vunpack.c.l.b16 %v274
      %v504 = vunpack.c.l.b16 %v275
      %v505 = vunpack.c.l.b16 %v276
      %v506 = vunpack.c.l.b16 %v277
      %v507 = vunpack.c.l.b16 %v278
      %v508 = vunpack.c.l.b16 %v279
      %v509 = vunpack.c.l.b16 %v280
      %v510 = vunpack.c.l.b16 %v281
      %v511 = vunpack.c.l.b16 %v282
      %v512 = vunpack.c.l.b16 %v283
      %v513 = vunpack.c.l.b16 %v284
      %v514 = vunpack.c.l.b16 %v285
      %v515 = vunpack.c.l.b16 %v286
      %v516 = vunpack.c.l.b16 %v287
      %v517 = vunpack.c.l.b16 %v288
      %v518 = vunpack.c.l.b16 %v289
      %v519 = vunpack.c.l.b16 %v290
      %v520 = vunpack.c.l.b16 %v291
      %v521 = vunpack.c.l.b16 %v292
      %v522 = vunpack.c.l.b16 %v293
      %v523 = vunpack.c.l.b16 %v294
      %v524 = vunpack.c.l.b16 %v295
      %v525 = vunpack.c.l.b16 %v296
      %v526 = vunpack.c.l.b16 %v297
      %v527 = vunpack.c.l.b16 %v298
      %v528 = vunpack.c.l.b16 %v299
      %v529 = vunpack.c.l.b16 %v300
      %v530 = vunpack.c.l.b16 %v301
      %v531 = vunpack.c.l.b16 %v302
      %v532 = vunpack.c.l.b16 %v303
      %v533 = vunpack.c.l.b16 %v304
      %v534 = vunpack.c.l.b16 %v305
      %v535 = vunpack.c.l.b16 %v306
      %v536 = vunpack.c.l.b16 %v307
      %v537 = vunpack.c.l.b16 %v308
      %v538 = vunpack.c.l.b16 %v309
      %v539 = vunpack.c.l.b16 %v310
      %v540 = vunpack.c.l.b16 %v311
      %v541 = vunpack.c.l.b16 %v312
      %v542 = vunpack.c.l.b16 %v313
      %v543 = vunpack.c.l.b16 %v314
      %v544 = vunpack.c.l.b16 %v315
      %v545 = vunpack.c.l.b16 %v316
      %v546 = vunpack.c.l.b16 %v317
      %v547 = vunpack.c.l.b16 %v318
      %v548 = vunpack.c.l.b16 %v319
      %v549 = vunpack.c.l.b16 %v320
      %v550 = vunpack.c.l.b16 %v321
      %v551 = vunpack.c.l.b16 %v322
      %v552 = vunpack.c.l.b16 %v323
      %v553 = vunpack.c.l.b16 %v324
      %v554 = vunpack.c.l.b16 %v325
      %v555 = vunpack.c.l.b16 %v326
      %v556 = vunpack.c.l.b16 %v327
      %v557 = vunpack.c.l.b16 %v328
      %v558 = vunpack.c.l.b16 %v329
      %v559 = vunpack.c.l.b16 %v330
      %v560 = vunpack.c.l.b16 %v331
      %v561 = vunpack.c.l.b16 %v332
      %v562 = vunpack.c.l.b16 %v333
      %v563 = vunpack.c.l.b16 %v334
      %v564 = vunpack.c.l.b16 %v335
      %v565 = vpack.c.b16 %v502, %v501
      %v566 = vpack.c.b16 %v504, %v503
      %v567 = vpack.c.b16 %v506, %v505
      %v568 = vpack.c.b16 %v508, %v507
      %v569 = vpack.c.b16 %v510, %v509
      %v570 = vpack.c.b16 %v512, %v511
      %v571 = vpack.c.b16 %v514, %v513
      %v572 = vpack.c.b16 %v516, %v515
      %v573 = vpack.c.b16 %v518, %v517
      %v574 = vpack.c.b16 %v520, %v519
      %v575 = vpack.c.b16 %v522, %v521
      %v576 = vpack.c.b16 %v524, %v523
      %v577 = vpack.c.b16 %v526, %v525
      %v578 = vpack.c.b16 %v528, %v527
      %v579 = vpack.c.b16 %v530, %v529
      %v580 = vpack.c.b16 %v532, %v531
      %v581 = vpack.c.b16 %v534, %v533
      %v582 = vpack.c.b16 %v536, %v535
      %v583 = vpack.c.b16 %v538, %v537
      %v584 = vpack.c.b16 %v540, %v539
      %v585 = vpack.c.b16 %v542, %v541
      %v586 = vpack.c.b16 %v544, %v543
      %v587 = vpack.c.b16 %v546, %v545
      %v588 = vpack.c.b16 %v548, %v547
      %v589 = vpack.c.b16 %v550, %v549
      %v590 = vpack.c.b16 %v552, %v551
      %v591 = vpack.c.b16 %v554, %v553
      %v592 = vpack.c.b16 %v556, %v555
      %v593 = vpack.c.b16 %v558, %v557
      %v594 = vpack.c.b16 %v560, %v559
      %v595 = vpack.c.b16 %v562, %v561
      %v596 = vpack.c.b16 %v564, %v563
      %629 = vmatprep.subr.bf16.mxu0 0
      %630 = vmatpush1.bf16.msra.mxu0 %v565
      %631 = vmatprep.subr.bf16.mxu0 0
      %632 = vmatpush1.bf16.msra.mxu0 %v566
      %633 = vmatprep.subr.bf16.mxu0 0
      %634 = vmatpush1.bf16.msra.mxu0 %v567
      %635 = vmatprep.subr.bf16.mxu0 0
      %636 = vmatpush1.bf16.msra.mxu0 %v568
      %637 = vmatprep.subr.bf16.mxu0 0
      %638 = vmatpush1.bf16.msra.mxu0 %v569
      %639 = vmatprep.subr.bf16.mxu0 0
      %640 = vmatpush1.bf16.msra.mxu0 %v570
      %641 = vmatprep.subr.bf16.mxu0 0
      %642 = vmatpush1.bf16.msra.mxu0 %v571
      %643 = vmatprep.subr.bf16.mxu0 0
      %644 = vmatpush1.bf16.msra.mxu0 %v572
      %645 = vmatprep.subr.bf16.mxu0 0
      %646 = vmatpush1.bf16.msra.mxu0 %v573
      %647 = vmatprep.subr.bf16.mxu0 0
      %648 = vmatpush1.bf16.msra.mxu0 %v574
      %649 = vmatprep.subr.bf16.mxu0 0
      %650 = vmatpush1.bf16.msra.mxu0 %v575
      %651 = vmatprep.subr.bf16.mxu0 0
      %652 = vmatpush1.bf16.msra.mxu0 %v576
      %653 = vmatprep.subr.bf16.mxu0 0
      %654 = vmatpush1.bf16.msra.mxu0 %v577
      %655 = vmatprep.subr.bf16.mxu0 0
      %656 = vmatpush1.bf16.msra.mxu0 %v578
      %657 = vmatprep.subr.bf16.mxu0 0
      %658 = vmatpush1.bf16.msra.mxu0 %v579
      %659 = vmatprep.subr.bf16.mxu0 0
      %660 = vmatpush1.bf16.msra.mxu0 %v580
      %661 = vmatprep.mubr.bf16.mxu0 %v392
      %662 = vmatmul.mubr.bf16.gmra.mrb[0].mxu0 %v380
      %v663 = vpop.f32.mrb[0].mxu0
      %v664 = vadd.f32 0.0, %v663
      %v665 = vpop.f32.mrb[0].mxu0
      %v666 = vpop.f32.mrb[0].mxu0
      %v667 = vadd.f32 0.0, %v666
      %v668 = vpop.f32.mrb[0].mxu0
      %669 = vmatprep.mubr.bf16.mxu0 %v422
      %670 = vmatmul.mubr.bf16.gmra.mrb[0].mxu0 %v419
      %v671 = vpop.f32.mrb[0].mxu0
      %v672 = vadd.f32 0.0, %v671
      %v673 = vpop.f32.mrb[0].mxu0
      %v674 = vpop.f32.mrb[0].mxu0
      %v675 = vpop.f32.mrb[0].mxu0
      %676 = vdwg.mxu0
      %677 = vmatprep.subr.bf16.mxu0 0
      %678 = vmatpush1.bf16.msra.mxu0 %v581
      %679 = vmatprep.subr.bf16.mxu0 0
      %680 = vmatpush1.bf16.msra.mxu0 %v582
      %681 = vmatprep.subr.bf16.mxu0 0
      %682 = vmatpush1.bf16.msra.mxu0 %v583
      %683 = vmatprep.subr.bf16.mxu0 0
      %684 = vmatpush1.bf16.msra.mxu0 %v584
      %685 = vmatprep.subr.bf16.mxu0 0
      %686 = vmatpush1.bf16.msra.mxu0 %v585
      %687 = vmatprep.subr.bf16.mxu0 0
      %688 = vmatpush1.bf16.msra.mxu0 %v586
      %689 = vmatprep.subr.bf16.mxu0 0
      %690 = vmatpush1.bf16.msra.mxu0 %v587
      %691 = vmatprep.subr.bf16.mxu0 0
      %692 = vmatpush1.bf16.msra.mxu0 %v588
      %693 = vmatprep.subr.bf16.mxu0 0
      %694 = vmatpush1.bf16.msra.mxu0 %v589
      %695 = vmatprep.subr.bf16.mxu0 0
      %696 = vmatpush1.bf16.msra.mxu0 %v590
      %697 = vmatprep.subr.bf16.mxu0 0
      %698 = vmatpush1.bf16.msra.mxu0 %v591
      %699 = vmatprep.subr.bf16.mxu0 0
      %700 = vmatpush1.bf16.msra.mxu0 %v592
      %701 = vmatprep.subr.bf16.mxu0 0
      %702 = vmatpush1.bf16.msra.mxu0 %v593
      %703 = vmatprep.subr.bf16.mxu0 0
      %704 = vmatpush1.bf16.msra.mxu0 %v594
      %705 = vmatprep.subr.bf16.mxu0 0
      %706 = vmatpush1.bf16.msra.mxu0 %v595
      %707 = vmatprep.subr.bf16.mxu0 0
      %708 = vmatpush1.bf16.msra.mxu0 %v596
      %709 = vmatprep.mubr.bf16.mxu0 %v416
      %710 = vmatmul.mubr.bf16.gmra.mrb[0].mxu0 %v404
      %v711 = vpop.f32.mrb[0].mxu0
      %v712 = vadd.f32 %v664, %v711
      %v713 = vpop.f32.mrb[0].mxu0
      %v714 = vpop.f32.mrb[0].mxu0
      %v715 = vadd.f32 %v667, %v714
      %v716 = vpop.f32.mrb[0].mxu0
      %717 = vmatprep.mubr.bf16.mxu0 %v428
      %718 = vmatmul.mubr.bf16.gmra.mrb[0].mxu0 %v425
      %v719 = vpop.f32.mrb[0].mxu0
      %v720 = vadd.f32 %v672, %v719
      %v721 = vpop.f32.mrb[0].mxu0
      %v722 = vpop.f32.mrb[0].mxu0
      %v723 = vpop.f32.mrb[0].mxu0
      %724 = vdwg.mxu0
      %v725 = vpack.c.b16 %v352, %v352
      %v726 = vpack.c.b16 %v353, %v353
      %v727 = vpack.c.b16 %v354, %v354
      %v728 = vpack.c.b16 %v355, %v355
      %v801 = vunpack.c.l.b16 %v205
      %v802 = vunpack.c.l.b16 %v206
      %v803 = vunpack.c.l.b16 %v207
      %v804 = vunpack.c.l.b16 %v208
      %v805 = vunpack.c.l.b16 %v209
      %v806 = vunpack.c.l.b16 %v210
      %v807 = vunpack.c.l.b16 %v211
      %v808 = vunpack.c.l.b16 %v212
      %v809 = vunpack.c.l.b16 %v213
      %v810 = vunpack.c.l.b16 %v214
      %v811 = vunpack.c.l.b16 %v215
      %v812 = vunpack.c.l.b16 %v216
      %v813 = vunpack.c.l.b16 %v217
      %v814 = vunpack.c.l.b16 %v218
      %v815 = vunpack.c.l.b16 %v219
      %v816 = vunpack.c.l.b16 %v220
      %v817 = vunpack.c.l.b16 %v221
      %v818 = vunpack.c.l.b16 %v222
      %v819 = vunpack.c.l.b16 %v223
      %v820 = vunpack.c.l.b16 %v224
      %v821 = vunpack.c.l.b16 %v225
      %v822 = vunpack.c.l.b16 %v226
      %v823 = vunpack.c.l.b16 %v227
      %v824 = vunpack.c.l.b16 %v228
      %v825 = vunpack.c.l.b16 %v229
      %v826 = vunpack.c.l.b16 %v230
      %v827 = vunpack.c.l.b16 %v231
      %v828 = vunpack.c.l.b16 %v232
      %v829 = vunpack.c.l.b16 %v233
      %v830 = vunpack.c.l.b16 %v234
      %v831 = vunpack.c.l.b16 %v235
      %v832 = vunpack.c.l.b16 %v236
      %v833 = vunpack.c.l.b16 %v237
      %v834 = vunpack.c.l.b16 %v238
      %v835 = vunpack.c.l.b16 %v239
      %v836 = vunpack.c.l.b16 %v240
      %v837 = vunpack.c.l.b16 %v241
      %v838 = vunpack.c.l.b16 %v242
      %v839 = vunpack.c.l.b16 %v243
      %v840 = vunpack.c.l.b16 %v244
      %v841 = vunpack.c.l.b16 %v245
      %v842 = vunpack.c.l.b16 %v246
      %v843 = vunpack.c.l.b16 %v247
      %v844 = vunpack.c.l.b16 %v248
      %v845 = vunpack.c.l.b16 %v249
      %v846 = vunpack.c.l.b16 %v250
      %v847 = vunpack.c.l.b16 %v251
      %v848 = vunpack.c.l.b16 %v252
      %v849 = vunpack.c.l.b16 %v253
      %v850 = vunpack.c.l.b16 %v254
      %v851 = vunpack.c.l.b16 %v255
      %v852 = vunpack.c.l.b16 %v256
      %v853 = vunpack.c.l.b16 %v257
      %v854 = vunpack.c.l.b16 %v258
      %v855 = vunpack.c.l.b16 %v259
      %v856 = vunpack.c.l.b16 %v260
      %v857 = vunpack.c.l.b16 %v261
      %v858 = vunpack.c.l.b16 %v262
      %v859 = vunpack.c.l.b16 %v263
      %v860 = vunpack.c.l.b16 %v264
      %v861 = vunpack.c.l.b16 %v265
      %v862 = vunpack.c.l.b16 %v266
      %v863 = vunpack.c.l.b16 %v267
      %v864 = vunpack.c.l.b16 %v268
      %v865 = vpack.c.b16 %v802, %v801
      %v866 = vpack.c.b16 %v804, %v803
      %v867 = vpack.c.b16 %v806, %v805
      %v868 = vpack.c.b16 %v808, %v807
      %v869 = vpack.c.b16 %v810, %v809
      %v870 = vpack.c.b16 %v812, %v811
      %v871 = vpack.c.b16 %v814, %v813
      %v872 = vpack.c.b16 %v816, %v815
      %v873 = vpack.c.b16 %v818, %v817
      %v874 = vpack.c.b16 %v820, %v819
      %v875 = vpack.c.b16 %v822, %v821
      %v876 = vpack.c.b16 %v824, %v823
      %v877 = vpack.c.b16 %v826, %v825
      %v878 = vpack.c.b16 %v828, %v827
      %v879 = vpack.c.b16 %v830, %v829
      %v880 = vpack.c.b16 %v832, %v831
      %v881 = vpack.c.b16 %v834, %v833
      %v882 = vpack.c.b16 %v836, %v835
      %v883 = vpack.c.b16 %v838, %v837
      %v884 = vpack.c.b16 %v840, %v839
      %v885 = vpack.c.b16 %v842, %v841
      %v886 = vpack.c.b16 %v844, %v843
      %v887 = vpack.c.b16 %v846, %v845
      %v888 = vpack.c.b16 %v848, %v847
      %v889 = vpack.c.b16 %v850, %v849
      %v890 = vpack.c.b16 %v852, %v851
      %v891 = vpack.c.b16 %v854, %v853
      %v892 = vpack.c.b16 %v856, %v855
      %v893 = vpack.c.b16 %v858, %v857
      %v894 = vpack.c.b16 %v860, %v859
      %v895 = vpack.c.b16 %v862, %v861
      %v896 = vpack.c.b16 %v864, %v863
      %929 = vmatprep.subr.bf16.mxu0 0
      %930 = vmatpush1.bf16.msra.mxu0 %v865
      %931 = vmatprep.subr.bf16.mxu0 0
      %932 = vmatpush1.bf16.msra.mxu0 %v866
      %933 = vmatprep.subr.bf16.mxu0 0
      %934 = vmatpush1.bf16.msra.mxu0 %v867
      %935 = vmatprep.subr.bf16.mxu0 0
      %936 = vmatpush1.bf16.msra.mxu0 %v868
      %937 = vmatprep.subr.bf16.mxu0 0
      %938 = vmatpush1.bf16.msra.mxu0 %v869
      %939 = vmatprep.subr.bf16.mxu0 0
      %940 = vmatpush1.bf16.msra.mxu0 %v870
      %941 = vmatprep.subr.bf16.mxu0 0
      %942 = vmatpush1.bf16.msra.mxu0 %v871
      %943 = vmatprep.subr.bf16.mxu0 0
      %944 = vmatpush1.bf16.msra.mxu0 %v872
      %945 = vmatprep.subr.bf16.mxu0 0
      %946 = vmatpush1.bf16.msra.mxu0 %v873
      %947 = vmatprep.subr.bf16.mxu0 0
      %948 = vmatpush1.bf16.msra.mxu0 %v874
      %949 = vmatprep.subr.bf16.mxu0 0
      %950 = vmatpush1.bf16.msra.mxu0 %v875
      %951 = vmatprep.subr.bf16.mxu0 0
      %952 = vmatpush1.bf16.msra.mxu0 %v876
      %953 = vmatprep.subr.bf16.mxu0 0
      %954 = vmatpush1.bf16.msra.mxu0 %v877
      %955 = vmatprep.subr.bf16.mxu0 0
      %956 = vmatpush1.bf16.msra.mxu0 %v878
      %957 = vmatprep.subr.bf16.mxu0 0
      %958 = vmatpush1.bf16.msra.mxu0 %v879
      %959 = vmatprep.subr.bf16.mxu0 0
      %960 = vmatpush1.bf16.msra.mxu0 %v880
      %961 = vmatprep.mubr.bf16.mxu0 %v361
      %962 = vmatmul.mubr.bf16.gmra.mrb[0].mxu0 %v360
      %v963 = vpop.f32.mrb[0].mxu0
      %v964 = vadd.f32 %v712, %v963
      %v965 = vpop.f32.mrb[0].mxu0
      %v966 = vpop.f32.mrb[0].mxu0
      %v967 = vadd.f32 %v715, %v966
      %v968 = vpop.f32.mrb[0].mxu0
      %969 = vmatprep.mubr.bf16.mxu0 %v726
      %970 = vmatmul.mubr.bf16.gmra.mrb[0].mxu0 %v725
      %v971 = vpop.f32.mrb[0].mxu0
      %v972 = vadd.f32 %v720, %v971
      %v973 = vpop.f32.mrb[0].mxu0
      %v974 = vpop.f32.mrb[0].mxu0
      %v975 = vpop.f32.mrb[0].mxu0
      %976 = vdwg.mxu0
      %977 = vmatprep.subr.bf16.mxu0 0
      %978 = vmatpush1.bf16.msra.mxu0 %v881
      %979 = vmatprep.subr.bf16.mxu0 0
      %980 = vmatpush1.bf16.msra.mxu0 %v882
      %981 = vmatprep.subr.bf16.mxu0 0
      %982 = vmatpush1.bf16.msra.mxu0 %v883
      %983 = vmatprep.subr.bf16.mxu0 0
      %984 = vmatpush1.bf16.msra.mxu0 %v884
      %985 = vmatprep.subr.bf16.mxu0 0
      %986 = vmatpush1.bf16.msra.mxu0 %v885
      %987 = vmatprep.subr.bf16.mxu0 0
      %988 = vmatpush1.bf16.msra.mxu0 %v886
      %989 = vmatprep.subr.bf16.mxu0 0
      %990 = vmatpush1.bf16.msra.mxu0 %v887
      %991 = vmatprep.subr.bf16.mxu0 0
      %992 = vmatpush1.bf16.msra.mxu0 %v888
      %993 = vmatprep.subr.bf16.mxu0 0
      %994 = vmatpush1.bf16.msra.mxu0 %v889
      %995 = vmatprep.subr.bf16.mxu0 0
      %996 = vmatpush1.bf16.msra.mxu0 %v890
      %997 = vmatprep.subr.bf16.mxu0 0
      %998 = vmatpush1.bf16.msra.mxu0 %v891
      %999 = vmatprep.subr.bf16.mxu0 0
      %1000 = vmatpush1.bf16.msra.mxu0 %v892
      %1001 = vmatprep.subr.bf16.mxu0 0
      %1002 = vmatpush1.bf16.msra.mxu0 %v893
      %1003 = vmatprep.subr.bf16.mxu0 0
      %1004 = vmatpush1.bf16.msra.mxu0 %v894
      %1005 = vmatprep.subr.bf16.mxu0 0
      %1006 = vmatpush1.bf16.msra.mxu0 %v895
      %1007 = vmatprep.subr.bf16.mxu0 0
      %1008 = vmatpush1.bf16.msra.mxu0 %v896
      %1009 = vmatprep.mubr.bf16.mxu0 %v363
      %1010 = vmatmul.mubr.bf16.gmra.mrb[0].mxu0 %v362
      %v1011 = vpop.f32.mrb[0].mxu0
      %v1012 = vadd.f32 %v964, %v1011
      %v1013 = vpop.f32.mrb[0].mxu0
      %v1014 = vpop.f32.mrb[0].mxu0
      %v1015 = vadd.f32 %v967, %v1014
      %v1016 = vpop.f32.mrb[0].mxu0
      %1017 = vmatprep.mubr.bf16.mxu0 %v728
      %1018 = vmatmul.mubr.bf16.gmra.mrb[0].mxu0 %v727
      %v1019 = vpop.f32.mrb[0].mxu0
      %v1020 = vadd.f32 %v972, %v1019
      %v1021 = vpop.f32.mrb[0].mxu0
      %v1022 = vpop.f32.mrb[0].mxu0
      %v1023 = vpop.f32.mrb[0].mxu0
      %1024 = vdwg.mxu0
      %v1025 = vld [vmem:[%s192] sm:$0x88]
      %v1026 = vld [vmem:[%s192 + $0x8] sm:$0x88]
      %v1027 = vld [vmem:[%s192 + $0x30] sm:$0x77]
      %v1028 = vld [vmem:[%s192 + $0x38] sm:$0x77]
      %s1029 = scalar_lea.vmem %s1, 512
      %v1030 = vld [vmem:[%s1029] sm:$0xf]
      %v1031 = vld [vmem:[%s1029 + $0x4] sm:$0xf]
      %v1032 = vld [vmem:[%s1029 + $0x8] sm:$0xf]
      %v1033 = vld [vmem:[%s1029 + $0xc] sm:$0xf]
      %v1034 = vld [vmem:[%s1029 + $0x10] sm:$0xf]
      %v1035 = vld [vmem:[%s1029 + $0x14] sm:$0xf]
      %v1036 = vld [vmem:[%s1029 + $0x18] sm:$0xf]
      %v1037 = vld [vmem:[%s1029 + $0x1c] sm:$0xf]
      %v1038 = vld [vmem:[%s1029 + $0x20] sm:$0xf]
      %v1039 = vld [vmem:[%s1029 + $0x24] sm:$0xf]
      %v1040 = vld [vmem:[%s1029 + $0x28] sm:$0xf]
      %v1041 = vld [vmem:[%s1029 + $0x2c] sm:$0xf]
      %v1042 = vld [vmem:[%s1029 + $0x30] sm:$0xf]
      %v1043 = vld [vmem:[%s1029 + $0x34] sm:$0xf]
      %v1044 = vld [vmem:[%s1029 + $0x38] sm:$0xf]
      %v1045 = vld [vmem:[%s1029 + $0x3c] sm:$0xf]
      %v1046 = vld [vmem:[%s1029 + $0x40] sm:$0xf]
      %v1047 = vld [vmem:[%s1029 + $0x44] sm:$0xf]
      %v1048 = vld [vmem:[%s1029 + $0x48] sm:$0xf]
      %v1049 = vld [vmem:[%s1029 + $0x4c] sm:$0xf]
      %v1050 = vld [vmem:[%s1029 + $0x50] sm:$0xf]
      %v1051 = vld [vmem:[%s1029 + $0x54] sm:$0xf]
      %v1052 = vld [vmem:[%s1029 + $0x58] sm:$0xf]
      %v1053 = vld [vmem:[%s1029 + $0x5c] sm:$0xf]
      %v1054 = vld [vmem:[%s1029 + $0x60] sm:$0xf]
      %v1055 = vld [vmem:[%s1029 + $0x64] sm:$0xf]
      %v1056 = vld [vmem:[%s1029 + $0x68] sm:$0xf]
      %v1057 = vld [vmem:[%s1029 + $0x6c] sm:$0xf]
      %v1058 = vld [vmem:[%s1029 + $0x70] sm:$0xf]
      %v1059 = vld [vmem:[%s1029 + $0x74] sm:$0xf]
      %v1060 = vld [vmem:[%s1029 + $0x78] sm:$0xf]
      %v1061 = vld [vmem:[%s1029 + $0x7c] sm:$0xf]
      %v1062 = vld [vmem:[%s1029 + $0x80] sm:$0xf]
      %v1063 = vld [vmem:[%s1029 + $0x84] sm:$0xf]
      %v1064 = vld [vmem:[%s1029 + $0x88] sm:$0xf]
      %v1065 = vld [vmem:[%s1029 + $0x8c] sm:$0xf]
      %v1066 = vld [vmem:[%s1029 + $0x90] sm:$0xf]
      %v1067 = vld [vmem:[%s1029 + $0x94] sm:$0xf]
      %v1068 = vld [vmem:[%s1029 + $0x98] sm:$0xf]
      %v1069 = vld [vmem:[%s1029 + $0x9c] sm:$0xf]
      %v1070 = vld [vmem:[%s1029 + $0xa0] sm:$0xf]
      %v1071 = vld [vmem:[%s1029 + $0xa4] sm:$0xf]
      %v1072 = vld [vmem:[%s1029 + $0xa8] sm:$0xf]
      %v1073 = vld [vmem:[%s1029 + $0xac] sm:$0xf]
      %v1074 = vld [vmem:[%s1029 + $0xb0] sm:$0xf]
      %v1075 = vld [vmem:[%s1029 + $0xb4] sm:$0xf]
      %v1076 = vld [vmem:[%s1029 + $0xb8] sm:$0xf]
      %v1077 = vld [vmem:[%s1029 + $0xbc] sm:$0xf]
      %v1078 = vld [vmem:[%s1029 + $0xc0] sm:$0xf]
      %v1079 = vld [vmem:[%s1029 + $0xc4] sm:$0xf]
      %v1080 = vld [vmem:[%s1029 + $0xc8] sm:$0xf]
      %v1081 = vld [vmem:[%s1029 + $0xcc] sm:$0xf]
      %v1082 = vld [vmem:[%s1029 + $0xd0] sm:$0xf]
      %v1083 = vld [vmem:[%s1029 + $0xd4] sm:$0xf]
      %v1084 = vld [vmem:[%s1029 + $0xd8] sm:$0xf]
      %v1085 = vld [vmem:[%s1029 + $0xdc] sm:$0xf]
      %v1086 = vld [vmem:[%s1029 + $0xe0] sm:$0xf]
      %v1087 = vld [vmem:[%s1029 + $0xe4] sm:$0xf]
      %v1088 = vld [vmem:[%s1029 + $0xe8] sm:$0xf]
      %v1089 = vld [vmem:[%s1029 + $0xec] sm:$0xf]
      %v1090 = vld [vmem:[%s1029 + $0xf0] sm:$0xf]
      %v1091 = vld [vmem:[%s1029 + $0xf4] sm:$0xf]
      %v1092 = vld [vmem:[%s1029 + $0xf8] sm:$0xf]
      %v1093 = vld [vmem:[%s1029 + $0xfc] sm:$0xf]
      %v1098 = vunpack.c.l.b16 %v1025
      %v1099 = vunpack.c.h.b16 %v1025
      %v1100 = vunpack.c.l.b16 %v1026
      %v1101 = vunpack.c.h.b16 %v1026
      %v1102 = vunpack.c.l.b16 %v1027
      %v1103 = vunpack.c.h.b16 %v1027
      %v1104 = vunpack.c.l.b16 %v1028
      %v1105 = vunpack.c.h.b16 %v1028
      %v1106 = vpack.c.b16 %v348, %v1098
      %v1107 = vpack.c.b16 %v349, %v1099
      %v1108 = vpack.c.b16 %v350, %v1100
      %v1109 = vpack.c.b16 %v351, %v1101
      %v1110 = vpack.c.b16 %v1102, %v352
      %v1111 = vpack.c.b16 %v1103, %v353
      %v1112 = vpack.c.b16 %v1104, %v354
      %v1113 = vpack.c.b16 %v1105, %v355
      %vm1114 = vcmask 1044480
      %v1115 = vrot.slane %v1106, 3
      %v1116 = vrot.slane %v1110, 3
      %v1117 = vsel %vm1114, %v1115, %v1116
      %v1118 = vrot.slane %v1107, 3
      %v1119 = vrot.slane %v1111, 3
      %v1120 = vsel %vm1114, %v1118, %v1119
      %v1121 = vrot.slane %v1108, 3
      %v1122 = vrot.slane %v1112, 3
      %v1123 = vsel %vm1114, %v1121, %v1122
      %v1124 = vrot.slane %v1109, 3
      %v1125 = vrot.slane %v1113, 3
      %v1126 = vsel %vm1114, %v1124, %v1125
      %v1199 = vunpack.c.l.b16 %v1030
      %v1200 = vunpack.c.l.b16 %v1031
      %v1201 = vunpack.c.l.b16 %v1032
      %v1202 = vunpack.c.l.b16 %v1033
      %v1203 = vunpack.c.l.b16 %v1034
      %v1204 = vunpack.c.l.b16 %v1035
      %v1205 = vunpack.c.l.b16 %v1036
      %v1206 = vunpack.c.l.b16 %v1037
      %v1207 = vunpack.c.l.b16 %v1038
      %v1208 = vunpack.c.l.b16 %v1039
      %v1209 = vunpack.c.l.b16 %v1040
      %v1210 = vunpack.c.l.b16 %v1041
      %v1211 = vunpack.c.l.b16 %v1042
      %v1212 = vunpack.c.l.b16 %v1043
      %v1213 = vunpack.c.l.b16 %v1044
      %v1214 = vunpack.c.l.b16 %v1045
      %v1215 = vunpack.c.l.b16 %v1046
      %v1216 = vunpack.c.l.b16 %v1047
      %v1217 = vunpack.c.l.b16 %v1048
      %v1218 = vunpack.c.l.b16 %v1049
      %v1219 = vunpack.c.l.b16 %v1050
      %v1220 = vunpack.c.l.b16 %v1051
      %v1221 = vunpack.c.l.b16 %v1052
      %v1222 = vunpack.c.l.b16 %v1053
      %v1223 = vunpack.c.l.b16 %v1054
      %v1224 = vunpack.c.l.b16 %v1055
      %v1225 = vunpack.c.l.b16 %v1056
      %v1226 = vunpack.c.l.b16 %v1057
      %v1227 = vunpack.c.l.b16 %v1058
      %v1228 = vunpack.c.l.b16 %v1059
      %v1229 = vunpack.c.l.b16 %v1060
      %v1230 = vunpack.c.l.b16 %v1061
      %v1231 = vunpack.c.l.b16 %v1062
      %v1232 = vunpack.c.l.b16 %v1063
      %v1233 = vunpack.c.l.b16 %v1064
      %v1234 = vunpack.c.l.b16 %v1065
      %v1235 = vunpack.c.l.b16 %v1066
      %v1236 = vunpack.c.l.b16 %v1067
      %v1237 = vunpack.c.l.b16 %v1068
      %v1238 = vunpack.c.l.b16 %v1069
      %v1239 = vunpack.c.l.b16 %v1070
      %v1240 = vunpack.c.l.b16 %v1071
      %v1241 = vunpack.c.l.b16 %v1072
      %v1242 = vunpack.c.l.b16 %v1073
      %v1243 = vunpack.c.l.b16 %v1074
      %v1244 = vunpack.c.l.b16 %v1075
      %v1245 = vunpack.c.l.b16 %v1076
      %v1246 = vunpack.c.l.b16 %v1077
      %v1247 = vunpack.c.l.b16 %v1078
      %v1248 = vunpack.c.l.b16 %v1079
      %v1249 = vunpack.c.l.b16 %v1080
      %v1250 = vunpack.c.l.b16 %v1081
      %v1251 = vunpack.c.l.b16 %v1082
      %v1252 = vunpack.c.l.b16 %v1083
      %v1253 = vunpack.c.l.b16 %v1084
      %v1254 = vunpack.c.l.b16 %v1085
      %v1255 = vunpack.c.l.b16 %v1086
      %v1256 = vunpack.c.l.b16 %v1087
      %v1257 = vunpack.c.l.b16 %v1088
      %v1258 = vunpack.c.l.b16 %v1089
      %v1259 = vunpack.c.l.b16 %v1090
      %v1260 = vunpack.c.l.b16 %v1091
      %v1261 = vunpack.c.l.b16 %v1092
      %v1262 = vunpack.c.l.b16 %v1093
      %v1263 = vpack.c.b16 %v1200, %v1199
      %v1264 = vpack.c.b16 %v1202, %v1201
      %v1265 = vpack.c.b16 %v1204, %v1203
      %v1266 = vpack.c.b16 %v1206, %v1205
      %v1267 = vpack.c.b16 %v1208, %v1207
      %v1268 = vpack.c.b16 %v1210, %v1209
      %v1269 = vpack.c.b16 %v1212, %v1211
      %v1270 = vpack.c.b16 %v1214, %v1213
      %v1271 = vpack.c.b16 %v1216, %v1215
      %v1272 = vpack.c.b16 %v1218, %v1217
      %v1273 = vpack.c.b16 %v1220, %v1219
      %v1274 = vpack.c.b16 %v1222, %v1221
      %v1275 = vpack.c.b16 %v1224, %v1223
      %v1276 = vpack.c.b16 %v1226, %v1225
      %v1277 = vpack.c.b16 %v1228, %v1227
      %v1278 = vpack.c.b16 %v1230, %v1229
      %v1279 = vpack.c.b16 %v1232, %v1231
      %v1280 = vpack.c.b16 %v1234, %v1233
      %v1281 = vpack.c.b16 %v1236, %v1235
      %v1282 = vpack.c.b16 %v1238, %v1237
      %v1283 = vpack.c.b16 %v1240, %v1239
      %v1284 = vpack.c.b16 %v1242, %v1241
      %v1285 = vpack.c.b16 %v1244, %v1243
      %v1286 = vpack.c.b16 %v1246, %v1245
      %v1287 = vpack.c.b16 %v1248, %v1247
      %v1288 = vpack.c.b16 %v1250, %v1249
      %v1289 = vpack.c.b16 %v1252, %v1251
      %v1290 = vpack.c.b16 %v1254, %v1253
      %v1291 = vpack.c.b16 %v1256, %v1255
      %v1292 = vpack.c.b16 %v1258, %v1257
      %v1293 = vpack.c.b16 %v1260, %v1259
      %v1294 = vpack.c.b16 %v1262, %v1261
      %1327 = vmatprep.subr.bf16.mxu0 0
      %1328 = vmatpush1.bf16.msra.mxu0 %v1263
      %1329 = vmatprep.subr.bf16.mxu0 0
      %1330 = vmatpush1.bf16.msra.mxu0 %v1264
      %1331 = vmatprep.subr.bf16.mxu0 0
      %1332 = vmatpush1.bf16.msra.mxu0 %v1265
      %1333 = vmatprep.subr.bf16.mxu0 0
      %1334 = vmatpush1.bf16.msra.mxu0 %v1266
      %1335 = vmatprep.subr.bf16.mxu0 0
      %1336 = vmatpush1.bf16.msra.mxu0 %v1267
      %1337 = vmatprep.subr.bf16.mxu0 0
      %1338 = vmatpush1.bf16.msra.mxu0 %v1268
      %1339 = vmatprep.subr.bf16.mxu0 0
      %1340 = vmatpush1.bf16.msra.mxu0 %v1269
      %1341 = vmatprep.subr.bf16.mxu0 0
      %1342 = vmatpush1.bf16.msra.mxu0 %v1270
      %1343 = vmatprep.subr.bf16.mxu0 0
      %1344 = vmatpush1.bf16.msra.mxu0 %v1271
      %1345 = vmatprep.subr.bf16.mxu0 0
      %1346 = vmatpush1.bf16.msra.mxu0 %v1272
      %1347 = vmatprep.subr.bf16.mxu0 0
      %1348 = vmatpush1.bf16.msra.mxu0 %v1273
      %1349 = vmatprep.subr.bf16.mxu0 0
      %1350 = vmatpush1.bf16.msra.mxu0 %v1274
      %1351 = vmatprep.subr.bf16.mxu0 0
      %1352 = vmatpush1.bf16.msra.mxu0 %v1275
      %1353 = vmatprep.subr.bf16.mxu0 0
      %1354 = vmatpush1.bf16.msra.mxu0 %v1276
      %1355 = vmatprep.subr.bf16.mxu0 0
      %1356 = vmatpush1.bf16.msra.mxu0 %v1277
      %1357 = vmatprep.subr.bf16.mxu0 0
      %1358 = vmatpush1.bf16.msra.mxu0 %v1278
      %1359 = vmatprep.mubr.bf16.mxu0 %v1120
      %1360 = vmatmul.mubr.bf16.gmra.mrb[0].mxu0 %v1117
      %v1361 = vpop.f32.mrb[0].mxu0
      %v1362 = vadd.f32 0.0, %v1361
      %v1363 = vpop.f32.mrb[0].mxu0
      %v1364 = vpop.f32.mrb[0].mxu0
      %v1365 = vadd.f32 0.0, %v1364
      %v1366 = vpop.f32.mrb[0].mxu0
      %1367 = vmatprep.mubr.bf16.mxu0 %v1119
      %1368 = vmatmul.mubr.bf16.gmra.mrb[0].mxu0 %v1116
      %v1369 = vpop.f32.mrb[0].mxu0
      %v1370 = vadd.f32 0.0, %v1369
      %v1371 = vpop.f32.mrb[0].mxu0
      %v1372 = vpop.f32.mrb[0].mxu0
      %v1373 = vpop.f32.mrb[0].mxu0
      %1374 = vdwg.mxu0
      %1375 = vmatprep.subr.bf16.mxu0 0
      %1376 = vmatpush1.bf16.msra.mxu0 %v1279
      %1377 = vmatprep.subr.bf16.mxu0 0
      %1378 = vmatpush1.bf16.msra.mxu0 %v1280
      %1379 = vmatprep.subr.bf16.mxu0 0
      %1380 = vmatpush1.bf16.msra.mxu0 %v1281
      %1381 = vmatprep.subr.bf16.mxu0 0
      %1382 = vmatpush1.bf16.msra.mxu0 %v1282
      %1383 = vmatprep.subr.bf16.mxu0 0
      %1384 = vmatpush1.bf16.msra.mxu0 %v1283
      %1385 = vmatprep.subr.bf16.mxu0 0
      %1386 = vmatpush1.bf16.msra.mxu0 %v1284
      %1387 = vmatprep.subr.bf16.mxu0 0
      %1388 = vmatpush1.bf16.msra.mxu0 %v1285
      %1389 = vmatprep.subr.bf16.mxu0 0
      %1390 = vmatpush1.bf16.msra.mxu0 %v1286
      %1391 = vmatprep.subr.bf16.mxu0 0
      %1392 = vmatpush1.bf16.msra.mxu0 %v1287
      %1393 = vmatprep.subr.bf16.mxu0 0
      %1394 = vmatpush1.bf16.msra.mxu0 %v1288
      %1395 = vmatprep.subr.bf16.mxu0 0
      %1396 = vmatpush1.bf16.msra.mxu0 %v1289
      %1397 = vmatprep.subr.bf16.mxu0 0
      %1398 = vmatpush1.bf16.msra.mxu0 %v1290
      %1399 = vmatprep.subr.bf16.mxu0 0
      %1400 = vmatpush1.bf16.msra.mxu0 %v1291
      %1401 = vmatprep.subr.bf16.mxu0 0
      %1402 = vmatpush1.bf16.msra.mxu0 %v1292
      %1403 = vmatprep.subr.bf16.mxu0 0
      %1404 = vmatpush1.bf16.msra.mxu0 %v1293
      %1405 = vmatprep.subr.bf16.mxu0 0
      %1406 = vmatpush1.bf16.msra.mxu0 %v1294
      %1407 = vmatprep.mubr.bf16.mxu0 %v1126
      %1408 = vmatmul.mubr.bf16.gmra.mrb[0].mxu0 %v1123
      %v1409 = vpop.f32.mrb[0].mxu0
      %v1410 = vadd.f32 %v1362, %v1409
      %v1411 = vpop.f32.mrb[0].mxu0
      %v1412 = vpop.f32.mrb[0].mxu0
      %v1413 = vadd.f32 %v1365, %v1412
      %v1414 = vpop.f32.mrb[0].mxu0
      %1415 = vmatprep.mubr.bf16.mxu0 %v1125
      %1416 = vmatmul.mubr.bf16.gmra.mrb[0].mxu0 %v1122
      %v1417 = vpop.f32.mrb[0].mxu0
      %v1418 = vadd.f32 %v1370, %v1417
      %v1419 = vpop.f32.mrb[0].mxu0
      %v1420 = vpop.f32.mrb[0].mxu0
      %v1421 = vpop.f32.mrb[0].mxu0
      %1422 = vdwg.mxu0
      %v1423 = vadd.f32 %v1012, %v1410
      %v1424 = vadd.f32 %v1015, %v1413
      %v1425 = vadd.f32 %v1020, %v1418
      %v1426 = vld [vmem:[%s192 + $0x30] sm:$0xff]
      %v1427 = vld [vmem:[%s192 + $0x38] sm:$0xff]
      %s1428 = scalar_lea.vmem %s1, 768
      %v1429 = vld [vmem:[%s1428] sm:$0xf]
      %v1430 = vld [vmem:[%s1428 + $0x4] sm:$0xf]
      %v1431 = vld [vmem:[%s1428 + $0x8] sm:$0xf]
      %v1432 = vld [vmem:[%s1428 + $0xc] sm:$0xf]
      %v1433 = vld [vmem:[%s1428 + $0x10] sm:$0xf]
      %v1434 = vld [vmem:[%s1428 + $0x14] sm:$0xf]
      %v1435 = vld [vmem:[%s1428 + $0x18] sm:$0xf]
      %v1436 = vld [vmem:[%s1428 + $0x1c] sm:$0xf]
      %v1437 = vld [vmem:[%s1428 + $0x20] sm:$0xf]
      %v1438 = vld [vmem:[%s1428 + $0x24] sm:$0xf]
      %v1439 = vld [vmem:[%s1428 + $0x28] sm:$0xf]
      %v1440 = vld [vmem:[%s1428 + $0x2c] sm:$0xf]
      %v1441 = vld [vmem:[%s1428 + $0x30] sm:$0xf]
      %v1442 = vld [vmem:[%s1428 + $0x34] sm:$0xf]
      %v1443 = vld [vmem:[%s1428 + $0x38] sm:$0xf]
      %v1444 = vld [vmem:[%s1428 + $0x3c] sm:$0xf]
      %v1445 = vld [vmem:[%s1428 + $0x40] sm:$0xf]
      %v1446 = vld [vmem:[%s1428 + $0x44] sm:$0xf]
      %v1447 = vld [vmem:[%s1428 + $0x48] sm:$0xf]
      %v1448 = vld [vmem:[%s1428 + $0x4c] sm:$0xf]
      %v1449 = vld [vmem:[%s1428 + $0x50] sm:$0xf]
      %v1450 = vld [vmem:[%s1428 + $0x54] sm:$0xf]
      %v1451 = vld [vmem:[%s1428 + $0x58] sm:$0xf]
      %v1452 = vld [vmem:[%s1428 + $0x5c] sm:$0xf]
      %v1453 = vld [vmem:[%s1428 + $0x60] sm:$0xf]
      %v1454 = vld [vmem:[%s1428 + $0x64] sm:$0xf]
      %v1455 = vld [vmem:[%s1428 + $0x68] sm:$0xf]
      %v1456 = vld [vmem:[%s1428 + $0x6c] sm:$0xf]
      %v1457 = vld [vmem:[%s1428 + $0x70] sm:$0xf]
      %v1458 = vld [vmem:[%s1428 + $0x74] sm:$0xf]
      %v1459 = vld [vmem:[%s1428 + $0x78] sm:$0xf]
      %v1460 = vld [vmem:[%s1428 + $0x7c] sm:$0xf]
      %v1461 = vld [vmem:[%s1428 + $0x80] sm:$0xf]
      %v1462 = vld [vmem:[%s1428 + $0x84] sm:$0xf]
      %v1463 = vld [vmem:[%s1428 + $0x88] sm:$0xf]
      %v1464 = vld [vmem:[%s1428 + $0x8c] sm:$0xf]
      %v1465 = vld [vmem:[%s1428 + $0x90] sm:$0xf]
      %v1466 = vld [vmem:[%s1428 + $0x94] sm:$0xf]
      %v1467 = vld [vmem:[%s1428 + $0x98] sm:$0xf]
      %v1468 = vld [vmem:[%s1428 + $0x9c] sm:$0xf]
      %v1469 = vld [vmem:[%s1428 + $0xa0] sm:$0xf]
      %v1470 = vld [vmem:[%s1428 + $0xa4] sm:$0xf]
      %v1471 = vld [vmem:[%s1428 + $0xa8] sm:$0xf]
      %v1472 = vld [vmem:[%s1428 + $0xac] sm:$0xf]
      %v1473 = vld [vmem:[%s1428 + $0xb0] sm:$0xf]
      %v1474 = vld [vmem:[%s1428 + $0xb4] sm:$0xf]
      %v1475 = vld [vmem:[%s1428 + $0xb8] sm:$0xf]
      %v1476 = vld [vmem:[%s1428 + $0xbc] sm:$0xf]
      %v1477 = vld [vmem:[%s1428 + $0xc0] sm:$0xf]
      %v1478 = vld [vmem:[%s1428 + $0xc4] sm:$0xf]
      %v1479 = vld [vmem:[%s1428 + $0xc8] sm:$0xf]
      %v1480 = vld [vmem:[%s1428 + $0xcc] sm:$0xf]
      %v1481 = vld [vmem:[%s1428 + $0xd0] sm:$0xf]
      %v1482 = vld [vmem:[%s1428 + $0xd4] sm:$0xf]
      %v1483 = vld [vmem:[%s1428 + $0xd8] sm:$0xf]
      %v1484 = vld [vmem:[%s1428 + $0xdc] sm:$0xf]
      %v1485 = vld [vmem:[%s1428 + $0xe0] sm:$0xf]
      %v1486 = vld [vmem:[%s1428 + $0xe4] sm:$0xf]
      %v1487 = vld [vmem:[%s1428 + $0xe8] sm:$0xf]
      %v1488 = vld [vmem:[%s1428 + $0xec] sm:$0xf]
      %v1489 = vld [vmem:[%s1428 + $0xf0] sm:$0xf]
      %v1490 = vld [vmem:[%s1428 + $0xf4] sm:$0xf]
      %v1491 = vld [vmem:[%s1428 + $0xf8] sm:$0xf]
      %v1492 = vld [vmem:[%s1428 + $0xfc] sm:$0xf]
      %v1495 = vunpack.c.l.b16 %v1426
      %v1496 = vunpack.c.h.b16 %v1426
      %v1497 = vunpack.c.l.b16 %v1427
      %v1498 = vunpack.c.h.b16 %v1427
      %v1499 = vpack.c.b16 %v1495, %v352
      %v1500 = vpack.c.b16 %v1496, %v353
      %v1501 = vpack.c.b16 %v1497, %v354
      %v1502 = vpack.c.b16 %v1498, %v355
      %vm1503 = vsmask.f32 4352
      %v1505 = vshrl.u32 %v1106, 16
      %v1507 = vrot.slane %v1505, 3
      %v1508 = vshll.u32 %v1106, 16
      %v1510 = vrot.slane %v1508, 4
      %v1511 = vor.u32 %v1507, %v1510
      %v1513 = vshrl.u32 %v1499, 16
      %v1515 = vrot.slane %v1513, 3
      %v1516 = vshll.u32 %v1499, 16
      %v1518 = vrot.slane %v1516, 4
      %v1519 = vor.u32 %v1515, %v1518
      %v1520 = vsel %vm1503, %v1511, %v1519
      %v1522 = vshrl.u32 %v1107, 16
      %v1524 = vrot.slane %v1522, 3
      %v1525 = vshll.u32 %v1107, 16
      %v1527 = vrot.slane %v1525, 4
      %v1528 = vor.u32 %v1524, %v1527
      %v1530 = vshrl.u32 %v1500, 16
      %v1532 = vrot.slane %v1530, 3
      %v1533 = vshll.u32 %v1500, 16
      %v1535 = vrot.slane %v1533, 4
      %v1536 = vor.u32 %v1532, %v1535
      %v1537 = vsel %vm1503, %v1528, %v1536
      %v1539 = vshrl.u32 %v1108, 16
      %v1541 = vrot.slane %v1539, 3
      %v1542 = vshll.u32 %v1108, 16
      %v1544 = vrot.slane %v1542, 4
      %v1545 = vor.u32 %v1541, %v1544
      %v1547 = vshrl.u32 %v1501, 16
      %v1549 = vrot.slane %v1547, 3
      %v1550 = vshll.u32 %v1501, 16
      %v1552 = vrot.slane %v1550, 4
      %v1553 = vor.u32 %v1549, %v1552
      %v1554 = vsel %vm1503, %v1545, %v1553
      %v1556 = vshrl.u32 %v1109, 16
      %v1558 = vrot.slane %v1556, 3
      %v1559 = vshll.u32 %v1109, 16
      %v1561 = vrot.slane %v1559, 4
      %v1562 = vor.u32 %v1558, %v1561
      %v1564 = vshrl.u32 %v1502, 16
      %v1566 = vrot.slane %v1564, 3
      %v1567 = vshll.u32 %v1502, 16
      %v1569 = vrot.slane %v1567, 4
      %v1570 = vor.u32 %v1566, %v1569
      %v1571 = vsel %vm1503, %v1562, %v1570
      %v1644 = vunpack.c.l.b16 %v1429
      %v1645 = vunpack.c.l.b16 %v1430
      %v1646 = vunpack.c.l.b16 %v1431
      %v1647 = vunpack.c.l.b16 %v1432
      %v1648 = vunpack.c.l.b16 %v1433
      %v1649 = vunpack.c.l.b16 %v1434
      %v1650 = vunpack.c.l.b16 %v1435
      %v1651 = vunpack.c.l.b16 %v1436
      %v1652 = vunpack.c.l.b16 %v1437
      %v1653 = vunpack.c.l.b16 %v1438
      %v1654 = vunpack.c.l.b16 %v1439
      %v1655 = vunpack.c.l.b16 %v1440
      %v1656 = vunpack.c.l.b16 %v1441
      %v1657 = vunpack.c.l.b16 %v1442
      %v1658 = vunpack.c.l.b16 %v1443
      %v1659 = vunpack.c.l.b16 %v1444
      %v1660 = vunpack.c.l.b16 %v1445
      %v1661 = vunpack.c.l.b16 %v1446
      %v1662 = vunpack.c.l.b16 %v1447
      %v1663 = vunpack.c.l.b16 %v1448
      %v1664 = vunpack.c.l.b16 %v1449
      %v1665 = vunpack.c.l.b16 %v1450
      %v1666 = vunpack.c.l.b16 %v1451
      %v1667 = vunpack.c.l.b16 %v1452
      %v1668 = vunpack.c.l.b16 %v1453
      %v1669 = vunpack.c.l.b16 %v1454
      %v1670 = vunpack.c.l.b16 %v1455
      %v1671 = vunpack.c.l.b16 %v1456
      %v1672 = vunpack.c.l.b16 %v1457
      %v1673 = vunpack.c.l.b16 %v1458
      %v1674 = vunpack.c.l.b16 %v1459
      %v1675 = vunpack.c.l.b16 %v1460
      %v1676 = vunpack.c.l.b16 %v1461
      %v1677 = vunpack.c.l.b16 %v1462
      %v1678 = vunpack.c.l.b16 %v1463
      %v1679 = vunpack.c.l.b16 %v1464
      %v1680 = vunpack.c.l.b16 %v1465
      %v1681 = vunpack.c.l.b16 %v1466
      %v1682 = vunpack.c.l.b16 %v1467
      %v1683 = vunpack.c.l.b16 %v1468
      %v1684 = vunpack.c.l.b16 %v1469
      %v1685 = vunpack.c.l.b16 %v1470
      %v1686 = vunpack.c.l.b16 %v1471
      %v1687 = vunpack.c.l.b16 %v1472
      %v1688 = vunpack.c.l.b16 %v1473
      %v1689 = vunpack.c.l.b16 %v1474
      %v1690 = vunpack.c.l.b16 %v1475
      %v1691 = vunpack.c.l.b16 %v1476
      %v1692 = vunpack.c.l.b16 %v1477
      %v1693 = vunpack.c.l.b16 %v1478
      %v1694 = vunpack.c.l.b16 %v1479
      %v1695 = vunpack.c.l.b16 %v1480
      %v1696 = vunpack.c.l.b16 %v1481
      %v1697 = vunpack.c.l.b16 %v1482
      %v1698 = vunpack.c.l.b16 %v1483
      %v1699 = vunpack.c.l.b16 %v1484
      %v1700 = vunpack.c.l.b16 %v1485
      %v1701 = vunpack.c.l.b16 %v1486
      %v1702 = vunpack.c.l.b16 %v1487
      %v1703 = vunpack.c.l.b16 %v1488
      %v1704 = vunpack.c.l.b16 %v1489
      %v1705 = vunpack.c.l.b16 %v1490
      %v1706 = vunpack.c.l.b16 %v1491
      %v1707 = vunpack.c.l.b16 %v1492
      %v1708 = vpack.c.b16 %v1645, %v1644
      %v1709 = vpack.c.b16 %v1647, %v1646
      %v1710 = vpack.c.b16 %v1649, %v1648
      %v1711 = vpack.c.b16 %v1651, %v1650
      %v1712 = vpack.c.b16 %v1653, %v1652
      %v1713 = vpack.c.b16 %v1655, %v1654
      %v1714 = vpack.c.b16 %v1657, %v1656
      %v1715 = vpack.c.b16 %v1659, %v1658
      %v1716 = vpack.c.b16 %v1661, %v1660
      %v1717 = vpack.c.b16 %v1663, %v1662
      %v1718 = vpack.c.b16 %v1665, %v1664
      %v1719 = vpack.c.b16 %v1667, %v1666
      %v1720 = vpack.c.b16 %v1669, %v1668
      %v1721 = vpack.c.b16 %v1671, %v1670
      %v1722 = vpack.c.b16 %v1673, %v1672
      %v1723 = vpack.c.b16 %v1675, %v1674
      %v1724 = vpack.c.b16 %v1677, %v1676
      %v1725 = vpack.c.b16 %v1679, %v1678
      %v1726 = vpack.c.b16 %v1681, %v1680
      %v1727 = vpack.c.b16 %v1683, %v1682
      %v1728 = vpack.c.b16 %v1685, %v1684
      %v1729 = vpack.c.b16 %v1687, %v1686
      %v1730 = vpack.c.b16 %v1689, %v1688
      %v1731 = vpack.c.b16 %v1691, %v1690
      %v1732 = vpack.c.b16 %v1693, %v1692
      %v1733 = vpack.c.b16 %v1695, %v1694
      %v1734 = vpack.c.b16 %v1697, %v1696
      %v1735 = vpack.c.b16 %v1699, %v1698
      %v1736 = vpack.c.b16 %v1701, %v1700
      %v1737 = vpack.c.b16 %v1703, %v1702
      %v1738 = vpack.c.b16 %v1705, %v1704
      %v1739 = vpack.c.b16 %v1707, %v1706
      %1772 = vmatprep.subr.bf16.mxu0 0
      %1773 = vmatpush1.bf16.msra.mxu0 %v1708
      %1774 = vmatprep.subr.bf16.mxu0 0
      %1775 = vmatpush1.bf16.msra.mxu0 %v1709
      %1776 = vmatprep.subr.bf16.mxu0 0
      %1777 = vmatpush1.bf16.msra.mxu0 %v1710
      %1778 = vmatprep.subr.bf16.mxu0 0
      %1779 = vmatpush1.bf16.msra.mxu0 %v1711
      %1780 = vmatprep.subr.bf16.mxu0 0
      %1781 = vmatpush1.bf16.msra.mxu0 %v1712
      %1782 = vmatprep.subr.bf16.mxu0 0
      %1783 = vmatpush1.bf16.msra.mxu0 %v1713
      %1784 = vmatprep.subr.bf16.mxu0 0
      %1785 = vmatpush1.bf16.msra.mxu0 %v1714
      %1786 = vmatprep.subr.bf16.mxu0 0
      %1787 = vmatpush1.bf16.msra.mxu0 %v1715
      %1788 = vmatprep.subr.bf16.mxu0 0
      %1789 = vmatpush1.bf16.msra.mxu0 %v1716
      %1790 = vmatprep.subr.bf16.mxu0 0
      %1791 = vmatpush1.bf16.msra.mxu0 %v1717
      %1792 = vmatprep.subr.bf16.mxu0 0
      %1793 = vmatpush1.bf16.msra.mxu0 %v1718
      %1794 = vmatprep.subr.bf16.mxu0 0
      %1795 = vmatpush1.bf16.msra.mxu0 %v1719
      %1796 = vmatprep.subr.bf16.mxu0 0
      %1797 = vmatpush1.bf16.msra.mxu0 %v1720
      %1798 = vmatprep.subr.bf16.mxu0 0
      %1799 = vmatpush1.bf16.msra.mxu0 %v1721
      %1800 = vmatprep.subr.bf16.mxu0 0
      %1801 = vmatpush1.bf16.msra.mxu0 %v1722
      %1802 = vmatprep.subr.bf16.mxu0 0
      %1803 = vmatpush1.bf16.msra.mxu0 %v1723
      %1804 = vmatprep.mubr.bf16.mxu0 %v1537
      %1805 = vmatmul.mubr.bf16.gmra.mrb[0].mxu0 %v1520
      %v1806 = vpop.f32.mrb[0].mxu0
      %v1807 = vadd.f32 0.0, %v1806
      %v1808 = vpop.f32.mrb[0].mxu0
      %v1809 = vpop.f32.mrb[0].mxu0
      %v1810 = vadd.f32 0.0, %v1809
      %v1811 = vpop.f32.mrb[0].mxu0
      %1812 = vmatprep.mubr.bf16.mxu0 %v1536
      %1813 = vmatmul.mubr.bf16.gmra.mrb[0].mxu0 %v1519
      %v1814 = vpop.f32.mrb[0].mxu0
      %v1815 = vadd.f32 0.0, %v1814
      %v1816 = vpop.f32.mrb[0].mxu0
      %v1817 = vpop.f32.mrb[0].mxu0
      %v1818 = vpop.f32.mrb[0].mxu0
      %1819 = vdwg.mxu0
      %1820 = vmatprep.subr.bf16.mxu0 0
      %1821 = vmatpush1.bf16.msra.mxu0 %v1724
      %1822 = vmatprep.subr.bf16.mxu0 0
      %1823 = vmatpush1.bf16.msra.mxu0 %v1725
      %1824 = vmatprep.subr.bf16.mxu0 0
      %1825 = vmatpush1.bf16.msra.mxu0 %v1726
      %1826 = vmatprep.subr.bf16.mxu0 0
      %1827 = vmatpush1.bf16.msra.mxu0 %v1727
      %1828 = vmatprep.subr.bf16.mxu0 0
      %1829 = vmatpush1.bf16.msra.mxu0 %v1728
      %1830 = vmatprep.subr.bf16.mxu0 0
      %1831 = vmatpush1.bf16.msra.mxu0 %v1729
      %1832 = vmatprep.subr.bf16.mxu0 0
      %1833 = vmatpush1.bf16.msra.mxu0 %v1730
      %1834 = vmatprep.subr.bf16.mxu0 0
      %1835 = vmatpush1.bf16.msra.mxu0 %v1731
      %1836 = vmatprep.subr.bf16.mxu0 0
      %1837 = vmatpush1.bf16.msra.mxu0 %v1732
      %1838 = vmatprep.subr.bf16.mxu0 0
      %1839 = vmatpush1.bf16.msra.mxu0 %v1733
      %1840 = vmatprep.subr.bf16.mxu0 0
      %1841 = vmatpush1.bf16.msra.mxu0 %v1734
      %1842 = vmatprep.subr.bf16.mxu0 0
      %1843 = vmatpush1.bf16.msra.mxu0 %v1735
      %1844 = vmatprep.subr.bf16.mxu0 0
      %1845 = vmatpush1.bf16.msra.mxu0 %v1736
      %1846 = vmatprep.subr.bf16.mxu0 0
      %1847 = vmatpush1.bf16.msra.mxu0 %v1737
      %1848 = vmatprep.subr.bf16.mxu0 0
      %1849 = vmatpush1.bf16.msra.mxu0 %v1738
      %1850 = vmatprep.subr.bf16.mxu0 0
      %1851 = vmatpush1.bf16.msra.mxu0 %v1739
      %1852 = vmatprep.mubr.bf16.mxu0 %v1571
      %1853 = vmatmul.mubr.bf16.gmra.mrb[0].mxu0 %v1554
      %v1854 = vpop.f32.mrb[0].mxu0
      %v1855 = vadd.f32 %v1807, %v1854
      %v1856 = vpop.f32.mrb[0].mxu0
      %v1857 = vpop.f32.mrb[0].mxu0
      %v1858 = vadd.f32 %v1810, %v1857
      %v1859 = vpop.f32.mrb[0].mxu0
      %1860 = vmatprep.mubr.bf16.mxu0 %v1570
      %1861 = vmatmul.mubr.bf16.gmra.mrb[0].mxu0 %v1553
      %v1862 = vpop.f32.mrb[0].mxu0
      %v1863 = vadd.f32 %v1815, %v1862
      %v1864 = vpop.f32.mrb[0].mxu0
      %v1865 = vpop.f32.mrb[0].mxu0
      %v1866 = vpop.f32.mrb[0].mxu0
      %1867 = vdwg.mxu0
      %v1868 = vadd.f32 %v1423, %v1855
      %v1869 = vadd.f32 %v1424, %v1858
      %v1870 = vadd.f32 %v1425, %v1863
      %v1871 = vld [vmem:[%s3] sm:$0xff]
      %v1872 = vld [vmem:[%s3 + $0x8] sm:$0xff]
      %v1873 = vld [vmem:[%s3 + $0x10] sm:$0xff]
      %1875 = vset.pattern.permute.xlu0 0
      %1876 = vperm.xlu0 %1875, %v1871
      %v1877 = vpop.permute.xlu0 %1876
      %1880 = vset.pattern.permute.xlu0 0
      %1881 = vperm.xlu0 %1880, %v1872
      %v1882 = vpop.permute.xlu0 %1881
      %1885 = vset.pattern.permute.xlu0 0
      %1886 = vperm.xlu0 %1885, %v1873
      %v1887 = vpop.permute.xlu0 %1886
      %v1889 = vmul.f32 %v1868, %v1877
      %v1890 = vmul.f32 %v1869, %v1882
      %v1891 = vmul.f32 %v1870, %v1887
      %v1892 = vadd.f32 %v1889, %v1890
      %v1893 = vadd.f32 %v1892, %v1891
      %v1894 = vrot.slane %v1893, 4
      %v1895 = vadd.f32 %v1893, %v1894
      %v1896 = vrot.slane %v1895, 2
      %v1897 = vadd.f32 %v1895, %v1896
      %v1898 = vrot.slane %v1897, 1
      %v1899 = vadd.f32 %v1897, %v1898
      %v1900 = vmul.f32 %v1889, %v1889
      %v1901 = vmul.f32 %v1890, %v1890
      %v1902 = vmul.f32 %v1891, %v1891
      %v1903 = vadd.f32 %v1900, %v1901
      %v1904 = vadd.f32 %v1903, %v1902
      %v1905 = vrot.slane %v1904, 4
      %v1906 = vadd.f32 %v1904, %v1905
      %v1907 = vrot.slane %v1906, 2
      %v1908 = vadd.f32 %v1906, %v1907
      %v1909 = vrot.slane %v1908, 1
      %v1910 = vadd.f32 %v1908, %v1909
      %v1911 = vmul.f32 %v1899, 0.0625
      %v1912 = vmul.f32 %v1910, 0.0625
      %v1913 = vmul.f32 %v1911, %v1911
      %v1914 = vsub.f32 %v1912, %v1913
      %v1915 = vmax.f32 %v1914, 0.0
      %v1916 = vsub.f32 %v1868, %v1911
      %v1917 = vsub.f32 %v1869, %v1911
      %v1918 = vsub.f32 %v1870, %v1911
      %v1919 = vadd.f32 %v1915, 1e-05
      %v1920 = vrsqrt.pop %v1919
      %v1921 = vmul.f32 %v1916, %v1920
      %v1922 = vmul.f32 %v1917, %v1920
      %v1923 = vmul.f32 %v1918, %v1920
      %vm1924 = vcmp.gt.f32.partialorder %v1921, 0.0
      %vm1925 = vcmp.gt.f32.partialorder %v1922, 0.0
      %vm1926 = vcmp.gt.f32.partialorder %v1923, 0.0
      %v1927 = vmul.f32 %v1921, 0.2
      %v1928 = vmul.f32 %v1922, 0.2
      %v1929 = vmul.f32 %v1923, 0.2
      %v1930 = vsel %vm1924, %v1921, %v1927
      %v1931 = vsel %vm1925, %v1922, %v1928
      %v1932 = vsel %vm1926, %v1923, %v1929
      %v1933 = vmul.f32 %v1930, %v1877
      %v1934 = vmul.f32 %v1931, %v1882
      %v1935 = vmul.f32 %v1932, %v1887
      %v1936 = vpack.c.bf16 %v1934, %v1933
      %v1937 = vpack.c.bf16 %v1935, %v1935
      %v1940 = vunpack.c.l.b16 %v1936
      %v1941 = vunpack.c.h.b16 %v1936
      %v1942 = vunpack.c.l.b16 %v1937
      %v1943 = vpack.c.b16 %v1940, %v1940
      %v1944 = vpack.c.b16 %v1941, %v1941
      %v1945 = vpack.c.b16 %v1942, %v1942
      %1949 = vst [vmem:[%s197] sm:$0xf] %v1943
      %1950 = vst [vmem:[%s197 + $0x4] sm:$0xf] %v1944
      %1951 = vst [vmem:[%s197 + $0x8] sm:$0xf] %v1945
      %p1952 = scmp.lt.s32.totalorder %s15, 1
      %s1953 = scalar_select %p1952, %s15, 1
      %s1954 = smul.addr %s1953, 3
      %s1955 = smul.addr %s1954, 4
      %s1956 = scalar_lea.vmem %s4, %s1955
      // Predicated region
      $region37: #{discriminator_forward.7} parent=35 // pred_check
        %p1957 = pneg %p122
      $region38: #{discriminator_forward.7} parent=35 // pred_check_branch
        %1959 = sbr.rel (%p1957) target = $region40
      $region39: #{discriminator_forward.7} parent=35 // pred_region
        _
      $region40: #{discriminator_forward.7} parent=35 // pred_fallthru
        _
    $region36: #{discriminator_forward.7} parent=5 // pred_fallthru
      _
    %p1960 = scmp.le.s32.totalorder 2, %s10
    // Predicated region
    $region41: #{discriminator_forward.7} parent=5 // pred_check
      %p1961 = pneg %p1960
    $region42: #{discriminator_forward.7} parent=5 // pred_check_branch
      %1963 = sbr.rel (%p1961) target = $region44
    $region43: #{discriminator_forward.7} parent=5 // pred_region
      %s1964 = ssub.s32 %s10, 2
      // Predicated region
      $region45: #{discriminator_forward.7} parent=43 // pred_check
        %p1965 = pneg %p128
      $region46: #{discriminator_forward.7} parent=43 // pred_check_branch
        %1967 = sbr.rel (%p1965) target = $region48
      $region47: #{discriminator_forward.7} parent=43 // pred_region
        %p1968 = scmp.lt.s32.totalorder %s16, 1
        %s1969 = scalar_select %p1968, %s16, 1
        %s1970 = smul.addr %s1969, 3
        %s1971 = smul.addr %s1970, 4
        %s1972 = scalar_lea.vmem %s4, %s1971
      $region48: #{discriminator_forward.7} parent=43 // pred_fallthru
        _
    $region44: #{discriminator_forward.7} parent=5 // pred_fallthru
      _
  $region6: #{discriminator_forward.7} parent=0 // loop_footer
    %s14 = sadd.s32 1, %s10
  $region7: #{discriminator_forward.7} parent=0 // loop_footer_branch
    %9 = sbr.rel target = $region3
  $region8: #{discriminator_forward.7} parent=0 // loop_exit
    _

// kernel: discriminator_forward.8
$region0: #{discriminator_forward.8}
  #allocation0 [shape = 'u32[]', space=smem, size = 0x4, offset = 0x4, fixed_abs, tag = 'smem constant byte address 0x4 - core index']
  #allocation1 [shape = 'u32[144,128]{1,0:T(1,128)}', space=vmem, size = 0x12000, scoped, tag = 'internal scratch']
  %s0 = inlined_call_operand.vmem [shape: bf16[2,16,512], index: 0, kind: input, shape index: {}]
  %s1 = inlined_call_operand.vmem [shape: bf16[4,512,128], index: 1, kind: input, shape index: {}]
  %s2 = inlined_call_operand.vmem [shape: f32[1,128], index: 2, kind: input, shape index: {}]
  %s3 = inlined_call_operand.vmem [shape: f32[8,1], index: 3, kind: input, shape index: {}]
  %s4 = inlined_call_operand.vmem [shape: f32[144,8], index: 4, kind: input, shape index: {}]
  %s5 = inlined_call_operand.vmem [shape: bf16[2,144,128], index: 5, kind: output, shape index: {}]
  %s6 = sld [smem:[#allocation0]]
  $region53: #{discriminator_forward.8} parent=0
    _
  %s8 = ssub.s32 1, %s6
  %s9 = scalar_select 0, %s8, %s6
  loop: start=0, step=1, limit=4
  $region2: #{discriminator_forward.8} parent=0 // loop_pre_header
    _
  $region3: #{discriminator_forward.8} parent=0 // loop_header
    %s11 = sphi 0, %s15
    %p12 = scmp.ge.s32.totalorder %s11, 4
    %s21 = sphi 0, %s23
    %s24 = sphi 0, %s21
    %s25 = sphi 0, %s24
    %s41 = sphi 0, %s25
    %s45 = sphi 0, %s45
    %s47 = sphi 0, %s45
    %s48 = sphi 0, %s47
    %s62 = sphi 0, %s48
    %s66 = sphi 0, %s66
    %s68 = sphi 0, %s66
    %s69 = sphi 0, %s68
    %s83 = sphi 0, %s69
    %s87 = sphi 0, %s87
    %s89 = sphi 0, %s87
    %s90 = sphi 0, %s89
    %s104 = sphi 0, %s90
    %s108 = sphi 0, %s108
    %s110 = sphi 0, %s108
    %s111 = sphi 0, %s110
    %s125 = sphi 0, %s111
    %s131 = sphi 0, %s133
    %s134 = sphi 0, %s131
    %s135 = sphi 0, %s134
    %s151 = sphi 0, %s135
  $region4: #{discriminator_forward.8} parent=0 // loop_header_branch
    %14 = sbr.rel (%p12) target = $region8
  $region5: #{discriminator_forward.8} parent=0 // loop_body
    %s16 = ssub.s32 %s11, 1
    %s17 = ssub.s32 %s11, 2
    %s18 = sadd.s32 %s11, 1
    %s19 = ssub.s32 %s11, %s18
    %p20 = scmp.eq.s32.totalorder %s19, 0
    %s22 = sadd.s32 %s21, 1
    %s23 = scalar_select %p20, %s21, %s22
    %p26 = pneg %p20
    %p27 = scmp.eq.s32.totalorder %s11, 1
    %p28 = por %p26, %p27
    %p29 = scmp.ne.s32.totalorder %s21, %s24
    %p30 = scmp.eq.s32.totalorder %s11, 0
    %p31 = por %p29, %p30
    %p32 = scmp.ne.s32.totalorder %s21, %s24
    %p33 = scmp.eq.s32.totalorder %s16, 1
    %p34 = por %p32, %p33
    %p35 = scmp.ne.s32.totalorder %s24, %s25
    %p36 = scmp.eq.s32.totalorder %s16, 0
    %p37 = por %p35, %p36
    %p38 = scmp.ne.s32.totalorder %s24, %s25
    %p39 = scmp.eq.s32.totalorder %s17, 1
    %p40 = por %p38, %p39
    %p42 = scmp.ne.s32.totalorder %s25, %s41
    %p43 = scmp.eq.s32.totalorder %s17, 0
    %p44 = por %p42, %p43
    %s46 = sadd.s32 %s45, 1
    %p49 = scmp.eq.s32.totalorder %s11, 1
    %p50 = scmp.ne.s32.totalorder %s45, %s47
    %p51 = scmp.eq.s32.totalorder %s11, 0
    %p52 = por %p50, %p51
    %p53 = scmp.ne.s32.totalorder %s45, %s47
    %p54 = scmp.eq.s32.totalorder %s16, 1
    %p55 = por %p53, %p54
    %p56 = scmp.ne.s32.totalorder %s47, %s48
    %p57 = scmp.eq.s32.totalorder %s16, 0
    %p58 = por %p56, %p57
    %p59 = scmp.ne.s32.totalorder %s47, %s48
    %p60 = scmp.eq.s32.totalorder %s17, 1
    %p61 = por %p59, %p60
    %p63 = scmp.ne.s32.totalorder %s48, %s62
    %p64 = scmp.eq.s32.totalorder %s17, 0
    %p65 = por %p63, %p64
    %s67 = sadd.s32 %s66, 1
    %p70 = scmp.eq.s32.totalorder %s11, 1
    %p71 = scmp.ne.s32.totalorder %s66, %s68
    %p72 = scmp.eq.s32.totalorder %s11, 0
    %p73 = por %p71, %p72
    %p74 = scmp.ne.s32.totalorder %s66, %s68
    %p75 = scmp.eq.s32.totalorder %s16, 1
    %p76 = por %p74, %p75
    %p77 = scmp.ne.s32.totalorder %s68, %s69
    %p78 = scmp.eq.s32.totalorder %s16, 0
    %p79 = por %p77, %p78
    %p80 = scmp.ne.s32.totalorder %s68, %s69
    %p81 = scmp.eq.s32.totalorder %s17, 1
    %p82 = por %p80, %p81
    %p84 = scmp.ne.s32.totalorder %s69, %s83
    %p85 = scmp.eq.s32.totalorder %s17, 0
    %p86 = por %p84, %p85
    %s88 = sadd.s32 %s87, 1
    %p91 = scmp.eq.s32.totalorder %s11, 1
    %p92 = scmp.ne.s32.totalorder %s87, %s89
    %p93 = scmp.eq.s32.totalorder %s11, 0
    %p94 = por %p92, %p93
    %p95 = scmp.ne.s32.totalorder %s87, %s89
    %p96 = scmp.eq.s32.totalorder %s16, 1
    %p97 = por %p95, %p96
    %p98 = scmp.ne.s32.totalorder %s89, %s90
    %p99 = scmp.eq.s32.totalorder %s16, 0
    %p100 = por %p98, %p99
    %p101 = scmp.ne.s32.totalorder %s89, %s90
    %p102 = scmp.eq.s32.totalorder %s17, 1
    %p103 = por %p101, %p102
    %p105 = scmp.ne.s32.totalorder %s90, %s104
    %p106 = scmp.eq.s32.totalorder %s17, 0
    %p107 = por %p105, %p106
    %s109 = sadd.s32 %s108, 1
    %p112 = scmp.eq.s32.totalorder %s11, 1
    %p113 = scmp.ne.s32.totalorder %s108, %s110
    %p114 = scmp.eq.s32.totalorder %s11, 0
    %p115 = por %p113, %p114
    %p116 = scmp.ne.s32.totalorder %s108, %s110
    %p117 = scmp.eq.s32.totalorder %s16, 1
    %p118 = por %p116, %p117
    %p119 = scmp.ne.s32.totalorder %s110, %s111
    %p120 = scmp.eq.s32.totalorder %s16, 0
    %p121 = por %p119, %p120
    %p122 = scmp.ne.s32.totalorder %s110, %s111
    %p123 = scmp.eq.s32.totalorder %s17, 1
    %p124 = por %p122, %p123
    %p126 = scmp.ne.s32.totalorder %s111, %s125
    %p127 = scmp.eq.s32.totalorder %s17, 0
    %p128 = por %p126, %p127
    %s129 = ssub.s32 %s11, %s18
    %p130 = scmp.eq.s32.totalorder %s129, 0
    %s132 = sadd.s32 %s131, 1
    %s133 = scalar_select %p130, %s131, %s132
    %p136 = pneg %p130
    %p137 = scmp.eq.s32.totalorder %s11, 1
    %p138 = por %p136, %p137
    %p139 = scmp.ne.s32.totalorder %s131, %s134
    %p140 = scmp.eq.s32.totalorder %s11, 0
    %p141 = por %p139, %p140
    %p142 = scmp.ne.s32.totalorder %s131, %s134
    %p143 = scmp.eq.s32.totalorder %s16, 1
    %p144 = por %p142, %p143
    %p145 = scmp.ne.s32.totalorder %s134, %s135
    %p146 = scmp.eq.s32.totalorder %s16, 0
    %p147 = por %p145, %p146
    %p148 = scmp.ne.s32.totalorder %s134, %s135
    %p149 = scmp.eq.s32.totalorder %s17, 1
    %p150 = por %p148, %p149
    %p152 = scmp.ne.s32.totalorder %s135, %s151
    %p153 = scmp.eq.s32.totalorder %s17, 0
    %p154 = por %p152, %p153
    %p155 = scmp.le.s32.totalorder 1, %s11
    %p156 = scmp.lt.s32.totalorder %s11, 3
    %p157 = pnand %p155, %p156
    %p158 = pneg %p157
    // Predicated region
    $region9: #{discriminator_forward.8} parent=5 // pred_check
      _
    $region10: #{discriminator_forward.8} parent=5 // pred_check_branch
      %160 = sbr.rel (%p157) target = $region12
    $region11: #{discriminator_forward.8} parent=5 // pred_region
      %s161 = ssub.s32 %s11, 1
      // Predicated region
      $region13: #{discriminator_forward.8} parent=11 // pred_check
        %p162 = pneg %p58
      $region14: #{discriminator_forward.8} parent=11 // pred_check_branch
        %164 = sbr.rel (%p162) target = $region16
      $region15: #{discriminator_forward.8} parent=11 // pred_region
        _
      $region16: #{discriminator_forward.8} parent=11 // pred_fallthru
        _
      // Predicated region
      $region17: #{discriminator_forward.8} parent=11 // pred_check
        %p165 = pneg %p79
      $region18: #{discriminator_forward.8} parent=11 // pred_check_branch
        %167 = sbr.rel (%p165) target = $region20
      $region19: #{discriminator_forward.8} parent=11 // pred_region
        _
      $region20: #{discriminator_forward.8} parent=11 // pred_fallthru
        _
      // Predicated region
      $region21: #{discriminator_forward.8} parent=11 // pred_check
        %p168 = pneg %p100
      $region22: #{discriminator_forward.8} parent=11 // pred_check_branch
        %170 = sbr.rel (%p168) target = $region24
      $region23: #{discriminator_forward.8} parent=11 // pred_region
        _
      $region24: #{discriminator_forward.8} parent=11 // pred_fallthru
        _
      // Predicated region
      $region25: #{discriminator_forward.8} parent=11 // pred_check
        %p171 = pneg %p121
      $region26: #{discriminator_forward.8} parent=11 // pred_check_branch
        %173 = sbr.rel (%p171) target = $region28
      $region27: #{discriminator_forward.8} parent=11 // pred_region
        _
      $region28: #{discriminator_forward.8} parent=11 // pred_fallthru
        _
    $region12: #{discriminator_forward.8} parent=5 // pred_fallthru
      _
    %p174 = scmp.lt.s32.totalorder %s11, 2
    // Predicated region
    $region29: #{discriminator_forward.8} parent=5 // pred_check
      %p175 = pneg %p174
    $region30: #{discriminator_forward.8} parent=5 // pred_check_branch
      %177 = sbr.rel (%p175) target = $region32
    $region31: #{discriminator_forward.8} parent=5 // pred_region
      // Predicated region
      $region33: #{discriminator_forward.8} parent=31 // pred_check
        %p178 = pneg %p31
      $region34: #{discriminator_forward.8} parent=31 // pred_check_branch
        %180 = sbr.rel (%p178) target = $region36
      $region35: #{discriminator_forward.8} parent=31 // pred_region
        %p181 = scmp.lt.s32.totalorder %s11, 1
        %s182 = scalar_select %p181, %s11, 1
        %s183 = smul.addr %s182, 8
        %s184 = smul.addr %s183, 4
        %s185 = scalar_lea.vmem %s0, %s184
      $region36: #{discriminator_forward.8} parent=31 // pred_fallthru
        _
    $region32: #{discriminator_forward.8} parent=5 // pred_fallthru
      _
    %p186 = scmp.le.s32.totalorder 1, %s11
    %p187 = scmp.lt.s32.totalorder %s11, 3
    %p188 = pnand %p186, %p187
    %p189 = pneg %p188
    // Predicated region
    $region37: #{discriminator_forward.8} parent=5 // pred_check
      _
    $region38: #{discriminator_forward.8} parent=5 // pred_check_branch
      %191 = sbr.rel (%p188) target = $region40
    $region39: #{discriminator_forward.8} parent=5 // pred_region
      %s192 = ssub.s32 %s11, 1
      %p193 = scmp.lt.s32.totalorder %s16, 1
      %s194 = scalar_select %p193, %s16, 1
      %s195 = smul.addr %s194, 8
      %s196 = smul.addr %s195, 4
      %s197 = scalar_lea.vmem %s0, %s196
      %p198 = pneg %p37
      %p199 = pneg %p34
      %p200 = pneg %p58
      %p201 = pneg %p55
      %p202 = pneg %p79
      %p203 = pneg %p76
      %p204 = pneg %p100
      %p205 = pneg %p97
      %p206 = pneg %p121
      %p207 = pneg %p118
      %p208 = pneg %p147
      %p209 = pneg %p144
      %p210 = scmp.lt.s32.totalorder %s16, 1
      %s211 = scalar_select %p210, %s16, 1
      %s212 = smul.addr %s211, 18
      %s213 = smul.addr %s212, 4
      %s214 = scalar_lea.vmem %s5, %s213
      %p215 = scmp.lt.s32.totalorder %s16, 1
      %s216 = scalar_select %p215, %s16, 1
      %s217 = smul.addr %s216, 8
      %s218 = smul.addr %s217, 4
      %s219 = scalar_lea.vmem %s0, %s218
      %p220 = scmp.lt.s32.totalorder %s16, 1
      %s221 = scalar_select %p220, %s16, 1
      %s222 = smul.addr %s221, 18
      %s223 = smul.addr %s222, 4
      %s224 = scalar_lea.vmem %s5, %s223
      %v226 = vld [vmem:[%s219] sm:$0xff]
      %v227 = vld [vmem:[%s219 + $0x8] sm:$0xff]
      %v228 = vld [vmem:[%s1] sm:$0xf]
      %v229 = vld [vmem:[%s1 + $0x4] sm:$0xf]
      %v230 = vld [vmem:[%s1 + $0x8] sm:$0xf]
      %v231 = vld [vmem:[%s1 + $0xc] sm:$0xf]
      %v232 = vld [vmem:[%s1 + $0x10] sm:$0xf]
      %v233 = vld [vmem:[%s1 + $0x14] sm:$0xf]
      %v234 = vld [vmem:[%s1 + $0x18] sm:$0xf]
      %v235 = vld [vmem:[%s1 + $0x1c] sm:$0xf]
      %v236 = vld [vmem:[%s1 + $0x20] sm:$0xf]
      %v237 = vld [vmem:[%s1 + $0x24] sm:$0xf]
      %v238 = vld [vmem:[%s1 + $0x28] sm:$0xf]
      %v239 = vld [vmem:[%s1 + $0x2c] sm:$0xf]
      %v240 = vld [vmem:[%s1 + $0x30] sm:$0xf]
      %v241 = vld [vmem:[%s1 + $0x34] sm:$0xf]
      %v242 = vld [vmem:[%s1 + $0x38] sm:$0xf]
      %v243 = vld [vmem:[%s1 + $0x3c] sm:$0xf]
      %v244 = vld [vmem:[%s1 + $0x40] sm:$0xf]
      %v245 = vld [vmem:[%s1 + $0x44] sm:$0xf]
      %v246 = vld [vmem:[%s1 + $0x48] sm:$0xf]
      %v247 = vld [vmem:[%s1 + $0x4c] sm:$0xf]
      %v248 = vld [vmem:[%s1 + $0x50] sm:$0xf]
      %v249 = vld [vmem:[%s1 + $0x54] sm:$0xf]
      %v250 = vld [vmem:[%s1 + $0x58] sm:$0xf]
      %v251 = vld [vmem:[%s1 + $0x5c] sm:$0xf]
      %v252 = vld [vmem:[%s1 + $0x60] sm:$0xf]
      %v253 = vld [vmem:[%s1 + $0x64] sm:$0xf]
      %v254 = vld [vmem:[%s1 + $0x68] sm:$0xf]
      %v255 = vld [vmem:[%s1 + $0x6c] sm:$0xf]
      %v256 = vld [vmem:[%s1 + $0x70] sm:$0xf]
      %v257 = vld [vmem:[%s1 + $0x74] sm:$0xf]
      %v258 = vld [vmem:[%s1 + $0x78] sm:$0xf]
      %v259 = vld [vmem:[%s1 + $0x7c] sm:$0xf]
      %v260 = vld [vmem:[%s1 + $0x80] sm:$0xf]
      %v261 = vld [vmem:[%s1 + $0x84] sm:$0xf]
      %v262 = vld [vmem:[%s1 + $0x88] sm:$0xf]
      %v263 = vld [vmem:[%s1 + $0x8c] sm:$0xf]
      %v264 = vld [vmem:[%s1 + $0x90] sm:$0xf]
      %v265 = vld [vmem:[%s1 + $0x94] sm:$0xf]
      %v266 = vld [vmem:[%s1 + $0x98] sm:$0xf]
      %v267 = vld [vmem:[%s1 + $0x9c] sm:$0xf]
      %v268 = vld [vmem:[%s1 + $0xa0] sm:$0xf]
      %v269 = vld [vmem:[%s1 + $0xa4] sm:$0xf]
      %v270 = vld [vmem:[%s1 + $0xa8] sm:$0xf]
      %v271 = vld [vmem:[%s1 + $0xac] sm:$0xf]
      %v272 = vld [vmem:[%s1 + $0xb0] sm:$0xf]
      %v273 = vld [vmem:[%s1 + $0xb4] sm:$0xf]
      %v274 = vld [vmem:[%s1 + $0xb8] sm:$0xf]
      %v275 = vld [vmem:[%s1 + $0xbc] sm:$0xf]
      %v276 = vld [vmem:[%s1 + $0xc0] sm:$0xf]
      %v277 = vld [vmem:[%s1 + $0xc4] sm:$0xf]
      %v278 = vld [vmem:[%s1 + $0xc8] sm:$0xf]
      %v279 = vld [vmem:[%s1 + $0xcc] sm:$0xf]
      %v280 = vld [vmem:[%s1 + $0xd0] sm:$0xf]
      %v281 = vld [vmem:[%s1 + $0xd4] sm:$0xf]
      %v282 = vld [vmem:[%s1 + $0xd8] sm:$0xf]
      %v283 = vld [vmem:[%s1 + $0xdc] sm:$0xf]
      %v284 = vld [vmem:[%s1 + $0xe0] sm:$0xf]
      %v285 = vld [vmem:[%s1 + $0xe4] sm:$0xf]
      %v286 = vld [vmem:[%s1 + $0xe8] sm:$0xf]
      %v287 = vld [vmem:[%s1 + $0xec] sm:$0xf]
      %v288 = vld [vmem:[%s1 + $0xf0] sm:$0xf]
      %v289 = vld [vmem:[%s1 + $0xf4] sm:$0xf]
      %v290 = vld [vmem:[%s1 + $0xf8] sm:$0xf]
      %v291 = vld [vmem:[%s1 + $0xfc] sm:$0xf]
      %v292 = vld [vmem:[%s219] sm:$0xff]
      %v293 = vld [vmem:[%s219 + $0x8] sm:$0xff]
      %v294 = vld [vmem:[%s219 + $0x10] sm:$0x11]
      %v295 = vld [vmem:[%s219 + $0x18] sm:$0x11]
      %s296 = scalar_lea.vmem %s1, 256
      %v297 = vld [vmem:[%s296] sm:$0xf]
      %v298 = vld [vmem:[%s296 + $0x4] sm:$0xf]
      %v299 = vld [vmem:[%s296 + $0x8] sm:$0xf]
      %v300 = vld [vmem:[%s296 + $0xc] sm:$0xf]
      %v301 = vld [vmem:[%s296 + $0x10] sm:$0xf]
      %v302 = vld [vmem:[%s296 + $0x14] sm:$0xf]
      %v303 = vld [vmem:[%s296 + $0x18] sm:$0xf]
      %v304 = vld [vmem:[%s296 + $0x1c] sm:$0xf]
      %v305 = vld [vmem:[%s296 + $0x20] sm:$0xf]
      %v306 = vld [vmem:[%s296 + $0x24] sm:$0xf]
      %v307 = vld [vmem:[%s296 + $0x28] sm:$0xf]
      %v308 = vld [vmem:[%s296 + $0x2c] sm:$0xf]
      %v309 = vld [vmem:[%s296 + $0x30] sm:$0xf]
      %v310 = vld [vmem:[%s296 + $0x34] sm:$0xf]
      %v311 = vld [vmem:[%s296 + $0x38] sm:$0xf]
      %v312 = vld [vmem:[%s296 + $0x3c] sm:$0xf]
      %v313 = vld [vmem:[%s296 + $0x40] sm:$0xf]
      %v314 = vld [vmem:[%s296 + $0x44] sm:$0xf]
      %v315 = vld [vmem:[%s296 + $0x48] sm:$0xf]
      %v316 = vld [vmem:[%s296 + $0x4c] sm:$0xf]
      %v317 = vld [vmem:[%s296 + $0x50] sm:$0xf]
      %v318 = vld [vmem:[%s296 + $0x54] sm:$0xf]
      %v319 = vld [vmem:[%s296 + $0x58] sm:$0xf]
      %v320 = vld [vmem:[%s296 + $0x5c] sm:$0xf]
      %v321 = vld [vmem:[%s296 + $0x60] sm:$0xf]
      %v322 = vld [vmem:[%s296 + $0x64] sm:$0xf]
      %v323 = vld [vmem:[%s296 + $0x68] sm:$0xf]
      %v324 = vld [vmem:[%s296 + $0x6c] sm:$0xf]
      %v325 = vld [vmem:[%s296 + $0x70] sm:$0xf]
      %v326 = vld [vmem:[%s296 + $0x74] sm:$0xf]
      %v327 = vld [vmem:[%s296 + $0x78] sm:$0xf]
      %v328 = vld [vmem:[%s296 + $0x7c] sm:$0xf]
      %v329 = vld [vmem:[%s296 + $0x80] sm:$0xf]
      %v330 = vld [vmem:[%s296 + $0x84] sm:$0xf]
      %v331 = vld [vmem:[%s296 + $0x88] sm:$0xf]
      %v332 = vld [vmem:[%s296 + $0x8c] sm:$0xf]
      %v333 = vld [vmem:[%s296 + $0x90] sm:$0xf]
      %v334 = vld [vmem:[%s296 + $0x94] sm:$0xf]
      %v335 = vld [vmem:[%s296 + $0x98] sm:$0xf]
      %v336 = vld [vmem:[%s296 + $0x9c] sm:$0xf]
      %v337 = vld [vmem:[%s296 + $0xa0] sm:$0xf]
      %v338 = vld [vmem:[%s296 + $0xa4] sm:$0xf]
      %v339 = vld [vmem:[%s296 + $0xa8] sm:$0xf]
      %v340 = vld [vmem:[%s296 + $0xac] sm:$0xf]
      %v341 = vld [vmem:[%s296 + $0xb0] sm:$0xf]
      %v342 = vld [vmem:[%s296 + $0xb4] sm:$0xf]
      %v343 = vld [vmem:[%s296 + $0xb8] sm:$0xf]
      %v344 = vld [vmem:[%s296 + $0xbc] sm:$0xf]
      %v345 = vld [vmem:[%s296 + $0xc0] sm:$0xf]
      %v346 = vld [vmem:[%s296 + $0xc4] sm:$0xf]
      %v347 = vld [vmem:[%s296 + $0xc8] sm:$0xf]
      %v348 = vld [vmem:[%s296 + $0xcc] sm:$0xf]
      %v349 = vld [vmem:[%s296 + $0xd0] sm:$0xf]
      %v350 = vld [vmem:[%s296 + $0xd4] sm:$0xf]
      %v351 = vld [vmem:[%s296 + $0xd8] sm:$0xf]
      %v352 = vld [vmem:[%s296 + $0xdc] sm:$0xf]
      %v353 = vld [vmem:[%s296 + $0xe0] sm:$0xf]
      %v354 = vld [vmem:[%s296 + $0xe4] sm:$0xf]
      %v355 = vld [vmem:[%s296 + $0xe8] sm:$0xf]
      %v356 = vld [vmem:[%s296 + $0xec] sm:$0xf]
      %v357 = vld [vmem:[%s296 + $0xf0] sm:$0xf]
      %v358 = vld [vmem:[%s296 + $0xf4] sm:$0xf]
      %v359 = vld [vmem:[%s296 + $0xf8] sm:$0xf]
      %v360 = vld [vmem:[%s296 + $0xfc] sm:$0xf]
      %v365 = vunpack.c.l.b16 %v292
      %v366 = vunpack.c.h.b16 %v292
      %v367 = vunpack.c.l.b16 %v293
      %v368 = vunpack.c.h.b16 %v293
      %v369 = vunpack.c.l.b16 %v294
      %v370 = vunpack.c.h.b16 %v294
      %v371 = vunpack.c.l.b16 %v295
      %v372 = vunpack.c.h.b16 %v295
      %v373 = vpack.c.b16 %v369, %v365
      %v374 = vpack.c.b16 %v370, %v366
      %v375 = vpack.c.b16 %v371, %v367
      %v376 = vpack.c.b16 %v372, %v368
      %v378 = vshrl.u32 %v373, 16
      %v380 = vshll.u32 %v373, 16
      %v382 = vrot.slane %v380, 1
      %v383 = vor.u32 %v378, %v382
      %v385 = vshrl.u32 %v374, 16
      %v387 = vshll.u32 %v374, 16
      %v389 = vrot.slane %v387, 1
      %v390 = vor.u32 %v385, %v389
      %v392 = vshrl.u32 %v375, 16
      %v394 = vshll.u32 %v375, 16
      %v396 = vrot.slane %v394, 1
      %v397 = vor.u32 %v392, %v396
      %v399 = vshrl.u32 %v376, 16
      %v401 = vshll.u32 %v376, 16
      %v403 = vrot.slane %v401, 1
      %v404 = vor.u32 %v399, %v403
      %v473 = vunpack.c.l.b16 %v297
      %v474 = vunpack.c.l.b16 %v298
      %v475 = vunpack.c.l.b16 %v299
      %v476 = vunpack.c.l.b16 %v300
      %v477 = vunpack.c.l.b16 %v301
      %v478 = vunpack.c.l.b16 %v302
      %v479 = vunpack.c.l.b16 %v303
      %v480 = vunpack.c.l.b16 %v304
      %v481 = vunpack.c.l.b16 %v305
      %v482 = vunpack.c.l.b16 %v306
      %v483 = vunpack.c.l.b16 %v307
      %v484 = vunpack.c.l.b16 %v308
      %v485 = vunpack.c.l.b16 %v309
      %v486 = vunpack.c.l.b16 %v310
      %v487 = vunpack.c.l.b16 %v311
      %v488 = vunpack.c.l.b16 %v312
      %v489 = vunpack.c.l.b16 %v313
      %v490 = vunpack.c.l.b16 %v314
      %v491 = vunpack.c.l.b16 %v315
      %v492 = vunpack.c.l.b16 %v316
      %v493 = vunpack.c.l.b16 %v317
      %v494 = vunpack.c.l.b16 %v318
      %v495 = vunpack.c.l.b16 %v319
      %v496 = vunpack.c.l.b16 %v320
      %v497 = vunpack.c.l.b16 %v321
      %v498 = vunpack.c.l.b16 %v322
      %v499 = vunpack.c.l.b16 %v323
      %v500 = vunpack.c.l.b16 %v324
      %v501 = vunpack.c.l.b16 %v325
      %v502 = vunpack.c.l.b16 %v326
      %v503 = vunpack.c.l.b16 %v327
      %v504 = vunpack.c.l.b16 %v328
      %v505 = vunpack.c.l.b16 %v329
      %v506 = vunpack.c.l.b16 %v330
      %v507 = vunpack.c.l.b16 %v331
      %v508 = vunpack.c.l.b16 %v332
      %v509 = vunpack.c.l.b16 %v333
      %v510 = vunpack.c.l.b16 %v334
      %v511 = vunpack.c.l.b16 %v335
      %v512 = vunpack.c.l.b16 %v336
      %v513 = vunpack.c.l.b16 %v337
      %v514 = vunpack.c.l.b16 %v338
      %v515 = vunpack.c.l.b16 %v339
      %v516 = vunpack.c.l.b16 %v340
      %v517 = vunpack.c.l.b16 %v341
      %v518 = vunpack.c.l.b16 %v342
      %v519 = vunpack.c.l.b16 %v343
      %v520 = vunpack.c.l.b16 %v344
      %v521 = vunpack.c.l.b16 %v345
      %v522 = vunpack.c.l.b16 %v346
      %v523 = vunpack.c.l.b16 %v347
      %v524 = vunpack.c.l.b16 %v348
      %v525 = vunpack.c.l.b16 %v349
      %v526 = vunpack.c.l.b16 %v350
      %v527 = vunpack.c.l.b16 %v351
      %v528 = vunpack.c.l.b16 %v352
      %v529 = vunpack.c.l.b16 %v353
      %v530 = vunpack.c.l.b16 %v354
      %v531 = vunpack.c.l.b16 %v355
      %v532 = vunpack.c.l.b16 %v356
      %v533 = vunpack.c.l.b16 %v357
      %v534 = vunpack.c.l.b16 %v358
      %v535 = vunpack.c.l.b16 %v359
      %v536 = vunpack.c.l.b16 %v360
      %v537 = vpack.c.b16 %v474, %v473
      %v538 = vpack.c.b16 %v476, %v475
      %v539 = vpack.c.b16 %v478, %v477
      %v540 = vpack.c.b16 %v480, %v479
      %v541 = vpack.c.b16 %v482, %v481
      %v542 = vpack.c.b16 %v484, %v483
      %v543 = vpack.c.b16 %v486, %v485
      %v544 = vpack.c.b16 %v488, %v487
      %v545 = vpack.c.b16 %v490, %v489
      %v546 = vpack.c.b16 %v492, %v491
      %v547 = vpack.c.b16 %v494, %v493
      %v548 = vpack.c.b16 %v496, %v495
      %v549 = vpack.c.b16 %v498, %v497
      %v550 = vpack.c.b16 %v500, %v499
      %v551 = vpack.c.b16 %v502, %v501
      %v552 = vpack.c.b16 %v504, %v503
      %v553 = vpack.c.b16 %v506, %v505
      %v554 = vpack.c.b16 %v508, %v507
      %v555 = vpack.c.b16 %v510, %v509
      %v556 = vpack.c.b16 %v512, %v511
      %v557 = vpack.c.b16 %v514, %v513
      %v558 = vpack.c.b16 %v516, %v515
      %v559 = vpack.c.b16 %v518, %v517
      %v560 = vpack.c.b16 %v520, %v519
      %v561 = vpack.c.b16 %v522, %v521
      %v562 = vpack.c.b16 %v524, %v523
      %v563 = vpack.c.b16 %v526, %v525
      %v564 = vpack.c.b16 %v528, %v527
      %v565 = vpack.c.b16 %v530, %v529
      %v566 = vpack.c.b16 %v532, %v531
      %v567 = vpack.c.b16 %v534, %v533
      %v568 = vpack.c.b16 %v536, %v535
      %601 = vmatprep.subr.bf16.mxu0 0
      %602 = vmatpush1.bf16.msra.mxu0 %v537
      %603 = vmatprep.subr.bf16.mxu0 0
      %604 = vmatpush1.bf16.msra.mxu0 %v538
      %605 = vmatprep.subr.bf16.mxu0 0
      %606 = vmatpush1.bf16.msra.mxu0 %v539
      %607 = vmatprep.subr.bf16.mxu0 0
      %608 = vmatpush1.bf16.msra.mxu0 %v540
      %609 = vmatprep.subr.bf16.mxu0 0
      %610 = vmatpush1.bf16.msra.mxu0 %v541
      %611 = vmatprep.subr.bf16.mxu0 0
      %612 = vmatpush1.bf16.msra.mxu0 %v542
      %613 = vmatprep.subr.bf16.mxu0 0
      %614 = vmatpush1.bf16.msra.mxu0 %v543
      %615 = vmatprep.subr.bf16.mxu0 0
      %616 = vmatpush1.bf16.msra.mxu0 %v544
      %617 = vmatprep.subr.bf16.mxu0 0
      %618 = vmatpush1.bf16.msra.mxu0 %v545
      %619 = vmatprep.subr.bf16.mxu0 0
      %620 = vmatpush1.bf16.msra.mxu0 %v546
      %621 = vmatprep.subr.bf16.mxu0 0
      %622 = vmatpush1.bf16.msra.mxu0 %v547
      %623 = vmatprep.subr.bf16.mxu0 0
      %624 = vmatpush1.bf16.msra.mxu0 %v548
      %625 = vmatprep.subr.bf16.mxu0 0
      %626 = vmatpush1.bf16.msra.mxu0 %v549
      %627 = vmatprep.subr.bf16.mxu0 0
      %628 = vmatpush1.bf16.msra.mxu0 %v550
      %629 = vmatprep.subr.bf16.mxu0 0
      %630 = vmatpush1.bf16.msra.mxu0 %v551
      %631 = vmatprep.subr.bf16.mxu0 0
      %632 = vmatpush1.bf16.msra.mxu0 %v552
      %633 = vmatprep.mubr.bf16.mxu0 %v390
      %634 = vmatmul.mubr.bf16.gmra.mrb[0].mxu0 %v383
      %v635 = vpop.f32.mrb[0].mxu0
      %v636 = vadd.f32 0.0, %v635
      %v637 = vpop.f32.mrb[0].mxu0
      %v638 = vpop.f32.mrb[0].mxu0
      %v639 = vpop.f32.mrb[0].mxu0
      %640 = vdwg.mxu0
      %641 = vmatprep.subr.bf16.mxu0 0
      %642 = vmatpush1.bf16.msra.mxu0 %v553
      %643 = vmatprep.subr.bf16.mxu0 0
      %644 = vmatpush1.bf16.msra.mxu0 %v554
      %645 = vmatprep.subr.bf16.mxu0 0
      %646 = vmatpush1.bf16.msra.mxu0 %v555
      %647 = vmatprep.subr.bf16.mxu0 0
      %648 = vmatpush1.bf16.msra.mxu0 %v556
      %649 = vmatprep.subr.bf16.mxu0 0
      %650 = vmatpush1.bf16.msra.mxu0 %v557
      %651 = vmatprep.subr.bf16.mxu0 0
      %652 = vmatpush1.bf16.msra.mxu0 %v558
      %653 = vmatprep.subr.bf16.mxu0 0
      %654 = vmatpush1.bf16.msra.mxu0 %v559
      %655 = vmatprep.subr.bf16.mxu0 0
      %656 = vmatpush1.bf16.msra.mxu0 %v560
      %657 = vmatprep.subr.bf16.mxu0 0
      %658 = vmatpush1.bf16.msra.mxu0 %v561
      %659 = vmatprep.subr.bf16.mxu0 0
      %660 = vmatpush1.bf16.msra.mxu0 %v562
      %661 = vmatprep.subr.bf16.mxu0 0
      %662 = vmatpush1.bf16.msra.mxu0 %v563
      %663 = vmatprep.subr.bf16.mxu0 0
      %664 = vmatpush1.bf16.msra.mxu0 %v564
      %665 = vmatprep.subr.bf16.mxu0 0
      %666 = vmatpush1.bf16.msra.mxu0 %v565
      %667 = vmatprep.subr.bf16.mxu0 0
      %668 = vmatpush1.bf16.msra.mxu0 %v566
      %669 = vmatprep.subr.bf16.mxu0 0
      %670 = vmatpush1.bf16.msra.mxu0 %v567
      %671 = vmatprep.subr.bf16.mxu0 0
      %672 = vmatpush1.bf16.msra.mxu0 %v568
      %673 = vmatprep.mubr.bf16.mxu0 %v404
      %674 = vmatmul.mubr.bf16.gmra.mrb[0].mxu0 %v397
      %v675 = vpop.f32.mrb[0].mxu0
      %v676 = vadd.f32 %v636, %v675
      %v677 = vpop.f32.mrb[0].mxu0
      %v678 = vpop.f32.mrb[0].mxu0
      %v679 = vpop.f32.mrb[0].mxu0
      %680 = vdwg.mxu0
      %v683 = vunpack.c.l.b16 %v226
      %v684 = vunpack.c.h.b16 %v226
      %v685 = vunpack.c.l.b16 %v227
      %v686 = vunpack.c.h.b16 %v227
      %v687 = vpack.c.b16 %v683, %v683
      %v688 = vpack.c.b16 %v684, %v684
      %v689 = vpack.c.b16 %v685, %v685
      %v690 = vpack.c.b16 %v686, %v686
      %v759 = vunpack.c.l.b16 %v228
      %v760 = vunpack.c.l.b16 %v229
      %v761 = vunpack.c.l.b16 %v230
      %v762 = vunpack.c.l.b16 %v231
      %v763 = vunpack.c.l.b16 %v232
      %v764 = vunpack.c.l.b16 %v233
      %v765 = vunpack.c.l.b16 %v234
      %v766 = vunpack.c.l.b16 %v235
      %v767 = vunpack.c.l.b16 %v236
      %v768 = vunpack.c.l.b16 %v237
      %v769 = vunpack.c.l.b16 %v238
      %v770 = vunpack.c.l.b16 %v239
      %v771 = vunpack.c.l.b16 %v240
      %v772 = vunpack.c.l.b16 %v241
      %v773 = vunpack.c.l.b16 %v242
      %v774 = vunpack.c.l.b16 %v243
      %v775 = vunpack.c.l.b16 %v244
      %v776 = vunpack.c.l.b16 %v245
      %v777 = vunpack.c.l.b16 %v246
      %v778 = vunpack.c.l.b16 %v247
      %v779 = vunpack.c.l.b16 %v248
      %v780 = vunpack.c.l.b16 %v249
      %v781 = vunpack.c.l.b16 %v250
      %v782 = vunpack.c.l.b16 %v251
      %v783 = vunpack.c.l.b16 %v252
      %v784 = vunpack.c.l.b16 %v253
      %v785 = vunpack.c.l.b16 %v254
      %v786 = vunpack.c.l.b16 %v255
      %v787 = vunpack.c.l.b16 %v256
      %v788 = vunpack.c.l.b16 %v257
      %v789 = vunpack.c.l.b16 %v258
      %v790 = vunpack.c.l.b16 %v259
      %v791 = vunpack.c.l.b16 %v260
      %v792 = vunpack.c.l.b16 %v261
      %v793 = vunpack.c.l.b16 %v262
      %v794 = vunpack.c.l.b16 %v263
      %v795 = vunpack.c.l.b16 %v264
      %v796 = vunpack.c.l.b16 %v265
      %v797 = vunpack.c.l.b16 %v266
      %v798 = vunpack.c.l.b16 %v267
      %v799 = vunpack.c.l.b16 %v268
      %v800 = vunpack.c.l.b16 %v269
      %v801 = vunpack.c.l.b16 %v270
      %v802 = vunpack.c.l.b16 %v271
      %v803 = vunpack.c.l.b16 %v272
      %v804 = vunpack.c.l.b16 %v273
      %v805 = vunpack.c.l.b16 %v274
      %v806 = vunpack.c.l.b16 %v275
      %v807 = vunpack.c.l.b16 %v276
      %v808 = vunpack.c.l.b16 %v277
      %v809 = vunpack.c.l.b16 %v278
      %v810 = vunpack.c.l.b16 %v279
      %v811 = vunpack.c.l.b16 %v280
      %v812 = vunpack.c.l.b16 %v281
      %v813 = vunpack.c.l.b16 %v282
      %v814 = vunpack.c.l.b16 %v283
      %v815 = vunpack.c.l.b16 %v284
      %v816 = vunpack.c.l.b16 %v285
      %v817 = vunpack.c.l.b16 %v286
      %v818 = vunpack.c.l.b16 %v287
      %v819 = vunpack.c.l.b16 %v288
      %v820 = vunpack.c.l.b16 %v289
      %v821 = vunpack.c.l.b16 %v290
      %v822 = vunpack.c.l.b16 %v291
      %v823 = vpack.c.b16 %v760, %v759
      %v824 = vpack.c.b16 %v762, %v761
      %v825 = vpack.c.b16 %v764, %v763
      %v826 = vpack.c.b16 %v766, %v765
      %v827 = vpack.c.b16 %v768, %v767
      %v828 = vpack.c.b16 %v770, %v769
      %v829 = vpack.c.b16 %v772, %v771
      %v830 = vpack.c.b16 %v774, %v773
      %v831 = vpack.c.b16 %v776, %v775
      %v832 = vpack.c.b16 %v778, %v777
      %v833 = vpack.c.b16 %v780, %v779
      %v834 = vpack.c.b16 %v782, %v781
      %v835 = vpack.c.b16 %v784, %v783
      %v836 = vpack.c.b16 %v786, %v785
      %v837 = vpack.c.b16 %v788, %v787
      %v838 = vpack.c.b16 %v790, %v789
      %v839 = vpack.c.b16 %v792, %v791
      %v840 = vpack.c.b16 %v794, %v793
      %v841 = vpack.c.b16 %v796, %v795
      %v842 = vpack.c.b16 %v798, %v797
      %v843 = vpack.c.b16 %v800, %v799
      %v844 = vpack.c.b16 %v802, %v801
      %v845 = vpack.c.b16 %v804, %v803
      %v846 = vpack.c.b16 %v806, %v805
      %v847 = vpack.c.b16 %v808, %v807
      %v848 = vpack.c.b16 %v810, %v809
      %v849 = vpack.c.b16 %v812, %v811
      %v850 = vpack.c.b16 %v814, %v813
      %v851 = vpack.c.b16 %v816, %v815
      %v852 = vpack.c.b16 %v818, %v817
      %v853 = vpack.c.b16 %v820, %v819
      %v854 = vpack.c.b16 %v822, %v821
      %887 = vmatprep.subr.bf16.mxu0 0
      %888 = vmatpush1.bf16.msra.mxu0 %v823
      %889 = vmatprep.subr.bf16.mxu0 0
      %890 = vmatpush1.bf16.msra.mxu0 %v824
      %891 = vmatprep.subr.bf16.mxu0 0
      %892 = vmatpush1.bf16.msra.mxu0 %v825
      %893 = vmatprep.subr.bf16.mxu0 0
      %894 = vmatpush1.bf16.msra.mxu0 %v826
      %895 = vmatprep.subr.bf16.mxu0 0
      %896 = vmatpush1.bf16.msra.mxu0 %v827
      %897 = vmatprep.subr.bf16.mxu0 0
      %898 = vmatpush1.bf16.msra.mxu0 %v828
      %899 = vmatprep.subr.bf16.mxu0 0
      %900 = vmatpush1.bf16.msra.mxu0 %v829
      %901 = vmatprep.subr.bf16.mxu0 0
      %902 = vmatpush1.bf16.msra.mxu0 %v830
      %903 = vmatprep.subr.bf16.mxu0 0
      %904 = vmatpush1.bf16.msra.mxu0 %v831
      %905 = vmatprep.subr.bf16.mxu0 0
      %906 = vmatpush1.bf16.msra.mxu0 %v832
      %907 = vmatprep.subr.bf16.mxu0 0
      %908 = vmatpush1.bf16.msra.mxu0 %v833
      %909 = vmatprep.subr.bf16.mxu0 0
      %910 = vmatpush1.bf16.msra.mxu0 %v834
      %911 = vmatprep.subr.bf16.mxu0 0
      %912 = vmatpush1.bf16.msra.mxu0 %v835
      %913 = vmatprep.subr.bf16.mxu0 0
      %914 = vmatpush1.bf16.msra.mxu0 %v836
      %915 = vmatprep.subr.bf16.mxu0 0
      %916 = vmatpush1.bf16.msra.mxu0 %v837
      %917 = vmatprep.subr.bf16.mxu0 0
      %918 = vmatpush1.bf16.msra.mxu0 %v838
      %919 = vmatprep.mubr.bf16.mxu0 %v688
      %920 = vmatmul.mubr.bf16.gmra.mrb[0].mxu0 %v687
      %v921 = vpop.f32.mrb[0].mxu0
      %v922 = vadd.f32 %v676, %v921
      %v923 = vpop.f32.mrb[0].mxu0
      %v924 = vpop.f32.mrb[0].mxu0
      %v925 = vpop.f32.mrb[0].mxu0
      %926 = vdwg.mxu0
      %927 = vmatprep.subr.bf16.mxu0 0
      %928 = vmatpush1.bf16.msra.mxu0 %v839
      %929 = vmatprep.subr.bf16.mxu0 0
      %930 = vmatpush1.bf16.msra.mxu0 %v840
      %931 = vmatprep.subr.bf16.mxu0 0
      %932 = vmatpush1.bf16.msra.mxu0 %v841
      %933 = vmatprep.subr.bf16.mxu0 0
      %934 = vmatpush1.bf16.msra.mxu0 %v842
      %935 = vmatprep.subr.bf16.mxu0 0
      %936 = vmatpush1.bf16.msra.mxu0 %v843
      %937 = vmatprep.subr.bf16.mxu0 0
      %938 = vmatpush1.bf16.msra.mxu0 %v844
      %939 = vmatprep.subr.bf16.mxu0 0
      %940 = vmatpush1.bf16.msra.mxu0 %v845
      %941 = vmatprep.subr.bf16.mxu0 0
      %942 = vmatpush1.bf16.msra.mxu0 %v846
      %943 = vmatprep.subr.bf16.mxu0 0
      %944 = vmatpush1.bf16.msra.mxu0 %v847
      %945 = vmatprep.subr.bf16.mxu0 0
      %946 = vmatpush1.bf16.msra.mxu0 %v848
      %947 = vmatprep.subr.bf16.mxu0 0
      %948 = vmatpush1.bf16.msra.mxu0 %v849
      %949 = vmatprep.subr.bf16.mxu0 0
      %950 = vmatpush1.bf16.msra.mxu0 %v850
      %951 = vmatprep.subr.bf16.mxu0 0
      %952 = vmatpush1.bf16.msra.mxu0 %v851
      %953 = vmatprep.subr.bf16.mxu0 0
      %954 = vmatpush1.bf16.msra.mxu0 %v852
      %955 = vmatprep.subr.bf16.mxu0 0
      %956 = vmatpush1.bf16.msra.mxu0 %v853
      %957 = vmatprep.subr.bf16.mxu0 0
      %958 = vmatpush1.bf16.msra.mxu0 %v854
      %959 = vmatprep.mubr.bf16.mxu0 %v690
      %960 = vmatmul.mubr.bf16.gmra.mrb[0].mxu0 %v689
      %v961 = vpop.f32.mrb[0].mxu0
      %v962 = vadd.f32 %v922, %v961
      %v963 = vpop.f32.mrb[0].mxu0
      %v964 = vpop.f32.mrb[0].mxu0
      %v965 = vpop.f32.mrb[0].mxu0
      %966 = vdwg.mxu0
      %v967 = vld [vmem:[%s219] sm:$0xcc]
      %v968 = vld [vmem:[%s219 + $0x8] sm:$0xcc]
      %v969 = vld [vmem:[%s219 + $0x10] sm:$0x33]
      %v970 = vld [vmem:[%s219 + $0x18] sm:$0x33]
      %s971 = scalar_lea.vmem %s1, 512
      %v972 = vld [vmem:[%s971] sm:$0xf]
      %v973 = vld [vmem:[%s971 + $0x4] sm:$0xf]
      %v974 = vld [vmem:[%s971 + $0x8] sm:$0xf]
      %v975 = vld [vmem:[%s971 + $0xc] sm:$0xf]
      %v976 = vld [vmem:[%s971 + $0x10] sm:$0xf]
      %v977 = vld [vmem:[%s971 + $0x14] sm:$0xf]
      %v978 = vld [vmem:[%s971 + $0x18] sm:$0xf]
      %v979 = vld [vmem:[%s971 + $0x1c] sm:$0xf]
      %v980 = vld [vmem:[%s971 + $0x20] sm:$0xf]
      %v981 = vld [vmem:[%s971 + $0x24] sm:$0xf]
      %v982 = vld [vmem:[%s971 + $0x28] sm:$0xf]
      %v983 = vld [vmem:[%s971 + $0x2c] sm:$0xf]
      %v984 = vld [vmem:[%s971 + $0x30] sm:$0xf]
      %v985 = vld [vmem:[%s971 + $0x34] sm:$0xf]
      %v986 = vld [vmem:[%s971 + $0x38] sm:$0xf]
      %v987 = vld [vmem:[%s971 + $0x3c] sm:$0xf]
      %v988 = vld [vmem:[%s971 + $0x40] sm:$0xf]
      %v989 = vld [vmem:[%s971 + $0x44] sm:$0xf]
      %v990 = vld [vmem:[%s971 + $0x48] sm:$0xf]
      %v991 = vld [vmem:[%s971 + $0x4c] sm:$0xf]
      %v992 = vld [vmem:[%s971 + $0x50] sm:$0xf]
      %v993 = vld [vmem:[%s971 + $0x54] sm:$0xf]
      %v994 = vld [vmem:[%s971 + $0x58] sm:$0xf]
      %v995 = vld [vmem:[%s971 + $0x5c] sm:$0xf]
      %v996 = vld [vmem:[%s971 + $0x60] sm:$0xf]
      %v997 = vld [vmem:[%s971 + $0x64] sm:$0xf]
      %v998 = vld [vmem:[%s971 + $0x68] sm:$0xf]
      %v999 = vld [vmem:[%s971 + $0x6c] sm:$0xf]
      %v1000 = vld [vmem:[%s971 + $0x70] sm:$0xf]
      %v1001 = vld [vmem:[%s971 + $0x74] sm:$0xf]
      %v1002 = vld [vmem:[%s971 + $0x78] sm:$0xf]
      %v1003 = vld [vmem:[%s971 + $0x7c] sm:$0xf]
      %v1004 = vld [vmem:[%s971 + $0x80] sm:$0xf]
      %v1005 = vld [vmem:[%s971 + $0x84] sm:$0xf]
      %v1006 = vld [vmem:[%s971 + $0x88] sm:$0xf]
      %v1007 = vld [vmem:[%s971 + $0x8c] sm:$0xf]
      %v1008 = vld [vmem:[%s971 + $0x90] sm:$0xf]
      %v1009 = vld [vmem:[%s971 + $0x94] sm:$0xf]
      %v1010 = vld [vmem:[%s971 + $0x98] sm:$0xf]
      %v1011 = vld [vmem:[%s971 + $0x9c] sm:$0xf]
      %v1012 = vld [vmem:[%s971 + $0xa0] sm:$0xf]
      %v1013 = vld [vmem:[%s971 + $0xa4] sm:$0xf]
      %v1014 = vld [vmem:[%s971 + $0xa8] sm:$0xf]
      %v1015 = vld [vmem:[%s971 + $0xac] sm:$0xf]
      %v1016 = vld [vmem:[%s971 + $0xb0] sm:$0xf]
      %v1017 = vld [vmem:[%s971 + $0xb4] sm:$0xf]
      %v1018 = vld [vmem:[%s971 + $0xb8] sm:$0xf]
      %v1019 = vld [vmem:[%s971 + $0xbc] sm:$0xf]
      %v1020 = vld [vmem:[%s971 + $0xc0] sm:$0xf]
      %v1021 = vld [vmem:[%s971 + $0xc4] sm:$0xf]
      %v1022 = vld [vmem:[%s971 + $0xc8] sm:$0xf]
      %v1023 = vld [vmem:[%s971 + $0xcc] sm:$0xf]
      %v1024 = vld [vmem:[%s971 + $0xd0] sm:$0xf]
      %v1025 = vld [vmem:[%s971 + $0xd4] sm:$0xf]
      %v1026 = vld [vmem:[%s971 + $0xd8] sm:$0xf]
      %v1027 = vld [vmem:[%s971 + $0xdc] sm:$0xf]
      %v1028 = vld [vmem:[%s971 + $0xe0] sm:$0xf]
      %v1029 = vld [vmem:[%s971 + $0xe4] sm:$0xf]
      %v1030 = vld [vmem:[%s971 + $0xe8] sm:$0xf]
      %v1031 = vld [vmem:[%s971 + $0xec] sm:$0xf]
      %v1032 = vld [vmem:[%s971 + $0xf0] sm:$0xf]
      %v1033 = vld [vmem:[%s971 + $0xf4] sm:$0xf]
      %v1034 = vld [vmem:[%s971 + $0xf8] sm:$0xf]
      %v1035 = vld [vmem:[%s971 + $0xfc] sm:$0xf]
      %v1040 = vunpack.c.l.b16 %v967
      %v1041 = vunpack.c.h.b16 %v967
      %v1042 = vunpack.c.l.b16 %v968
      %v1043 = vunpack.c.h.b16 %v968
      %v1044 = vunpack.c.l.b16 %v969
      %v1045 = vunpack.c.h.b16 %v969
      %v1046 = vunpack.c.l.b16 %v970
      %v1047 = vunpack.c.h.b16 %v970
      %v1048 = vpack.c.b16 %v1044, %v1040
      %v1049 = vpack.c.b16 %v1045, %v1041
      %v1050 = vpack.c.b16 %v1046, %v1042
      %v1051 = vpack.c.b16 %v1047, %v1043
      %v1052 = vrot.slane %v1048, 2
      %v1053 = vrot.slane %v1049, 2
      %v1054 = vrot.slane %v1050, 2
      %v1055 = vrot.slane %v1051, 2
      %v1124 = vunpack.c.l.b16 %v972
      %v1125 = vunpack.c.l.b16 %v973
      %v1126 = vunpack.c.l.b16 %v974
      %v1127 = vunpack.c.l.b16 %v975
      %v1128 = vunpack.c.l.b16 %v976
      %v1129 = vunpack.c.l.b16 %v977
      %v1130 = vunpack.c.l.b16 %v978
      %v1131 = vunpack.c.l.b16 %v979
      %v1132 = vunpack.c.l.b16 %v980
      %v1133 = vunpack.c.l.b16 %v981
      %v1134 = vunpack.c.l.b16 %v982
      %v1135 = vunpack.c.l.b16 %v983
      %v1136 = vunpack.c.l.b16 %v984
      %v1137 = vunpack.c.l.b16 %v985
      %v1138 = vunpack.c.l.b16 %v986
      %v1139 = vunpack.c.l.b16 %v987
      %v1140 = vunpack.c.l.b16 %v988
      %v1141 = vunpack.c.l.b16 %v989
      %v1142 = vunpack.c.l.b16 %v990
      %v1143 = vunpack.c.l.b16 %v991
      %v1144 = vunpack.c.l.b16 %v992
      %v1145 = vunpack.c.l.b16 %v993
      %v1146 = vunpack.c.l.b16 %v994
      %v1147 = vunpack.c.l.b16 %v995
      %v1148 = vunpack.c.l.b16 %v996
      %v1149 = vunpack.c.l.b16 %v997
      %v1150 = vunpack.c.l.b16 %v998
      %v1151 = vunpack.c.l.b16 %v999
      %v1152 = vunpack.c.l.b16 %v1000
      %v1153 = vunpack.c.l.b16 %v1001
      %v1154 = vunpack.c.l.b16 %v1002
      %v1155 = vunpack.c.l.b16 %v1003
      %v1156 = vunpack.c.l.b16 %v1004
      %v1157 = vunpack.c.l.b16 %v1005
      %v1158 = vunpack.c.l.b16 %v1006
      %v1159 = vunpack.c.l.b16 %v1007
      %v1160 = vunpack.c.l.b16 %v1008
      %v1161 = vunpack.c.l.b16 %v1009
      %v1162 = vunpack.c.l.b16 %v1010
      %v1163 = vunpack.c.l.b16 %v1011
      %v1164 = vunpack.c.l.b16 %v1012
      %v1165 = vunpack.c.l.b16 %v1013
      %v1166 = vunpack.c.l.b16 %v1014
      %v1167 = vunpack.c.l.b16 %v1015
      %v1168 = vunpack.c.l.b16 %v1016
      %v1169 = vunpack.c.l.b16 %v1017
      %v1170 = vunpack.c.l.b16 %v1018
      %v1171 = vunpack.c.l.b16 %v1019
      %v1172 = vunpack.c.l.b16 %v1020
      %v1173 = vunpack.c.l.b16 %v1021
      %v1174 = vunpack.c.l.b16 %v1022
      %v1175 = vunpack.c.l.b16 %v1023
      %v1176 = vunpack.c.l.b16 %v1024
      %v1177 = vunpack.c.l.b16 %v1025
      %v1178 = vunpack.c.l.b16 %v1026
      %v1179 = vunpack.c.l.b16 %v1027
      %v1180 = vunpack.c.l.b16 %v1028
      %v1181 = vunpack.c.l.b16 %v1029
      %v1182 = vunpack.c.l.b16 %v1030
      %v1183 = vunpack.c.l.b16 %v1031
      %v1184 = vunpack.c.l.b16 %v1032
      %v1185 = vunpack.c.l.b16 %v1033
      %v1186 = vunpack.c.l.b16 %v1034
      %v1187 = vunpack.c.l.b16 %v1035
      %v1188 = vpack.c.b16 %v1125, %v1124
      %v1189 = vpack.c.b16 %v1127, %v1126
      %v1190 = vpack.c.b16 %v1129, %v1128
      %v1191 = vpack.c.b16 %v1131, %v1130
      %v1192 = vpack.c.b16 %v1133, %v1132
      %v1193 = vpack.c.b16 %v1135, %v1134
      %v1194 = vpack.c.b16 %v1137, %v1136
      %v1195 = vpack.c.b16 %v1139, %v1138
      %v1196 = vpack.c.b16 %v1141, %v1140
      %v1197 = vpack.c.b16 %v1143, %v1142
      %v1198 = vpack.c.b16 %v1145, %v1144
      %v1199 = vpack.c.b16 %v1147, %v1146
      %v1200 = vpack.c.b16 %v1149, %v1148
      %v1201 = vpack.c.b16 %v1151, %v1150
      %v1202 = vpack.c.b16 %v1153, %v1152
      %v1203 = vpack.c.b16 %v1155, %v1154
      %v1204 = vpack.c.b16 %v1157, %v1156
      %v1205 = vpack.c.b16 %v1159, %v1158
      %v1206 = vpack.c.b16 %v1161, %v1160
      %v1207 = vpack.c.b16 %v1163, %v1162
      %v1208 = vpack.c.b16 %v1165, %v1164
      %v1209 = vpack.c.b16 %v1167, %v1166
      %v1210 = vpack.c.b16 %v1169, %v1168
      %v1211 = vpack.c.b16 %v1171, %v1170
      %v1212 = vpack.c.b16 %v1173, %v1172
      %v1213 = vpack.c.b16 %v1175, %v1174
      %v1214 = vpack.c.b16 %v1177, %v1176
      %v1215 = vpack.c.b16 %v1179, %v1178
      %v1216 = vpack.c.b16 %v1181, %v1180
      %v1217 = vpack.c.b16 %v1183, %v1182
      %v1218 = vpack.c.b16 %v1185, %v1184
      %v1219 = vpack.c.b16 %v1187, %v1186
      %1252 = vmatprep.subr.bf16.mxu0 0
      %1253 = vmatpush1.bf16.msra.mxu0 %v1188
      %1254 = vmatprep.subr.bf16.mxu0 0
      %1255 = vmatpush1.bf16.msra.mxu0 %v1189
      %1256 = vmatprep.subr.bf16.mxu0 0
      %1257 = vmatpush1.bf16.msra.mxu0 %v1190
      %1258 = vmatprep.subr.bf16.mxu0 0
      %1259 = vmatpush1.bf16.msra.mxu0 %v1191
      %1260 = vmatprep.subr.bf16.mxu0 0
      %1261 = vmatpush1.bf16.msra.mxu0 %v1192
      %1262 = vmatprep.subr.bf16.mxu0 0
      %1263 = vmatpush1.bf16.msra.mxu0 %v1193
      %1264 = vmatprep.subr.bf16.mxu0 0
      %1265 = vmatpush1.bf16.msra.mxu0 %v1194
      %1266 = vmatprep.subr.bf16.mxu0 0
      %1267 = vmatpush1.bf16.msra.mxu0 %v1195
      %1268 = vmatprep.subr.bf16.mxu0 0
      %1269 = vmatpush1.bf16.msra.mxu0 %v1196
      %1270 = vmatprep.subr.bf16.mxu0 0
      %1271 = vmatpush1.bf16.msra.mxu0 %v1197
      %1272 = vmatprep.subr.bf16.mxu0 0
      %1273 = vmatpush1.bf16.msra.mxu0 %v1198
      %1274 = vmatprep.subr.bf16.mxu0 0
      %1275 = vmatpush1.bf16.msra.mxu0 %v1199
      %1276 = vmatprep.subr.bf16.mxu0 0
      %1277 = vmatpush1.bf16.msra.mxu0 %v1200
      %1278 = vmatprep.subr.bf16.mxu0 0
      %1279 = vmatpush1.bf16.msra.mxu0 %v1201
      %1280 = vmatprep.subr.bf16.mxu0 0
      %1281 = vmatpush1.bf16.msra.mxu0 %v1202
      %1282 = vmatprep.subr.bf16.mxu0 0
      %1283 = vmatpush1.bf16.msra.mxu0 %v1203
      %1284 = vmatprep.mubr.bf16.mxu0 %v1053
      %1285 = vmatmul.mubr.bf16.gmra.mrb[0].mxu0 %v1052
      %v1286 = vpop.f32.mrb[0].mxu0
      %v1287 = vadd.f32 0.0, %v1286
      %v1288 = vpop.f32.mrb[0].mxu0
      %v1289 = vpop.f32.mrb[0].mxu0
      %v1290 = vpop.f32.mrb[0].mxu0
      %1291 = vdwg.mxu0
      %1292 = vmatprep.subr.bf16.mxu0 0
      %1293 = vmatpush1.bf16.msra.mxu0 %v1204
      %1294 = vmatprep.subr.bf16.mxu0 0
      %1295 = vmatpush1.bf16.msra.mxu0 %v1205
      %1296 = vmatprep.subr.bf16.mxu0 0
      %1297 = vmatpush1.bf16.msra.mxu0 %v1206
      %1298 = vmatprep.subr.bf16.mxu0 0
      %1299 = vmatpush1.bf16.msra.mxu0 %v1207
      %1300 = vmatprep.subr.bf16.mxu0 0
      %1301 = vmatpush1.bf16.msra.mxu0 %v1208
      %1302 = vmatprep.subr.bf16.mxu0 0
      %1303 = vmatpush1.bf16.msra.mxu0 %v1209
      %1304 = vmatprep.subr.bf16.mxu0 0
      %1305 = vmatpush1.bf16.msra.mxu0 %v1210
      %1306 = vmatprep.subr.bf16.mxu0 0
      %1307 = vmatpush1.bf16.msra.mxu0 %v1211
      %1308 = vmatprep.subr.bf16.mxu0 0
      %1309 = vmatpush1.bf16.msra.mxu0 %v1212
      %1310 = vmatprep.subr.bf16.mxu0 0
      %1311 = vmatpush1.bf16.msra.mxu0 %v1213
      %1312 = vmatprep.subr.bf16.mxu0 0
      %1313 = vmatpush1.bf16.msra.mxu0 %v1214
      %1314 = vmatprep.subr.bf16.mxu0 0
      %1315 = vmatpush1.bf16.msra.mxu0 %v1215
      %1316 = vmatprep.subr.bf16.mxu0 0
      %1317 = vmatpush1.bf16.msra.mxu0 %v1216
      %1318 = vmatprep.subr.bf16.mxu0 0
      %1319 = vmatpush1.bf16.msra.mxu0 %v1217
      %1320 = vmatprep.subr.bf16.mxu0 0
      %1321 = vmatpush1.bf16.msra.mxu0 %v1218
      %1322 = vmatprep.subr.bf16.mxu0 0
      %1323 = vmatpush1.bf16.msra.mxu0 %v1219
      %1324 = vmatprep.mubr.bf16.mxu0 %v1055
      %1325 = vmatmul.mubr.bf16.gmra.mrb[0].mxu0 %v1054
      %v1326 = vpop.f32.mrb[0].mxu0
      %v1327 = vadd.f32 %v1287, %v1326
      %v1328 = vpop.f32.mrb[0].mxu0
      %v1329 = vpop.f32.mrb[0].mxu0
      %v1330 = vpop.f32.mrb[0].mxu0
      %1331 = vdwg.mxu0
      %v1332 = vadd.f32 %v962, %v1327
      %v1333 = vld [vmem:[%s219 + $0x10] sm:$0x77]
      %v1334 = vld [vmem:[%s219 + $0x18] sm:$0x77]
      %s1335 = scalar_lea.vmem %s1, 768
      %v1336 = vld [vmem:[%s1335] sm:$0xf]
      %v1337 = vld [vmem:[%s1335 + $0x4] sm:$0xf]
      %v1338 = vld [vmem:[%s1335 + $0x8] sm:$0xf]
      %v1339 = vld [vmem:[%s1335 + $0xc] sm:$0xf]
      %v1340 = vld [vmem:[%s1335 + $0x10] sm:$0xf]
      %v1341 = vld [vmem:[%s1335 + $0x14] sm:$0xf]
      %v1342 = vld [vmem:[%s1335 + $0x18] sm:$0xf]
      %v1343 = vld [vmem:[%s1335 + $0x1c] sm:$0xf]
      %v1344 = vld [vmem:[%s1335 + $0x20] sm:$0xf]
      %v1345 = vld [vmem:[%s1335 + $0x24] sm:$0xf]
      %v1346 = vld [vmem:[%s1335 + $0x28] sm:$0xf]
      %v1347 = vld [vmem:[%s1335 + $0x2c] sm:$0xf]
      %v1348 = vld [vmem:[%s1335 + $0x30] sm:$0xf]
      %v1349 = vld [vmem:[%s1335 + $0x34] sm:$0xf]
      %v1350 = vld [vmem:[%s1335 + $0x38] sm:$0xf]
      %v1351 = vld [vmem:[%s1335 + $0x3c] sm:$0xf]
      %v1352 = vld [vmem:[%s1335 + $0x40] sm:$0xf]
      %v1353 = vld [vmem:[%s1335 + $0x44] sm:$0xf]
      %v1354 = vld [vmem:[%s1335 + $0x48] sm:$0xf]
      %v1355 = vld [vmem:[%s1335 + $0x4c] sm:$0xf]
      %v1356 = vld [vmem:[%s1335 + $0x50] sm:$0xf]
      %v1357 = vld [vmem:[%s1335 + $0x54] sm:$0xf]
      %v1358 = vld [vmem:[%s1335 + $0x58] sm:$0xf]
      %v1359 = vld [vmem:[%s1335 + $0x5c] sm:$0xf]
      %v1360 = vld [vmem:[%s1335 + $0x60] sm:$0xf]
      %v1361 = vld [vmem:[%s1335 + $0x64] sm:$0xf]
      %v1362 = vld [vmem:[%s1335 + $0x68] sm:$0xf]
      %v1363 = vld [vmem:[%s1335 + $0x6c] sm:$0xf]
      %v1364 = vld [vmem:[%s1335 + $0x70] sm:$0xf]
      %v1365 = vld [vmem:[%s1335 + $0x74] sm:$0xf]
      %v1366 = vld [vmem:[%s1335 + $0x78] sm:$0xf]
      %v1367 = vld [vmem:[%s1335 + $0x7c] sm:$0xf]
      %v1368 = vld [vmem:[%s1335 + $0x80] sm:$0xf]
      %v1369 = vld [vmem:[%s1335 + $0x84] sm:$0xf]
      %v1370 = vld [vmem:[%s1335 + $0x88] sm:$0xf]
      %v1371 = vld [vmem:[%s1335 + $0x8c] sm:$0xf]
      %v1372 = vld [vmem:[%s1335 + $0x90] sm:$0xf]
      %v1373 = vld [vmem:[%s1335 + $0x94] sm:$0xf]
      %v1374 = vld [vmem:[%s1335 + $0x98] sm:$0xf]
      %v1375 = vld [vmem:[%s1335 + $0x9c] sm:$0xf]
      %v1376 = vld [vmem:[%s1335 + $0xa0] sm:$0xf]
      %v1377 = vld [vmem:[%s1335 + $0xa4] sm:$0xf]
      %v1378 = vld [vmem:[%s1335 + $0xa8] sm:$0xf]
      %v1379 = vld [vmem:[%s1335 + $0xac] sm:$0xf]
      %v1380 = vld [vmem:[%s1335 + $0xb0] sm:$0xf]
      %v1381 = vld [vmem:[%s1335 + $0xb4] sm:$0xf]
      %v1382 = vld [vmem:[%s1335 + $0xb8] sm:$0xf]
      %v1383 = vld [vmem:[%s1335 + $0xbc] sm:$0xf]
      %v1384 = vld [vmem:[%s1335 + $0xc0] sm:$0xf]
      %v1385 = vld [vmem:[%s1335 + $0xc4] sm:$0xf]
      %v1386 = vld [vmem:[%s1335 + $0xc8] sm:$0xf]
      %v1387 = vld [vmem:[%s1335 + $0xcc] sm:$0xf]
      %v1388 = vld [vmem:[%s1335 + $0xd0] sm:$0xf]
      %v1389 = vld [vmem:[%s1335 + $0xd4] sm:$0xf]
      %v1390 = vld [vmem:[%s1335 + $0xd8] sm:$0xf]
      %v1391 = vld [vmem:[%s1335 + $0xdc] sm:$0xf]
      %v1392 = vld [vmem:[%s1335 + $0xe0] sm:$0xf]
      %v1393 = vld [vmem:[%s1335 + $0xe4] sm:$0xf]
      %v1394 = vld [vmem:[%s1335 + $0xe8] sm:$0xf]
      %v1395 = vld [vmem:[%s1335 + $0xec] sm:$0xf]
      %v1396 = vld [vmem:[%s1335 + $0xf0] sm:$0xf]
      %v1397 = vld [vmem:[%s1335 + $0xf4] sm:$0xf]
      %v1398 = vld [vmem:[%s1335 + $0xf8] sm:$0xf]
      %v1399 = vld [vmem:[%s1335 + $0xfc] sm:$0xf]
      %v1402 = vunpack.c.l.b16 %v1333
      %v1403 = vunpack.c.h.b16 %v1333
      %v1404 = vunpack.c.l.b16 %v1334
      %v1405 = vunpack.c.h.b16 %v1334
      %v1406 = vpack.c.b16 %v1402, %v1040
      %v1407 = vpack.c.b16 %v1403, %v1041
      %v1408 = vpack.c.b16 %v1404, %v1042
      %v1409 = vpack.c.b16 %v1405, %v1043
      %v1411 = vshrl.u32 %v1406, 16
      %v1413 = vrot.slane %v1411, 2
      %v1414 = vshll.u32 %v1406, 16
      %v1416 = vrot.slane %v1414, 3
      %v1417 = vor.u32 %v1413, %v1416
      %v1419 = vshrl.u32 %v1407, 16
      %v1421 = vrot.slane %v1419, 2
      %v1422 = vshll.u32 %v1407, 16
      %v1424 = vrot.slane %v1422, 3
      %v1425 = vor.u32 %v1421, %v1424
      %v1427 = vshrl.u32 %v1408, 16
      %v1429 = vrot.slane %v1427, 2
      %v1430 = vshll.u32 %v1408, 16
      %v1432 = vrot.slane %v1430, 3
      %v1433 = vor.u32 %v1429, %v1432
      %v1435 = vshrl.u32 %v1409, 16
      %v1437 = vrot.slane %v1435, 2
      %v1438 = vshll.u32 %v1409, 16
      %v1440 = vrot.slane %v1438, 3
      %v1441 = vor.u32 %v1437, %v1440
      %v1510 = vunpack.c.l.b16 %v1336
      %v1511 = vunpack.c.l.b16 %v1337
      %v1512 = vunpack.c.l.b16 %v1338
      %v1513 = vunpack.c.l.b16 %v1339
      %v1514 = vunpack.c.l.b16 %v1340
      %v1515 = vunpack.c.l.b16 %v1341
      %v1516 = vunpack.c.l.b16 %v1342
      %v1517 = vunpack.c.l.b16 %v1343
      %v1518 = vunpack.c.l.b16 %v1344
      %v1519 = vunpack.c.l.b16 %v1345
      %v1520 = vunpack.c.l.b16 %v1346
      %v1521 = vunpack.c.l.b16 %v1347
      %v1522 = vunpack.c.l.b16 %v1348
      %v1523 = vunpack.c.l.b16 %v1349
      %v1524 = vunpack.c.l.b16 %v1350
      %v1525 = vunpack.c.l.b16 %v1351
      %v1526 = vunpack.c.l.b16 %v1352
      %v1527 = vunpack.c.l.b16 %v1353
      %v1528 = vunpack.c.l.b16 %v1354
      %v1529 = vunpack.c.l.b16 %v1355
      %v1530 = vunpack.c.l.b16 %v1356
      %v1531 = vunpack.c.l.b16 %v1357
      %v1532 = vunpack.c.l.b16 %v1358
      %v1533 = vunpack.c.l.b16 %v1359
      %v1534 = vunpack.c.l.b16 %v1360
      %v1535 = vunpack.c.l.b16 %v1361
      %v1536 = vunpack.c.l.b16 %v1362
      %v1537 = vunpack.c.l.b16 %v1363
      %v1538 = vunpack.c.l.b16 %v1364
      %v1539 = vunpack.c.l.b16 %v1365
      %v1540 = vunpack.c.l.b16 %v1366
      %v1541 = vunpack.c.l.b16 %v1367
      %v1542 = vunpack.c.l.b16 %v1368
      %v1543 = vunpack.c.l.b16 %v1369
      %v1544 = vunpack.c.l.b16 %v1370
      %v1545 = vunpack.c.l.b16 %v1371
      %v1546 = vunpack.c.l.b16 %v1372
      %v1547 = vunpack.c.l.b16 %v1373
      %v1548 = vunpack.c.l.b16 %v1374
      %v1549 = vunpack.c.l.b16 %v1375
      %v1550 = vunpack.c.l.b16 %v1376
      %v1551 = vunpack.c.l.b16 %v1377
      %v1552 = vunpack.c.l.b16 %v1378
      %v1553 = vunpack.c.l.b16 %v1379
      %v1554 = vunpack.c.l.b16 %v1380
      %v1555 = vunpack.c.l.b16 %v1381
      %v1556 = vunpack.c.l.b16 %v1382
      %v1557 = vunpack.c.l.b16 %v1383
      %v1558 = vunpack.c.l.b16 %v1384
      %v1559 = vunpack.c.l.b16 %v1385
      %v1560 = vunpack.c.l.b16 %v1386
      %v1561 = vunpack.c.l.b16 %v1387
      %v1562 = vunpack.c.l.b16 %v1388
      %v1563 = vunpack.c.l.b16 %v1389
      %v1564 = vunpack.c.l.b16 %v1390
      %v1565 = vunpack.c.l.b16 %v1391
      %v1566 = vunpack.c.l.b16 %v1392
      %v1567 = vunpack.c.l.b16 %v1393
      %v1568 = vunpack.c.l.b16 %v1394
      %v1569 = vunpack.c.l.b16 %v1395
      %v1570 = vunpack.c.l.b16 %v1396
      %v1571 = vunpack.c.l.b16 %v1397
      %v1572 = vunpack.c.l.b16 %v1398
      %v1573 = vunpack.c.l.b16 %v1399
      %v1574 = vpack.c.b16 %v1511, %v1510
      %v1575 = vpack.c.b16 %v1513, %v1512
      %v1576 = vpack.c.b16 %v1515, %v1514
      %v1577 = vpack.c.b16 %v1517, %v1516
      %v1578 = vpack.c.b16 %v1519, %v1518
      %v1579 = vpack.c.b16 %v1521, %v1520
      %v1580 = vpack.c.b16 %v1523, %v1522
      %v1581 = vpack.c.b16 %v1525, %v1524
      %v1582 = vpack.c.b16 %v1527, %v1526
      %v1583 = vpack.c.b16 %v1529, %v1528
      %v1584 = vpack.c.b16 %v1531, %v1530
      %v1585 = vpack.c.b16 %v1533, %v1532
      %v1586 = vpack.c.b16 %v1535, %v1534
      %v1587 = vpack.c.b16 %v1537, %v1536
      %v1588 = vpack.c.b16 %v1539, %v1538
      %v1589 = vpack.c.b16 %v1541, %v1540
      %v1590 = vpack.c.b16 %v1543, %v1542
      %v1591 = vpack.c.b16 %v1545, %v1544
      %v1592 = vpack.c.b16 %v1547, %v1546
      %v1593 = vpack.c.b16 %v1549, %v1548
      %v1594 = vpack.c.b16 %v1551, %v1550
      %v1595 = vpack.c.b16 %v1553, %v1552
      %v1596 = vpack.c.b16 %v1555, %v1554
      %v1597 = vpack.c.b16 %v1557, %v1556
      %v1598 = vpack.c.b16 %v1559, %v1558
      %v1599 = vpack.c.b16 %v1561, %v1560
      %v1600 = vpack.c.b16 %v1563, %v1562
      %v1601 = vpack.c.b16 %v1565, %v1564
      %v1602 = vpack.c.b16 %v1567, %v1566
      %v1603 = vpack.c.b16 %v1569, %v1568
      %v1604 = vpack.c.b16 %v1571, %v1570
      %v1605 = vpack.c.b16 %v1573, %v1572
      %1638 = vmatprep.subr.bf16.mxu0 0
      %1639 = vmatpush1.bf16.msra.mxu0 %v1574
      %1640 = vmatprep.subr.bf16.mxu0 0
      %1641 = vmatpush1.bf16.msra.mxu0 %v1575
      %1642 = vmatprep.subr.bf16.mxu0 0
      %1643 = vmatpush1.bf16.msra.mxu0 %v1576
      %1644 = vmatprep.subr.bf16.mxu0 0
      %1645 = vmatpush1.bf16.msra.mxu0 %v1577
      %1646 = vmatprep.subr.bf16.mxu0 0
      %1647 = vmatpush1.bf16.msra.mxu0 %v1578
      %1648 = vmatprep.subr.bf16.mxu0 0
      %1649 = vmatpush1.bf16.msra.mxu0 %v1579
      %1650 = vmatprep.subr.bf16.mxu0 0
      %1651 = vmatpush1.bf16.msra.mxu0 %v1580
      %1652 = vmatprep.subr.bf16.mxu0 0
      %1653 = vmatpush1.bf16.msra.mxu0 %v1581
      %1654 = vmatprep.subr.bf16.mxu0 0
      %1655 = vmatpush1.bf16.msra.mxu0 %v1582
      %1656 = vmatprep.subr.bf16.mxu0 0
      %1657 = vmatpush1.bf16.msra.mxu0 %v1583
      %1658 = vmatprep.subr.bf16.mxu0 0
      %1659 = vmatpush1.bf16.msra.mxu0 %v1584
      %1660 = vmatprep.subr.bf16.mxu0 0
      %1661 = vmatpush1.bf16.msra.mxu0 %v1585
      %1662 = vmatprep.subr.bf16.mxu0 0
      %1663 = vmatpush1.bf16.msra.mxu0 %v1586
      %1664 = vmatprep.subr.bf16.mxu0 0
      %1665 = vmatpush1.bf16.msra.mxu0 %v1587
      %1666 = vmatprep.subr.bf16.mxu0 0
      %1667 = vmatpush1.bf16.msra.mxu0 %v1588
      %1668 = vmatprep.subr.bf16.mxu0 0
      %1669 = vmatpush1.bf16.msra.mxu0 %v1589
      %1670 = vmatprep.mubr.bf16.mxu0 %v1425
      %1671 = vmatmul.mubr.bf16.gmra.mrb[0].mxu0 %v1417
      %v1672 = vpop.f32.mrb[0].mxu0
      %v1673 = vadd.f32 0.0, %v1672
      %v1674 = vpop.f32.mrb[0].mxu0
      %v1675 = vpop.f32.mrb[0].mxu0
      %v1676 = vpop.f32.mrb[0].mxu0
      %1677 = vdwg.mxu0
      %1678 = vmatprep.subr.bf16.mxu0 0
      %1679 = vmatpush1.bf16.msra.mxu0 %v1590
      %1680 = vmatprep.subr.bf16.mxu0 0
      %1681 = vmatpush1.bf16.msra.mxu0 %v1591
      %1682 = vmatprep.subr.bf16.mxu0 0
      %1683 = vmatpush1.bf16.msra.mxu0 %v1592
      %1684 = vmatprep.subr.bf16.mxu0 0
      %1685 = vmatpush1.bf16.msra.mxu0 %v1593
      %1686 = vmatprep.subr.bf16.mxu0 0
      %1687 = vmatpush1.bf16.msra.mxu0 %v1594
      %1688 = vmatprep.subr.bf16.mxu0 0
      %1689 = vmatpush1.bf16.msra.mxu0 %v1595
      %1690 = vmatprep.subr.bf16.mxu0 0
      %1691 = vmatpush1.bf16.msra.mxu0 %v1596
      %1692 = vmatprep.subr.bf16.mxu0 0
      %1693 = vmatpush1.bf16.msra.mxu0 %v1597
      %1694 = vmatprep.subr.bf16.mxu0 0
      %1695 = vmatpush1.bf16.msra.mxu0 %v1598
      %1696 = vmatprep.subr.bf16.mxu0 0
      %1697 = vmatpush1.bf16.msra.mxu0 %v1599
      %1698 = vmatprep.subr.bf16.mxu0 0
      %1699 = vmatpush1.bf16.msra.mxu0 %v1600
      %1700 = vmatprep.subr.bf16.mxu0 0
      %1701 = vmatpush1.bf16.msra.mxu0 %v1601
      %1702 = vmatprep.subr.bf16.mxu0 0
      %1703 = vmatpush1.bf16.msra.mxu0 %v1602
      %1704 = vmatprep.subr.bf16.mxu0 0
      %1705 = vmatpush1.bf16.msra.mxu0 %v1603
      %1706 = vmatprep.subr.bf16.mxu0 0
      %1707 = vmatpush1.bf16.msra.mxu0 %v1604
      %1708 = vmatprep.subr.bf16.mxu0 0
      %1709 = vmatpush1.bf16.msra.mxu0 %v1605
      %1710 = vmatprep.mubr.bf16.mxu0 %v1441
      %1711 = vmatmul.mubr.bf16.gmra.mrb[0].mxu0 %v1433
      %v1712 = vpop.f32.mrb[0].mxu0
      %v1713 = vadd.f32 %v1673, %v1712
      %v1714 = vpop.f32.mrb[0].mxu0
      %v1715 = vpop.f32.mrb[0].mxu0
      %v1716 = vpop.f32.mrb[0].mxu0
      %1717 = vdwg.mxu0
      %v1718 = vadd.f32 %v1332, %v1713
      %v1719 = vld [vmem:[%s3] sm:$0xff]
      %1721 = vset.pattern.permute.xlu0 0
      %1722 = vperm.xlu0 %1721, %v1719
      %v1723 = vpop.permute.xlu0 %1722
      %v1725 = vmul.f32 %v1718, %v1723
      %v1726 = vrot.slane %v1725, 4
      %v1727 = vadd.f32 %v1725, %v1726
      %v1728 = vrot.slane %v1727, 2
      %v1729 = vadd.f32 %v1727, %v1728
      %v1730 = vrot.slane %v1729, 1
      %v1731 = vadd.f32 %v1729, %v1730
      %v1732 = vmul.f32 %v1725, %v1725
      %v1733 = vrot.slane %v1732, 4
      %v1734 = vadd.f32 %v1732, %v1733
      %v1735 = vrot.slane %v1734, 2
      %v1736 = vadd.f32 %v1734, %v1735
      %v1737 = vrot.slane %v1736, 1
      %v1738 = vadd.f32 %v1736, %v1737
      %v1739 = vmul.f32 %v1731, 0.25
      %v1740 = vmul.f32 %v1738, 0.25
      %v1741 = vmul.f32 %v1739, %v1739
      %v1742 = vsub.f32 %v1740, %v1741
      %v1743 = vmax.f32 %v1742, 0.0
      %v1744 = vsub.f32 %v1718, %v1739
      %v1745 = vadd.f32 %v1743, 1e-05
      %v1746 = vrsqrt.pop %v1745
      %v1747 = vmul.f32 %v1744, %v1746
      %vm1748 = vcmp.gt.f32.partialorder %v1747, 0.0
      %v1749 = vmul.f32 %v1747, 0.2
      %v1750 = vsel %vm1748, %v1747, %v1749
      %v1751 = vmul.f32 %v1750, %v1723
      %v1752 = vld [vmem:[%s4] sm:$0xff]
      %v1753 = vld [vmem:[%s4 + $0x8] sm:$0xff]
      %v1754 = vld [vmem:[%s4 + $0x10] sm:$0xff]
      %v1755 = vld [vmem:[%s4 + $0x18] sm:$0xff]
      %v1756 = vld [vmem:[%s4 + $0x20] sm:$0xff]
      %v1757 = vld [vmem:[%s4 + $0x28] sm:$0xff]
      %v1758 = vld [vmem:[%s4 + $0x30] sm:$0xff]
      %v1759 = vld [vmem:[%s4 + $0x38] sm:$0xff]
      %v1760 = vld [vmem:[%s4 + $0x40] sm:$0xff]
      %v1761 = vld [vmem:[%s4 + $0x48] sm:$0xff]
      %v1762 = vld [vmem:[%s4 + $0x50] sm:$0xff]
      %v1763 = vld [vmem:[%s4 + $0x58] sm:$0xff]
      %v1764 = vld [vmem:[%s4 + $0x60] sm:$0xff]
      %v1765 = vld [vmem:[%s4 + $0x68] sm:$0xff]
      %v1766 = vld [vmem:[%s4 + $0x70] sm:$0xff]
      %v1767 = vld [vmem:[%s4 + $0x78] sm:$0xff]
      %v1768 = vld [vmem:[%s4 + $0x80] sm:$0xff]
      %v1769 = vld [vmem:[%s4 + $0x88] sm:$0xff]
      %vm1770 = vcmask 64512
      %v1772 = vsel %vm1770, %v1752, 0
      %v1775 = vsel %vm1770, %v1753, 0
      %v1778 = vsel %vm1770, %v1754, 0
      %v1781 = vsel %vm1770, %v1755, 0
      %v1784 = vsel %vm1770, %v1756, 0
      %v1787 = vsel %vm1770, %v1757, 0
      %v1790 = vsel %vm1770, %v1758, 0
      %v1793 = vsel %vm1770, %v1759, 0
      %v1796 = vsel %vm1770, %v1760, 0
      %v1799 = vsel %vm1770, %v1761, 0
      %v1802 = vsel %vm1770, %v1762, 0
      %v1805 = vsel %vm1770, %v1763, 0
      %v1808 = vsel %vm1770, %v1764, 0
      %v1811 = vsel %vm1770, %v1765, 0
      %v1814 = vsel %vm1770, %v1766, 0
      %v1817 = vsel %vm1770, %v1767, 0
      %v1820 = vsel %vm1770, %v1768, 0
      %v1823 = vsel %vm1770, %v1769, 0
      %1825 = vmatprep.subr.mxu0 0.0
      %1826 = vmatpush1.msra.mxu0 %v1751
      %1827 = vmatprep.subr.mxu0 0.0
      %1828 = vmatpush1.msra.mxu0 0.0
      %1829 = vmatprep.subr.mxu0 0.0
      %1830 = vmatpush1.msra.mxu0 0.0
      %1831 = vmatprep.subr.mxu0 0.0
      %1832 = vmatpush1.msra.mxu0 0.0
      %1833 = vmatprep.subr.mxu0 0.0
      %1834 = vmatpush1.msra.mxu0 0.0
      %1835 = vmatprep.subr.mxu0 0.0
      %1836 = vmatpush1.msra.mxu0 0.0
      %1837 = vmatprep.subr.mxu0 0.0
      %1838 = vmatpush1.msra.mxu0 0.0
      %1839 = vmatprep.subr.mxu0 0.0
      %1840 = vmatpush1.msra.mxu0 0.0
      %1841 = vmatprep.subr.mxu0 0.0
      %1842 = vmatpush1.msra.mxu0 0.0
      %1843 = vmatprep.subr.mxu0 0.0
      %1844 = vmatpush1.msra.mxu0 0.0
      %1845 = vmatprep.subr.mxu0 0.0
      %1846 = vmatpush1.msra.mxu0 0.0
      %1847 = vmatprep.subr.mxu0 0.0
      %1848 = vmatpush1.msra.mxu0 0.0
      %1849 = vmatprep.subr.mxu0 0.0
      %1850 = vmatpush1.msra.mxu0 0.0
      %1851 = vmatprep.subr.mxu0 0.0
      %1852 = vmatpush1.msra.mxu0 0.0
      %1853 = vmatprep.subr.mxu0 0.0
      %1854 = vmatpush1.msra.mxu0 0.0
      %1855 = vmatprep.subr.mxu0 0.0
      %1856 = vmatpush1.msra.mxu0 0.0
      %1857 = vmatprep.subr.mxu0 0.0
      %1858 = vmatpush1.msra.mxu0 0.0
      %1859 = vmatprep.subr.mxu0 0.0
      %1860 = vmatpush1.msra.mxu0 0.0
      %1861 = vmatprep.subr.mxu0 0.0
      %1862 = vmatpush1.msra.mxu0 0.0
      %1863 = vmatprep.subr.mxu0 0.0
      %1864 = vmatpush1.msra.mxu0 0.0
      %1865 = vmatprep.subr.mxu0 0.0
      %1866 = vmatpush1.msra.mxu0 0.0
      %1867 = vmatprep.subr.mxu0 0.0
      %1868 = vmatpush1.msra.mxu0 0.0
      %1869 = vmatprep.subr.mxu0 0.0
      %1870 = vmatpush1.msra.mxu0 0.0
      %1871 = vmatprep.subr.mxu0 0.0
      %1872 = vmatpush1.msra.mxu0 0.0
      %1873 = vmatprep.subr.mxu0 0.0
      %1874 = vmatpush1.msra.mxu0 0.0
      %1875 = vmatprep.subr.mxu0 0.0
      %1876 = vmatpush1.msra.mxu0 0.0
      %1877 = vmatprep.subr.mxu0 0.0
      %1878 = vmatpush1.msra.mxu0 0.0
      %1879 = vmatprep.subr.mxu0 0.0
      %1880 = vmatpush1.msra.mxu0 0.0
      %1881 = vmatprep.subr.mxu0 0.0
      %1882 = vmatpush1.msra.mxu0 0.0
      %1883 = vmatprep.subr.mxu0 0.0
      %1884 = vmatpush1.msra.mxu0 0.0
      %1885 = vmatprep.subr.mxu0 0.0
      %1886 = vmatpush1.msra.mxu0 0.0
      %1887 = vmatprep.subr.mxu0 0.0
      %1888 = vmatpush1.msra.mxu0 0.0
      %1889 = vmatprep.mubr.f32.mxu0 0.0
      %1890 = vmatmul.mubr.f32.gmra.mrb[0].mxu0 %v1772
      %v1891 = vpop.f32.mrb[0].mxu0
      %v1892 = vadd.f32 0.0, %v1891
      %v1893 = vpop.f32.mrb[0].mxu0
      %1894 = vmatprep.mubr.f32.mxu0 0.0
      %1895 = vmatmul.mubr.f32.gmra.mrb[0].mxu0 %v1775
      %v1896 = vpop.f32.mrb[0].mxu0
      %v1897 = vadd.f32 0.0, %v1896
      %v1898 = vpop.f32.mrb[0].mxu0
      %1899 = vmatprep.mubr.f32.mxu0 0.0
      %1900 = vmatmul.mubr.f32.gmra.mrb[0].mxu0 %v1778
      %v1901 = vpop.f32.mrb[0].mxu0
      %v1902 = vadd.f32 0.0, %v1901
      %v1903 = vpop.f32.mrb[0].mxu0
      %1904 = vmatprep.mubr.f32.mxu0 0.0
      %1905 = vmatmul.mubr.f32.gmra.mrb[0].mxu0 %v1781
      %v1906 = vpop.f32.mrb[0].mxu0
      %v1907 = vadd.f32 0.0, %v1906
      %v1908 = vpop.f32.mrb[0].mxu0
      %1909 = vmatprep.mubr.f32.mxu0 0.0
      %1910 = vmatmul.mubr.f32.gmra.mrb[0].mxu0 %v1784
      %v1911 = vpop.f32.mrb[0].mxu0
      %v1912 = vadd.f32 0.0, %v1911
      %v1913 = vpop.f32.mrb[0].mxu0
      %1914 = vmatprep.mubr.f32.mxu0 0.0
      %1915 = vmatmul.mubr.f32.gmra.mrb[0].mxu0 %v1787
      %v1916 = vpop.f32.mrb[0].mxu0
      %v1917 = vadd.f32 0.0, %v1916
      %v1918 = vpop.f32.mrb[0].mxu0
      %1919 = vmatprep.mubr.f32.mxu0 0.0
      %1920 = vmatmul.mubr.f32.gmra.mrb[0].mxu0 %v1790
      %v1921 = vpop.f32.mrb[0].mxu0
      %v1922 = vadd.f32 0.0, %v1921
      %v1923 = vpop.f32.mrb[0].mxu0
      %1924 = vmatprep.mubr.f32.mxu0 0.0
      %1925 = vmatmul.mubr.f32.gmra.mrb[0].mxu0 %v1793
      %v1926 = vpop.f32.mrb[0].mxu0
      %v1927 = vadd.f32 0.0, %v1926
      %v1928 = vpop.f32.mrb[0].mxu0
      %1929 = vmatprep.mubr.f32.mxu0 0.0
      %1930 = vmatmul.mubr.f32.gmra.mrb[0].mxu0 %v1796
      %v1931 = vpop.f32.mrb[0].mxu0
      %v1932 = vadd.f32 0.0, %v1931
      %v1933 = vpop.f32.mrb[0].mxu0
      %1934 = vmatprep.mubr.f32.mxu0 0.0
      %1935 = vmatmul.mubr.f32.gmra.mrb[0].mxu0 %v1799
      %v1936 = vpop.f32.mrb[0].mxu0
      %v1937 = vadd.f32 0.0, %v1936
      %v1938 = vpop.f32.mrb[0].mxu0
      %1939 = vmatprep.mubr.f32.mxu0 0.0
      %1940 = vmatmul.mubr.f32.gmra.mrb[0].mxu0 %v1802
      %v1941 = vpop.f32.mrb[0].mxu0
      %v1942 = vadd.f32 0.0, %v1941
      %v1943 = vpop.f32.mrb[0].mxu0
      %1944 = vmatprep.mubr.f32.mxu0 0.0
      %1945 = vmatmul.mubr.f32.gmra.mrb[0].mxu0 %v1805
      %v1946 = vpop.f32.mrb[0].mxu0
      %v1947 = vadd.f32 0.0, %v1946
      %v1948 = vpop.f32.mrb[0].mxu0
      %1949 = vmatprep.mubr.f32.mxu0 0.0
      %1950 = vmatmul.mubr.f32.gmra.mrb[0].mxu0 %v1808
      %v1951 = vpop.f32.mrb[0].mxu0
      %v1952 = vadd.f32 0.0, %v1951
      %v1953 = vpop.f32.mrb[0].mxu0
      %1954 = vmatprep.mubr.f32.mxu0 0.0
      %1955 = vmatmul.mubr.f32.gmra.mrb[0].mxu0 %v1811
      %v1956 = vpop.f32.mrb[0].mxu0
      %v1957 = vadd.f32 0.0, %v1956
      %v1958 = vpop.f32.mrb[0].mxu0
      %1959 = vmatprep.mubr.f32.mxu0 0.0
      %1960 = vmatmul.mubr.f32.gmra.mrb[0].mxu0 %v1814
      %v1961 = vpop.f32.mrb[0].mxu0
      %v1962 = vadd.f32 0.0, %v1961
      %v1963 = vpop.f32.mrb[0].mxu0
      %1964 = vmatprep.mubr.f32.mxu0 0.0
      %1965 = vmatmul.mubr.f32.gmra.mrb[0].mxu0 %v1817
      %v1966 = vpop.f32.mrb[0].mxu0
      %v1967 = vadd.f32 0.0, %v1966
      %v1968 = vpop.f32.mrb[0].mxu0
      %1969 = vmatprep.mubr.f32.mxu0 0.0
      %1970 = vmatmul.mubr.f32.gmra.mrb[0].mxu0 %v1820
      %v1971 = vpop.f32.mrb[0].mxu0
      %v1972 = vadd.f32 0.0, %v1971
      %v1973 = vpop.f32.mrb[0].mxu0
      %1974 = vmatprep.mubr.f32.mxu0 0.0
      %1975 = vmatmul.mubr.f32.gmra.mrb[0].mxu0 %v1823
      %v1976 = vpop.f32.mrb[0].mxu0
      %v1977 = vadd.f32 0.0, %v1976
      %v1978 = vpop.f32.mrb[0].mxu0
      %1979 = vdwg.mxu0
      %v1980 = vpack.c.bf16 %v1897, %v1892
      %v1981 = vpack.c.bf16 %v1907, %v1902
      %v1982 = vpack.c.bf16 %v1917, %v1912
      %v1983 = vpack.c.bf16 %v1927, %v1922
      %v1984 = vpack.c.bf16 %v1937, %v1932
      %v1985 = vpack.c.bf16 %v1947, %v1942
      %v1986 = vpack.c.bf16 %v1957, %v1952
      %v1987 = vpack.c.bf16 %v1967, %v1962
      %v1988 = vpack.c.bf16 %v1977, %v1972
      %v1998 = vunpack.c.l.b16 %v1980
      %v1999 = vunpack.c.h.b16 %v1980
      %v2000 = vunpack.c.l.b16 %v1981
      %v2001 = vunpack.c.h.b16 %v1981
      %v2002 = vunpack.c.l.b16 %v1982
      %v2003 = vunpack.c.h.b16 %v1982
      %v2004 = vunpack.c.l.b16 %v1983
      %v2005 = vunpack.c.h.b16 %v1983
      %v2006 = vunpack.c.l.b16 %v1984
      %v2007 = vunpack.c.h.b16 %v1984
      %v2008 = vunpack.c.l.b16 %v1985
      %v2009 = vunpack.c.h.b16 %v1985
      %v2010 = vunpack.c.l.b16 %v1986
      %v2011 = vunpack.c.h.b16 %v1986
      %v2012 = vunpack.c.l.b16 %v1987
      %v2013 = vunpack.c.h.b16 %v1987
      %v2014 = vunpack.c.l.b16 %v1988
      %v2015 = vunpack.c.h.b16 %v1988
      %v2016 = vpack.c.b16 %v1998, %v1998
      %v2017 = vpack.c.b16 %v1999, %v1999
      %v2018 = vpack.c.b16 %v2000, %v2000
      %v2019 = vpack.c.b16 %v2001, %v2001
      %v2020 = vpack.c.b16 %v2002, %v2002
      %v2021 = vpack.c.b16 %v2003, %v2003
      %v2022 = vpack.c.b16 %v2004, %v2004
      %v2023 = vpack.c.b16 %v2005, %v2005
      %v2024 = vpack.c.b16 %v2006, %v2006
      %v2025 = vpack.c.b16 %v2007, %v2007
      %v2026 = vpack.c.b16 %v2008, %v2008
      %v2027 = vpack.c.b16 %v2009, %v2009
      %v2028 = vpack.c.b16 %v2010, %v2010
      %v2029 = vpack.c.b16 %v2011, %v2011
      %v2030 = vpack.c.b16 %v2012, %v2012
      %v2031 = vpack.c.b16 %v2013, %v2013
      %v2032 = vpack.c.b16 %v2014, %v2014
      %v2033 = vpack.c.b16 %v2015, %v2015
      %2052 = vst [vmem:[%s224] sm:$0xf] %v2016
      %2053 = vst [vmem:[%s224 + $0x4] sm:$0xf] %v2017
      %2054 = vst [vmem:[%s224 + $0x8] sm:$0xf] %v2018
      %2055 = vst [vmem:[%s224 + $0xc] sm:$0xf] %v2019
      %2056 = vst [vmem:[%s224 + $0x10] sm:$0xf] %v2020
      %2057 = vst [vmem:[%s224 + $0x14] sm:$0xf] %v2021
      %2058 = vst [vmem:[%s224 + $0x18] sm:$0xf] %v2022
      %2059 = vst [vmem:[%s224 + $0x1c] sm:$0xf] %v2023
      %2060 = vst [vmem:[%s224 + $0x20] sm:$0xf] %v2024
      %2061 = vst [vmem:[%s224 + $0x24] sm:$0xf] %v2025
      %2062 = vst [vmem:[%s224 + $0x28] sm:$0xf] %v2026
      %2063 = vst [vmem:[%s224 + $0x2c] sm:$0xf] %v2027
      %2064 = vst [vmem:[%s224 + $0x30] sm:$0xf] %v2028
      %2065 = vst [vmem:[%s224 + $0x34] sm:$0xf] %v2029
      %2066 = vst [vmem:[%s224 + $0x38] sm:$0xf] %v2030
      %2067 = vst [vmem:[%s224 + $0x3c] sm:$0xf] %v2031
      %2068 = vst [vmem:[%s224 + $0x40] sm:$0xf] %v2032
      %2069 = vst [vmem:[%s224 + $0x44] sm:$0xf] %v2033
      %p2070 = scmp.lt.s32.totalorder %s16, 1
      %s2071 = scalar_select %p2070, %s16, 1
      %s2072 = smul.addr %s2071, 18
      %s2073 = smul.addr %s2072, 4
      %s2074 = scalar_lea.vmem %s5, %s2073
      // Predicated region
      $region41: #{discriminator_forward.8} parent=39 // pred_check
        %p2075 = pneg %p144
      $region42: #{discriminator_forward.8} parent=39 // pred_check_branch
        %2077 = sbr.rel (%p2075) target = $region44
      $region43: #{discriminator_forward.8} parent=39 // pred_region
        _
      $region44: #{discriminator_forward.8} parent=39 // pred_fallthru
        _
    $region40: #{discriminator_forward.8} parent=5 // pred_fallthru
      _
    %p2078 = scmp.le.s32.totalorder 2, %s11
    // Predicated region
    $region45: #{discriminator_forward.8} parent=5 // pred_check
      %p2079 = pneg %p2078
    $region46: #{discriminator_forward.8} parent=5 // pred_check_branch
      %2081 = sbr.rel (%p2079) target = $region48
    $region47: #{discriminator_forward.8} parent=5 // pred_region
      %s2082 = ssub.s32 %s11, 2
      // Predicated region
      $region49: #{discriminator_forward.8} parent=47 // pred_check
        %p2083 = pneg %p150
      $region50: #{discriminator_forward.8} parent=47 // pred_check_branch
        %2085 = sbr.rel (%p2083) target = $region52
      $region51: #{discriminator_forward.8} parent=47 // pred_region
        %p2086 = scmp.lt.s32.totalorder %s17, 1
        %s2087 = scalar_select %p2086, %s17, 1
        %s2088 = smul.addr %s2087, 18
        %s2089 = smul.addr %s2088, 4
        %s2090 = scalar_lea.vmem %s5, %s2089
      $region52: #{discriminator_forward.8} parent=47 // pred_fallthru
        _
    $region48: #{discriminator_forward.8} parent=5 // pred_fallthru
      _
  $region6: #{discriminator_forward.8} parent=0 // loop_footer
    %s15 = sadd.s32 1, %s11
  $region7: #{discriminator_forward.8} parent=0 // loop_footer_branch
    %10 = sbr.rel target = $region3
  $region8: #{discriminator_forward.8} parent=0 // loop_exit
    _

// kernel: discriminator_forward.9
$region0: #{discriminator_forward.9}
  #allocation0 [shape = 'u32[]', space=smem, size = 0x4, offset = 0x4, fixed_abs, tag = 'smem constant byte address 0x4 - core index']
  #allocation1 [shape = 'u32[144,128]{1,0:T(1,128)}', space=vmem, size = 0x12000, scoped, tag = 'internal scratch']
  #allocation2 [shape = 'f32[2,128]{1,0:T(2,128)}', space=vmem, size = 0x400, scoped, tag = 'scratch operand']
  #allocation3 [shape = 'f32[1,1]{1,0:T(1,128)S(1)}', space=vmem, size = 0x200, scoped, tag = 'scoped memory for discriminator_forward.9']
  %s0 = inlined_call_operand.vmem [shape: bf16[2,18432], index: 0, kind: input, shape index: {}]
  %s1 = inlined_call_operand.vmem [shape: bf16[18432,128], index: 1, kind: input, shape index: {}]
  %s2 = inlined_call_operand.vmem [shape: f32[1,128], index: 2, kind: input, shape index: {}]
  %s3 = inlined_call_operand.vmem [shape: f32[128,1], index: 3, kind: input, shape index: {}]
  %s4 = inlined_call_operand.<no memory space> [shape: f32[1,1], index: 4, kind: input, shape index: {}]
  %s5 = inlined_call_operand.vmem [shape: f32[2,1], index: 5, kind: output, shape index: {}]
  %s6 = sld [smem:[#allocation0]]
  $region61: #{discriminator_forward.9} parent=0
    _
  %s8 = ssub.s32 1, %s6
  %s9 = scalar_select 0, %s8, %s6
  %v10 = vstv %s4
  %11 = vst [vmem:[#allocation3] sm:$0x1] %v10
  loop: start=0, step=1, limit=11
  $region2: #{discriminator_forward.9} parent=0 // loop_pre_header
    _
  $region3: #{discriminator_forward.9} parent=0 // loop_header
    %s13 = sphi 0, %s17
    %p14 = scmp.ge.s32.totalorder %s13, 11
    %s23 = sphi 0, %s25
    %s26 = sphi 0, %s23
    %s27 = sphi 0, %s26
    %s43 = sphi 0, %s27
    %s49 = sphi 0, %s51
    %s52 = sphi 0, %s49
    %s53 = sphi 0, %s52
    %s69 = sphi 0, %s53
    %s73 = sphi 0, %s73
    %s75 = sphi 0, %s73
    %s76 = sphi 0, %s75
    %s90 = sphi 0, %s76
    %s94 = sphi 0, %s94
    %s96 = sphi 0, %s94
    %s97 = sphi 0, %s96
    %s111 = sphi 0, %s97
    %s115 = sphi 0, %s115
    %s117 = sphi 0, %s115
    %s118 = sphi 0, %s117
    %s132 = sphi 0, %s118
    %s136 = sphi 0, %s136
    %s138 = sphi 0, %s136
    %s139 = sphi 0, %s138
    %s153 = sphi 0, %s139
  $region4: #{discriminator_forward.9} parent=0 // loop_header_branch
    %16 = sbr.rel (%p14) target = $region8
  $region5: #{discriminator_forward.9} parent=0 // loop_body
    %s18 = ssub.s32 %s13, 1
    %s19 = ssub.s32 %s13, 2
    %s20 = sadd.s32 %s13, 1
    %s21 = ssub.s32 %s13, %s20
    %p22 = scmp.eq.s32.totalorder %s21, 0
    %s24 = sadd.s32 %s23, 1
    %s25 = scalar_select %p22, %s23, %s24
    %p28 = pneg %p22
    %p29 = scmp.eq.s32.totalorder %s13, 8
    %p30 = por %p28, %p29
    %p31 = scmp.ne.s32.totalorder %s23, %s26
    %p32 = scmp.eq.s32.totalorder %s13, 0
    %p33 = por %p31, %p32
    %p34 = scmp.ne.s32.totalorder %s23, %s26
    %p35 = scmp.eq.s32.totalorder %s18, 8
    %p36 = por %p34, %p35
    %p37 = scmp.ne.s32.totalorder %s26, %s27
    %p38 = scmp.eq.s32.totalorder %s18, 0
    %p39 = por %p37, %p38
    %p40 = scmp.ne.s32.totalorder %s26, %s27
    %p41 = scmp.eq.s32.totalorder %s19, 8
    %p42 = por %p40, %p41
    %p44 = scmp.ne.s32.totalorder %s27, %s43
    %p45 = scmp.eq.s32.totalorder %s19, 0
    %p46 = por %p44, %p45
    %s47 = ssub.s32 %s13, %s20
    %p48 = scmp.eq.s32.totalorder %s47, 0
    %s50 = sadd.s32 %s49, 1
    %s51 = scalar_select %p48, %s49, %s50
    %p54 = pneg %p48
    %p55 = scmp.eq.s32.totalorder %s13, 8
    %p56 = por %p54, %p55
    %p57 = scmp.ne.s32.totalorder %s49, %s52
    %p58 = scmp.eq.s32.totalorder %s13, 0
    %p59 = por %p57, %p58
    %p60 = scmp.ne.s32.totalorder %s49, %s52
    %p61 = scmp.eq.s32.totalorder %s18, 8
    %p62 = por %p60, %p61
    %p63 = scmp.ne.s32.totalorder %s52, %s53
    %p64 = scmp.eq.s32.totalorder %s18, 0
    %p65 = por %p63, %p64
    %p66 = scmp.ne.s32.totalorder %s52, %s53
    %p67 = scmp.eq.s32.totalorder %s19, 8
    %p68 = por %p66, %p67
    %p70 = scmp.ne.s32.totalorder %s53, %s69
    %p71 = scmp.eq.s32.totalorder %s19, 0
    %p72 = por %p70, %p71
    %s74 = sadd.s32 %s73, 1
    %p77 = scmp.eq.s32.totalorder %s13, 8
    %p78 = scmp.ne.s32.totalorder %s73, %s75
    %p79 = scmp.eq.s32.totalorder %s13, 0
    %p80 = por %p78, %p79
    %p81 = scmp.ne.s32.totalorder %s73, %s75
    %p82 = scmp.eq.s32.totalorder %s18, 8
    %p83 = por %p81, %p82
    %p84 = scmp.ne.s32.totalorder %s75, %s76
    %p85 = scmp.eq.s32.totalorder %s18, 0
    %p86 = por %p84, %p85
    %p87 = scmp.ne.s32.totalorder %s75, %s76
    %p88 = scmp.eq.s32.totalorder %s19, 8
    %p89 = por %p87, %p88
    %p91 = scmp.ne.s32.totalorder %s76, %s90
    %p92 = scmp.eq.s32.totalorder %s19, 0
    %p93 = por %p91, %p92
    %s95 = sadd.s32 %s94, 1
    %p98 = scmp.eq.s32.totalorder %s13, 8
    %p99 = scmp.ne.s32.totalorder %s94, %s96
    %p100 = scmp.eq.s32.totalorder %s13, 0
    %p101 = por %p99, %p100
    %p102 = scmp.ne.s32.totalorder %s94, %s96
    %p103 = scmp.eq.s32.totalorder %s18, 8
    %p104 = por %p102, %p103
    %p105 = scmp.ne.s32.totalorder %s96, %s97
    %p106 = scmp.eq.s32.totalorder %s18, 0
    %p107 = por %p105, %p106
    %p108 = scmp.ne.s32.totalorder %s96, %s97
    %p109 = scmp.eq.s32.totalorder %s19, 8
    %p110 = por %p108, %p109
    %p112 = scmp.ne.s32.totalorder %s97, %s111
    %p113 = scmp.eq.s32.totalorder %s19, 0
    %p114 = por %p112, %p113
    %s116 = sadd.s32 %s115, 1
    %p119 = scmp.eq.s32.totalorder %s13, 8
    %p120 = scmp.ne.s32.totalorder %s115, %s117
    %p121 = scmp.eq.s32.totalorder %s13, 0
    %p122 = por %p120, %p121
    %p123 = scmp.ne.s32.totalorder %s115, %s117
    %p124 = scmp.eq.s32.totalorder %s18, 8
    %p125 = por %p123, %p124
    %p126 = scmp.ne.s32.totalorder %s117, %s118
    %p127 = scmp.eq.s32.totalorder %s18, 0
    %p128 = por %p126, %p127
    %p129 = scmp.ne.s32.totalorder %s117, %s118
    %p130 = scmp.eq.s32.totalorder %s19, 8
    %p131 = por %p129, %p130
    %p133 = scmp.ne.s32.totalorder %s118, %s132
    %p134 = scmp.eq.s32.totalorder %s19, 0
    %p135 = por %p133, %p134
    %s137 = sadd.s32 %s136, 1
    %p140 = scmp.eq.s32.totalorder %s13, 8
    %p141 = scmp.ne.s32.totalorder %s136, %s138
    %p142 = scmp.eq.s32.totalorder %s13, 0
    %p143 = por %p141, %p142
    %p144 = scmp.ne.s32.totalorder %s136, %s138
    %p145 = scmp.eq.s32.totalorder %s18, 8
    %p146 = por %p144, %p145
    %p147 = scmp.ne.s32.totalorder %s138, %s139
    %p148 = scmp.eq.s32.totalorder %s18, 0
    %p149 = por %p147, %p148
    %p150 = scmp.ne.s32.totalorder %s138, %s139
    %p151 = scmp.eq.s32.totalorder %s19, 8
    %p152 = por %p150, %p151
    %p154 = scmp.ne.s32.totalorder %s139, %s153
    %p155 = scmp.eq.s32.totalorder %s19, 0
    %p156 = por %p154, %p155
    %p157 = scmp.le.s32.totalorder 1, %s13
    %p158 = scmp.lt.s32.totalorder %s13, 10
    %p159 = pnand %p157, %p158
    %p160 = pneg %p159
    // Predicated region
    $region9: #{discriminator_forward.9} parent=5 // pred_check
      _
    $region10: #{discriminator_forward.9} parent=5 // pred_check_branch
      %162 = sbr.rel (%p159) target = $region12
    $region11: #{discriminator_forward.9} parent=5 // pred_region
      %s163 = ssub.s32 %s13, 1
      // Predicated region
      $region13: #{discriminator_forward.9} parent=11 // pred_check
        %p164 = pneg %p86
      $region14: #{discriminator_forward.9} parent=11 // pred_check_branch
        %166 = sbr.rel (%p164) target = $region16
      $region15: #{discriminator_forward.9} parent=11 // pred_region
        _
      $region16: #{discriminator_forward.9} parent=11 // pred_fallthru
        _
      // Predicated region
      $region17: #{discriminator_forward.9} parent=11 // pred_check
        %p167 = pneg %p107
      $region18: #{discriminator_forward.9} parent=11 // pred_check_branch
        %169 = sbr.rel (%p167) target = $region20
      $region19: #{discriminator_forward.9} parent=11 // pred_region
        _
      $region20: #{discriminator_forward.9} parent=11 // pred_fallthru
        _
      // Predicated region
      $region21: #{discriminator_forward.9} parent=11 // pred_check
        %p170 = pneg %p128
      $region22: #{discriminator_forward.9} parent=11 // pred_check_branch
        %172 = sbr.rel (%p170) target = $region24
      $region23: #{discriminator_forward.9} parent=11 // pred_region
        _
      $region24: #{discriminator_forward.9} parent=11 // pred_fallthru
        _
    $region12: #{discriminator_forward.9} parent=5 // pred_fallthru
      _
    %p173 = scmp.lt.s32.totalorder %s13, 9
    // Predicated region
    $region25: #{discriminator_forward.9} parent=5 // pred_check
      %p174 = pneg %p173
    $region26: #{discriminator_forward.9} parent=5 // pred_check_branch
      %176 = sbr.rel (%p174) target = $region28
    $region27: #{discriminator_forward.9} parent=5 // pred_region
      // Predicated region
      $region29: #{discriminator_forward.9} parent=27 // pred_check
        %p177 = pneg %p33
      $region30: #{discriminator_forward.9} parent=27 // pred_check_branch
        %179 = sbr.rel (%p177) target = $region32
      $region31: #{discriminator_forward.9} parent=27 // pred_region
        %s180 = smul.u32 16, %s13
        %p181 = scmp.lt.s32.totalorder %s180, 143
        %s182 = scalar_select %p181, %s180, 143
        %s183 = scalar_lea.vmem %s0, %s182
        %s184 = smul.u32 16, %s13
      $region32: #{discriminator_forward.9} parent=27 // pred_fallthru
        _
      // Predicated region
      $region33: #{discriminator_forward.9} parent=27 // pred_check
        %p185 = pneg %p59
      $region34: #{discriminator_forward.9} parent=27 // pred_check_branch
        %187 = sbr.rel (%p185) target = $region36
      $region35: #{discriminator_forward.9} parent=27 // pred_region
        %s188 = smul.u32 256, %s13
        %p189 = scmp.lt.s32.totalorder %s188, 2303
        %s190 = scalar_select %p189, %s188, 2303
        %s191 = smul.addr %s190, 4
        %s192 = scalar_lea.vmem %s1, %s191
        %s193 = smul.u32 256, %s13
      $region36: #{discriminator_forward.9} parent=27 // pred_fallthru
        _
    $region28: #{discriminator_forward.9} parent=5 // pred_fallthru
      _
    %p194 = scmp.le.s32.totalorder 1, %s13
    %p195 = scmp.lt.s32.totalorder %s13, 10
    %p196 = pnand %p194, %p195
    %p197 = pneg %p196
    // Predicated region
    $region37: #{discriminator_forward.9} parent=5 // pred_check
      _
    $region38: #{discriminator_forward.9} parent=5 // pred_check_branch
      %199 = sbr.rel (%p196) target = $region40
    $region39: #{discriminator_forward.9} parent=5 // pred_region
      %s200 = ssub.s32 %s13, 1
      %s201 = smul.u32 16, %s18
      %p202 = scmp.lt.s32.totalorder %s201, 143
      %s203 = scalar_select %p202, %s201, 143
      %s204 = scalar_lea.vmem %s0, %s203
      %p205 = pneg %p39
      %p206 = pneg %p36
      %s207 = smul.u32 256, %s18
      %p208 = scmp.lt.s32.totalorder %s207, 2303
      %s209 = scalar_select %p208, %s207, 2303
      %s210 = smul.addr %s209, 4
      %s211 = scalar_lea.vmem %s1, %s210
      %p212 = pneg %p65
      %p213 = pneg %p62
      %p214 = pneg %p86
      %p215 = pneg %p83
      %p216 = pneg %p107
      %p217 = pneg %p104
      %p218 = pneg %p128
      %p219 = pneg %p125
      %p220 = pneg %p149
      %p221 = pneg %p146
      %s222 = smul.u32 16, %s18
      %p223 = scmp.lt.s32.totalorder %s222, 143
      %s224 = scalar_select %p223, %s222, 143
      %s225 = scalar_lea.vmem %s0, %s224
      %s226 = smul.u32 16, %s18
      %s227 = smul.u32 256, %s18
      %p228 = scmp.lt.s32.totalorder %s227, 2303
      %s229 = scalar_select %p228, %s227, 2303
      %s230 = smul.addr %s229, 4
      %s231 = scalar_lea.vmem %s1, %s230
      %s232 = smul.u32 256, %s18
      %p234 = scmp.eq.s32.totalorder %s18, 0
      // Predicated region
      $region41: #{discriminator_forward.9} parent=39 // pred_check
        %p235 = pneg %p234
      $region42: #{discriminator_forward.9} parent=39 // pred_check_branch
        %237 = sbr.rel (%p235) target = $region44
      $region43: #{discriminator_forward.9} parent=39 // pred_region
        %238 = vst [vmem:[#allocation2] sm:$0x3] 0.0
      $region44: #{discriminator_forward.9} parent=39 // pred_fallthru
        _
      %v239 = vld [vmem:[#allocation2] sm:$0x3]
      %v240 = vld [vmem:[%s225] sm:$0xff]
      %v241 = vld [vmem:[%s225 + $0x8] sm:$0xff]
      %v242 = vld [vmem:[%s231] sm:$0xf]
      %v243 = vld [vmem:[%s231 + $0x4] sm:$0xf]
      %v244 = vld [vmem:[%s231 + $0x8] sm:$0xf]
      %v245 = vld [vmem:[%s231 + $0xc] sm:$0xf]
      %v246 = vld [vmem:[%s231 + $0x10] sm:$0xf]
      %v247 = vld [vmem:[%s231 + $0x14] sm:$0xf]
      %v248 = vld [vmem:[%s231 + $0x18] sm:$0xf]
      %v249 = vld [vmem:[%s231 + $0x1c] sm:$0xf]
      %v250 = vld [vmem:[%s231 + $0x20] sm:$0xf]
      %v251 = vld [vmem:[%s231 + $0x24] sm:$0xf]
      %v252 = vld [vmem:[%s231 + $0x28] sm:$0xf]
      %v253 = vld [vmem:[%s231 + $0x2c] sm:$0xf]
      %v254 = vld [vmem:[%s231 + $0x30] sm:$0xf]
      %v255 = vld [vmem:[%s231 + $0x34] sm:$0xf]
      %v256 = vld [vmem:[%s231 + $0x38] sm:$0xf]
      %v257 = vld [vmem:[%s231 + $0x3c] sm:$0xf]
      %v258 = vld [vmem:[%s231 + $0x40] sm:$0xf]
      %v259 = vld [vmem:[%s231 + $0x44] sm:$0xf]
      %v260 = vld [vmem:[%s231 + $0x48] sm:$0xf]
      %v261 = vld [vmem:[%s231 + $0x4c] sm:$0xf]
      %v262 = vld [vmem:[%s231 + $0x50] sm:$0xf]
      %v263 = vld [vmem:[%s231 + $0x54] sm:$0xf]
      %v264 = vld [vmem:[%s231 + $0x58] sm:$0xf]
      %v265 = vld [vmem:[%s231 + $0x5c] sm:$0xf]
      %v266 = vld [vmem:[%s231 + $0x60] sm:$0xf]
      %v267 = vld [vmem:[%s231 + $0x64] sm:$0xf]
      %v268 = vld [vmem:[%s231 + $0x68] sm:$0xf]
      %v269 = vld [vmem:[%s231 + $0x6c] sm:$0xf]
      %v270 = vld [vmem:[%s231 + $0x70] sm:$0xf]
      %v271 = vld [vmem:[%s231 + $0x74] sm:$0xf]
      %v272 = vld [vmem:[%s231 + $0x78] sm:$0xf]
      %v273 = vld [vmem:[%s231 + $0x7c] sm:$0xf]
      %v274 = vld [vmem:[%s231 + $0x80] sm:$0xf]
      %v275 = vld [vmem:[%s231 + $0x84] sm:$0xf]
      %v276 = vld [vmem:[%s231 + $0x88] sm:$0xf]
      %v277 = vld [vmem:[%s231 + $0x8c] sm:$0xf]
      %v278 = vld [vmem:[%s231 + $0x90] sm:$0xf]
      %v279 = vld [vmem:[%s231 + $0x94] sm:$0xf]
      %v280 = vld [vmem:[%s231 + $0x98] sm:$0xf]
      %v281 = vld [vmem:[%s231 + $0x9c] sm:$0xf]
      %v282 = vld [vmem:[%s231 + $0xa0] sm:$0xf]
      %v283 = vld [vmem:[%s231 + $0xa4] sm:$0xf]
      %v284 = vld [vmem:[%s231 + $0xa8] sm:$0xf]
      %v285 = vld [vmem:[%s231 + $0xac] sm:$0xf]
      %v286 = vld [vmem:[%s231 + $0xb0] sm:$0xf]
      %v287 = vld [vmem:[%s231 + $0xb4] sm:$0xf]
      %v288 = vld [vmem:[%s231 + $0xb8] sm:$0xf]
      %v289 = vld [vmem:[%s231 + $0xbc] sm:$0xf]
      %v290 = vld [vmem:[%s231 + $0xc0] sm:$0xf]
      %v291 = vld [vmem:[%s231 + $0xc4] sm:$0xf]
      %v292 = vld [vmem:[%s231 + $0xc8] sm:$0xf]
      %v293 = vld [vmem:[%s231 + $0xcc] sm:$0xf]
      %v294 = vld [vmem:[%s231 + $0xd0] sm:$0xf]
      %v295 = vld [vmem:[%s231 + $0xd4] sm:$0xf]
      %v296 = vld [vmem:[%s231 + $0xd8] sm:$0xf]
      %v297 = vld [vmem:[%s231 + $0xdc] sm:$0xf]
      %v298 = vld [vmem:[%s231 + $0xe0] sm:$0xf]
      %v299 = vld [vmem:[%s231 + $0xe4] sm:$0xf]
      %v300 = vld [vmem:[%s231 + $0xe8] sm:$0xf]
      %v301 = vld [vmem:[%s231 + $0xec] sm:$0xf]
      %v302 = vld [vmem:[%s231 + $0xf0] sm:$0xf]
      %v303 = vld [vmem:[%s231 + $0xf4] sm:$0xf]
      %v304 = vld [vmem:[%s231 + $0xf8] sm:$0xf]
      %v305 = vld [vmem:[%s231 + $0xfc] sm:$0xf]
      %v306 = vld [vmem:[%s231 + $0x100] sm:$0xf]
      %v307 = vld [vmem:[%s231 + $0x104] sm:$0xf]
      %v308 = vld [vmem:[%s231 + $0x108] sm:$0xf]
      %v309 = vld [vmem:[%s231 + $0x10c] sm:$0xf]
      %v310 = vld [vmem:[%s231 + $0x110] sm:$0xf]
      %v311 = vld [vmem:[%s231 + $0x114] sm:$0xf]
      %v312 = vld [vmem:[%s231 + $0x118] sm:$0xf]
      %v313 = vld [vmem:[%s231 + $0x11c] sm:$0xf]
      %v314 = vld [vmem:[%s231 + $0x120] sm:$0xf]
      %v315 = vld [vmem:[%s231 + $0x124] sm:$0xf]
      %v316 = vld [vmem:[%s231 + $0x128] sm:$0xf]
      %v317 = vld [vmem:[%s231 + $0x12c] sm:$0xf]
      %v318 = vld [vmem:[%s231 + $0x130] sm:$0xf]
      %v319 = vld [vmem:[%s231 + $0x134] sm:$0xf]
      %v320 = vld [vmem:[%s231 + $0x138] sm:$0xf]
      %v321 = vld [vmem:[%s231 + $0x13c] sm:$0xf]
      %v322 = vld [vmem:[%s231 + $0x140] sm:$0xf]
      %v323 = vld [vmem:[%s231 + $0x144] sm:$0xf]
      %v324 = vld [vmem:[%s231 + $0x148] sm:$0xf]
      %v325 = vld [vmem:[%s231 + $0x14c] sm:$0xf]
      %v326 = vld [vmem:[%s231 + $0x150] sm:$0xf]
      %v327 = vld [vmem:[%s231 + $0x154] sm:$0xf]
      %v328 = vld [vmem:[%s231 + $0x158] sm:$0xf]
      %v329 = vld [vmem:[%s231 + $0x15c] sm:$0xf]
      %v330 = vld [vmem:[%s231 + $0x160] sm:$0xf]
      %v331 = vld [vmem:[%s231 + $0x164] sm:$0xf]
      %v332 = vld [vmem:[%s231 + $0x168] sm:$0xf]
      %v333 = vld [vmem:[%s231 + $0x16c] sm:$0xf]
      %v334 = vld [vmem:[%s231 + $0x170] sm:$0xf]
      %v335 = vld [vmem:[%s231 + $0x174] sm:$0xf]
      %v336 = vld [vmem:[%s231 + $0x178] sm:$0xf]
      %v337 = vld [vmem:[%s231 + $0x17c] sm:$0xf]
      %v338 = vld [vmem:[%s231 + $0x180] sm:$0xf]
      %v339 = vld [vmem:[%s231 + $0x184] sm:$0xf]
      %v340 = vld [vmem:[%s231 + $0x188] sm:$0xf]
      %v341 = vld [vmem:[%s231 + $0x18c] sm:$0xf]
      %v342 = vld [vmem:[%s231 + $0x190] sm:$0xf]
      %v343 = vld [vmem:[%s231 + $0x194] sm:$0xf]
      %v344 = vld [vmem:[%s231 + $0x198] sm:$0xf]
      %v345 = vld [vmem:[%s231 + $0x19c] sm:$0xf]
      %v346 = vld [vmem:[%s231 + $0x1a0] sm:$0xf]
      %v347 = vld [vmem:[%s231 + $0x1a4] sm:$0xf]
      %v348 = vld [vmem:[%s231 + $0x1a8] sm:$0xf]
      %v349 = vld [vmem:[%s231 + $0x1ac] sm:$0xf]
      %v350 = vld [vmem:[%s231 + $0x1b0] sm:$0xf]
      %v351 = vld [vmem:[%s231 + $0x1b4] sm:$0xf]
      %v352 = vld [vmem:[%s231 + $0x1b8] sm:$0xf]
      %v353 = vld [vmem:[%s231 + $0x1bc] sm:$0xf]
      %v354 = vld [vmem:[%s231 + $0x1c0] sm:$0xf]
      %v355 = vld [vmem:[%s231 + $0x1c4] sm:$0xf]
      %v356 = vld [vmem:[%s231 + $0x1c8] sm:$0xf]
      %v357 = vld [vmem:[%s231 + $0x1cc] sm:$0xf]
      %v358 = vld [vmem:[%s231 + $0x1d0] sm:$0xf]
      %v359 = vld [vmem:[%s231 + $0x1d4] sm:$0xf]
      %v360 = vld [vmem:[%s231 + $0x1d8] sm:$0xf]
      %v361 = vld [vmem:[%s231 + $0x1dc] sm:$0xf]
      %v362 = vld [vmem:[%s231 + $0x1e0] sm:$0xf]
      %v363 = vld [vmem:[%s231 + $0x1e4] sm:$0xf]
      %v364 = vld [vmem:[%s231 + $0x1e8] sm:$0xf]
      %v365 = vld [vmem:[%s231 + $0x1ec] sm:$0xf]
      %v366 = vld [vmem:[%s231 + $0x1f0] sm:$0xf]
      %v367 = vld [vmem:[%s231 + $0x1f4] sm:$0xf]
      %v368 = vld [vmem:[%s231 + $0x1f8] sm:$0xf]
      %v369 = vld [vmem:[%s231 + $0x1fc] sm:$0xf]
      %v370 = vld [vmem:[%s231 + $0x200] sm:$0xf]
      %v371 = vld [vmem:[%s231 + $0x204] sm:$0xf]
      %v372 = vld [vmem:[%s231 + $0x208] sm:$0xf]
      %v373 = vld [vmem:[%s231 + $0x20c] sm:$0xf]
      %v374 = vld [vmem:[%s231 + $0x210] sm:$0xf]
      %v375 = vld [vmem:[%s231 + $0x214] sm:$0xf]
      %v376 = vld [vmem:[%s231 + $0x218] sm:$0xf]
      %v377 = vld [vmem:[%s231 + $0x21c] sm:$0xf]
      %v378 = vld [vmem:[%s231 + $0x220] sm:$0xf]
      %v379 = vld [vmem:[%s231 + $0x224] sm:$0xf]
      %v380 = vld [vmem:[%s231 + $0x228] sm:$0xf]
      %v381 = vld [vmem:[%s231 + $0x22c] sm:$0xf]
      %v382 = vld [vmem:[%s231 + $0x230] sm:$0xf]
      %v383 = vld [vmem:[%s231 + $0x234] sm:$0xf]
      %v384 = vld [vmem:[%s231 + $0x238] sm:$0xf]
      %v385 = vld [vmem:[%s231 + $0x23c] sm:$0xf]
      %v386 = vld [vmem:[%s231 + $0x240] sm:$0xf]
      %v387 = vld [vmem:[%s231 + $0x244] sm:$0xf]
      %v388 = vld [vmem:[%s231 + $0x248] sm:$0xf]
      %v389 = vld [vmem:[%s231 + $0x24c] sm:$0xf]
      %v390 = vld [vmem:[%s231 + $0x250] sm:$0xf]
      %v391 = vld [vmem:[%s231 + $0x254] sm:$0xf]
      %v392 = vld [vmem:[%s231 + $0x258] sm:$0xf]
      %v393 = vld [vmem:[%s231 + $0x25c] sm:$0xf]
      %v394 = vld [vmem:[%s231 + $0x260] sm:$0xf]
      %v395 = vld [vmem:[%s231 + $0x264] sm:$0xf]
      %v396 = vld [vmem:[%s231 + $0x268] sm:$0xf]
      %v397 = vld [vmem:[%s231 + $0x26c] sm:$0xf]
      %v398 = vld [vmem:[%s231 + $0x270] sm:$0xf]
      %v399 = vld [vmem:[%s231 + $0x274] sm:$0xf]
      %v400 = vld [vmem:[%s231 + $0x278] sm:$0xf]
      %v401 = vld [vmem:[%s231 + $0x27c] sm:$0xf]
      %v402 = vld [vmem:[%s231 + $0x280] sm:$0xf]
      %v403 = vld [vmem:[%s231 + $0x284] sm:$0xf]
      %v404 = vld [vmem:[%s231 + $0x288] sm:$0xf]
      %v405 = vld [vmem:[%s231 + $0x28c] sm:$0xf]
      %v406 = vld [vmem:[%s231 + $0x290] sm:$0xf]
      %v407 = vld [vmem:[%s231 + $0x294] sm:$0xf]
      %v408 = vld [vmem:[%s231 + $0x298] sm:$0xf]
      %v409 = vld [vmem:[%s231 + $0x29c] sm:$0xf]
      %v410 = vld [vmem:[%s231 + $0x2a0] sm:$0xf]
      %v411 = vld [vmem:[%s231 + $0x2a4] sm:$0xf]
      %v412 = vld [vmem:[%s231 + $0x2a8] sm:$0xf]
      %v413 = vld [vmem:[%s231 + $0x2ac] sm:$0xf]
      %v414 = vld [vmem:[%s231 + $0x2b0] sm:$0xf]
      %v415 = vld [vmem:[%s231 + $0x2b4] sm:$0xf]
      %v416 = vld [vmem:[%s231 + $0x2b8] sm:$0xf]
      %v417 = vld [vmem:[%s231 + $0x2bc] sm:$0xf]
      %v418 = vld [vmem:[%s231 + $0x2c0] sm:$0xf]
      %v419 = vld [vmem:[%s231 + $0x2c4] sm:$0xf]
      %v420 = vld [vmem:[%s231 + $0x2c8] sm:$0xf]
      %v421 = vld [vmem:[%s231 + $0x2cc] sm:$0xf]
      %v422 = vld [vmem:[%s231 + $0x2d0] sm:$0xf]
      %v423 = vld [vmem:[%s231 + $0x2d4] sm:$0xf]
      %v424 = vld [vmem:[%s231 + $0x2d8] sm:$0xf]
      %v425 = vld [vmem:[%s231 + $0x2dc] sm:$0xf]
      %v426 = vld [vmem:[%s231 + $0x2e0] sm:$0xf]
      %v427 = vld [vmem:[%s231 + $0x2e4] sm:$0xf]
      %v428 = vld [vmem:[%s231 + $0x2e8] sm:$0xf]
      %v429 = vld [vmem:[%s231 + $0x2ec] sm:$0xf]
      %v430 = vld [vmem:[%s231 + $0x2f0] sm:$0xf]
      %v431 = vld [vmem:[%s231 + $0x2f4] sm:$0xf]
      %v432 = vld [vmem:[%s231 + $0x2f8] sm:$0xf]
      %v433 = vld [vmem:[%s231 + $0x2fc] sm:$0xf]
      %v434 = vld [vmem:[%s231 + $0x300] sm:$0xf]
      %v435 = vld [vmem:[%s231 + $0x304] sm:$0xf]
      %v436 = vld [vmem:[%s231 + $0x308] sm:$0xf]
      %v437 = vld [vmem:[%s231 + $0x30c] sm:$0xf]
      %v438 = vld [vmem:[%s231 + $0x310] sm:$0xf]
      %v439 = vld [vmem:[%s231 + $0x314] sm:$0xf]
      %v440 = vld [vmem:[%s231 + $0x318] sm:$0xf]
      %v441 = vld [vmem:[%s231 + $0x31c] sm:$0xf]
      %v442 = vld [vmem:[%s231 + $0x320] sm:$0xf]
      %v443 = vld [vmem:[%s231 + $0x324] sm:$0xf]
      %v444 = vld [vmem:[%s231 + $0x328] sm:$0xf]
      %v445 = vld [vmem:[%s231 + $0x32c] sm:$0xf]
      %v446 = vld [vmem:[%s231 + $0x330] sm:$0xf]
      %v447 = vld [vmem:[%s231 + $0x334] sm:$0xf]
      %v448 = vld [vmem:[%s231 + $0x338] sm:$0xf]
      %v449 = vld [vmem:[%s231 + $0x33c] sm:$0xf]
      %v450 = vld [vmem:[%s231 + $0x340] sm:$0xf]
      %v451 = vld [vmem:[%s231 + $0x344] sm:$0xf]
      %v452 = vld [vmem:[%s231 + $0x348] sm:$0xf]
      %v453 = vld [vmem:[%s231 + $0x34c] sm:$0xf]
      %v454 = vld [vmem:[%s231 + $0x350] sm:$0xf]
      %v455 = vld [vmem:[%s231 + $0x354] sm:$0xf]
      %v456 = vld [vmem:[%s231 + $0x358] sm:$0xf]
      %v457 = vld [vmem:[%s231 + $0x35c] sm:$0xf]
      %v458 = vld [vmem:[%s231 + $0x360] sm:$0xf]
      %v459 = vld [vmem:[%s231 + $0x364] sm:$0xf]
      %v460 = vld [vmem:[%s231 + $0x368] sm:$0xf]
      %v461 = vld [vmem:[%s231 + $0x36c] sm:$0xf]
      %v462 = vld [vmem:[%s231 + $0x370] sm:$0xf]
      %v463 = vld [vmem:[%s231 + $0x374] sm:$0xf]
      %v464 = vld [vmem:[%s231 + $0x378] sm:$0xf]
      %v465 = vld [vmem:[%s231 + $0x37c] sm:$0xf]
      %v466 = vld [vmem:[%s231 + $0x380] sm:$0xf]
      %v467 = vld [vmem:[%s231 + $0x384] sm:$0xf]
      %v468 = vld [vmem:[%s231 + $0x388] sm:$0xf]
      %v469 = vld [vmem:[%s231 + $0x38c] sm:$0xf]
      %v470 = vld [vmem:[%s231 + $0x390] sm:$0xf]
      %v471 = vld [vmem:[%s231 + $0x394] sm:$0xf]
      %v472 = vld [vmem:[%s231 + $0x398] sm:$0xf]
      %v473 = vld [vmem:[%s231 + $0x39c] sm:$0xf]
      %v474 = vld [vmem:[%s231 + $0x3a0] sm:$0xf]
      %v475 = vld [vmem:[%s231 + $0x3a4] sm:$0xf]
      %v476 = vld [vmem:[%s231 + $0x3a8] sm:$0xf]
      %v477 = vld [vmem:[%s231 + $0x3ac] sm:$0xf]
      %v478 = vld [vmem:[%s231 + $0x3b0] sm:$0xf]
      %v479 = vld [vmem:[%s231 + $0x3b4] sm:$0xf]
      %v480 = vld [vmem:[%s231 + $0x3b8] sm:$0xf]
      %v481 = vld [vmem:[%s231 + $0x3bc] sm:$0xf]
      %v482 = vld [vmem:[%s231 + $0x3c0] sm:$0xf]
      %v483 = vld [vmem:[%s231 + $0x3c4] sm:$0xf]
      %v484 = vld [vmem:[%s231 + $0x3c8] sm:$0xf]
      %v485 = vld [vmem:[%s231 + $0x3cc] sm:$0xf]
      %v486 = vld [vmem:[%s231 + $0x3d0] sm:$0xf]
      %v487 = vld [vmem:[%s231 + $0x3d4] sm:$0xf]
      %v488 = vld [vmem:[%s231 + $0x3d8] sm:$0xf]
      %v489 = vld [vmem:[%s231 + $0x3dc] sm:$0xf]
      %v490 = vld [vmem:[%s231 + $0x3e0] sm:$0xf]
      %v491 = vld [vmem:[%s231 + $0x3e4] sm:$0xf]
      %v492 = vld [vmem:[%s231 + $0x3e8] sm:$0xf]
      %v493 = vld [vmem:[%s231 + $0x3ec] sm:$0xf]
      %v494 = vld [vmem:[%s231 + $0x3f0] sm:$0xf]
      %v495 = vld [vmem:[%s231 + $0x3f4] sm:$0xf]
      %v496 = vld [vmem:[%s231 + $0x3f8] sm:$0xf]
      %v497 = vld [vmem:[%s231 + $0x3fc] sm:$0xf]
      %v500 = vcombine.high %v240, %v240
      %v502 = vunpack.c.l.s4 1966171168
      %v503 = vunpack.c.0.s8 %v502
      %v504 = vlaneseq
      %v505 = vshrl.u32 %v504, 7
      %v506 = vsub.s32 %v503, %v505
      %v507 = vrot.slane %v240, %v506
      %v509 = vunpack.c.l.s4 1966171168
      %v510 = vunpack.c.0.s8 %v509
      %v511 = vlaneseq
      %v512 = vshrl.u32 %v511, 7
      %v513 = vsub.s32 %v510, %v512
      %v514 = vrot.slane %v500, %v513
      %v515 = vcombine.high %v507, %v507
      %v516 = vcombine.high %v514, %v514
      %v518 = vunpack.c.l.s4 1966171168
      %v519 = vunpack.c.0.s8 %v518
      %v520 = vlaneseq
      %v521 = vshrl.u32 %v520, 7
      %v522 = vsub.s32 %v519, %v521
      %v523 = vrot.slane %v507, %v522
      %v525 = vunpack.c.l.s4 1966171168
      %v526 = vunpack.c.0.s8 %v525
      %v527 = vlaneseq
      %v528 = vshrl.u32 %v527, 7
      %v529 = vsub.s32 %v526, %v528
      %v530 = vrot.slane %v514, %v529
      %v532 = vunpack.c.l.s4 1966171168
      %v533 = vunpack.c.0.s8 %v532
      %v534 = vlaneseq
      %v535 = vshrl.u32 %v534, 7
      %v536 = vsub.s32 %v533, %v535
      %v537 = vrot.slane %v515, %v536
      %v539 = vunpack.c.l.s4 1966171168
      %v540 = vunpack.c.0.s8 %v539
      %v541 = vlaneseq
      %v542 = vshrl.u32 %v541, 7
      %v543 = vsub.s32 %v540, %v542
      %v544 = vrot.slane %v516, %v543
      %v545 = vcombine.high %v523, %v523
      %v546 = vcombine.high %v530, %v530
      %v547 = vcombine.high %v537, %v537
      %v548 = vcombine.high %v544, %v544
      %v549 = vcombine.high %v241, %v241
      %v551 = vunpack.c.l.s4 1966171168
      %v552 = vunpack.c.0.s8 %v551
      %v553 = vlaneseq
      %v554 = vshrl.u32 %v553, 7
      %v555 = vsub.s32 %v552, %v554
      %v556 = vrot.slane %v241, %v555
      %v558 = vunpack.c.l.s4 1966171168
      %v559 = vunpack.c.0.s8 %v558
      %v560 = vlaneseq
      %v561 = vshrl.u32 %v560, 7
      %v562 = vsub.s32 %v559, %v561
      %v563 = vrot.slane %v549, %v562
      %v564 = vcombine.high %v556, %v556
      %v565 = vcombine.high %v563, %v563
      %v567 = vunpack.c.l.s4 1966171168
      %v568 = vunpack.c.0.s8 %v567
      %v569 = vlaneseq
      %v570 = vshrl.u32 %v569, 7
      %v571 = vsub.s32 %v568, %v570
      %v572 = vrot.slane %v556, %v571
      %v574 = vunpack.c.l.s4 1966171168
      %v575 = vunpack.c.0.s8 %v574
      %v576 = vlaneseq
      %v577 = vshrl.u32 %v576, 7
      %v578 = vsub.s32 %v575, %v577
      %v579 = vrot.slane %v563, %v578
      %v581 = vunpack.c.l.s4 1966171168
      %v582 = vunpack.c.0.s8 %v581
      %v583 = vlaneseq
      %v584 = vshrl.u32 %v583, 7
      %v585 = vsub.s32 %v582, %v584
      %v586 = vrot.slane %v564, %v585
      %v588 = vunpack.c.l.s4 1966171168
      %v589 = vunpack.c.0.s8 %v588
      %v590 = vlaneseq
      %v591 = vshrl.u32 %v590, 7
      %v592 = vsub.s32 %v589, %v591
      %v593 = vrot.slane %v565, %v592
      %v594 = vcombine.high %v572, %v572
      %v595 = vcombine.high %v579, %v579
      %v596 = vcombine.high %v586, %v586
      %v597 = vcombine.high %v593, %v593
      %v870 = vunpack.c.l.b16 %v242
      %v871 = vunpack.c.l.b16 %v243
      %v872 = vunpack.c.l.b16 %v244
      %v873 = vunpack.c.l.b16 %v245
      %v874 = vunpack.c.l.b16 %v246
      %v875 = vunpack.c.l.b16 %v247
      %v876 = vunpack.c.l.b16 %v248
      %v877 = vunpack.c.l.b16 %v249
      %v878 = vunpack.c.l.b16 %v250
      %v879 = vunpack.c.l.b16 %v251
      %v880 = vunpack.c.l.b16 %v252
      %v881 = vunpack.c.l.b16 %v253
      %v882 = vunpack.c.l.b16 %v254
      %v883 = vunpack.c.l.b16 %v255
      %v884 = vunpack.c.l.b16 %v256
      %v885 = vunpack.c.l.b16 %v257
      %v886 = vunpack.c.l.b16 %v258
      %v887 = vunpack.c.l.b16 %v259
      %v888 = vunpack.c.l.b16 %v260
      %v889 = vunpack.c.l.b16 %v261
      %v890 = vunpack.c.l.b16 %v262
      %v891 = vunpack.c.l.b16 %v263
      %v892 = vunpack.c.l.b16 %v264
      %v893 = vunpack.c.l.b16 %v265
      %v894 = vunpack.c.l.b16 %v266
      %v895 = vunpack.c.l.b16 %v267
      %v896 = vunpack.c.l.b16 %v268
      %v897 = vunpack.c.l.b16 %v269
      %v898 = vunpack.c.l.b16 %v270
      %v899 = vunpack.c.l.b16 %v271
      %v900 = vunpack.c.l.b16 %v272
      %v901 = vunpack.c.l.b16 %v273
      %v902 = vunpack.c.l.b16 %v274
      %v903 = vunpack.c.l.b16 %v275
      %v904 = vunpack.c.l.b16 %v276
      %v905 = vunpack.c.l.b16 %v277
      %v906 = vunpack.c.l.b16 %v278
      %v907 = vunpack.c.l.b16 %v279
      %v908 = vunpack.c.l.b16 %v280
      %v909 = vunpack.c.l.b16 %v281
      %v910 = vunpack.c.l.b16 %v282
      %v911 = vunpack.c.l.b16 %v283
      %v912 = vunpack.c.l.b16 %v284
      %v913 = vunpack.c.l.b16 %v285
      %v914 = vunpack.c.l.b16 %v286
      %v915 = vunpack.c.l.b16 %v287
      %v916 = vunpack.c.l.b16 %v288
      %v917 = vunpack.c.l.b16 %v289
      %v918 = vunpack.c.l.b16 %v290
      %v919 = vunpack.c.l.b16 %v291
      %v920 = vunpack.c.l.b16 %v292
      %v921 = vunpack.c.l.b16 %v293
      %v922 = vunpack.c.l.b16 %v294
      %v923 = vunpack.c.l.b16 %v295
      %v924 = vunpack.c.l.b16 %v296
      %v925 = vunpack.c.l.b16 %v297
      %v926 = vunpack.c.l.b16 %v298
      %v927 = vunpack.c.l.b16 %v299
      %v928 = vunpack.c.l.b16 %v300
      %v929 = vunpack.c.l.b16 %v301
      %v930 = vunpack.c.l.b16 %v302
      %v931 = vunpack.c.l.b16 %v303
      %v932 = vunpack.c.l.b16 %v304
      %v933 = vunpack.c.l.b16 %v305
      %v934 = vunpack.c.l.b16 %v306
      %v935 = vunpack.c.l.b16 %v307
      %v936 = vunpack.c.l.b16 %v308
      %v937 = vunpack.c.l.b16 %v309
      %v938 = vunpack.c.l.b16 %v310
      %v939 = vunpack.c.l.b16 %v311
      %v940 = vunpack.c.l.b16 %v312
      %v941 = vunpack.c.l.b16 %v313
      %v942 = vunpack.c.l.b16 %v314
      %v943 = vunpack.c.l.b16 %v315
      %v944 = vunpack.c.l.b16 %v316
      %v945 = vunpack.c.l.b16 %v317
      %v946 = vunpack.c.l.b16 %v318
      %v947 = vunpack.c.l.b16 %v319
      %v948 = vunpack.c.l.b16 %v320
      %v949 = vunpack.c.l.b16 %v321
      %v950 = vunpack.c.l.b16 %v322
      %v951 = vunpack.c.l.b16 %v323
      %v952 = vunpack.c.l.b16 %v324
      %v953 = vunpack.c.l.b16 %v325
      %v954 = vunpack.c.l.b16 %v326
      %v955 = vunpack.c.l.b16 %v327
      %v956 = vunpack.c.l.b16 %v328
      %v957 = vunpack.c.l.b16 %v329
      %v958 = vunpack.c.l.b16 %v330
      %v959 = vunpack.c.l.b16 %v331
      %v960 = vunpack.c.l.b16 %v332
      %v961 = vunpack.c.l.b16 %v333
      %v962 = vunpack.c.l.b16 %v334
      %v963 = vunpack.c.l.b16 %v335
      %v964 = vunpack.c.l.b16 %v336
      %v965 = vunpack.c.l.b16 %v337
      %v966 = vunpack.c.l.b16 %v338
      %v967 = vunpack.c.l.b16 %v339
      %v968 = vunpack.c.l.b16 %v340
      %v969 = vunpack.c.l.b16 %v341
      %v970 = vunpack.c.l.b16 %v342
      %v971 = vunpack.c.l.b16 %v343
      %v972 = vunpack.c.l.b16 %v344
      %v973 = vunpack.c.l.b16 %v345
      %v974 = vunpack.c.l.b16 %v346
      %v975 = vunpack.c.l.b16 %v347
      %v976 = vunpack.c.l.b16 %v348
      %v977 = vunpack.c.l.b16 %v349
      %v978 = vunpack.c.l.b16 %v350
      %v979 = vunpack.c.l.b16 %v351
      %v980 = vunpack.c.l.b16 %v352
      %v981 = vunpack.c.l.b16 %v353
      %v982 = vunpack.c.l.b16 %v354
      %v983 = vunpack.c.l.b16 %v355
      %v984 = vunpack.c.l.b16 %v356
      %v985 = vunpack.c.l.b16 %v357
      %v986 = vunpack.c.l.b16 %v358
      %v987 = vunpack.c.l.b16 %v359
      %v988 = vunpack.c.l.b16 %v360
      %v989 = vunpack.c.l.b16 %v361
      %v990 = vunpack.c.l.b16 %v362
      %v991 = vunpack.c.l.b16 %v363
      %v992 = vunpack.c.l.b16 %v364
      %v993 = vunpack.c.l.b16 %v365
      %v994 = vunpack.c.l.b16 %v366
      %v995 = vunpack.c.l.b16 %v367
      %v996 = vunpack.c.l.b16 %v368
      %v997 = vunpack.c.l.b16 %v369
      %v998 = vunpack.c.l.b16 %v370
      %v999 = vunpack.c.l.b16 %v371
      %v1000 = vunpack.c.l.b16 %v372
      %v1001 = vunpack.c.l.b16 %v373
      %v1002 = vunpack.c.l.b16 %v374
      %v1003 = vunpack.c.l.b16 %v375
      %v1004 = vunpack.c.l.b16 %v376
      %v1005 = vunpack.c.l.b16 %v377
      %v1006 = vunpack.c.l.b16 %v378
      %v1007 = vunpack.c.l.b16 %v379
      %v1008 = vunpack.c.l.b16 %v380
      %v1009 = vunpack.c.l.b16 %v381
      %v1010 = vunpack.c.l.b16 %v382
      %v1011 = vunpack.c.l.b16 %v383
      %v1012 = vunpack.c.l.b16 %v384
      %v1013 = vunpack.c.l.b16 %v385
      %v1014 = vunpack.c.l.b16 %v386
      %v1015 = vunpack.c.l.b16 %v387
      %v1016 = vunpack.c.l.b16 %v388
      %v1017 = vunpack.c.l.b16 %v389
      %v1018 = vunpack.c.l.b16 %v390
      %v1019 = vunpack.c.l.b16 %v391
      %v1020 = vunpack.c.l.b16 %v392
      %v1021 = vunpack.c.l.b16 %v393
      %v1022 = vunpack.c.l.b16 %v394
      %v1023 = vunpack.c.l.b16 %v395
      %v1024 = vunpack.c.l.b16 %v396
      %v1025 = vunpack.c.l.b16 %v397
      %v1026 = vunpack.c.l.b16 %v398
      %v1027 = vunpack.c.l.b16 %v399
      %v1028 = vunpack.c.l.b16 %v400
      %v1029 = vunpack.c.l.b16 %v401
      %v1030 = vunpack.c.l.b16 %v402
      %v1031 = vunpack.c.l.b16 %v403
      %v1032 = vunpack.c.l.b16 %v404
      %v1033 = vunpack.c.l.b16 %v405
      %v1034 = vunpack.c.l.b16 %v406
      %v1035 = vunpack.c.l.b16 %v407
      %v1036 = vunpack.c.l.b16 %v408
      %v1037 = vunpack.c.l.b16 %v409
      %v1038 = vunpack.c.l.b16 %v410
      %v1039 = vunpack.c.l.b16 %v411
      %v1040 = vunpack.c.l.b16 %v412
      %v1041 = vunpack.c.l.b16 %v413
      %v1042 = vunpack.c.l.b16 %v414
      %v1043 = vunpack.c.l.b16 %v415
      %v1044 = vunpack.c.l.b16 %v416
      %v1045 = vunpack.c.l.b16 %v417
      %v1046 = vunpack.c.l.b16 %v418
      %v1047 = vunpack.c.l.b16 %v419
      %v1048 = vunpack.c.l.b16 %v420
      %v1049 = vunpack.c.l.b16 %v421
      %v1050 = vunpack.c.l.b16 %v422
      %v1051 = vunpack.c.l.b16 %v423
      %v1052 = vunpack.c.l.b16 %v424
      %v1053 = vunpack.c.l.b16 %v425
      %v1054 = vunpack.c.l.b16 %v426
      %v1055 = vunpack.c.l.b16 %v427
      %v1056 = vunpack.c.l.b16 %v428
      %v1057 = vunpack.c.l.b16 %v429
      %v1058 = vunpack.c.l.b16 %v430
      %v1059 = vunpack.c.l.b16 %v431
      %v1060 = vunpack.c.l.b16 %v432
      %v1061 = vunpack.c.l.b16 %v433
      %v1062 = vunpack.c.l.b16 %v434
      %v1063 = vunpack.c.l.b16 %v435
      %v1064 = vunpack.c.l.b16 %v436
      %v1065 = vunpack.c.l.b16 %v437
      %v1066 = vunpack.c.l.b16 %v438
      %v1067 = vunpack.c.l.b16 %v439
      %v1068 = vunpack.c.l.b16 %v440
      %v1069 = vunpack.c.l.b16 %v441
      %v1070 = vunpack.c.l.b16 %v442
      %v1071 = vunpack.c.l.b16 %v443
      %v1072 = vunpack.c.l.b16 %v444
      %v1073 = vunpack.c.l.b16 %v445
      %v1074 = vunpack.c.l.b16 %v446
      %v1075 = vunpack.c.l.b16 %v447
      %v1076 = vunpack.c.l.b16 %v448
      %v1077 = vunpack.c.l.b16 %v449
      %v1078 = vunpack.c.l.b16 %v450
      %v1079 = vunpack.c.l.b16 %v451
      %v1080 = vunpack.c.l.b16 %v452
      %v1081 = vunpack.c.l.b16 %v453
      %v1082 = vunpack.c.l.b16 %v454
      %v1083 = vunpack.c.l.b16 %v455
      %v1084 = vunpack.c.l.b16 %v456
      %v1085 = vunpack.c.l.b16 %v457
      %v1086 = vunpack.c.l.b16 %v458
      %v1087 = vunpack.c.l.b16 %v459
      %v1088 = vunpack.c.l.b16 %v460
      %v1089 = vunpack.c.l.b16 %v461
      %v1090 = vunpack.c.l.b16 %v462
      %v1091 = vunpack.c.l.b16 %v463
      %v1092 = vunpack.c.l.b16 %v464
      %v1093 = vunpack.c.l.b16 %v465
      %v1094 = vunpack.c.l.b16 %v466
      %v1095 = vunpack.c.l.b16 %v467
      %v1096 = vunpack.c.l.b16 %v468
      %v1097 = vunpack.c.l.b16 %v469
      %v1098 = vunpack.c.l.b16 %v470
      %v1099 = vunpack.c.l.b16 %v471
      %v1100 = vunpack.c.l.b16 %v472
      %v1101 = vunpack.c.l.b16 %v473
      %v1102 = vunpack.c.l.b16 %v474
      %v1103 = vunpack.c.l.b16 %v475
      %v1104 = vunpack.c.l.b16 %v476
      %v1105 = vunpack.c.l.b16 %v477
      %v1106 = vunpack.c.l.b16 %v478
      %v1107 = vunpack.c.l.b16 %v479
      %v1108 = vunpack.c.l.b16 %v480
      %v1109 = vunpack.c.l.b16 %v481
      %v1110 = vunpack.c.l.b16 %v482
      %v1111 = vunpack.c.l.b16 %v483
      %v1112 = vunpack.c.l.b16 %v484
      %v1113 = vunpack.c.l.b16 %v485
      %v1114 = vunpack.c.l.b16 %v486
      %v1115 = vunpack.c.l.b16 %v487
      %v1116 = vunpack.c.l.b16 %v488
      %v1117 = vunpack.c.l.b16 %v489
      %v1118 = vunpack.c.l.b16 %v490
      %v1119 = vunpack.c.l.b16 %v491
      %v1120 = vunpack.c.l.b16 %v492
      %v1121 = vunpack.c.l.b16 %v493
      %v1122 = vunpack.c.l.b16 %v494
      %v1123 = vunpack.c.l.b16 %v495
      %v1124 = vunpack.c.l.b16 %v496
      %v1125 = vunpack.c.l.b16 %v497
      %v1126 = vpack.c.b16 %v871, %v870
      %v1127 = vpack.c.b16 %v873, %v872
      %v1128 = vpack.c.b16 %v875, %v874
      %v1129 = vpack.c.b16 %v877, %v876
      %v1130 = vpack.c.b16 %v879, %v878
      %v1131 = vpack.c.b16 %v881, %v880
      %v1132 = vpack.c.b16 %v883, %v882
      %v1133 = vpack.c.b16 %v885, %v884
      %v1134 = vpack.c.b16 %v887, %v886
      %v1135 = vpack.c.b16 %v889, %v888
      %v1136 = vpack.c.b16 %v891, %v890
      %v1137 = vpack.c.b16 %v893, %v892
      %v1138 = vpack.c.b16 %v895, %v894
      %v1139 = vpack.c.b16 %v897, %v896
      %v1140 = vpack.c.b16 %v899, %v898
      %v1141 = vpack.c.b16 %v901, %v900
      %v1142 = vpack.c.b16 %v903, %v902
      %v1143 = vpack.c.b16 %v905, %v904
      %v1144 = vpack.c.b16 %v907, %v906
      %v1145 = vpack.c.b16 %v909, %v908
      %v1146 = vpack.c.b16 %v911, %v910
      %v1147 = vpack.c.b16 %v913, %v912
      %v1148 = vpack.c.b16 %v915, %v914
      %v1149 = vpack.c.b16 %v917, %v916
      %v1150 = vpack.c.b16 %v919, %v918
      %v1151 = vpack.c.b16 %v921, %v920
      %v1152 = vpack.c.b16 %v923, %v922
      %v1153 = vpack.c.b16 %v925, %v924
      %v1154 = vpack.c.b16 %v927, %v926
      %v1155 = vpack.c.b16 %v929, %v928
      %v1156 = vpack.c.b16 %v931, %v930
      %v1157 = vpack.c.b16 %v933, %v932
      %v1158 = vpack.c.b16 %v935, %v934
      %v1159 = vpack.c.b16 %v937, %v936
      %v1160 = vpack.c.b16 %v939, %v938
      %v1161 = vpack.c.b16 %v941, %v940
      %v1162 = vpack.c.b16 %v943, %v942
      %v1163 = vpack.c.b16 %v945, %v944
      %v1164 = vpack.c.b16 %v947, %v946
      %v1165 = vpack.c.b16 %v949, %v948
      %v1166 = vpack.c.b16 %v951, %v950
      %v1167 = vpack.c.b16 %v953, %v952
      %v1168 = vpack.c.b16 %v955, %v954
      %v1169 = vpack.c.b16 %v957, %v956
      %v1170 = vpack.c.b16 %v959, %v958
      %v1171 = vpack.c.b16 %v961, %v960
      %v1172 = vpack.c.b16 %v963, %v962
      %v1173 = vpack.c.b16 %v965, %v964
      %v1174 = vpack.c.b16 %v967, %v966
      %v1175 = vpack.c.b16 %v969, %v968
      %v1176 = vpack.c.b16 %v971, %v970
      %v1177 = vpack.c.b16 %v973, %v972
      %v1178 = vpack.c.b16 %v975, %v974
      %v1179 = vpack.c.b16 %v977, %v976
      %v1180 = vpack.c.b16 %v979, %v978
      %v1181 = vpack.c.b16 %v981, %v980
      %v1182 = vpack.c.b16 %v983, %v982
      %v1183 = vpack.c.b16 %v985, %v984
      %v1184 = vpack.c.b16 %v987, %v986
      %v1185 = vpack.c.b16 %v989, %v988
      %v1186 = vpack.c.b16 %v991, %v990
      %v1187 = vpack.c.b16 %v993, %v992
      %v1188 = vpack.c.b16 %v995, %v994
      %v1189 = vpack.c.b16 %v997, %v996
      %v1190 = vpack.c.b16 %v999, %v998
      %v1191 = vpack.c.b16 %v1001, %v1000
      %v1192 = vpack.c.b16 %v1003, %v1002
      %v1193 = vpack.c.b16 %v1005, %v1004
      %v1194 = vpack.c.b16 %v1007, %v1006
      %v1195 = vpack.c.b16 %v1009, %v1008
      %v1196 = vpack.c.b16 %v1011, %v1010
      %v1197 = vpack.c.b16 %v1013, %v1012
      %v1198 = vpack.c.b16 %v1015, %v1014
      %v1199 = vpack.c.b16 %v1017, %v1016
      %v1200 = vpack.c.b16 %v1019, %v1018
      %v1201 = vpack.c.b16 %v1021, %v1020
      %v1202 = vpack.c.b16 %v1023, %v1022
      %v1203 = vpack.c.b16 %v1025, %v1024
      %v1204 = vpack.c.b16 %v1027, %v1026
      %v1205 = vpack.c.b16 %v1029, %v1028
      %v1206 = vpack.c.b16 %v1031, %v1030
      %v1207 = vpack.c.b16 %v1033, %v1032
      %v1208 = vpack.c.b16 %v1035, %v1034
      %v1209 = vpack.c.b16 %v1037, %v1036
      %v1210 = vpack.c.b16 %v1039, %v1038
      %v1211 = vpack.c.b16 %v1041, %v1040
      %v1212 = vpack.c.b16 %v1043, %v1042
      %v1213 = vpack.c.b16 %v1045, %v1044
      %v1214 = vpack.c.b16 %v1047, %v1046
      %v1215 = vpack.c.b16 %v1049, %v1048
      %v1216 = vpack.c.b16 %v1051, %v1050
      %v1217 = vpack.c.b16 %v1053, %v1052
      %v1218 = vpack.c.b16 %v1055, %v1054
      %v1219 = vpack.c.b16 %v1057, %v1056
      %v1220 = vpack.c.b16 %v1059, %v1058
      %v1221 = vpack.c.b16 %v1061, %v1060
      %v1222 = vpack.c.b16 %v1063, %v1062
      %v1223 = vpack.c.b16 %v1065, %v1064
      %v1224 = vpack.c.b16 %v1067, %v1066
      %v1225 = vpack.c.b16 %v1069, %v1068
      %v1226 = vpack.c.b16 %v1071, %v1070
      %v1227 = vpack.c.b16 %v1073, %v1072
      %v1228 = vpack.c.b16 %v1075, %v1074
      %v1229 = vpack.c.b16 %v1077, %v1076
      %v1230 = vpack.c.b16 %v1079, %v1078
      %v1231 = vpack.c.b16 %v1081, %v1080
      %v1232 = vpack.c.b16 %v1083, %v1082
      %v1233 = vpack.c.b16 %v1085, %v1084
      %v1234 = vpack.c.b16 %v1087, %v1086
      %v1235 = vpack.c.b16 %v1089, %v1088
      %v1236 = vpack.c.b16 %v1091, %v1090
      %v1237 = vpack.c.b16 %v1093, %v1092
      %v1238 = vpack.c.b16 %v1095, %v1094
      %v1239 = vpack.c.b16 %v1097, %v1096
      %v1240 = vpack.c.b16 %v1099, %v1098
      %v1241 = vpack.c.b16 %v1101, %v1100
      %v1242 = vpack.c.b16 %v1103, %v1102
      %v1243 = vpack.c.b16 %v1105, %v1104
      %v1244 = vpack.c.b16 %v1107, %v1106
      %v1245 = vpack.c.b16 %v1109, %v1108
      %v1246 = vpack.c.b16 %v1111, %v1110
      %v1247 = vpack.c.b16 %v1113, %v1112
      %v1248 = vpack.c.b16 %v1115, %v1114
      %v1249 = vpack.c.b16 %v1117, %v1116
      %v1250 = vpack.c.b16 %v1119, %v1118
      %v1251 = vpack.c.b16 %v1121, %v1120
      %v1252 = vpack.c.b16 %v1123, %v1122
      %v1253 = vpack.c.b16 %v1125, %v1124
      %1382 = vmatprep.subr.bf16.mxu0 0
      %1383 = vmatpush1.bf16.msra.mxu0 %v1126
      %1384 = vmatprep.subr.bf16.mxu0 0
      %1385 = vmatpush1.bf16.msra.mxu0 %v1127
      %1386 = vmatprep.subr.bf16.mxu0 0
      %1387 = vmatpush1.bf16.msra.mxu0 %v1128
      %1388 = vmatprep.subr.bf16.mxu0 0
      %1389 = vmatpush1.bf16.msra.mxu0 %v1129
      %1390 = vmatprep.subr.bf16.mxu0 0
      %1391 = vmatpush1.bf16.msra.mxu0 %v1130
      %1392 = vmatprep.subr.bf16.mxu0 0
      %1393 = vmatpush1.bf16.msra.mxu0 %v1131
      %1394 = vmatprep.subr.bf16.mxu0 0
      %1395 = vmatpush1.bf16.msra.mxu0 %v1132
      %1396 = vmatprep.subr.bf16.mxu0 0
      %1397 = vmatpush1.bf16.msra.mxu0 %v1133
      %1398 = vmatprep.subr.bf16.mxu0 0
      %1399 = vmatpush1.bf16.msra.mxu0 %v1134
      %1400 = vmatprep.subr.bf16.mxu0 0
      %1401 = vmatpush1.bf16.msra.mxu0 %v1135
      %1402 = vmatprep.subr.bf16.mxu0 0
      %1403 = vmatpush1.bf16.msra.mxu0 %v1136
      %1404 = vmatprep.subr.bf16.mxu0 0
      %1405 = vmatpush1.bf16.msra.mxu0 %v1137
      %1406 = vmatprep.subr.bf16.mxu0 0
      %1407 = vmatpush1.bf16.msra.mxu0 %v1138
      %1408 = vmatprep.subr.bf16.mxu0 0
      %1409 = vmatpush1.bf16.msra.mxu0 %v1139
      %1410 = vmatprep.subr.bf16.mxu0 0
      %1411 = vmatpush1.bf16.msra.mxu0 %v1140
      %1412 = vmatprep.subr.bf16.mxu0 0
      %1413 = vmatpush1.bf16.msra.mxu0 %v1141
      %1414 = vmatprep.mubr.bf16.mxu0 %v537
      %1415 = vmatmul.mubr.bf16.gmra.mrb[0].mxu0 %v523
      %v1416 = vpop.f32.mrb[0].mxu0
      %v1417 = vadd.f32 0.0, %v1416
      %v1418 = vpop.f32.mrb[0].mxu0
      %v1419 = vpop.f32.mrb[0].mxu0
      %v1420 = vpop.f32.mrb[0].mxu0
      %1421 = vdwg.mxu0
      %1422 = vmatprep.subr.bf16.mxu0 0
      %1423 = vmatpush1.bf16.msra.mxu0 %v1142
      %1424 = vmatprep.subr.bf16.mxu0 0
      %1425 = vmatpush1.bf16.msra.mxu0 %v1143
      %1426 = vmatprep.subr.bf16.mxu0 0
      %1427 = vmatpush1.bf16.msra.mxu0 %v1144
      %1428 = vmatprep.subr.bf16.mxu0 0
      %1429 = vmatpush1.bf16.msra.mxu0 %v1145
      %1430 = vmatprep.subr.bf16.mxu0 0
      %1431 = vmatpush1.bf16.msra.mxu0 %v1146
      %1432 = vmatprep.subr.bf16.mxu0 0
      %1433 = vmatpush1.bf16.msra.mxu0 %v1147
      %1434 = vmatprep.subr.bf16.mxu0 0
      %1435 = vmatpush1.bf16.msra.mxu0 %v1148
      %1436 = vmatprep.subr.bf16.mxu0 0
      %1437 = vmatpush1.bf16.msra.mxu0 %v1149
      %1438 = vmatprep.subr.bf16.mxu0 0
      %1439 = vmatpush1.bf16.msra.mxu0 %v1150
      %1440 = vmatprep.subr.bf16.mxu0 0
      %1441 = vmatpush1.bf16.msra.mxu0 %v1151
      %1442 = vmatprep.subr.bf16.mxu0 0
      %1443 = vmatpush1.bf16.msra.mxu0 %v1152
      %1444 = vmatprep.subr.bf16.mxu0 0
      %1445 = vmatpush1.bf16.msra.mxu0 %v1153
      %1446 = vmatprep.subr.bf16.mxu0 0
      %1447 = vmatpush1.bf16.msra.mxu0 %v1154
      %1448 = vmatprep.subr.bf16.mxu0 0
      %1449 = vmatpush1.bf16.msra.mxu0 %v1155
      %1450 = vmatprep.subr.bf16.mxu0 0
      %1451 = vmatpush1.bf16.msra.mxu0 %v1156
      %1452 = vmatprep.subr.bf16.mxu0 0
      %1453 = vmatpush1.bf16.msra.mxu0 %v1157
      %1454 = vmatprep.mubr.bf16.mxu0 %v547
      %1455 = vmatmul.mubr.bf16.gmra.mrb[0].mxu0 %v545
      %v1456 = vpop.f32.mrb[0].mxu0
      %v1457 = vadd.f32 %v1417, %v1456
      %v1458 = vpop.f32.mrb[0].mxu0
      %v1459 = vpop.f32.mrb[0].mxu0
      %v1460 = vpop.f32.mrb[0].mxu0
      %1461 = vdwg.mxu0
      %1462 = vmatprep.subr.bf16.mxu0 0
      %1463 = vmatpush1.bf16.msra.mxu0 %v1158
      %1464 = vmatprep.subr.bf16.mxu0 0
      %1465 = vmatpush1.bf16.msra.mxu0 %v1159
      %1466 = vmatprep.subr.bf16.mxu0 0
      %1467 = vmatpush1.bf16.msra.mxu0 %v1160
      %1468 = vmatprep.subr.bf16.mxu0 0
      %1469 = vmatpush1.bf16.msra.mxu0 %v1161
      %1470 = vmatprep.subr.bf16.mxu0 0
      %1471 = vmatpush1.bf16.msra.mxu0 %v1162
      %1472 = vmatprep.subr.bf16.mxu0 0
      %1473 = vmatpush1.bf16.msra.mxu0 %v1163
      %1474 = vmatprep.subr.bf16.mxu0 0
      %1475 = vmatpush1.bf16.msra.mxu0 %v1164
      %1476 = vmatprep.subr.bf16.mxu0 0
      %1477 = vmatpush1.bf16.msra.mxu0 %v1165
      %1478 = vmatprep.subr.bf16.mxu0 0
      %1479 = vmatpush1.bf16.msra.mxu0 %v1166
      %1480 = vmatprep.subr.bf16.mxu0 0
      %1481 = vmatpush1.bf16.msra.mxu0 %v1167
      %1482 = vmatprep.subr.bf16.mxu0 0
      %1483 = vmatpush1.bf16.msra.mxu0 %v1168
      %1484 = vmatprep.subr.bf16.mxu0 0
      %1485 = vmatpush1.bf16.msra.mxu0 %v1169
      %1486 = vmatprep.subr.bf16.mxu0 0
      %1487 = vmatpush1.bf16.msra.mxu0 %v1170
      %1488 = vmatprep.subr.bf16.mxu0 0
      %1489 = vmatpush1.bf16.msra.mxu0 %v1171
      %1490 = vmatprep.subr.bf16.mxu0 0
      %1491 = vmatpush1.bf16.msra.mxu0 %v1172
      %1492 = vmatprep.subr.bf16.mxu0 0
      %1493 = vmatpush1.bf16.msra.mxu0 %v1173
      %1494 = vmatprep.mubr.bf16.mxu0 %v544
      %1495 = vmatmul.mubr.bf16.gmra.mrb[0].mxu0 %v530
      %v1496 = vpop.f32.mrb[0].mxu0
      %v1497 = vadd.f32 %v1457, %v1496
      %v1498 = vpop.f32.mrb[0].mxu0
      %v1499 = vpop.f32.mrb[0].mxu0
      %v1500 = vpop.f32.mrb[0].mxu0
      %1501 = vdwg.mxu0
      %1502 = vmatprep.subr.bf16.mxu0 0
      %1503 = vmatpush1.bf16.msra.mxu0 %v1174
      %1504 = vmatprep.subr.bf16.mxu0 0
      %1505 = vmatpush1.bf16.msra.mxu0 %v1175
      %1506 = vmatprep.subr.bf16.mxu0 0
      %1507 = vmatpush1.bf16.msra.mxu0 %v1176
      %1508 = vmatprep.subr.bf16.mxu0 0
      %1509 = vmatpush1.bf16.msra.mxu0 %v1177
      %1510 = vmatprep.subr.bf16.mxu0 0
      %1511 = vmatpush1.bf16.msra.mxu0 %v1178
      %1512 = vmatprep.subr.bf16.mxu0 0
      %1513 = vmatpush1.bf16.msra.mxu0 %v1179
      %1514 = vmatprep.subr.bf16.mxu0 0
      %1515 = vmatpush1.bf16.msra.mxu0 %v1180
      %1516 = vmatprep.subr.bf16.mxu0 0
      %1517 = vmatpush1.bf16.msra.mxu0 %v1181
      %1518 = vmatprep.subr.bf16.mxu0 0
      %1519 = vmatpush1.bf16.msra.mxu0 %v1182
      %1520 = vmatprep.subr.bf16.mxu0 0
      %1521 = vmatpush1.bf16.msra.mxu0 %v1183
      %1522 = vmatprep.subr.bf16.mxu0 0
      %1523 = vmatpush1.bf16.msra.mxu0 %v1184
      %1524 = vmatprep.subr.bf16.mxu0 0
      %1525 = vmatpush1.bf16.msra.mxu0 %v1185
      %1526 = vmatprep.subr.bf16.mxu0 0
      %1527 = vmatpush1.bf16.msra.mxu0 %v1186
      %1528 = vmatprep.subr.bf16.mxu0 0
      %1529 = vmatpush1.bf16.msra.mxu0 %v1187
      %1530 = vmatprep.subr.bf16.mxu0 0
      %1531 = vmatpush1.bf16.msra.mxu0 %v1188
      %1532 = vmatprep.subr.bf16.mxu0 0
      %1533 = vmatpush1.bf16.msra.mxu0 %v1189
      %1534 = vmatprep.mubr.bf16.mxu0 %v548
      %1535 = vmatmul.mubr.bf16.gmra.mrb[0].mxu0 %v546
      %v1536 = vpop.f32.mrb[0].mxu0
      %v1537 = vadd.f32 %v1497, %v1536
      %v1538 = vpop.f32.mrb[0].mxu0
      %v1539 = vpop.f32.mrb[0].mxu0
      %v1540 = vpop.f32.mrb[0].mxu0
      %1541 = vdwg.mxu0
      %1542 = vmatprep.subr.bf16.mxu0 0
      %1543 = vmatpush1.bf16.msra.mxu0 %v1190
      %1544 = vmatprep.subr.bf16.mxu0 0
      %1545 = vmatpush1.bf16.msra.mxu0 %v1191
      %1546 = vmatprep.subr.bf16.mxu0 0
      %1547 = vmatpush1.bf16.msra.mxu0 %v1192
      %1548 = vmatprep.subr.bf16.mxu0 0
      %1549 = vmatpush1.bf16.msra.mxu0 %v1193
      %1550 = vmatprep.subr.bf16.mxu0 0
      %1551 = vmatpush1.bf16.msra.mxu0 %v1194
      %1552 = vmatprep.subr.bf16.mxu0 0
      %1553 = vmatpush1.bf16.msra.mxu0 %v1195
      %1554 = vmatprep.subr.bf16.mxu0 0
      %1555 = vmatpush1.bf16.msra.mxu0 %v1196
      %1556 = vmatprep.subr.bf16.mxu0 0
      %1557 = vmatpush1.bf16.msra.mxu0 %v1197
      %1558 = vmatprep.subr.bf16.mxu0 0
      %1559 = vmatpush1.bf16.msra.mxu0 %v1198
      %1560 = vmatprep.subr.bf16.mxu0 0
      %1561 = vmatpush1.bf16.msra.mxu0 %v1199
      %1562 = vmatprep.subr.bf16.mxu0 0
      %1563 = vmatpush1.bf16.msra.mxu0 %v1200
      %1564 = vmatprep.subr.bf16.mxu0 0
      %1565 = vmatpush1.bf16.msra.mxu0 %v1201
      %1566 = vmatprep.subr.bf16.mxu0 0
      %1567 = vmatpush1.bf16.msra.mxu0 %v1202
      %1568 = vmatprep.subr.bf16.mxu0 0
      %1569 = vmatpush1.bf16.msra.mxu0 %v1203
      %1570 = vmatprep.subr.bf16.mxu0 0
      %1571 = vmatpush1.bf16.msra.mxu0 %v1204
      %1572 = vmatprep.subr.bf16.mxu0 0
      %1573 = vmatpush1.bf16.msra.mxu0 %v1205
      %1574 = vmatprep.mubr.bf16.mxu0 %v586
      %1575 = vmatmul.mubr.bf16.gmra.mrb[0].mxu0 %v572
      %v1576 = vpop.f32.mrb[0].mxu0
      %v1577 = vadd.f32 %v1537, %v1576
      %v1578 = vpop.f32.mrb[0].mxu0
      %v1579 = vpop.f32.mrb[0].mxu0
      %v1580 = vpop.f32.mrb[0].mxu0
      %1581 = vdwg.mxu0
      %1582 = vmatprep.subr.bf16.mxu0 0
      %1583 = vmatpush1.bf16.msra.mxu0 %v1206
      %1584 = vmatprep.subr.bf16.mxu0 0
      %1585 = vmatpush1.bf16.msra.mxu0 %v1207
      %1586 = vmatprep.subr.bf16.mxu0 0
      %1587 = vmatpush1.bf16.msra.mxu0 %v1208
      %1588 = vmatprep.subr.bf16.mxu0 0
      %1589 = vmatpush1.bf16.msra.mxu0 %v1209
      %1590 = vmatprep.subr.bf16.mxu0 0
      %1591 = vmatpush1.bf16.msra.mxu0 %v1210
      %1592 = vmatprep.subr.bf16.mxu0 0
      %1593 = vmatpush1.bf16.msra.mxu0 %v1211
      %1594 = vmatprep.subr.bf16.mxu0 0
      %1595 = vmatpush1.bf16.msra.mxu0 %v1212
      %1596 = vmatprep.subr.bf16.mxu0 0
      %1597 = vmatpush1.bf16.msra.mxu0 %v1213
      %1598 = vmatprep.subr.bf16.mxu0 0
      %1599 = vmatpush1.bf16.msra.mxu0 %v1214
      %1600 = vmatprep.subr.bf16.mxu0 0
      %1601 = vmatpush1.bf16.msra.mxu0 %v1215
      %1602 = vmatprep.subr.bf16.mxu0 0
      %1603 = vmatpush1.bf16.msra.mxu0 %v1216
      %1604 = vmatprep.subr.bf16.mxu0 0
      %1605 = vmatpush1.bf16.msra.mxu0 %v1217
      %1606 = vmatprep.subr.bf16.mxu0 0
      %1607 = vmatpush1.bf16.msra.mxu0 %v1218
      %1608 = vmatprep.subr.bf16.mxu0 0
      %1609 = vmatpush1.bf16.msra.mxu0 %v1219
      %1610 = vmatprep.subr.bf16.mxu0 0
      %1611 = vmatpush1.bf16.msra.mxu0 %v1220
      %1612 = vmatprep.subr.bf16.mxu0 0
      %1613 = vmatpush1.bf16.msra.mxu0 %v1221
      %1614 = vmatprep.mubr.bf16.mxu0 %v596
      %1615 = vmatmul.mubr.bf16.gmra.mrb[0].mxu0 %v594
      %v1616 = vpop.f32.mrb[0].mxu0
      %v1617 = vadd.f32 %v1577, %v1616
      %v1618 = vpop.f32.mrb[0].mxu0
      %v1619 = vpop.f32.mrb[0].mxu0
      %v1620 = vpop.f32.mrb[0].mxu0
      %1621 = vdwg.mxu0
      %1622 = vmatprep.subr.bf16.mxu0 0
      %1623 = vmatpush1.bf16.msra.mxu0 %v1222
      %1624 = vmatprep.subr.bf16.mxu0 0
      %1625 = vmatpush1.bf16.msra.mxu0 %v1223
      %1626 = vmatprep.subr.bf16.mxu0 0
      %1627 = vmatpush1.bf16.msra.mxu0 %v1224
      %1628 = vmatprep.subr.bf16.mxu0 0
      %1629 = vmatpush1.bf16.msra.mxu0 %v1225
      %1630 = vmatprep.subr.bf16.mxu0 0
      %1631 = vmatpush1.bf16.msra.mxu0 %v1226
      %1632 = vmatprep.subr.bf16.mxu0 0
      %1633 = vmatpush1.bf16.msra.mxu0 %v1227
      %1634 = vmatprep.subr.bf16.mxu0 0
      %1635 = vmatpush1.bf16.msra.mxu0 %v1228
      %1636 = vmatprep.subr.bf16.mxu0 0
      %1637 = vmatpush1.bf16.msra.mxu0 %v1229
      %1638 = vmatprep.subr.bf16.mxu0 0
      %1639 = vmatpush1.bf16.msra.mxu0 %v1230
      %1640 = vmatprep.subr.bf16.mxu0 0
      %1641 = vmatpush1.bf16.msra.mxu0 %v1231
      %1642 = vmatprep.subr.bf16.mxu0 0
      %1643 = vmatpush1.bf16.msra.mxu0 %v1232
      %1644 = vmatprep.subr.bf16.mxu0 0
      %1645 = vmatpush1.bf16.msra.mxu0 %v1233
      %1646 = vmatprep.subr.bf16.mxu0 0
      %1647 = vmatpush1.bf16.msra.mxu0 %v1234
      %1648 = vmatprep.subr.bf16.mxu0 0
      %1649 = vmatpush1.bf16.msra.mxu0 %v1235
      %1650 = vmatprep.subr.bf16.mxu0 0
      %1651 = vmatpush1.bf16.msra.mxu0 %v1236
      %1652 = vmatprep.subr.bf16.mxu0 0
      %1653 = vmatpush1.bf16.msra.mxu0 %v1237
      %1654 = vmatprep.mubr.bf16.mxu0 %v593
      %1655 = vmatmul.mubr.bf16.gmra.mrb[0].mxu0 %v579
      %v1656 = vpop.f32.mrb[0].mxu0
      %v1657 = vadd.f32 %v1617, %v1656
      %v1658 = vpop.f32.mrb[0].mxu0
      %v1659 = vpop.f32.mrb[0].mxu0
      %v1660 = vpop.f32.mrb[0].mxu0
      %1661 = vdwg.mxu0
      %1662 = vmatprep.subr.bf16.mxu0 0
      %1663 = vmatpush1.bf16.msra.mxu0 %v1238
      %1664 = vmatprep.subr.bf16.mxu0 0
      %1665 = vmatpush1.bf16.msra.mxu0 %v1239
      %1666 = vmatprep.subr.bf16.mxu0 0
      %1667 = vmatpush1.bf16.msra.mxu0 %v1240
      %1668 = vmatprep.subr.bf16.mxu0 0
      %1669 = vmatpush1.bf16.msra.mxu0 %v1241
      %1670 = vmatprep.subr.bf16.mxu0 0
      %1671 = vmatpush1.bf16.msra.mxu0 %v1242
      %1672 = vmatprep.subr.bf16.mxu0 0
      %1673 = vmatpush1.bf16.msra.mxu0 %v1243
      %1674 = vmatprep.subr.bf16.mxu0 0
      %1675 = vmatpush1.bf16.msra.mxu0 %v1244
      %1676 = vmatprep.subr.bf16.mxu0 0
      %1677 = vmatpush1.bf16.msra.mxu0 %v1245
      %1678 = vmatprep.subr.bf16.mxu0 0
      %1679 = vmatpush1.bf16.msra.mxu0 %v1246
      %1680 = vmatprep.subr.bf16.mxu0 0
      %1681 = vmatpush1.bf16.msra.mxu0 %v1247
      %1682 = vmatprep.subr.bf16.mxu0 0
      %1683 = vmatpush1.bf16.msra.mxu0 %v1248
      %1684 = vmatprep.subr.bf16.mxu0 0
      %1685 = vmatpush1.bf16.msra.mxu0 %v1249
      %1686 = vmatprep.subr.bf16.mxu0 0
      %1687 = vmatpush1.bf16.msra.mxu0 %v1250
      %1688 = vmatprep.subr.bf16.mxu0 0
      %1689 = vmatpush1.bf16.msra.mxu0 %v1251
      %1690 = vmatprep.subr.bf16.mxu0 0
      %1691 = vmatpush1.bf16.msra.mxu0 %v1252
      %1692 = vmatprep.subr.bf16.mxu0 0
      %1693 = vmatpush1.bf16.msra.mxu0 %v1253
      %1694 = vmatprep.mubr.bf16.mxu0 %v597
      %1695 = vmatmul.mubr.bf16.gmra.mrb[0].mxu0 %v595
      %v1696 = vpop.f32.mrb[0].mxu0
      %v1697 = vadd.f32 %v1657, %v1696
      %v1698 = vpop.f32.mrb[0].mxu0
      %v1699 = vpop.f32.mrb[0].mxu0
      %v1700 = vpop.f32.mrb[0].mxu0
      %1701 = vdwg.mxu0
      %v1702 = vadd.f32 %v239, %v1697
      %1703 = vst [vmem:[#allocation2] sm:$0x3] %v1702
      %p1704 = scmp.eq.s32.totalorder %s18, 8
      // Predicated region
      $region45: #{discriminator_forward.9} parent=39 // pred_check
        %p1705 = pneg %p1704
      $region46: #{discriminator_forward.9} parent=39 // pred_check_branch
        %1707 = sbr.rel (%p1705) target = $region48
      $region47: #{discriminator_forward.9} parent=39 // pred_region
        %v1708 = vld [vmem:[#allocation2] sm:$0x3]
        %v1709 = vld [vmem:[%s2] sm:$0x1]
        %v1711 = vlaneseq
        %v1712 = vshrl.u32 %v1711, 7
        %v1713 = vsub.s32 0, %v1712
        %v1714 = vrot.slane %v1709, %v1713
        %v1716 = vadd.f32 %v1708, %v1714
        %vm1717 = vcmp.gt.f32.partialorder %v1716, 0.0
        %v1718 = vmul.f32 %v1716, 0.2
        %v1719 = vsel %vm1717, %v1716, %v1718
        %v1720 = vld [vmem:[%s3] sm:$0xff]
        %v1721 = vld [vmem:[%s3 + $0x8] sm:$0xff]
        %v1722 = vld [vmem:[%s3 + $0x10] sm:$0xff]
        %v1723 = vld [vmem:[%s3 + $0x18] sm:$0xff]
        %v1724 = vld [vmem:[%s3 + $0x20] sm:$0xff]
        %v1725 = vld [vmem:[%s3 + $0x28] sm:$0xff]
        %v1726 = vld [vmem:[%s3 + $0x30] sm:$0xff]
        %v1727 = vld [vmem:[%s3 + $0x38] sm:$0xff]
        %v1728 = vld [vmem:[%s3 + $0x40] sm:$0xff]
        %v1729 = vld [vmem:[%s3 + $0x48] sm:$0xff]
        %v1730 = vld [vmem:[%s3 + $0x50] sm:$0xff]
        %v1731 = vld [vmem:[%s3 + $0x58] sm:$0xff]
        %v1732 = vld [vmem:[%s3 + $0x60] sm:$0xff]
        %v1733 = vld [vmem:[%s3 + $0x68] sm:$0xff]
        %v1734 = vld [vmem:[%s3 + $0x70] sm:$0xff]
        %v1735 = vld [vmem:[%s3 + $0x78] sm:$0xff]
        %v1736 = vld [vmem:[#allocation3] sm:$0x1]
        %v1738 = vlaneseq
        %v1739 = vshrl.u32 %v1738, 7
        %v1740 = vsub.s32 0, %v1739
        %v1741 = vrot.slane %v1736, %v1740
        %1743 = vmatprep.subr.mxu0 0.0
        %1744 = vmatpush1.msra.mxu0 %v1720
        %1745 = vmatprep.subr.mxu0 0.0
        %1746 = vmatpush1.msra.mxu0 %v1721
        %1747 = vmatprep.subr.mxu0 0.0
        %1748 = vmatpush1.msra.mxu0 %v1722
        %1749 = vmatprep.subr.mxu0 0.0
        %1750 = vmatpush1.msra.mxu0 %v1723
        %1751 = vmatprep.subr.mxu0 0.0
        %1752 = vmatpush1.msra.mxu0 %v1724
        %1753 = vmatprep.subr.mxu0 0.0
        %1754 = vmatpush1.msra.mxu0 %v1725
        %1755 = vmatprep.subr.mxu0 0.0
        %1756 = vmatpush1.msra.mxu0 %v1726
        %1757 = vmatprep.subr.mxu0 0.0
        %1758 = vmatpush1.msra.mxu0 %v1727
        %1759 = vmatprep.subr.mxu0 0.0
        %1760 = vmatpush1.msra.mxu0 %v1728
        %1761 = vmatprep.subr.mxu0 0.0
        %1762 = vmatpush1.msra.mxu0 %v1729
        %1763 = vmatprep.subr.mxu0 0.0
        %1764 = vmatpush1.msra.mxu0 %v1730
        %1765 = vmatprep.subr.mxu0 0.0
        %1766 = vmatpush1.msra.mxu0 %v1731
        %1767 = vmatprep.subr.mxu0 0.0
        %1768 = vmatpush1.msra.mxu0 %v1732
        %1769 = vmatprep.subr.mxu0 0.0
        %1770 = vmatpush1.msra.mxu0 %v1733
        %1771 = vmatprep.subr.mxu0 0.0
        %1772 = vmatpush1.msra.mxu0 %v1734
        %1773 = vmatprep.subr.mxu0 0.0
        %1774 = vmatpush1.msra.mxu0 %v1735
        %1775 = vmatprep.subr.mxu0 0.0
        %1776 = vmatpush1.msra.mxu0 0.0
        %1777 = vmatprep.subr.mxu0 0.0
        %1778 = vmatpush1.msra.mxu0 0.0
        %1779 = vmatprep.subr.mxu0 0.0
        %1780 = vmatpush1.msra.mxu0 0.0
        %1781 = vmatprep.subr.mxu0 0.0
        %1782 = vmatpush1.msra.mxu0 0.0
        %1783 = vmatprep.subr.mxu0 0.0
        %1784 = vmatpush1.msra.mxu0 0.0
        %1785 = vmatprep.subr.mxu0 0.0
        %1786 = vmatpush1.msra.mxu0 0.0
        %1787 = vmatprep.subr.mxu0 0.0
        %1788 = vmatpush1.msra.mxu0 0.0
        %1789 = vmatprep.subr.mxu0 0.0
        %1790 = vmatpush1.msra.mxu0 0.0
        %1791 = vmatprep.subr.mxu0 0.0
        %1792 = vmatpush1.msra.mxu0 0.0
        %1793 = vmatprep.subr.mxu0 0.0
        %1794 = vmatpush1.msra.mxu0 0.0
        %1795 = vmatprep.subr.mxu0 0.0
        %1796 = vmatpush1.msra.mxu0 0.0
        %1797 = vmatprep.subr.mxu0 0.0
        %1798 = vmatpush1.msra.mxu0 0.0
        %1799 = vmatprep.subr.mxu0 0.0
        %1800 = vmatpush1.msra.mxu0 0.0
        %1801 = vmatprep.subr.mxu0 0.0
        %1802 = vmatpush1.msra.mxu0 0.0
        %1803 = vmatprep.subr.mxu0 0.0
        %1804 = vmatpush1.msra.mxu0 0.0
        %1805 = vmatprep.subr.mxu0 0.0
        %1806 = vmatpush1.msra.mxu0 0.0
        %1807 = vmatprep.mubr.f32.mxu0 0.0
        %1808 = vmatmul.mubr.f32.gmra.mrb[0].mxu0 %v1719
        %v1809 = vpop.f32.mrb[0].mxu0
        %v1810 = vadd.f32 %v1741, %v1809
        %v1811 = vpop.f32.mrb[0].mxu0
        %1812 = vdwg.mxu0
        %vm1813 = vcmask 1024
        %1814 = vst.msk [vmem:[%s5] sm:$0x3] %vm1813, %v1810
      $region48: #{discriminator_forward.9} parent=39 // pred_fallthru
        _
      // Predicated region
      $region49: #{discriminator_forward.9} parent=39 // pred_check
        %p1815 = pneg %p146
      $region50: #{discriminator_forward.9} parent=39 // pred_check_branch
        %1817 = sbr.rel (%p1815) target = $region52
      $region51: #{discriminator_forward.9} parent=39 // pred_region
        _
      $region52: #{discriminator_forward.9} parent=39 // pred_fallthru
        _
      // Predicated region
      $region53: #{discriminator_forward.9} parent=39 // pred_check
        %p1818 = pneg %p146
      $region54: #{discriminator_forward.9} parent=39 // pred_check_branch
        %1820 = sbr.rel (%p1818) target = $region56
      $region55: #{discriminator_forward.9} parent=39 // pred_region
        _
      $region56: #{discriminator_forward.9} parent=39 // pred_fallthru
        _
    $region40: #{discriminator_forward.9} parent=5 // pred_fallthru
      _
    %p1821 = scmp.le.s32.totalorder 2, %s13
    // Predicated region
    $region57: #{discriminator_forward.9} parent=5 // pred_check
      %p1822 = pneg %p1821
    $region58: #{discriminator_forward.9} parent=5 // pred_check_branch
      %1824 = sbr.rel (%p1822) target = $region60
    $region59: #{discriminator_forward.9} parent=5 // pred_region
      %s1825 = ssub.s32 %s13, 2
    $region60: #{discriminator_forward.9} parent=5 // pred_fallthru
      _
  $region6: #{discriminator_forward.9} parent=0 // loop_footer
    %s17 = sadd.s32 1, %s13
  $region7: #{discriminator_forward.9} parent=0 // loop_footer_branch
    %12 = sbr.rel target = $region3
  $region8: #{discriminator_forward.9} parent=0 // loop_exit
    _

</llo_original>
